<compile_context>
chip_gen: v6e
topology: v6e:2x2x1
jax: 0.10.0
libtpu: 0.0.40
codegen_flags: <defaults>
</compile_context>

<pallas_src>
import functools

import jax
import jax.numpy as jnp
from jax import lax
from jax.experimental import pallas as pl
from jax.experimental.pallas import tpu as pltpu

POOL_K = 5
POOL_S = 3
POOL_OUT = 5                      # floor((17 - 5) / 3) + 1  (InceptionAux geometry)
NPOS = POOL_OUT * POOL_OUT        # 25 pooled spatial positions
C0_OUT = 128
C1_OUT = 768
BN_EPS = 1e-3


# ---------------------------------------------------------------------------
# Fused kernel: one image per grid step, pure chain of lane-dense 2-D matmuls.
#   x_ref  : (1, 1, H*W*Cin) f32   image as a row vector, (h, w, c) with c fastest
#   pk_ref : (H*W*Cin, 25*Cin) f32 avg-pool selection matrix (incl. 1/25), kron I_Cin
#   w0_ref : (25*Cin, 25*128) bf16 1x1-conv weight kron'd with I_25 (keeps row form)
#   s0/b0  : (1, 25*128) f32       folded BN0 scale/bias, tiled per position
#   w1_ref : (25*128, 768) bf16    5x5-conv weight, rows ordered (kh, kw, cin)
#   s1/b1  : (1, 768) f32          folded BN1 scale/bias
#   wfc_ref: (768, NCP) bf16       fc weight, lane-padded to NCP (multiple of 128)
#   bfc_ref: (1, NCP) f32
#   o_ref  : (1, 1, NCP) f32
# ---------------------------------------------------------------------------
def _aux_head_kernel(x_ref, pk_ref, w0_ref, s0_ref, b0_ref,
                     w1_ref, s1_ref, b1_ref, wfc_ref, bfc_ref, o_ref):
    x = x_ref[0]                                                          # (1, H*W*Cin)

    # avg_pool2d(k=5, s=3): ONE MXU matmul with a constant selection matrix.
    pooled = jnp.dot(x, pk_ref[...], preferred_element_type=jnp.float32)  # (1, 25*Cin)

    # 1x1 conv + folded BN + ReLU (single matmul, lane-dense result).
    h0 = jnp.dot(pooled.astype(jnp.bfloat16), w0_ref[...],
                 preferred_element_type=jnp.float32)                      # (1, 25*128)
    h0 = jnp.maximum(h0 * s0_ref[...] + b0_ref[...], 0.0)

    # 5x5 conv over the 5x5 map == single matmul over the flattened (kh, kw, cin) axis.
    y1 = jnp.dot(h0.astype(jnp.bfloat16), w1_ref[...],
                 preferred_element_type=jnp.float32)                      # (1, 768)
    y1 = jnp.maximum(y1 * s1_ref[...] + b1_ref[...], 0.0)

    # Final Linear into a lane-padded (128-wide) output: one dense store.
    out = jnp.dot(y1.astype(jnp.bfloat16), wfc_ref[...],
                  preferred_element_type=jnp.float32) + bfc_ref[...]      # (1, NCP)
    o_ref[0] = out.astype(o_ref.dtype)


def _fold_bn(gamma, beta, mean, var, eps=BN_EPS):
    scale = gamma / jnp.sqrt(var + eps)
    bias = beta - mean * scale
    return scale, bias


def _pool_matrix(n):
    """(POOL_OUT, n) 0/1 window-selection matrix for avg_pool(k=5, s=3)."""
    idx = jnp.arange(n)[None, :]
    start = (jnp.arange(POOL_OUT) * POOL_S)[:, None]
    return ((idx >= start) & (idx < start + POOL_K)).astype(jnp.float32)


def init_params(key, in_channels, num_classes):
    ks = jax.random.split(key, 12)
    p = {}
    # conv0: 1x1, in_channels -> 128, bias=False; BatchNorm2d(128, eps=1e-3)
    p["w0"] = jax.random.normal(ks[0], (C0_OUT, in_channels, 1, 1), jnp.float32) * 0.1
    p["g0"] = jax.random.uniform(ks[1], (C0_OUT,), jnp.float32, 0.5, 1.5)
    p["be0"] = jax.random.normal(ks[2], (C0_OUT,), jnp.float32) * 0.1
    p["m0"] = jax.random.normal(ks[3], (C0_OUT,), jnp.float32) * 0.1
    p["v0"] = jax.random.uniform(ks[4], (C0_OUT,), jnp.float32, 0.5, 1.5)
    # conv1: 5x5, 128 -> 768, bias=False; BatchNorm2d(768, eps=1e-3)
    p["w1"] = jax.random.normal(ks[5], (C1_OUT, C0_OUT, 5, 5), jnp.float32) * 0.01
    p["g1"] = jax.random.uniform(ks[6], (C1_OUT,), jnp.float32, 0.5, 1.5)
    p["be1"] = jax.random.normal(ks[7], (C1_OUT,), jnp.float32) * 0.1
    p["m1"] = jax.random.normal(ks[8], (C1_OUT,), jnp.float32) * 0.1
    p["v1"] = jax.random.uniform(ks[9], (C1_OUT,), jnp.float32, 0.5, 1.5)
    # fc: Linear(768, num_classes)
    p["wfc"] = jax.random.normal(ks[10], (num_classes, C1_OUT), jnp.float32) * 0.001
    p["bfc"] = jax.random.normal(ks[11], (num_classes,), jnp.float32) * 0.01
    return p


@functools.partial(jax.jit, static_argnames=("num_classes",))
def inception_aux_forward(x_nchw, params, *, num_classes):
    """Pallas implementation. x_nchw: (B, Cin, H, W) float32."""
    B, Cin, H, W = x_nchw.shape
    # Geometry is hard-wired to the 17x17 InceptionAux input (5x5 pooled map).
    assert (H - POOL_K) % POOL_S == 0 and (H - POOL_K) // POOL_S + 1 == POOL_OUT, H
    assert (W - POOL_K) % POOL_S == 0 and (W - POOL_K) // POOL_S + 1 == POOL_OUT, W
    hwc = H * W * Cin
    ncp = ((num_classes + 127) // 128) * 128          # lane-pad the fc output

    # One lane-dense row vector per image: (h, w, c) with c fastest.
    x_row = jnp.transpose(x_nchw, (0, 2, 3, 1)).reshape(B, 1, hwc).astype(jnp.float32)

    # Constant pooling matrix: pk[(h*W+w)*Cin + c, p*Cin + c'] = win(p,h,w)/25 * (c==c')
    ph, pw = _pool_matrix(H), _pool_matrix(W)                            # (5,H), (5,W)
    pool2d = (ph[:, None, :, None] * pw[None, :, None, :]).reshape(NPOS, H * W)
    pk = jnp.kron(pool2d.T, jnp.eye(Cin, dtype=jnp.float32)) * (1.0 / (POOL_K * POOL_K))

    # Fold eval-mode BN into per-channel affine; cast MXU weights to bf16.
    s0, b0 = _fold_bn(params["g0"], params["be0"], params["m0"], params["v0"])
    s1, b1 = _fold_bn(params["g1"], params["be1"], params["m1"], params["v1"])

    w0mat = params["w0"].reshape(C0_OUT, Cin).T                          # (Cin, 128)
    # Fold the 25 pooled positions into the lane dim (block-diagonal 1x1-conv weight)
    # so stage-1 output is already the (1, 25*128) row that the 5x5 conv contracts.
    w0_wide = jnp.kron(jnp.eye(NPOS, dtype=jnp.float32), w0mat).astype(jnp.bfloat16)
    s0_wide = jnp.tile(s0, NPOS)[None, :]                                # (1, 25*128)
    b0_wide = jnp.tile(b0, NPOS)[None, :]

    # 5x5 conv weight as a (25*128, 768) matmul, rows ordered (kh, kw, cin).
    w1mat = jnp.transpose(params["w1"], (2, 3, 1, 0)).reshape(
        NPOS * C0_OUT, C1_OUT).astype(jnp.bfloat16)

    wfc = jnp.zeros((C1_OUT, ncp), jnp.bfloat16)
    wfc = wfc.at[:, :num_classes].set(params["wfc"].T.astype(jnp.bfloat16))
    bfc = jnp.zeros((1, ncp), jnp.float32).at[0, :num_classes].set(params["bfc"])

    flops = 2 * B * (hwc * NPOS * Cin + NPOS * Cin * NPOS * C0_OUT
                     + NPOS * C0_OUT * C1_OUT + C1_OUT * ncp)
    bytes_accessed = (x_row.size * 4 + pk.size * 4 + w0_wide.size * 2
                      + (s0_wide.size + b0_wide.size) * 4 + w1mat.size * 2
                      + (s1.size + b1.size) * 4 + wfc.size * 2 + bfc.size * 4
                      + B * ncp * 4)

    out = pl.pallas_call(
        _aux_head_kernel,
        out_shape=jax.ShapeDtypeStruct((B, 1, ncp), jnp.float32),
        grid=(B,),
        in_specs=[
            pl.BlockSpec((1, 1, hwc), lambda i: (i, 0, 0)),              # x (per image)
            pl.BlockSpec((hwc, NPOS * Cin), lambda i: (0, 0)),           # pooling matrix
            pl.BlockSpec((NPOS * Cin, NPOS * C0_OUT), lambda i: (0, 0)), # conv0 (wide)
            pl.BlockSpec((1, NPOS * C0_OUT), lambda i: (0, 0)),          # BN0 scale
            pl.BlockSpec((1, NPOS * C0_OUT), lambda i: (0, 0)),          # BN0 bias
            pl.BlockSpec((NPOS * C0_OUT, C1_OUT), lambda i: (0, 0)),     # conv1
            pl.BlockSpec((1, C1_OUT), lambda i: (0, 0)),                 # BN1 scale
            pl.BlockSpec((1, C1_OUT), lambda i: (0, 0)),                 # BN1 bias
            pl.BlockSpec((C1_OUT, ncp), lambda i: (0, 0)),               # fc weight
            pl.BlockSpec((1, ncp), lambda i: (0, 0)),                    # fc bias
        ],
        out_specs=pl.BlockSpec((1, 1, ncp), lambda i: (i, 0, 0)),
        compiler_params=pltpu.CompilerParams(
            dimension_semantics=("parallel",),
            vmem_limit_bytes=32 * 1024 * 1024),
        cost_estimate=pl.CostEstimate(flops=flops, transcendentals=0,
                                      bytes_accessed=bytes_accessed),
    )(x_row, pk, w0_wide, s0_wide, b0_wide,
      w1mat, s1[None, :], b1[None, :], wfc, bfc)

    return out.reshape(B, ncp)[:, :num_classes]


def reference_forward(x_nchw, params):
    """Pure-JAX f32 reference reproducing the PyTorch forward (eval-mode BN)."""
    B = x_nchw.shape[0]
    x = lax.reduce_window(x_nchw, 0.0, lax.add,
                          (1, 1, POOL_K, POOL_K), (1, 1, POOL_S, POOL_S),
                          "VALID") / float(POOL_K * POOL_K)

    def conv_bn_relu(y, w, g, be, m, v):
        y = lax.conv_general_dilated(y, w, (1, 1), "VALID",
                                     dimension_numbers=("NCHW", "OIHW", "NCHW"))
        y = (y - m[None, :, None, None]) / jnp.sqrt(v + BN_EPS)[None, :, None, None]
        y = y * g[None, :, None, None] + be[None, :, None, None]
        return jnp.maximum(y, 0.0)

    y = conv_bn_relu(x, params["w0"], params["g0"], params["be0"], params["m0"], params["v0"])
    y = conv_bn_relu(y, params["w1"], params["g1"], params["be1"], params["m1"], params["v1"])
    y = y.reshape(B, -1)
    return y @ params["wfc"].T + params["bfc"]


if __name__ == "__main__":
    B, Cin, H, W = 2, 4, 17, 17      # 17x17 spatial is what InceptionAux expects
    num_classes = 10

    key = jax.random.PRNGKey(0)
    kx, kp = jax.random.split(key)
    x = jax.random.normal(kx, (B, Cin, H, W), jnp.float32)
    params = init_params(kp, Cin, num_classes)

    out = inception_aux_forward(x, params, num_classes=num_classes)
    out = jax.block_until_ready(out)

    ref = reference_forward(x, params)
    assert out.shape == (B, num_classes), out.shape
    # bf16 MXU operands (f32 accumulate) -> bf16-level tolerance vs. the f32 reference.
    assert jnp.allclose(out, ref, rtol=2e-2, atol=1e-3), (
        f"max abs diff = {jnp.max(jnp.abs(out - ref))}")

    print("KERNEL_OK")
</pallas_src>

<mosaic_0001>
module attributes {stable_mosaic.version = 11 : i64} {
  func.func @_aux_head_kernel(%arg0: i32, %arg1: memref<1x1x1156xf32, #tpu.memory_space<vmem>>, %arg2: memref<1156x100xf32, #tpu.memory_space<vmem>>, %arg3: memref<100x3200xbf16, #tpu.memory_space<vmem>>, %arg4: memref<1x3200xf32, #tpu.memory_space<vmem>>, %arg5: memref<1x3200xf32, #tpu.memory_space<vmem>>, %arg6: memref<3200x768xbf16, #tpu.memory_space<vmem>>, %arg7: memref<1x768xf32, #tpu.memory_space<vmem>>, %arg8: memref<1x768xf32, #tpu.memory_space<vmem>>, %arg9: memref<768x128xbf16, #tpu.memory_space<vmem>>, %arg10: memref<1x128xf32, #tpu.memory_space<vmem>>, %arg11: memref<1x1x128xf32, #tpu.memory_space<vmem>>) attributes {dimension_semantics = [#tpu.dimension_semantics<parallel>], iteration_bounds = array<i64: 2>, scalar_prefetch = 0 : i64, scratch_operands = 0 : i64, tpu.core_type = #tpu.core_type<tc>, window_params = [{transform_indices = @transform_0, window_bounds = array<i64: 1, 1, 1156>}, {pipeline_mode = #tpu.pipeline_mode<synchronous>, transform_indices = @transform_1, window_bounds = array<i64: 1156, 100>}, {pipeline_mode = #tpu.pipeline_mode<synchronous>, transform_indices = @transform_2, window_bounds = array<i64: 100, 3200>}, {pipeline_mode = #tpu.pipeline_mode<synchronous>, transform_indices = @transform_3, window_bounds = array<i64: 1, 3200>}, {pipeline_mode = #tpu.pipeline_mode<synchronous>, transform_indices = @transform_4, window_bounds = array<i64: 1, 3200>}, {pipeline_mode = #tpu.pipeline_mode<synchronous>, transform_indices = @transform_5, window_bounds = array<i64: 3200, 768>}, {pipeline_mode = #tpu.pipeline_mode<synchronous>, transform_indices = @transform_6, window_bounds = array<i64: 1, 768>}, {pipeline_mode = #tpu.pipeline_mode<synchronous>, transform_indices = @transform_7, window_bounds = array<i64: 1, 768>}, {pipeline_mode = #tpu.pipeline_mode<synchronous>, transform_indices = @transform_8, window_bounds = array<i64: 768, 128>}, {pipeline_mode = #tpu.pipeline_mode<synchronous>, transform_indices = @transform_9, window_bounds = array<i64: 1, 128>}, {transform_indices = @transform_10, window_bounds = array<i64: 1, 1, 128>}]} {
    %c0 = arith.constant 0 : index
    %c0_0 = arith.constant 0 : index
    %c0_1 = arith.constant 0 : index
    %0 = vector.load %arg1[%c0, %c0_0, %c0_1] : memref<1x1x1156xf32, #tpu.memory_space<vmem>>, vector<1x1x1156xf32>
    %1 = vector.shape_cast %0 : vector<1x1x1156xf32> to vector<1x1156xf32>
    %c0_2 = arith.constant 0 : index
    %c0_3 = arith.constant 0 : index
    %2 = vector.load %arg2[%c0_2, %c0_3] : memref<1156x100xf32, #tpu.memory_space<vmem>>, vector<1156x100xf32>
    %cst = arith.constant dense<0.000000e+00> : vector<1x100xf32>
    %3 = tpu.matmul %1, %2, %cst {dimension_numbers = #tpu.dot_dimension_numbers<[1], [0], [0], [1], [0, 0, 1, 1], [], []>} : vector<1x1156xf32>, vector<1156x100xf32>, vector<1x100xf32> -> vector<1x100xf32>
    %4 = arith.truncf %3 : vector<1x100xf32> to vector<1x100xbf16>
    %c0_4 = arith.constant 0 : index
    %c0_5 = arith.constant 0 : index
    %5 = vector.load %arg3[%c0_4, %c0_5] : memref<100x3200xbf16, #tpu.memory_space<vmem>>, vector<100x3200xbf16>
    %cst_6 = arith.constant dense<0.000000e+00> : vector<1x3200xf32>
    %6 = tpu.matmul %4, %5, %cst_6 {dimension_numbers = #tpu.dot_dimension_numbers<[1], [0], [0], [1], [0, 0, 1, 1], [], []>} : vector<1x100xbf16>, vector<100x3200xbf16>, vector<1x3200xf32> -> vector<1x3200xf32>
    %c0_7 = arith.constant 0 : index
    %c0_8 = arith.constant 0 : index
    %7 = vector.load %arg4[%c0_7, %c0_8] : memref<1x3200xf32, #tpu.memory_space<vmem>>, vector<1x3200xf32>
    %8 = arith.mulf %6, %7 : vector<1x3200xf32>
    %c0_9 = arith.constant 0 : index
    %c0_10 = arith.constant 0 : index
    %9 = vector.load %arg5[%c0_9, %c0_10] : memref<1x3200xf32, #tpu.memory_space<vmem>>, vector<1x3200xf32>
    %10 = arith.addf %8, %9 : vector<1x3200xf32>
    %cst_11 = arith.constant 0.000000e+00 : f32
    %11 = vector.broadcast %cst_11 : f32 to vector<1x3200xf32>
    %12 = arith.maximumf %10, %11 : vector<1x3200xf32>
    %13 = arith.truncf %12 : vector<1x3200xf32> to vector<1x3200xbf16>
    %c0_12 = arith.constant 0 : index
    %c0_13 = arith.constant 0 : index
    %14 = vector.load %arg6[%c0_12, %c0_13] : memref<3200x768xbf16, #tpu.memory_space<vmem>>, vector<3200x768xbf16>
    %cst_14 = arith.constant dense<0.000000e+00> : vector<1x768xf32>
    %15 = tpu.matmul %13, %14, %cst_14 {dimension_numbers = #tpu.dot_dimension_numbers<[1], [0], [0], [1], [0, 0, 1, 1], [], []>} : vector<1x3200xbf16>, vector<3200x768xbf16>, vector<1x768xf32> -> vector<1x768xf32>
    %c0_15 = arith.constant 0 : index
    %c0_16 = arith.constant 0 : index
    %16 = vector.load %arg7[%c0_15, %c0_16] : memref<1x768xf32, #tpu.memory_space<vmem>>, vector<1x768xf32>
    %17 = arith.mulf %15, %16 : vector<1x768xf32>
    %c0_17 = arith.constant 0 : index
    %c0_18 = arith.constant 0 : index
    %18 = vector.load %arg8[%c0_17, %c0_18] : memref<1x768xf32, #tpu.memory_space<vmem>>, vector<1x768xf32>
    %19 = arith.addf %17, %18 : vector<1x768xf32>
    %cst_19 = arith.constant 0.000000e+00 : f32
    %20 = vector.broadcast %cst_19 : f32 to vector<1x768xf32>
    %21 = arith.maximumf %19, %20 : vector<1x768xf32>
    %22 = arith.truncf %21 : vector<1x768xf32> to vector<1x768xbf16>
    %c0_20 = arith.constant 0 : index
    %c0_21 = arith.constant 0 : index
    %23 = vector.load %arg9[%c0_20, %c0_21] : memref<768x128xbf16, #tpu.memory_space<vmem>>, vector<768x128xbf16>
    %cst_22 = arith.constant dense<0.000000e+00> : vector<1x128xf32>
    %24 = tpu.matmul %22, %23, %cst_22 {dimension_numbers = #tpu.dot_dimension_numbers<[1], [0], [0], [1], [0, 0, 1, 1], [], []>} : vector<1x768xbf16>, vector<768x128xbf16>, vector<1x128xf32> -> vector<1x128xf32>
    %c0_23 = arith.constant 0 : index
    %c0_24 = arith.constant 0 : index
    %25 = vector.load %arg10[%c0_23, %c0_24] : memref<1x128xf32, #tpu.memory_space<vmem>>, vector<1x128xf32>
    %26 = arith.addf %24, %25 : vector<1x128xf32>
    %c0_25 = arith.constant 0 : index
    %c0_26 = arith.constant 0 : index
    %c0_27 = arith.constant 0 : index
    %27 = vector.load %arg11[%c0_25, %c0_26, %c0_27] : memref<1x1x128xf32, #tpu.memory_space<vmem>>, vector<1x1x128xf32>
    %28 = vector.shape_cast %27 : vector<1x1x128xf32> to vector<1x128xf32>
    %29 = vector.shape_cast %26 : vector<1x128xf32> to vector<1x1x128xf32>
    tpu.vector_store %arg11[%c0_25, %c0_26, %c0_27], %29 {strides = array<i32>} : memref<1x1x128xf32, #tpu.memory_space<vmem>>, vector<1x1x128xf32>,
    return
  }
  func.func @transform_0(%arg0: i32) -> (i32, i32, i32) {
    %c0_i32 = arith.constant 0 : i32
    %c0_i32_0 = arith.constant 0 : i32
    %c0_i32_1 = arith.constant 0 : i32
    return %arg0, %c0_i32, %c0_i32_0 : i32, i32, i32
  }
  func.func @transform_1(%arg0: i32) -> (i32, i32) {
    %c0_i32 = arith.constant 0 : i32
    %c0_i32_0 = arith.constant 0 : i32
    %c0_i32_1 = arith.constant 0 : i32
    return %c0_i32, %c0_i32_0 : i32, i32
  }
  func.func @transform_2(%arg0: i32) -> (i32, i32) {
    %c0_i32 = arith.constant 0 : i32
    %c0_i32_0 = arith.constant 0 : i32
    %c0_i32_1 = arith.constant 0 : i32
    return %c0_i32, %c0_i32_0 : i32, i32
  }
  func.func @transform_3(%arg0: i32) -> (i32, i32) {
    %c0_i32 = arith.constant 0 : i32
    %c0_i32_0 = arith.constant 0 : i32
    %c0_i32_1 = arith.constant 0 : i32
    return %c0_i32, %c0_i32_0 : i32, i32
  }
  func.func @transform_4(%arg0: i32) -> (i32, i32) {
    %c0_i32 = arith.constant 0 : i32
    %c0_i32_0 = arith.constant 0 : i32
    %c0_i32_1 = arith.constant 0 : i32
    return %c0_i32, %c0_i32_0 : i32, i32
  }
  func.func @transform_5(%arg0: i32) -> (i32, i32) {
    %c0_i32 = arith.constant 0 : i32
    %c0_i32_0 = arith.constant 0 : i32
    %c0_i32_1 = arith.constant 0 : i32
    return %c0_i32, %c0_i32_0 : i32, i32
  }
  func.func @transform_6(%arg0: i32) -> (i32, i32) {
    %c0_i32 = arith.constant 0 : i32
    %c0_i32_0 = arith.constant 0 : i32
    %c0_i32_1 = arith.constant 0 : i32
    return %c0_i32, %c0_i32_0 : i32, i32
  }
  func.func @transform_7(%arg0: i32) -> (i32, i32) {
    %c0_i32 = arith.constant 0 : i32
    %c0_i32_0 = arith.constant 0 : i32
    %c0_i32_1 = arith.constant 0 : i32
    return %c0_i32, %c0_i32_0 : i32, i32
  }
  func.func @transform_8(%arg0: i32) -> (i32, i32) {
    %c0_i32 = arith.constant 0 : i32
    %c0_i32_0 = arith.constant 0 : i32
    %c0_i32_1 = arith.constant 0 : i32
    return %c0_i32, %c0_i32_0 : i32, i32
  }
  func.func @transform_9(%arg0: i32) -> (i32, i32) {
    %c0_i32 = arith.constant 0 : i32
    %c0_i32_0 = arith.constant 0 : i32
    %c0_i32_1 = arith.constant 0 : i32
    return %c0_i32, %c0_i32_0 : i32, i32
  }
  func.func @transform_10(%arg0: i32) -> (i32, i32, i32) {
    %c0_i32 = arith.constant 0 : i32
    %c0_i32_0 = arith.constant 0 : i32
    %c0_i32_1 = arith.constant 0 : i32
    return %arg0, %c0_i32, %c0_i32_0 : i32, i32, i32
  }
}

</mosaic_0001>

<llo_original>
// kernel: inception_aux_forward.1
$region0: #{inception_aux_forward.1}
  #allocation0 [shape = 'u32[]', space=smem, size = 0x4, offset = 0x4, fixed_abs, tag = 'smem constant byte address 0x4 - core index']
  #allocation1 [shape = 'u32[144,128]{1,0:T(1,128)}', space=vmem, size = 0x12000, scoped, tag = 'internal scratch']
  %s0 = inlined_call_operand.vmem [shape: f32[2,1,1156], index: 0, kind: input, shape index: {}]
  %s1 = inlined_call_operand.vmem [shape: f32[1156,100], index: 1, kind: input, shape index: {}]
  %s2 = inlined_call_operand.vmem [shape: bf16[100,3200], index: 2, kind: input, shape index: {}]
  %s3 = inlined_call_operand.vmem [shape: f32[1,3200], index: 3, kind: input, shape index: {}]
  %s4 = inlined_call_operand.vmem [shape: f32[1,3200], index: 4, kind: input, shape index: {}]
  %s5 = inlined_call_operand.vmem [shape: bf16[3200,768], index: 5, kind: input, shape index: {}]
  %s6 = inlined_call_operand.vmem [shape: f32[1,768], index: 6, kind: input, shape index: {}]
  %s7 = inlined_call_operand.vmem [shape: f32[1,768], index: 7, kind: input, shape index: {}]
  %s8 = inlined_call_operand.vmem [shape: bf16[768,128], index: 8, kind: input, shape index: {}]
  %s9 = inlined_call_operand.vmem [shape: f32[1,128], index: 9, kind: input, shape index: {}]
  %s10 = inlined_call_operand.hbm [shape: f32[2,1,128], index: 10, kind: output, shape index: {}]
  %s11 = sld [smem:[#allocation0]]
  $region73: #{inception_aux_forward.1} parent=0
    _
  %s13 = ssub.s32 1, %s11
  %s14 = scalar_select 0, %s13, %s11
  $region1: #{inception_aux_forward.1} parent=0
    #allocation2 [shape = 'u8[1024]{0}', space=vmem, size = 0x400, scoped, tag = 'output window, operand 0']
    #allocation3 [shape = 's32[2]{0}', space=sflag, size = 0x8, scoped, tag = 'scoped memory for inception_aux_forward.1']
    %15 = vsyncpa [#allocation3], 0
    %s16 = scalar_lea.sflag [#allocation3], 1
    %17 = vsyncpa %s16, 0
    loop: start=0, step=1, limit=4
    $region2: #{inception_aux_forward.1} parent=1 // loop_pre_header
      _
    $region3: #{inception_aux_forward.1} parent=1 // loop_header
      %s19 = sphi 0, %s23
      %p20 = scmp.ge.s32.totalorder %s19, 4
      %s29 = sphi 0, %s31
      %s32 = sphi 0, %s29
      %s33 = sphi 0, %s32
      %s49 = sphi 0, %s33
      %s53 = sphi 0, %s53
      %s55 = sphi 0, %s53
      %s56 = sphi 0, %s55
      %s70 = sphi 0, %s56
      %s74 = sphi 0, %s74
      %s76 = sphi 0, %s74
      %s77 = sphi 0, %s76
      %s91 = sphi 0, %s77
      %s95 = sphi 0, %s95
      %s97 = sphi 0, %s95
      %s98 = sphi 0, %s97
      %s112 = sphi 0, %s98
      %s116 = sphi 0, %s116
      %s118 = sphi 0, %s116
      %s119 = sphi 0, %s118
      %s133 = sphi 0, %s119
      %s137 = sphi 0, %s137
      %s139 = sphi 0, %s137
      %s140 = sphi 0, %s139
      %s154 = sphi 0, %s140
      %s158 = sphi 0, %s158
      %s160 = sphi 0, %s158
      %s161 = sphi 0, %s160
      %s175 = sphi 0, %s161
      %s179 = sphi 0, %s179
      %s181 = sphi 0, %s179
      %s182 = sphi 0, %s181
      %s196 = sphi 0, %s182
      %s200 = sphi 0, %s200
      %s202 = sphi 0, %s200
      %s203 = sphi 0, %s202
      %s217 = sphi 0, %s203
      %s221 = sphi 0, %s221
      %s223 = sphi 0, %s221
      %s224 = sphi 0, %s223
      %s238 = sphi 0, %s224
      %s244 = sphi 0, %s246
      %s247 = sphi 0, %s244
      %s248 = sphi 0, %s247
      %s264 = sphi 0, %s248
    $region4: #{inception_aux_forward.1} parent=1 // loop_header_branch
      %22 = sbr.rel (%p20) target = $region8
    $region5: #{inception_aux_forward.1} parent=1 // loop_body
      %s24 = ssub.s32 %s19, 1
      %s25 = ssub.s32 %s19, 2
      %s26 = sadd.s32 %s19, 1
      %s27 = ssub.s32 %s19, %s26
      %p28 = scmp.eq.s32.totalorder %s27, 0
      %s30 = sadd.s32 %s29, 1
      %s31 = scalar_select %p28, %s29, %s30
      %p34 = pneg %p28
      %p35 = scmp.eq.s32.totalorder %s19, 1
      %p36 = por %p34, %p35
      %p37 = scmp.ne.s32.totalorder %s29, %s32
      %p38 = scmp.eq.s32.totalorder %s19, 0
      %p39 = por %p37, %p38
      %p40 = scmp.ne.s32.totalorder %s29, %s32
      %p41 = scmp.eq.s32.totalorder %s24, 1
      %p42 = por %p40, %p41
      %p43 = scmp.ne.s32.totalorder %s32, %s33
      %p44 = scmp.eq.s32.totalorder %s24, 0
      %p45 = por %p43, %p44
      %p46 = scmp.ne.s32.totalorder %s32, %s33
      %p47 = scmp.eq.s32.totalorder %s25, 1
      %p48 = por %p46, %p47
      %p50 = scmp.ne.s32.totalorder %s33, %s49
      %p51 = scmp.eq.s32.totalorder %s25, 0
      %p52 = por %p50, %p51
      %s54 = sadd.s32 %s53, 1
      %p57 = scmp.eq.s32.totalorder %s19, 1
      %p58 = scmp.ne.s32.totalorder %s53, %s55
      %p59 = scmp.eq.s32.totalorder %s19, 0
      %p60 = por %p58, %p59
      %p61 = scmp.ne.s32.totalorder %s53, %s55
      %p62 = scmp.eq.s32.totalorder %s24, 1
      %p63 = por %p61, %p62
      %p64 = scmp.ne.s32.totalorder %s55, %s56
      %p65 = scmp.eq.s32.totalorder %s24, 0
      %p66 = por %p64, %p65
      %p67 = scmp.ne.s32.totalorder %s55, %s56
      %p68 = scmp.eq.s32.totalorder %s25, 1
      %p69 = por %p67, %p68
      %p71 = scmp.ne.s32.totalorder %s56, %s70
      %p72 = scmp.eq.s32.totalorder %s25, 0
      %p73 = por %p71, %p72
      %s75 = sadd.s32 %s74, 1
      %p78 = scmp.eq.s32.totalorder %s19, 1
      %p79 = scmp.ne.s32.totalorder %s74, %s76
      %p80 = scmp.eq.s32.totalorder %s19, 0
      %p81 = por %p79, %p80
      %p82 = scmp.ne.s32.totalorder %s74, %s76
      %p83 = scmp.eq.s32.totalorder %s24, 1
      %p84 = por %p82, %p83
      %p85 = scmp.ne.s32.totalorder %s76, %s77
      %p86 = scmp.eq.s32.totalorder %s24, 0
      %p87 = por %p85, %p86
      %p88 = scmp.ne.s32.totalorder %s76, %s77
      %p89 = scmp.eq.s32.totalorder %s25, 1
      %p90 = por %p88, %p89
      %p92 = scmp.ne.s32.totalorder %s77, %s91
      %p93 = scmp.eq.s32.totalorder %s25, 0
      %p94 = por %p92, %p93
      %s96 = sadd.s32 %s95, 1
      %p99 = scmp.eq.s32.totalorder %s19, 1
      %p100 = scmp.ne.s32.totalorder %s95, %s97
      %p101 = scmp.eq.s32.totalorder %s19, 0
      %p102 = por %p100, %p101
      %p103 = scmp.ne.s32.totalorder %s95, %s97
      %p104 = scmp.eq.s32.totalorder %s24, 1
      %p105 = por %p103, %p104
      %p106 = scmp.ne.s32.totalorder %s97, %s98
      %p107 = scmp.eq.s32.totalorder %s24, 0
      %p108 = por %p106, %p107
      %p109 = scmp.ne.s32.totalorder %s97, %s98
      %p110 = scmp.eq.s32.totalorder %s25, 1
      %p111 = por %p109, %p110
      %p113 = scmp.ne.s32.totalorder %s98, %s112
      %p114 = scmp.eq.s32.totalorder %s25, 0
      %p115 = por %p113, %p114
      %s117 = sadd.s32 %s116, 1
      %p120 = scmp.eq.s32.totalorder %s19, 1
      %p121 = scmp.ne.s32.totalorder %s116, %s118
      %p122 = scmp.eq.s32.totalorder %s19, 0
      %p123 = por %p121, %p122
      %p124 = scmp.ne.s32.totalorder %s116, %s118
      %p125 = scmp.eq.s32.totalorder %s24, 1
      %p126 = por %p124, %p125
      %p127 = scmp.ne.s32.totalorder %s118, %s119
      %p128 = scmp.eq.s32.totalorder %s24, 0
      %p129 = por %p127, %p128
      %p130 = scmp.ne.s32.totalorder %s118, %s119
      %p131 = scmp.eq.s32.totalorder %s25, 1
      %p132 = por %p130, %p131
      %p134 = scmp.ne.s32.totalorder %s119, %s133
      %p135 = scmp.eq.s32.totalorder %s25, 0
      %p136 = por %p134, %p135
      %s138 = sadd.s32 %s137, 1
      %p141 = scmp.eq.s32.totalorder %s19, 1
      %p142 = scmp.ne.s32.totalorder %s137, %s139
      %p143 = scmp.eq.s32.totalorder %s19, 0
      %p144 = por %p142, %p143
      %p145 = scmp.ne.s32.totalorder %s137, %s139
      %p146 = scmp.eq.s32.totalorder %s24, 1
      %p147 = por %p145, %p146
      %p148 = scmp.ne.s32.totalorder %s139, %s140
      %p149 = scmp.eq.s32.totalorder %s24, 0
      %p150 = por %p148, %p149
      %p151 = scmp.ne.s32.totalorder %s139, %s140
      %p152 = scmp.eq.s32.totalorder %s25, 1
      %p153 = por %p151, %p152
      %p155 = scmp.ne.s32.totalorder %s140, %s154
      %p156 = scmp.eq.s32.totalorder %s25, 0
      %p157 = por %p155, %p156
      %s159 = sadd.s32 %s158, 1
      %p162 = scmp.eq.s32.totalorder %s19, 1
      %p163 = scmp.ne.s32.totalorder %s158, %s160
      %p164 = scmp.eq.s32.totalorder %s19, 0
      %p165 = por %p163, %p164
      %p166 = scmp.ne.s32.totalorder %s158, %s160
      %p167 = scmp.eq.s32.totalorder %s24, 1
      %p168 = por %p166, %p167
      %p169 = scmp.ne.s32.totalorder %s160, %s161
      %p170 = scmp.eq.s32.totalorder %s24, 0
      %p171 = por %p169, %p170
      %p172 = scmp.ne.s32.totalorder %s160, %s161
      %p173 = scmp.eq.s32.totalorder %s25, 1
      %p174 = por %p172, %p173
      %p176 = scmp.ne.s32.totalorder %s161, %s175
      %p177 = scmp.eq.s32.totalorder %s25, 0
      %p178 = por %p176, %p177
      %s180 = sadd.s32 %s179, 1
      %p183 = scmp.eq.s32.totalorder %s19, 1
      %p184 = scmp.ne.s32.totalorder %s179, %s181
      %p185 = scmp.eq.s32.totalorder %s19, 0
      %p186 = por %p184, %p185
      %p187 = scmp.ne.s32.totalorder %s179, %s181
      %p188 = scmp.eq.s32.totalorder %s24, 1
      %p189 = por %p187, %p188
      %p190 = scmp.ne.s32.totalorder %s181, %s182
      %p191 = scmp.eq.s32.totalorder %s24, 0
      %p192 = por %p190, %p191
      %p193 = scmp.ne.s32.totalorder %s181, %s182
      %p194 = scmp.eq.s32.totalorder %s25, 1
      %p195 = por %p193, %p194
      %p197 = scmp.ne.s32.totalorder %s182, %s196
      %p198 = scmp.eq.s32.totalorder %s25, 0
      %p199 = por %p197, %p198
      %s201 = sadd.s32 %s200, 1
      %p204 = scmp.eq.s32.totalorder %s19, 1
      %p205 = scmp.ne.s32.totalorder %s200, %s202
      %p206 = scmp.eq.s32.totalorder %s19, 0
      %p207 = por %p205, %p206
      %p208 = scmp.ne.s32.totalorder %s200, %s202
      %p209 = scmp.eq.s32.totalorder %s24, 1
      %p210 = por %p208, %p209
      %p211 = scmp.ne.s32.totalorder %s202, %s203
      %p212 = scmp.eq.s32.totalorder %s24, 0
      %p213 = por %p211, %p212
      %p214 = scmp.ne.s32.totalorder %s202, %s203
      %p215 = scmp.eq.s32.totalorder %s25, 1
      %p216 = por %p214, %p215
      %p218 = scmp.ne.s32.totalorder %s203, %s217
      %p219 = scmp.eq.s32.totalorder %s25, 0
      %p220 = por %p218, %p219
      %s222 = sadd.s32 %s221, 1
      %p225 = scmp.eq.s32.totalorder %s19, 1
      %p226 = scmp.ne.s32.totalorder %s221, %s223
      %p227 = scmp.eq.s32.totalorder %s19, 0
      %p228 = por %p226, %p227
      %p229 = scmp.ne.s32.totalorder %s221, %s223
      %p230 = scmp.eq.s32.totalorder %s24, 1
      %p231 = por %p229, %p230
      %p232 = scmp.ne.s32.totalorder %s223, %s224
      %p233 = scmp.eq.s32.totalorder %s24, 0
      %p234 = por %p232, %p233
      %p235 = scmp.ne.s32.totalorder %s223, %s224
      %p236 = scmp.eq.s32.totalorder %s25, 1
      %p237 = por %p235, %p236
      %p239 = scmp.ne.s32.totalorder %s224, %s238
      %p240 = scmp.eq.s32.totalorder %s25, 0
      %p241 = por %p239, %p240
      %s242 = ssub.s32 %s19, %s26
      %p243 = scmp.eq.s32.totalorder %s242, 0
      %s245 = sadd.s32 %s244, 1
      %s246 = scalar_select %p243, %s244, %s245
      %p249 = pneg %p243
      %p250 = scmp.eq.s32.totalorder %s19, 1
      %p251 = por %p249, %p250
      %p252 = scmp.ne.s32.totalorder %s244, %s247
      %p253 = scmp.eq.s32.totalorder %s19, 0
      %p254 = por %p252, %p253
      %p255 = scmp.ne.s32.totalorder %s244, %s247
      %p256 = scmp.eq.s32.totalorder %s24, 1
      %p257 = por %p255, %p256
      %p258 = scmp.ne.s32.totalorder %s247, %s248
      %p259 = scmp.eq.s32.totalorder %s24, 0
      %p260 = por %p258, %p259
      %p261 = scmp.ne.s32.totalorder %s247, %s248
      %p262 = scmp.eq.s32.totalorder %s25, 1
      %p263 = por %p261, %p262
      %p265 = scmp.ne.s32.totalorder %s248, %s264
      %p266 = scmp.eq.s32.totalorder %s25, 0
      %p267 = por %p265, %p266
      %p268 = scmp.le.s32.totalorder 1, %s19
      %p269 = scmp.lt.s32.totalorder %s19, 3
      %p270 = pnand %p268, %p269
      %p271 = pneg %p270
      // Predicated region
      $region9: #{inception_aux_forward.1} parent=5 // pred_check
        _
      $region10: #{inception_aux_forward.1} parent=5 // pred_check_branch
        %273 = sbr.rel (%p270) target = $region12
      $region11: #{inception_aux_forward.1} parent=5 // pred_region
        %s274 = ssub.s32 %s19, 1
        // Predicated region
        $region13: #{inception_aux_forward.1} parent=11 // pred_check
          %p275 = pneg %p66
        $region14: #{inception_aux_forward.1} parent=11 // pred_check_branch
          %277 = sbr.rel (%p275) target = $region16
        $region15: #{inception_aux_forward.1} parent=11 // pred_region
          _
        $region16: #{inception_aux_forward.1} parent=11 // pred_fallthru
          _
        // Predicated region
        $region17: #{inception_aux_forward.1} parent=11 // pred_check
          %p278 = pneg %p87
        $region18: #{inception_aux_forward.1} parent=11 // pred_check_branch
          %280 = sbr.rel (%p278) target = $region20
        $region19: #{inception_aux_forward.1} parent=11 // pred_region
          _
        $region20: #{inception_aux_forward.1} parent=11 // pred_fallthru
          _
        // Predicated region
        $region21: #{inception_aux_forward.1} parent=11 // pred_check
          %p281 = pneg %p108
        $region22: #{inception_aux_forward.1} parent=11 // pred_check_branch
          %283 = sbr.rel (%p281) target = $region24
        $region23: #{inception_aux_forward.1} parent=11 // pred_region
          _
        $region24: #{inception_aux_forward.1} parent=11 // pred_fallthru
          _
        // Predicated region
        $region25: #{inception_aux_forward.1} parent=11 // pred_check
          %p284 = pneg %p129
        $region26: #{inception_aux_forward.1} parent=11 // pred_check_branch
          %286 = sbr.rel (%p284) target = $region28
        $region27: #{inception_aux_forward.1} parent=11 // pred_region
          _
        $region28: #{inception_aux_forward.1} parent=11 // pred_fallthru
          _
        // Predicated region
        $region29: #{inception_aux_forward.1} parent=11 // pred_check
          %p287 = pneg %p150
        $region30: #{inception_aux_forward.1} parent=11 // pred_check_branch
          %289 = sbr.rel (%p287) target = $region32
        $region31: #{inception_aux_forward.1} parent=11 // pred_region
          _
        $region32: #{inception_aux_forward.1} parent=11 // pred_fallthru
          _
        // Predicated region
        $region33: #{inception_aux_forward.1} parent=11 // pred_check
          %p290 = pneg %p171
        $region34: #{inception_aux_forward.1} parent=11 // pred_check_branch
          %292 = sbr.rel (%p290) target = $region36
        $region35: #{inception_aux_forward.1} parent=11 // pred_region
          _
        $region36: #{inception_aux_forward.1} parent=11 // pred_fallthru
          _
        // Predicated region
        $region37: #{inception_aux_forward.1} parent=11 // pred_check
          %p293 = pneg %p192
        $region38: #{inception_aux_forward.1} parent=11 // pred_check_branch
          %295 = sbr.rel (%p293) target = $region40
        $region39: #{inception_aux_forward.1} parent=11 // pred_region
          _
        $region40: #{inception_aux_forward.1} parent=11 // pred_fallthru
          _
        // Predicated region
        $region41: #{inception_aux_forward.1} parent=11 // pred_check
          %p296 = pneg %p213
        $region42: #{inception_aux_forward.1} parent=11 // pred_check_branch
          %298 = sbr.rel (%p296) target = $region44
        $region43: #{inception_aux_forward.1} parent=11 // pred_region
          _
        $region44: #{inception_aux_forward.1} parent=11 // pred_fallthru
          _
        // Predicated region
        $region45: #{inception_aux_forward.1} parent=11 // pred_check
          %p299 = pneg %p234
        $region46: #{inception_aux_forward.1} parent=11 // pred_check_branch
          %301 = sbr.rel (%p299) target = $region48
        $region47: #{inception_aux_forward.1} parent=11 // pred_region
          _
        $region48: #{inception_aux_forward.1} parent=11 // pred_fallthru
          _
      $region12: #{inception_aux_forward.1} parent=5 // pred_fallthru
        _
      %p302 = scmp.lt.s32.totalorder %s19, 2
      // Predicated region
      $region49: #{inception_aux_forward.1} parent=5 // pred_check
        %p303 = pneg %p302
      $region50: #{inception_aux_forward.1} parent=5 // pred_check_branch
        %305 = sbr.rel (%p303) target = $region52
      $region51: #{inception_aux_forward.1} parent=5 // pred_region
        // Predicated region
        $region53: #{inception_aux_forward.1} parent=51 // pred_check
          %p306 = pneg %p39
        $region54: #{inception_aux_forward.1} parent=51 // pred_check_branch
          %308 = sbr.rel (%p306) target = $region56
        $region55: #{inception_aux_forward.1} parent=51 // pred_region
          %p309 = scmp.lt.s32.totalorder %s19, 1
          %s310 = scalar_select %p309, %s19, 1
          %s311 = smul.addr %s310, 10
          %s312 = scalar_lea.vmem %s0, %s311
        $region56: #{inception_aux_forward.1} parent=51 // pred_fallthru
          _
      $region52: #{inception_aux_forward.1} parent=5 // pred_fallthru
        _
      %p313 = scmp.le.s32.totalorder 1, %s19
      %p314 = scmp.lt.s32.totalorder %s19, 3
      %p315 = pnand %p313, %p314
      %p316 = pneg %p315
      // Predicated region
      $region57: #{inception_aux_forward.1} parent=5 // pred_check
        _
      $region58: #{inception_aux_forward.1} parent=5 // pred_check_branch
        %318 = sbr.rel (%p315) target = $region60
      $region59: #{inception_aux_forward.1} parent=5 // pred_region
        %s319 = ssub.s32 %s19, 1
        %p320 = scmp.lt.s32.totalorder %s24, 1
        %s321 = scalar_select %p320, %s24, 1
        %s322 = smul.addr %s321, 10
        %s323 = scalar_lea.vmem %s0, %s322
        %p324 = pneg %p45
        %p325 = pneg %p42
        %p326 = pneg %p66
        %p327 = pneg %p63
        %p328 = pneg %p87
        %p329 = pneg %p84
        %p330 = pneg %p108
        %p331 = pneg %p105
        %p332 = pneg %p129
        %p333 = pneg %p126
        %p334 = pneg %p150
        %p335 = pneg %p147
        %p336 = pneg %p171
        %p337 = pneg %p168
        %p338 = pneg %p192
        %p339 = pneg %p189
        %p340 = pneg %p213
        %p341 = pneg %p210
        %p342 = pneg %p234
        %p343 = pneg %p231
        %p344 = pneg %p260
        %p345 = pneg %p257
        %s346 = sand.u32 %s247, 1
        %s347 = scalar_lea.sflag [#allocation3], %s346
        %s348 = sand.u32 %s247, 1
        %s349 = scalar_lea.vmem [#allocation2], %s348
        %p350 = scmp.lt.s32.totalorder %s24, 1
        %s351 = scalar_select %p350, %s24, 1
        %s352 = smul.addr %s351, 10
        %s353 = scalar_lea.vmem %s0, %s352
        %v355 = vld [vmem:[%s353] sm:$0xff]
        %v356 = vld [vmem:[%s353 + $0x8] sm:$0x3]
        %v357 = vld [vmem:[%s1] sm:$0xff]
        %v358 = vld [vmem:[%s1 + $0x8] sm:$0xff]
        %v359 = vld [vmem:[%s1 + $0x10] sm:$0xff]
        %v360 = vld [vmem:[%s1 + $0x18] sm:$0xff]
        %v361 = vld [vmem:[%s1 + $0x20] sm:$0xff]
        %v362 = vld [vmem:[%s1 + $0x28] sm:$0xff]
        %v363 = vld [vmem:[%s1 + $0x30] sm:$0xff]
        %v364 = vld [vmem:[%s1 + $0x38] sm:$0xff]
        %v365 = vld [vmem:[%s1 + $0x40] sm:$0xff]
        %v366 = vld [vmem:[%s1 + $0x48] sm:$0xff]
        %v367 = vld [vmem:[%s1 + $0x50] sm:$0xff]
        %v368 = vld [vmem:[%s1 + $0x58] sm:$0xff]
        %v369 = vld [vmem:[%s1 + $0x60] sm:$0xff]
        %v370 = vld [vmem:[%s1 + $0x68] sm:$0xff]
        %v371 = vld [vmem:[%s1 + $0x70] sm:$0xff]
        %v372 = vld [vmem:[%s1 + $0x78] sm:$0xff]
        %v373 = vld [vmem:[%s1 + $0x80] sm:$0xff]
        %v374 = vld [vmem:[%s1 + $0x88] sm:$0xff]
        %v375 = vld [vmem:[%s1 + $0x90] sm:$0xff]
        %v376 = vld [vmem:[%s1 + $0x98] sm:$0xff]
        %v377 = vld [vmem:[%s1 + $0xa0] sm:$0xff]
        %v378 = vld [vmem:[%s1 + $0xa8] sm:$0xff]
        %v379 = vld [vmem:[%s1 + $0xb0] sm:$0xff]
        %v380 = vld [vmem:[%s1 + $0xb8] sm:$0xff]
        %v381 = vld [vmem:[%s1 + $0xc0] sm:$0xff]
        %v382 = vld [vmem:[%s1 + $0xc8] sm:$0xff]
        %v383 = vld [vmem:[%s1 + $0xd0] sm:$0xff]
        %v384 = vld [vmem:[%s1 + $0xd8] sm:$0xff]
        %v385 = vld [vmem:[%s1 + $0xe0] sm:$0xff]
        %v386 = vld [vmem:[%s1 + $0xe8] sm:$0xff]
        %v387 = vld [vmem:[%s1 + $0xf0] sm:$0xff]
        %v388 = vld [vmem:[%s1 + $0xf8] sm:$0xff]
        %v389 = vld [vmem:[%s1 + $0x100] sm:$0xff]
        %v390 = vld [vmem:[%s1 + $0x108] sm:$0xff]
        %v391 = vld [vmem:[%s1 + $0x110] sm:$0xff]
        %v392 = vld [vmem:[%s1 + $0x118] sm:$0xff]
        %v393 = vld [vmem:[%s1 + $0x120] sm:$0xff]
        %v394 = vld [vmem:[%s1 + $0x128] sm:$0xff]
        %v395 = vld [vmem:[%s1 + $0x130] sm:$0xff]
        %v396 = vld [vmem:[%s1 + $0x138] sm:$0xff]
        %v397 = vld [vmem:[%s1 + $0x140] sm:$0xff]
        %v398 = vld [vmem:[%s1 + $0x148] sm:$0xff]
        %v399 = vld [vmem:[%s1 + $0x150] sm:$0xff]
        %v400 = vld [vmem:[%s1 + $0x158] sm:$0xff]
        %v401 = vld [vmem:[%s1 + $0x160] sm:$0xff]
        %v402 = vld [vmem:[%s1 + $0x168] sm:$0xff]
        %v403 = vld [vmem:[%s1 + $0x170] sm:$0xff]
        %v404 = vld [vmem:[%s1 + $0x178] sm:$0xff]
        %v405 = vld [vmem:[%s1 + $0x180] sm:$0xff]
        %v406 = vld [vmem:[%s1 + $0x188] sm:$0xff]
        %v407 = vld [vmem:[%s1 + $0x190] sm:$0xff]
        %v408 = vld [vmem:[%s1 + $0x198] sm:$0xff]
        %v409 = vld [vmem:[%s1 + $0x1a0] sm:$0xff]
        %v410 = vld [vmem:[%s1 + $0x1a8] sm:$0xff]
        %v411 = vld [vmem:[%s1 + $0x1b0] sm:$0xff]
        %v412 = vld [vmem:[%s1 + $0x1b8] sm:$0xff]
        %v413 = vld [vmem:[%s1 + $0x1c0] sm:$0xff]
        %v414 = vld [vmem:[%s1 + $0x1c8] sm:$0xff]
        %v415 = vld [vmem:[%s1 + $0x1d0] sm:$0xff]
        %v416 = vld [vmem:[%s1 + $0x1d8] sm:$0xff]
        %v417 = vld [vmem:[%s1 + $0x1e0] sm:$0xff]
        %v418 = vld [vmem:[%s1 + $0x1e8] sm:$0xff]
        %v419 = vld [vmem:[%s1 + $0x1f0] sm:$0xff]
        %v420 = vld [vmem:[%s1 + $0x1f8] sm:$0xff]
        %v421 = vld [vmem:[%s1 + $0x200] sm:$0xff]
        %v422 = vld [vmem:[%s1 + $0x208] sm:$0xff]
        %v423 = vld [vmem:[%s1 + $0x210] sm:$0xff]
        %v424 = vld [vmem:[%s1 + $0x218] sm:$0xff]
        %v425 = vld [vmem:[%s1 + $0x220] sm:$0xff]
        %v426 = vld [vmem:[%s1 + $0x228] sm:$0xff]
        %v427 = vld [vmem:[%s1 + $0x230] sm:$0xff]
        %v428 = vld [vmem:[%s1 + $0x238] sm:$0xff]
        %v429 = vld [vmem:[%s1 + $0x240] sm:$0xff]
        %v430 = vld [vmem:[%s1 + $0x248] sm:$0xff]
        %v431 = vld [vmem:[%s1 + $0x250] sm:$0xff]
        %v432 = vld [vmem:[%s1 + $0x258] sm:$0xff]
        %v433 = vld [vmem:[%s1 + $0x260] sm:$0xff]
        %v434 = vld [vmem:[%s1 + $0x268] sm:$0xff]
        %v435 = vld [vmem:[%s1 + $0x270] sm:$0xff]
        %v436 = vld [vmem:[%s1 + $0x278] sm:$0xff]
        %v437 = vld [vmem:[%s1 + $0x280] sm:$0xff]
        %v438 = vld [vmem:[%s1 + $0x288] sm:$0xff]
        %v439 = vld [vmem:[%s1 + $0x290] sm:$0xff]
        %v440 = vld [vmem:[%s1 + $0x298] sm:$0xff]
        %v441 = vld [vmem:[%s1 + $0x2a0] sm:$0xff]
        %v442 = vld [vmem:[%s1 + $0x2a8] sm:$0xff]
        %v443 = vld [vmem:[%s1 + $0x2b0] sm:$0xff]
        %v444 = vld [vmem:[%s1 + $0x2b8] sm:$0xff]
        %v445 = vld [vmem:[%s1 + $0x2c0] sm:$0xff]
        %v446 = vld [vmem:[%s1 + $0x2c8] sm:$0xff]
        %v447 = vld [vmem:[%s1 + $0x2d0] sm:$0xff]
        %v448 = vld [vmem:[%s1 + $0x2d8] sm:$0xff]
        %v449 = vld [vmem:[%s1 + $0x2e0] sm:$0xff]
        %v450 = vld [vmem:[%s1 + $0x2e8] sm:$0xff]
        %v451 = vld [vmem:[%s1 + $0x2f0] sm:$0xff]
        %v452 = vld [vmem:[%s1 + $0x2f8] sm:$0xff]
        %v453 = vld [vmem:[%s1 + $0x300] sm:$0xff]
        %v454 = vld [vmem:[%s1 + $0x308] sm:$0xff]
        %v455 = vld [vmem:[%s1 + $0x310] sm:$0xff]
        %v456 = vld [vmem:[%s1 + $0x318] sm:$0xff]
        %v457 = vld [vmem:[%s1 + $0x320] sm:$0xff]
        %v458 = vld [vmem:[%s1 + $0x328] sm:$0xff]
        %v459 = vld [vmem:[%s1 + $0x330] sm:$0xff]
        %v460 = vld [vmem:[%s1 + $0x338] sm:$0xff]
        %v461 = vld [vmem:[%s1 + $0x340] sm:$0xff]
        %v462 = vld [vmem:[%s1 + $0x348] sm:$0xff]
        %v463 = vld [vmem:[%s1 + $0x350] sm:$0xff]
        %v464 = vld [vmem:[%s1 + $0x358] sm:$0xff]
        %v465 = vld [vmem:[%s1 + $0x360] sm:$0xff]
        %v466 = vld [vmem:[%s1 + $0x368] sm:$0xff]
        %v467 = vld [vmem:[%s1 + $0x370] sm:$0xff]
        %v468 = vld [vmem:[%s1 + $0x378] sm:$0xff]
        %v469 = vld [vmem:[%s1 + $0x380] sm:$0xff]
        %v470 = vld [vmem:[%s1 + $0x388] sm:$0xff]
        %v471 = vld [vmem:[%s1 + $0x390] sm:$0xff]
        %v472 = vld [vmem:[%s1 + $0x398] sm:$0xff]
        %v473 = vld [vmem:[%s1 + $0x3a0] sm:$0xff]
        %v474 = vld [vmem:[%s1 + $0x3a8] sm:$0xff]
        %v475 = vld [vmem:[%s1 + $0x3b0] sm:$0xff]
        %v476 = vld [vmem:[%s1 + $0x3b8] sm:$0xff]
        %v477 = vld [vmem:[%s1 + $0x3c0] sm:$0xff]
        %v478 = vld [vmem:[%s1 + $0x3c8] sm:$0xff]
        %v479 = vld [vmem:[%s1 + $0x3d0] sm:$0xff]
        %v480 = vld [vmem:[%s1 + $0x3d8] sm:$0xff]
        %v481 = vld [vmem:[%s1 + $0x3e0] sm:$0xff]
        %v482 = vld [vmem:[%s1 + $0x3e8] sm:$0xff]
        %v483 = vld [vmem:[%s1 + $0x3f0] sm:$0xff]
        %v484 = vld [vmem:[%s1 + $0x3f8] sm:$0xff]
        %v485 = vld [vmem:[%s1 + $0x400] sm:$0xff]
        %v486 = vld [vmem:[%s1 + $0x408] sm:$0xff]
        %v487 = vld [vmem:[%s1 + $0x410] sm:$0xff]
        %v488 = vld [vmem:[%s1 + $0x418] sm:$0xff]
        %v489 = vld [vmem:[%s1 + $0x420] sm:$0xff]
        %v490 = vld [vmem:[%s1 + $0x428] sm:$0xff]
        %v491 = vld [vmem:[%s1 + $0x430] sm:$0xff]
        %v492 = vld [vmem:[%s1 + $0x438] sm:$0xff]
        %v493 = vld [vmem:[%s1 + $0x440] sm:$0xff]
        %v494 = vld [vmem:[%s1 + $0x448] sm:$0xff]
        %v495 = vld [vmem:[%s1 + $0x450] sm:$0xff]
        %v496 = vld [vmem:[%s1 + $0x458] sm:$0xff]
        %v497 = vld [vmem:[%s1 + $0x460] sm:$0xff]
        %v498 = vld [vmem:[%s1 + $0x468] sm:$0xff]
        %v499 = vld [vmem:[%s1 + $0x470] sm:$0xff]
        %v500 = vld [vmem:[%s1 + $0x478] sm:$0xff]
        %v501 = vld [vmem:[%s1 + $0x480] sm:$0xf]
        %v504 = vlaneseq
        %v505 = vshrl.u32 %v504, 7
        %v506 = vsub.s32 0, %v505
        %v507 = vrot.slane %v355, %v506
        %v508 = vlaneseq
        %v509 = vshrl.u32 %v508, 7
        %v510 = vsub.s32 1, %v509
        %v511 = vrot.slane %v355, %v510
        %v512 = vlaneseq
        %v513 = vshrl.u32 %v512, 7
        %v514 = vsub.s32 2, %v513
        %v515 = vrot.slane %v355, %v514
        %v516 = vlaneseq
        %v517 = vshrl.u32 %v516, 7
        %v518 = vsub.s32 3, %v517
        %v519 = vrot.slane %v355, %v518
        %v520 = vlaneseq
        %v521 = vshrl.u32 %v520, 7
        %v522 = vsub.s32 4, %v521
        %v523 = vrot.slane %v355, %v522
        %v524 = vlaneseq
        %v525 = vshrl.u32 %v524, 7
        %v526 = vsub.s32 5, %v525
        %v527 = vrot.slane %v355, %v526
        %v528 = vlaneseq
        %v529 = vshrl.u32 %v528, 7
        %v530 = vsub.s32 6, %v529
        %v531 = vrot.slane %v355, %v530
        %v532 = vlaneseq
        %v533 = vshrl.u32 %v532, 7
        %v534 = vsub.s32 7, %v533
        %v535 = vrot.slane %v355, %v534
        %v536 = vlaneseq
        %v537 = vshrl.u32 %v536, 7
        %v538 = vsub.s32 0, %v537
        %v539 = vrot.slane %v356, %v538
        %v540 = vlaneseq
        %v541 = vshrl.u32 %v540, 7
        %v542 = vsub.s32 1, %v541
        %v543 = vrot.slane %v356, %v542
        %vm553 = vcmask 31744
        %v554 = vsel %vm553, %v543, 0
        %vm556 = vcmask 1043456
        %v558 = vsel %vm556, %v501, 0
        %560 = vmatprep.subr.mxu0 0.0
        %561 = vmatpush1.msra.mxu0 %v372
        %562 = vmatprep.subr.mxu0 0.0
        %563 = vmatpush1.msra.mxu0 %v371
        %564 = vmatprep.subr.mxu0 0.0
        %565 = vmatpush1.msra.mxu0 %v370
        %566 = vmatprep.subr.mxu0 0.0
        %567 = vmatpush1.msra.mxu0 %v369
        %568 = vmatprep.subr.mxu0 0.0
        %569 = vmatpush1.msra.mxu0 %v368
        %570 = vmatprep.subr.mxu0 0.0
        %571 = vmatpush1.msra.mxu0 %v367
        %572 = vmatprep.subr.mxu0 0.0
        %573 = vmatpush1.msra.mxu0 %v366
        %574 = vmatprep.subr.mxu0 0.0
        %575 = vmatpush1.msra.mxu0 %v365
        %576 = vmatprep.subr.mxu0 0.0
        %577 = vmatpush1.msra.mxu0 %v364
        %578 = vmatprep.subr.mxu0 0.0
        %579 = vmatpush1.msra.mxu0 %v363
        %580 = vmatprep.subr.mxu0 0.0
        %581 = vmatpush1.msra.mxu0 %v362
        %582 = vmatprep.subr.mxu0 0.0
        %583 = vmatpush1.msra.mxu0 %v361
        %584 = vmatprep.subr.mxu0 0.0
        %585 = vmatpush1.msra.mxu0 %v360
        %586 = vmatprep.subr.mxu0 0.0
        %587 = vmatpush1.msra.mxu0 %v359
        %588 = vmatprep.subr.mxu0 0.0
        %589 = vmatpush1.msra.mxu0 %v358
        %590 = vmatprep.subr.mxu0 0.0
        %591 = vmatpush1.msra.mxu0 %v357
        %592 = vmatprep.subr.mxu0 0.0
        %593 = vmatpush2.msra.mxu0 %v388
        %594 = vmatprep.subr.mxu0 0.0
        %595 = vmatpush2.msra.mxu0 %v387
        %596 = vmatprep.subr.mxu0 0.0
        %597 = vmatpush2.msra.mxu0 %v386
        %598 = vmatprep.subr.mxu0 0.0
        %599 = vmatpush2.msra.mxu0 %v385
        %600 = vmatprep.subr.mxu0 0.0
        %601 = vmatpush2.msra.mxu0 %v384
        %602 = vmatprep.subr.mxu0 0.0
        %603 = vmatpush2.msra.mxu0 %v383
        %604 = vmatprep.subr.mxu0 0.0
        %605 = vmatpush2.msra.mxu0 %v382
        %606 = vmatprep.subr.mxu0 0.0
        %607 = vmatpush2.msra.mxu0 %v381
        %608 = vmatprep.subr.mxu0 0.0
        %609 = vmatpush2.msra.mxu0 %v380
        %610 = vmatprep.subr.mxu0 0.0
        %611 = vmatpush2.msra.mxu0 %v379
        %612 = vmatprep.subr.mxu0 0.0
        %613 = vmatpush2.msra.mxu0 %v378
        %614 = vmatprep.subr.mxu0 0.0
        %615 = vmatpush2.msra.mxu0 %v377
        %616 = vmatprep.subr.mxu0 0.0
        %617 = vmatpush2.msra.mxu0 %v376
        %618 = vmatprep.subr.mxu0 0.0
        %619 = vmatpush2.msra.mxu0 %v375
        %620 = vmatprep.subr.mxu0 0.0
        %621 = vmatpush2.msra.mxu0 %v374
        %622 = vmatprep.subr.mxu0 0.0
        %623 = vmatpush2.msra.mxu0 %v373
        %624 = vmatprep.mubr.f32.mxu0 %v511
        %625 = vmatmul.mubr.f32.gmra.mxu0 %v507
        %v626 = vpop.f32.mrf.mxu0
        %v627 = vadd.f32 0.0, %v626
        %v628 = vpop.f32.mrf.mxu0
        %629 = vdwg.mxu0
        %630 = vmatprep.subr.mxu0 0.0
        %631 = vmatpush1.msra.mxu0 %v404
        %632 = vmatprep.subr.mxu0 0.0
        %633 = vmatpush1.msra.mxu0 %v403
        %634 = vmatprep.subr.mxu0 0.0
        %635 = vmatpush1.msra.mxu0 %v402
        %636 = vmatprep.subr.mxu0 0.0
        %637 = vmatpush1.msra.mxu0 %v401
        %638 = vmatprep.subr.mxu0 0.0
        %639 = vmatpush1.msra.mxu0 %v400
        %640 = vmatprep.subr.mxu0 0.0
        %641 = vmatpush1.msra.mxu0 %v399
        %642 = vmatprep.subr.mxu0 0.0
        %643 = vmatpush1.msra.mxu0 %v398
        %644 = vmatprep.subr.mxu0 0.0
        %645 = vmatpush1.msra.mxu0 %v397
        %646 = vmatprep.subr.mxu0 0.0
        %647 = vmatpush1.msra.mxu0 %v396
        %648 = vmatprep.subr.mxu0 0.0
        %649 = vmatpush1.msra.mxu0 %v395
        %650 = vmatprep.subr.mxu0 0.0
        %651 = vmatpush1.msra.mxu0 %v394
        %652 = vmatprep.subr.mxu0 0.0
        %653 = vmatpush1.msra.mxu0 %v393
        %654 = vmatprep.subr.mxu0 0.0
        %655 = vmatpush1.msra.mxu0 %v392
        %656 = vmatprep.subr.mxu0 0.0
        %657 = vmatpush1.msra.mxu0 %v391
        %658 = vmatprep.subr.mxu0 0.0
        %659 = vmatpush1.msra.mxu0 %v390
        %660 = vmatprep.subr.mxu0 0.0
        %661 = vmatpush1.msra.mxu0 %v389
        %662 = vmatprep.subr.mxu0 0.0
        %663 = vmatpush2.msra.mxu0 %v420
        %664 = vmatprep.subr.mxu0 0.0
        %665 = vmatpush2.msra.mxu0 %v419
        %666 = vmatprep.subr.mxu0 0.0
        %667 = vmatpush2.msra.mxu0 %v418
        %668 = vmatprep.subr.mxu0 0.0
        %669 = vmatpush2.msra.mxu0 %v417
        %670 = vmatprep.subr.mxu0 0.0
        %671 = vmatpush2.msra.mxu0 %v416
        %672 = vmatprep.subr.mxu0 0.0
        %673 = vmatpush2.msra.mxu0 %v415
        %674 = vmatprep.subr.mxu0 0.0
        %675 = vmatpush2.msra.mxu0 %v414
        %676 = vmatprep.subr.mxu0 0.0
        %677 = vmatpush2.msra.mxu0 %v413
        %678 = vmatprep.subr.mxu0 0.0
        %679 = vmatpush2.msra.mxu0 %v412
        %680 = vmatprep.subr.mxu0 0.0
        %681 = vmatpush2.msra.mxu0 %v411
        %682 = vmatprep.subr.mxu0 0.0
        %683 = vmatpush2.msra.mxu0 %v410
        %684 = vmatprep.subr.mxu0 0.0
        %685 = vmatpush2.msra.mxu0 %v409
        %686 = vmatprep.subr.mxu0 0.0
        %687 = vmatpush2.msra.mxu0 %v408
        %688 = vmatprep.subr.mxu0 0.0
        %689 = vmatpush2.msra.mxu0 %v407
        %690 = vmatprep.subr.mxu0 0.0
        %691 = vmatpush2.msra.mxu0 %v406
        %692 = vmatprep.subr.mxu0 0.0
        %693 = vmatpush2.msra.mxu0 %v405
        %694 = vmatprep.mubr.f32.mxu0 %v519
        %695 = vmatmul.mubr.f32.gmra.mxu0 %v515
        %v696 = vpop.f32.mrf.mxu0
        %v697 = vadd.f32 %v627, %v696
        %v698 = vpop.f32.mrf.mxu0
        %699 = vdwg.mxu0
        %700 = vmatprep.subr.mxu0 0.0
        %701 = vmatpush1.msra.mxu0 %v436
        %702 = vmatprep.subr.mxu0 0.0
        %703 = vmatpush1.msra.mxu0 %v435
        %704 = vmatprep.subr.mxu0 0.0
        %705 = vmatpush1.msra.mxu0 %v434
        %706 = vmatprep.subr.mxu0 0.0
        %707 = vmatpush1.msra.mxu0 %v433
        %708 = vmatprep.subr.mxu0 0.0
        %709 = vmatpush1.msra.mxu0 %v432
        %710 = vmatprep.subr.mxu0 0.0
        %711 = vmatpush1.msra.mxu0 %v431
        %712 = vmatprep.subr.mxu0 0.0
        %713 = vmatpush1.msra.mxu0 %v430
        %714 = vmatprep.subr.mxu0 0.0
        %715 = vmatpush1.msra.mxu0 %v429
        %716 = vmatprep.subr.mxu0 0.0
        %717 = vmatpush1.msra.mxu0 %v428
        %718 = vmatprep.subr.mxu0 0.0
        %719 = vmatpush1.msra.mxu0 %v427
        %720 = vmatprep.subr.mxu0 0.0
        %721 = vmatpush1.msra.mxu0 %v426
        %722 = vmatprep.subr.mxu0 0.0
        %723 = vmatpush1.msra.mxu0 %v425
        %724 = vmatprep.subr.mxu0 0.0
        %725 = vmatpush1.msra.mxu0 %v424
        %726 = vmatprep.subr.mxu0 0.0
        %727 = vmatpush1.msra.mxu0 %v423
        %728 = vmatprep.subr.mxu0 0.0
        %729 = vmatpush1.msra.mxu0 %v422
        %730 = vmatprep.subr.mxu0 0.0
        %731 = vmatpush1.msra.mxu0 %v421
        %732 = vmatprep.subr.mxu0 0.0
        %733 = vmatpush2.msra.mxu0 %v452
        %734 = vmatprep.subr.mxu0 0.0
        %735 = vmatpush2.msra.mxu0 %v451
        %736 = vmatprep.subr.mxu0 0.0
        %737 = vmatpush2.msra.mxu0 %v450
        %738 = vmatprep.subr.mxu0 0.0
        %739 = vmatpush2.msra.mxu0 %v449
        %740 = vmatprep.subr.mxu0 0.0
        %741 = vmatpush2.msra.mxu0 %v448
        %742 = vmatprep.subr.mxu0 0.0
        %743 = vmatpush2.msra.mxu0 %v447
        %744 = vmatprep.subr.mxu0 0.0
        %745 = vmatpush2.msra.mxu0 %v446
        %746 = vmatprep.subr.mxu0 0.0
        %747 = vmatpush2.msra.mxu0 %v445
        %748 = vmatprep.subr.mxu0 0.0
        %749 = vmatpush2.msra.mxu0 %v444
        %750 = vmatprep.subr.mxu0 0.0
        %751 = vmatpush2.msra.mxu0 %v443
        %752 = vmatprep.subr.mxu0 0.0
        %753 = vmatpush2.msra.mxu0 %v442
        %754 = vmatprep.subr.mxu0 0.0
        %755 = vmatpush2.msra.mxu0 %v441
        %756 = vmatprep.subr.mxu0 0.0
        %757 = vmatpush2.msra.mxu0 %v440
        %758 = vmatprep.subr.mxu0 0.0
        %759 = vmatpush2.msra.mxu0 %v439
        %760 = vmatprep.subr.mxu0 0.0
        %761 = vmatpush2.msra.mxu0 %v438
        %762 = vmatprep.subr.mxu0 0.0
        %763 = vmatpush2.msra.mxu0 %v437
        %764 = vmatprep.mubr.f32.mxu0 %v527
        %765 = vmatmul.mubr.f32.gmra.mxu0 %v523
        %v766 = vpop.f32.mrf.mxu0
        %v767 = vadd.f32 %v697, %v766
        %v768 = vpop.f32.mrf.mxu0
        %769 = vdwg.mxu0
        %770 = vmatprep.subr.mxu0 0.0
        %771 = vmatpush1.msra.mxu0 %v468
        %772 = vmatprep.subr.mxu0 0.0
        %773 = vmatpush1.msra.mxu0 %v467
        %774 = vmatprep.subr.mxu0 0.0
        %775 = vmatpush1.msra.mxu0 %v466
        %776 = vmatprep.subr.mxu0 0.0
        %777 = vmatpush1.msra.mxu0 %v465
        %778 = vmatprep.subr.mxu0 0.0
        %779 = vmatpush1.msra.mxu0 %v464
        %780 = vmatprep.subr.mxu0 0.0
        %781 = vmatpush1.msra.mxu0 %v463
        %782 = vmatprep.subr.mxu0 0.0
        %783 = vmatpush1.msra.mxu0 %v462
        %784 = vmatprep.subr.mxu0 0.0
        %785 = vmatpush1.msra.mxu0 %v461
        %786 = vmatprep.subr.mxu0 0.0
        %787 = vmatpush1.msra.mxu0 %v460
        %788 = vmatprep.subr.mxu0 0.0
        %789 = vmatpush1.msra.mxu0 %v459
        %790 = vmatprep.subr.mxu0 0.0
        %791 = vmatpush1.msra.mxu0 %v458
        %792 = vmatprep.subr.mxu0 0.0
        %793 = vmatpush1.msra.mxu0 %v457
        %794 = vmatprep.subr.mxu0 0.0
        %795 = vmatpush1.msra.mxu0 %v456
        %796 = vmatprep.subr.mxu0 0.0
        %797 = vmatpush1.msra.mxu0 %v455
        %798 = vmatprep.subr.mxu0 0.0
        %799 = vmatpush1.msra.mxu0 %v454
        %800 = vmatprep.subr.mxu0 0.0
        %801 = vmatpush1.msra.mxu0 %v453
        %802 = vmatprep.subr.mxu0 0.0
        %803 = vmatpush2.msra.mxu0 %v484
        %804 = vmatprep.subr.mxu0 0.0
        %805 = vmatpush2.msra.mxu0 %v483
        %806 = vmatprep.subr.mxu0 0.0
        %807 = vmatpush2.msra.mxu0 %v482
        %808 = vmatprep.subr.mxu0 0.0
        %809 = vmatpush2.msra.mxu0 %v481
        %810 = vmatprep.subr.mxu0 0.0
        %811 = vmatpush2.msra.mxu0 %v480
        %812 = vmatprep.subr.mxu0 0.0
        %813 = vmatpush2.msra.mxu0 %v479
        %814 = vmatprep.subr.mxu0 0.0
        %815 = vmatpush2.msra.mxu0 %v478
        %816 = vmatprep.subr.mxu0 0.0
        %817 = vmatpush2.msra.mxu0 %v477
        %818 = vmatprep.subr.mxu0 0.0
        %819 = vmatpush2.msra.mxu0 %v476
        %820 = vmatprep.subr.mxu0 0.0
        %821 = vmatpush2.msra.mxu0 %v475
        %822 = vmatprep.subr.mxu0 0.0
        %823 = vmatpush2.msra.mxu0 %v474
        %824 = vmatprep.subr.mxu0 0.0
        %825 = vmatpush2.msra.mxu0 %v473
        %826 = vmatprep.subr.mxu0 0.0
        %827 = vmatpush2.msra.mxu0 %v472
        %828 = vmatprep.subr.mxu0 0.0
        %829 = vmatpush2.msra.mxu0 %v471
        %830 = vmatprep.subr.mxu0 0.0
        %831 = vmatpush2.msra.mxu0 %v470
        %832 = vmatprep.subr.mxu0 0.0
        %833 = vmatpush2.msra.mxu0 %v469
        %834 = vmatprep.mubr.f32.mxu0 %v535
        %835 = vmatmul.mubr.f32.gmra.mxu0 %v531
        %v836 = vpop.f32.mrf.mxu0
        %v837 = vadd.f32 %v767, %v836
        %v838 = vpop.f32.mrf.mxu0
        %839 = vdwg.mxu0
        %840 = vmatprep.subr.mxu0 0.0
        %841 = vmatpush1.msra.mxu0 %v500
        %842 = vmatprep.subr.mxu0 0.0
        %843 = vmatpush1.msra.mxu0 %v499
        %844 = vmatprep.subr.mxu0 0.0
        %845 = vmatpush1.msra.mxu0 %v498
        %846 = vmatprep.subr.mxu0 0.0
        %847 = vmatpush1.msra.mxu0 %v497
        %848 = vmatprep.subr.mxu0 0.0
        %849 = vmatpush1.msra.mxu0 %v496
        %850 = vmatprep.subr.mxu0 0.0
        %851 = vmatpush1.msra.mxu0 %v495
        %852 = vmatprep.subr.mxu0 0.0
        %853 = vmatpush1.msra.mxu0 %v494
        %854 = vmatprep.subr.mxu0 0.0
        %855 = vmatpush1.msra.mxu0 %v493
        %856 = vmatprep.subr.mxu0 0.0
        %857 = vmatpush1.msra.mxu0 %v492
        %858 = vmatprep.subr.mxu0 0.0
        %859 = vmatpush1.msra.mxu0 %v491
        %860 = vmatprep.subr.mxu0 0.0
        %861 = vmatpush1.msra.mxu0 %v490
        %862 = vmatprep.subr.mxu0 0.0
        %863 = vmatpush1.msra.mxu0 %v489
        %864 = vmatprep.subr.mxu0 0.0
        %865 = vmatpush1.msra.mxu0 %v488
        %866 = vmatprep.subr.mxu0 0.0
        %867 = vmatpush1.msra.mxu0 %v487
        %868 = vmatprep.subr.mxu0 0.0
        %869 = vmatpush1.msra.mxu0 %v486
        %870 = vmatprep.subr.mxu0 0.0
        %871 = vmatpush1.msra.mxu0 %v485
        %872 = vmatprep.subr.mxu0 0.0
        %873 = vmatpush2.msra.mxu0 0.0
        %874 = vmatprep.subr.mxu0 0.0
        %875 = vmatpush2.msra.mxu0 0.0
        %876 = vmatprep.subr.mxu0 0.0
        %877 = vmatpush2.msra.mxu0 0.0
        %878 = vmatprep.subr.mxu0 0.0
        %879 = vmatpush2.msra.mxu0 0.0
        %880 = vmatprep.subr.mxu0 0.0
        %881 = vmatpush2.msra.mxu0 0.0
        %882 = vmatprep.subr.mxu0 0.0
        %883 = vmatpush2.msra.mxu0 0.0
        %884 = vmatprep.subr.mxu0 0.0
        %885 = vmatpush2.msra.mxu0 0.0
        %886 = vmatprep.subr.mxu0 0.0
        %887 = vmatpush2.msra.mxu0 0.0
        %888 = vmatprep.subr.mxu0 0.0
        %889 = vmatpush2.msra.mxu0 0.0
        %890 = vmatprep.subr.mxu0 0.0
        %891 = vmatpush2.msra.mxu0 0.0
        %892 = vmatprep.subr.mxu0 0.0
        %893 = vmatpush2.msra.mxu0 0.0
        %894 = vmatprep.subr.mxu0 0.0
        %895 = vmatpush2.msra.mxu0 0.0
        %896 = vmatprep.subr.mxu0 0.0
        %897 = vmatpush2.msra.mxu0 0.0
        %898 = vmatprep.subr.mxu0 0.0
        %899 = vmatpush2.msra.mxu0 0.0
        %900 = vmatprep.subr.mxu0 0.0
        %901 = vmatpush2.msra.mxu0 0.0
        %902 = vmatprep.subr.mxu0 0.0
        %903 = vmatpush2.msra.mxu0 %v558
        %904 = vmatprep.mubr.f32.mxu0 %v554
        %905 = vmatmul.mubr.f32.gmra.mxu0 %v539
        %v906 = vpop.f32.mrf.mxu0
        %v907 = vadd.f32 %v837, %v906
        %v908 = vpop.f32.mrf.mxu0
        %909 = vdwg.mxu0
        %v910 = vpack.c.bf16 %v907, %v907
        %v911 = vld [vmem:[%s2] sm:$0xff]
        %v912 = vld [vmem:[%s2 + $0x8] sm:$0xff]
        %v913 = vld [vmem:[%s2 + $0x10] sm:$0xff]
        %v914 = vld [vmem:[%s2 + $0x18] sm:$0xff]
        %v915 = vld [vmem:[%s2 + $0x20] sm:$0xff]
        %v916 = vld [vmem:[%s2 + $0x28] sm:$0xff]
        %v917 = vld [vmem:[%s2 + $0x30] sm:$0xff]
        %v918 = vld [vmem:[%s2 + $0x38] sm:$0xff]
        %v919 = vld [vmem:[%s2 + $0x40] sm:$0xff]
        %v920 = vld [vmem:[%s2 + $0x48] sm:$0xff]
        %v921 = vld [vmem:[%s2 + $0x50] sm:$0xff]
        %v922 = vld [vmem:[%s2 + $0x58] sm:$0xff]
        %v923 = vld [vmem:[%s2 + $0x60] sm:$0xf]
        %v924 = vld [vmem:[%s2 + $0x64] sm:$0xff]
        %v925 = vld [vmem:[%s2 + $0x6c] sm:$0xff]
        %v926 = vld [vmem:[%s2 + $0x74] sm:$0xff]
        %v927 = vld [vmem:[%s2 + $0x7c] sm:$0xff]
        %v928 = vld [vmem:[%s2 + $0x84] sm:$0xff]
        %v929 = vld [vmem:[%s2 + $0x8c] sm:$0xff]
        %v930 = vld [vmem:[%s2 + $0x94] sm:$0xff]
        %v931 = vld [vmem:[%s2 + $0x9c] sm:$0xff]
        %v932 = vld [vmem:[%s2 + $0xa4] sm:$0xff]
        %v933 = vld [vmem:[%s2 + $0xac] sm:$0xff]
        %v934 = vld [vmem:[%s2 + $0xb4] sm:$0xff]
        %v935 = vld [vmem:[%s2 + $0xbc] sm:$0xff]
        %v936 = vld [vmem:[%s2 + $0xc4] sm:$0xf]
        %v937 = vld [vmem:[%s2 + $0xc8] sm:$0xff]
        %v938 = vld [vmem:[%s2 + $0xd0] sm:$0xff]
        %v939 = vld [vmem:[%s2 + $0xd8] sm:$0xff]
        %v940 = vld [vmem:[%s2 + $0xe0] sm:$0xff]
        %v941 = vld [vmem:[%s2 + $0xe8] sm:$0xff]
        %v942 = vld [vmem:[%s2 + $0xf0] sm:$0xff]
        %v943 = vld [vmem:[%s2 + $0xf8] sm:$0xff]
        %v944 = vld [vmem:[%s2 + $0x100] sm:$0xff]
        %v945 = vld [vmem:[%s2 + $0x108] sm:$0xff]
        %v946 = vld [vmem:[%s2 + $0x110] sm:$0xff]
        %v947 = vld [vmem:[%s2 + $0x118] sm:$0xff]
        %v948 = vld [vmem:[%s2 + $0x120] sm:$0xff]
        %v949 = vld [vmem:[%s2 + $0x128] sm:$0xf]
        %v950 = vld [vmem:[%s2 + $0x12c] sm:$0xff]
        %v951 = vld [vmem:[%s2 + $0x134] sm:$0xff]
        %v952 = vld [vmem:[%s2 + $0x13c] sm:$0xff]
        %v953 = vld [vmem:[%s2 + $0x144] sm:$0xff]
        %v954 = vld [vmem:[%s2 + $0x14c] sm:$0xff]
        %v955 = vld [vmem:[%s2 + $0x154] sm:$0xff]
        %v956 = vld [vmem:[%s2 + $0x15c] sm:$0xff]
        %v957 = vld [vmem:[%s2 + $0x164] sm:$0xff]
        %v958 = vld [vmem:[%s2 + $0x16c] sm:$0xff]
        %v959 = vld [vmem:[%s2 + $0x174] sm:$0xff]
        %v960 = vld [vmem:[%s2 + $0x17c] sm:$0xff]
        %v961 = vld [vmem:[%s2 + $0x184] sm:$0xff]
        %v962 = vld [vmem:[%s2 + $0x18c] sm:$0xf]
        %v963 = vld [vmem:[%s2 + $0x190] sm:$0xff]
        %v964 = vld [vmem:[%s2 + $0x198] sm:$0xff]
        %v965 = vld [vmem:[%s2 + $0x1a0] sm:$0xff]
        %v966 = vld [vmem:[%s2 + $0x1a8] sm:$0xff]
        %v967 = vld [vmem:[%s2 + $0x1b0] sm:$0xff]
        %v968 = vld [vmem:[%s2 + $0x1b8] sm:$0xff]
        %v969 = vld [vmem:[%s2 + $0x1c0] sm:$0xff]
        %v970 = vld [vmem:[%s2 + $0x1c8] sm:$0xff]
        %v971 = vld [vmem:[%s2 + $0x1d0] sm:$0xff]
        %v972 = vld [vmem:[%s2 + $0x1d8] sm:$0xff]
        %v973 = vld [vmem:[%s2 + $0x1e0] sm:$0xff]
        %v974 = vld [vmem:[%s2 + $0x1e8] sm:$0xff]
        %v975 = vld [vmem:[%s2 + $0x1f0] sm:$0xf]
        %v976 = vld [vmem:[%s2 + $0x1f4] sm:$0xff]
        %v977 = vld [vmem:[%s2 + $0x1fc] sm:$0xff]
        %v978 = vld [vmem:[%s2 + $0x204] sm:$0xff]
        %v979 = vld [vmem:[%s2 + $0x20c] sm:$0xff]
        %v980 = vld [vmem:[%s2 + $0x214] sm:$0xff]
        %v981 = vld [vmem:[%s2 + $0x21c] sm:$0xff]
        %v982 = vld [vmem:[%s2 + $0x224] sm:$0xff]
        %v983 = vld [vmem:[%s2 + $0x22c] sm:$0xff]
        %v984 = vld [vmem:[%s2 + $0x234] sm:$0xff]
        %v985 = vld [vmem:[%s2 + $0x23c] sm:$0xff]
        %v986 = vld [vmem:[%s2 + $0x244] sm:$0xff]
        %v987 = vld [vmem:[%s2 + $0x24c] sm:$0xff]
        %v988 = vld [vmem:[%s2 + $0x254] sm:$0xf]
        %v989 = vld [vmem:[%s2 + $0x258] sm:$0xff]
        %v990 = vld [vmem:[%s2 + $0x260] sm:$0xff]
        %v991 = vld [vmem:[%s2 + $0x268] sm:$0xff]
        %v992 = vld [vmem:[%s2 + $0x270] sm:$0xff]
        %v993 = vld [vmem:[%s2 + $0x278] sm:$0xff]
        %v994 = vld [vmem:[%s2 + $0x280] sm:$0xff]
        %v995 = vld [vmem:[%s2 + $0x288] sm:$0xff]
        %v996 = vld [vmem:[%s2 + $0x290] sm:$0xff]
        %v997 = vld [vmem:[%s2 + $0x298] sm:$0xff]
        %v998 = vld [vmem:[%s2 + $0x2a0] sm:$0xff]
        %v999 = vld [vmem:[%s2 + $0x2a8] sm:$0xff]
        %v1000 = vld [vmem:[%s2 + $0x2b0] sm:$0xff]
        %v1001 = vld [vmem:[%s2 + $0x2b8] sm:$0xf]
        %v1002 = vld [vmem:[%s2 + $0x2bc] sm:$0xff]
        %v1003 = vld [vmem:[%s2 + $0x2c4] sm:$0xff]
        %v1004 = vld [vmem:[%s2 + $0x2cc] sm:$0xff]
        %v1005 = vld [vmem:[%s2 + $0x2d4] sm:$0xff]
        %v1006 = vld [vmem:[%s2 + $0x2dc] sm:$0xff]
        %v1007 = vld [vmem:[%s2 + $0x2e4] sm:$0xff]
        %v1008 = vld [vmem:[%s2 + $0x2ec] sm:$0xff]
        %v1009 = vld [vmem:[%s2 + $0x2f4] sm:$0xff]
        %v1010 = vld [vmem:[%s2 + $0x2fc] sm:$0xff]
        %v1011 = vld [vmem:[%s2 + $0x304] sm:$0xff]
        %v1012 = vld [vmem:[%s2 + $0x30c] sm:$0xff]
        %v1013 = vld [vmem:[%s2 + $0x314] sm:$0xff]
        %v1014 = vld [vmem:[%s2 + $0x31c] sm:$0xf]
        %v1015 = vld [vmem:[%s2 + $0x320] sm:$0xff]
        %v1016 = vld [vmem:[%s2 + $0x328] sm:$0xff]
        %v1017 = vld [vmem:[%s2 + $0x330] sm:$0xff]
        %v1018 = vld [vmem:[%s2 + $0x338] sm:$0xff]
        %v1019 = vld [vmem:[%s2 + $0x340] sm:$0xff]
        %v1020 = vld [vmem:[%s2 + $0x348] sm:$0xff]
        %v1021 = vld [vmem:[%s2 + $0x350] sm:$0xff]
        %v1022 = vld [vmem:[%s2 + $0x358] sm:$0xff]
        %v1023 = vld [vmem:[%s2 + $0x360] sm:$0xff]
        %v1024 = vld [vmem:[%s2 + $0x368] sm:$0xff]
        %v1025 = vld [vmem:[%s2 + $0x370] sm:$0xff]
        %v1026 = vld [vmem:[%s2 + $0x378] sm:$0xff]
        %v1027 = vld [vmem:[%s2 + $0x380] sm:$0xf]
        %v1028 = vld [vmem:[%s2 + $0x384] sm:$0xff]
        %v1029 = vld [vmem:[%s2 + $0x38c] sm:$0xff]
        %v1030 = vld [vmem:[%s2 + $0x394] sm:$0xff]
        %v1031 = vld [vmem:[%s2 + $0x39c] sm:$0xff]
        %v1032 = vld [vmem:[%s2 + $0x3a4] sm:$0xff]
        %v1033 = vld [vmem:[%s2 + $0x3ac] sm:$0xff]
        %v1034 = vld [vmem:[%s2 + $0x3b4] sm:$0xff]
        %v1035 = vld [vmem:[%s2 + $0x3bc] sm:$0xff]
        %v1036 = vld [vmem:[%s2 + $0x3c4] sm:$0xff]
        %v1037 = vld [vmem:[%s2 + $0x3cc] sm:$0xff]
        %v1038 = vld [vmem:[%s2 + $0x3d4] sm:$0xff]
        %v1039 = vld [vmem:[%s2 + $0x3dc] sm:$0xff]
        %v1040 = vld [vmem:[%s2 + $0x3e4] sm:$0xf]
        %v1041 = vld [vmem:[%s2 + $0x3e8] sm:$0xff]
        %v1042 = vld [vmem:[%s2 + $0x3f0] sm:$0xff]
        %v1043 = vld [vmem:[%s2 + $0x3f8] sm:$0xff]
        %v1044 = vld [vmem:[%s2 + $0x400] sm:$0xff]
        %v1045 = vld [vmem:[%s2 + $0x408] sm:$0xff]
        %v1046 = vld [vmem:[%s2 + $0x410] sm:$0xff]
        %v1047 = vld [vmem:[%s2 + $0x418] sm:$0xff]
        %v1048 = vld [vmem:[%s2 + $0x420] sm:$0xff]
        %v1049 = vld [vmem:[%s2 + $0x428] sm:$0xff]
        %v1050 = vld [vmem:[%s2 + $0x430] sm:$0xff]
        %v1051 = vld [vmem:[%s2 + $0x438] sm:$0xff]
        %v1052 = vld [vmem:[%s2 + $0x440] sm:$0xff]
        %v1053 = vld [vmem:[%s2 + $0x448] sm:$0xf]
        %v1054 = vld [vmem:[%s2 + $0x44c] sm:$0xff]
        %v1055 = vld [vmem:[%s2 + $0x454] sm:$0xff]
        %v1056 = vld [vmem:[%s2 + $0x45c] sm:$0xff]
        %v1057 = vld [vmem:[%s2 + $0x464] sm:$0xff]
        %v1058 = vld [vmem:[%s2 + $0x46c] sm:$0xff]
        %v1059 = vld [vmem:[%s2 + $0x474] sm:$0xff]
        %v1060 = vld [vmem:[%s2 + $0x47c] sm:$0xff]
        %v1061 = vld [vmem:[%s2 + $0x484] sm:$0xff]
        %v1062 = vld [vmem:[%s2 + $0x48c] sm:$0xff]
        %v1063 = vld [vmem:[%s2 + $0x494] sm:$0xff]
        %v1064 = vld [vmem:[%s2 + $0x49c] sm:$0xff]
        %v1065 = vld [vmem:[%s2 + $0x4a4] sm:$0xff]
        %v1066 = vld [vmem:[%s2 + $0x4ac] sm:$0xf]
        %v1067 = vld [vmem:[%s2 + $0x4b0] sm:$0x33]
        %v1068 = vld [vmem:[%s2 + $0x4b8] sm:$0x33]
        %v1069 = vld [vmem:[%s2 + $0x4c0] sm:$0x33]
        %v1070 = vld [vmem:[%s2 + $0x4c8] sm:$0x33]
        %v1071 = vld [vmem:[%s2 + $0x4d0] sm:$0x33]
        %v1072 = vld [vmem:[%s2 + $0x4d8] sm:$0x33]
        %v1073 = vld [vmem:[%s2 + $0x4e0] sm:$0x33]
        %v1074 = vld [vmem:[%s2 + $0x4e8] sm:$0x33]
        %v1075 = vld [vmem:[%s2 + $0x4f0] sm:$0x33]
        %v1076 = vld [vmem:[%s2 + $0x4f8] sm:$0x33]
        %v1077 = vld [vmem:[%s2 + $0x500] sm:$0x33]
        %v1078 = vld [vmem:[%s2 + $0x508] sm:$0x33]
        %v1079 = vld [vmem:[%s2 + $0x510] sm:$0x3]
        %v1249 = vunpack.c.l.b16 %v911
        %v1250 = vunpack.c.h.b16 %v911
        %v1251 = vunpack.c.l.b16 %v912
        %v1252 = vunpack.c.h.b16 %v912
        %v1253 = vunpack.c.l.b16 %v913
        %v1254 = vunpack.c.h.b16 %v913
        %v1255 = vunpack.c.l.b16 %v914
        %v1256 = vunpack.c.h.b16 %v914
        %v1257 = vunpack.c.l.b16 %v915
        %v1258 = vunpack.c.h.b16 %v915
        %v1259 = vunpack.c.l.b16 %v916
        %v1260 = vunpack.c.h.b16 %v916
        %v1261 = vunpack.c.l.b16 %v917
        %v1262 = vunpack.c.h.b16 %v917
        %v1263 = vunpack.c.l.b16 %v918
        %v1264 = vunpack.c.h.b16 %v918
        %v1265 = vunpack.c.l.b16 %v919
        %v1266 = vunpack.c.h.b16 %v919
        %v1267 = vunpack.c.l.b16 %v920
        %v1268 = vunpack.c.h.b16 %v920
        %v1269 = vunpack.c.l.b16 %v921
        %v1270 = vunpack.c.h.b16 %v921
        %v1271 = vunpack.c.l.b16 %v922
        %v1272 = vunpack.c.h.b16 %v922
        %v1273 = vunpack.c.l.b16 %v923
        %v1274 = vunpack.c.l.b16 %v924
        %v1275 = vunpack.c.h.b16 %v924
        %v1276 = vunpack.c.l.b16 %v925
        %v1277 = vunpack.c.h.b16 %v925
        %v1278 = vunpack.c.l.b16 %v926
        %v1279 = vunpack.c.h.b16 %v926
        %v1280 = vunpack.c.l.b16 %v927
        %v1281 = vunpack.c.h.b16 %v927
        %v1282 = vunpack.c.l.b16 %v928
        %v1283 = vunpack.c.h.b16 %v928
        %v1284 = vunpack.c.l.b16 %v929
        %v1285 = vunpack.c.h.b16 %v929
        %v1286 = vunpack.c.l.b16 %v930
        %v1287 = vunpack.c.h.b16 %v930
        %v1288 = vunpack.c.l.b16 %v931
        %v1289 = vunpack.c.h.b16 %v931
        %v1290 = vunpack.c.l.b16 %v932
        %v1291 = vunpack.c.h.b16 %v932
        %v1292 = vunpack.c.l.b16 %v933
        %v1293 = vunpack.c.h.b16 %v933
        %v1294 = vunpack.c.l.b16 %v934
        %v1295 = vunpack.c.h.b16 %v934
        %v1296 = vunpack.c.l.b16 %v935
        %v1297 = vunpack.c.h.b16 %v935
        %v1298 = vunpack.c.l.b16 %v936
        %v1299 = vunpack.c.l.b16 %v937
        %v1300 = vunpack.c.h.b16 %v937
        %v1301 = vunpack.c.l.b16 %v938
        %v1302 = vunpack.c.h.b16 %v938
        %v1303 = vunpack.c.l.b16 %v939
        %v1304 = vunpack.c.h.b16 %v939
        %v1305 = vunpack.c.l.b16 %v940
        %v1306 = vunpack.c.h.b16 %v940
        %v1307 = vunpack.c.l.b16 %v941
        %v1308 = vunpack.c.h.b16 %v941
        %v1309 = vunpack.c.l.b16 %v942
        %v1310 = vunpack.c.h.b16 %v942
        %v1311 = vunpack.c.l.b16 %v943
        %v1312 = vunpack.c.h.b16 %v943
        %v1313 = vunpack.c.l.b16 %v944
        %v1314 = vunpack.c.h.b16 %v944
        %v1315 = vunpack.c.l.b16 %v945
        %v1316 = vunpack.c.h.b16 %v945
        %v1317 = vunpack.c.l.b16 %v946
        %v1318 = vunpack.c.h.b16 %v946
        %v1319 = vunpack.c.l.b16 %v947
        %v1320 = vunpack.c.h.b16 %v947
        %v1321 = vunpack.c.l.b16 %v948
        %v1322 = vunpack.c.h.b16 %v948
        %v1323 = vunpack.c.l.b16 %v949
        %v1324 = vunpack.c.l.b16 %v950
        %v1325 = vunpack.c.h.b16 %v950
        %v1326 = vunpack.c.l.b16 %v951
        %v1327 = vunpack.c.h.b16 %v951
        %v1328 = vunpack.c.l.b16 %v952
        %v1329 = vunpack.c.h.b16 %v952
        %v1330 = vunpack.c.l.b16 %v953
        %v1331 = vunpack.c.h.b16 %v953
        %v1332 = vunpack.c.l.b16 %v954
        %v1333 = vunpack.c.h.b16 %v954
        %v1334 = vunpack.c.l.b16 %v955
        %v1335 = vunpack.c.h.b16 %v955
        %v1336 = vunpack.c.l.b16 %v956
        %v1337 = vunpack.c.h.b16 %v956
        %v1338 = vunpack.c.l.b16 %v957
        %v1339 = vunpack.c.h.b16 %v957
        %v1340 = vunpack.c.l.b16 %v958
        %v1341 = vunpack.c.h.b16 %v958
        %v1342 = vunpack.c.l.b16 %v959
        %v1343 = vunpack.c.h.b16 %v959
        %v1344 = vunpack.c.l.b16 %v960
        %v1345 = vunpack.c.h.b16 %v960
        %v1346 = vunpack.c.l.b16 %v961
        %v1347 = vunpack.c.h.b16 %v961
        %v1348 = vunpack.c.l.b16 %v962
        %v1349 = vunpack.c.l.b16 %v963
        %v1350 = vunpack.c.h.b16 %v963
        %v1351 = vunpack.c.l.b16 %v964
        %v1352 = vunpack.c.h.b16 %v964
        %v1353 = vunpack.c.l.b16 %v965
        %v1354 = vunpack.c.h.b16 %v965
        %v1355 = vunpack.c.l.b16 %v966
        %v1356 = vunpack.c.h.b16 %v966
        %v1357 = vunpack.c.l.b16 %v967
        %v1358 = vunpack.c.h.b16 %v967
        %v1359 = vunpack.c.l.b16 %v968
        %v1360 = vunpack.c.h.b16 %v968
        %v1361 = vunpack.c.l.b16 %v969
        %v1362 = vunpack.c.h.b16 %v969
        %v1363 = vunpack.c.l.b16 %v970
        %v1364 = vunpack.c.h.b16 %v970
        %v1365 = vunpack.c.l.b16 %v971
        %v1366 = vunpack.c.h.b16 %v971
        %v1367 = vunpack.c.l.b16 %v972
        %v1368 = vunpack.c.h.b16 %v972
        %v1369 = vunpack.c.l.b16 %v973
        %v1370 = vunpack.c.h.b16 %v973
        %v1371 = vunpack.c.l.b16 %v974
        %v1372 = vunpack.c.h.b16 %v974
        %v1373 = vunpack.c.l.b16 %v975
        %v1374 = vunpack.c.l.b16 %v976
        %v1375 = vunpack.c.h.b16 %v976
        %v1376 = vunpack.c.l.b16 %v977
        %v1377 = vunpack.c.h.b16 %v977
        %v1378 = vunpack.c.l.b16 %v978
        %v1379 = vunpack.c.h.b16 %v978
        %v1380 = vunpack.c.l.b16 %v979
        %v1381 = vunpack.c.h.b16 %v979
        %v1382 = vunpack.c.l.b16 %v980
        %v1383 = vunpack.c.h.b16 %v980
        %v1384 = vunpack.c.l.b16 %v981
        %v1385 = vunpack.c.h.b16 %v981
        %v1386 = vunpack.c.l.b16 %v982
        %v1387 = vunpack.c.h.b16 %v982
        %v1388 = vunpack.c.l.b16 %v983
        %v1389 = vunpack.c.h.b16 %v983
        %v1390 = vunpack.c.l.b16 %v984
        %v1391 = vunpack.c.h.b16 %v984
        %v1392 = vunpack.c.l.b16 %v985
        %v1393 = vunpack.c.h.b16 %v985
        %v1394 = vunpack.c.l.b16 %v986
        %v1395 = vunpack.c.h.b16 %v986
        %v1396 = vunpack.c.l.b16 %v987
        %v1397 = vunpack.c.h.b16 %v987
        %v1398 = vunpack.c.l.b16 %v988
        %v1399 = vunpack.c.l.b16 %v989
        %v1400 = vunpack.c.h.b16 %v989
        %v1401 = vunpack.c.l.b16 %v990
        %v1402 = vunpack.c.h.b16 %v990
        %v1403 = vunpack.c.l.b16 %v991
        %v1404 = vunpack.c.h.b16 %v991
        %v1405 = vunpack.c.l.b16 %v992
        %v1406 = vunpack.c.h.b16 %v992
        %v1407 = vunpack.c.l.b16 %v993
        %v1408 = vunpack.c.h.b16 %v993
        %v1409 = vunpack.c.l.b16 %v994
        %v1410 = vunpack.c.h.b16 %v994
        %v1411 = vunpack.c.l.b16 %v995
        %v1412 = vunpack.c.h.b16 %v995
        %v1413 = vunpack.c.l.b16 %v996
        %v1414 = vunpack.c.h.b16 %v996
        %v1415 = vunpack.c.l.b16 %v997
        %v1416 = vunpack.c.h.b16 %v997
        %v1417 = vunpack.c.l.b16 %v998
        %v1418 = vunpack.c.h.b16 %v998
        %v1419 = vunpack.c.l.b16 %v999
        %v1420 = vunpack.c.h.b16 %v999
        %v1421 = vunpack.c.l.b16 %v1000
        %v1422 = vunpack.c.h.b16 %v1000
        %v1423 = vunpack.c.l.b16 %v1001
        %v1424 = vunpack.c.l.b16 %v1002
        %v1425 = vunpack.c.h.b16 %v1002
        %v1426 = vunpack.c.l.b16 %v1003
        %v1427 = vunpack.c.h.b16 %v1003
        %v1428 = vunpack.c.l.b16 %v1004
        %v1429 = vunpack.c.h.b16 %v1004
        %v1430 = vunpack.c.l.b16 %v1005
        %v1431 = vunpack.c.h.b16 %v1005
        %v1432 = vunpack.c.l.b16 %v1006
        %v1433 = vunpack.c.h.b16 %v1006
        %v1434 = vunpack.c.l.b16 %v1007
        %v1435 = vunpack.c.h.b16 %v1007
        %v1436 = vunpack.c.l.b16 %v1008
        %v1437 = vunpack.c.h.b16 %v1008
        %v1438 = vunpack.c.l.b16 %v1009
        %v1439 = vunpack.c.h.b16 %v1009
        %v1440 = vunpack.c.l.b16 %v1010
        %v1441 = vunpack.c.h.b16 %v1010
        %v1442 = vunpack.c.l.b16 %v1011
        %v1443 = vunpack.c.h.b16 %v1011
        %v1444 = vunpack.c.l.b16 %v1012
        %v1445 = vunpack.c.h.b16 %v1012
        %v1446 = vunpack.c.l.b16 %v1013
        %v1447 = vunpack.c.h.b16 %v1013
        %v1448 = vunpack.c.l.b16 %v1014
        %v1449 = vunpack.c.l.b16 %v1015
        %v1450 = vunpack.c.h.b16 %v1015
        %v1451 = vunpack.c.l.b16 %v1016
        %v1452 = vunpack.c.h.b16 %v1016
        %v1453 = vunpack.c.l.b16 %v1017
        %v1454 = vunpack.c.h.b16 %v1017
        %v1455 = vunpack.c.l.b16 %v1018
        %v1456 = vunpack.c.h.b16 %v1018
        %v1457 = vunpack.c.l.b16 %v1019
        %v1458 = vunpack.c.h.b16 %v1019
        %v1459 = vunpack.c.l.b16 %v1020
        %v1460 = vunpack.c.h.b16 %v1020
        %v1461 = vunpack.c.l.b16 %v1021
        %v1462 = vunpack.c.h.b16 %v1021
        %v1463 = vunpack.c.l.b16 %v1022
        %v1464 = vunpack.c.h.b16 %v1022
        %v1465 = vunpack.c.l.b16 %v1023
        %v1466 = vunpack.c.h.b16 %v1023
        %v1467 = vunpack.c.l.b16 %v1024
        %v1468 = vunpack.c.h.b16 %v1024
        %v1469 = vunpack.c.l.b16 %v1025
        %v1470 = vunpack.c.h.b16 %v1025
        %v1471 = vunpack.c.l.b16 %v1026
        %v1472 = vunpack.c.h.b16 %v1026
        %v1473 = vunpack.c.l.b16 %v1027
        %v1474 = vunpack.c.l.b16 %v1028
        %v1475 = vunpack.c.h.b16 %v1028
        %v1476 = vunpack.c.l.b16 %v1029
        %v1477 = vunpack.c.h.b16 %v1029
        %v1478 = vunpack.c.l.b16 %v1030
        %v1479 = vunpack.c.h.b16 %v1030
        %v1480 = vunpack.c.l.b16 %v1031
        %v1481 = vunpack.c.h.b16 %v1031
        %v1482 = vunpack.c.l.b16 %v1032
        %v1483 = vunpack.c.h.b16 %v1032
        %v1484 = vunpack.c.l.b16 %v1033
        %v1485 = vunpack.c.h.b16 %v1033
        %v1486 = vunpack.c.l.b16 %v1034
        %v1487 = vunpack.c.h.b16 %v1034
        %v1488 = vunpack.c.l.b16 %v1035
        %v1489 = vunpack.c.h.b16 %v1035
        %v1490 = vunpack.c.l.b16 %v1036
        %v1491 = vunpack.c.h.b16 %v1036
        %v1492 = vunpack.c.l.b16 %v1037
        %v1493 = vunpack.c.h.b16 %v1037
        %v1494 = vunpack.c.l.b16 %v1038
        %v1495 = vunpack.c.h.b16 %v1038
        %v1496 = vunpack.c.l.b16 %v1039
        %v1497 = vunpack.c.h.b16 %v1039
        %v1498 = vunpack.c.l.b16 %v1040
        %v1499 = vunpack.c.l.b16 %v1041
        %v1500 = vunpack.c.h.b16 %v1041
        %v1501 = vunpack.c.l.b16 %v1042
        %v1502 = vunpack.c.h.b16 %v1042
        %v1503 = vunpack.c.l.b16 %v1043
        %v1504 = vunpack.c.h.b16 %v1043
        %v1505 = vunpack.c.l.b16 %v1044
        %v1506 = vunpack.c.h.b16 %v1044
        %v1507 = vunpack.c.l.b16 %v1045
        %v1508 = vunpack.c.h.b16 %v1045
        %v1509 = vunpack.c.l.b16 %v1046
        %v1510 = vunpack.c.h.b16 %v1046
        %v1511 = vunpack.c.l.b16 %v1047
        %v1512 = vunpack.c.h.b16 %v1047
        %v1513 = vunpack.c.l.b16 %v1048
        %v1514 = vunpack.c.h.b16 %v1048
        %v1515 = vunpack.c.l.b16 %v1049
        %v1516 = vunpack.c.h.b16 %v1049
        %v1517 = vunpack.c.l.b16 %v1050
        %v1518 = vunpack.c.h.b16 %v1050
        %v1519 = vunpack.c.l.b16 %v1051
        %v1520 = vunpack.c.h.b16 %v1051
        %v1521 = vunpack.c.l.b16 %v1052
        %v1522 = vunpack.c.h.b16 %v1052
        %v1523 = vunpack.c.l.b16 %v1053
        %v1524 = vunpack.c.l.b16 %v1054
        %v1525 = vunpack.c.h.b16 %v1054
        %v1526 = vunpack.c.l.b16 %v1055
        %v1527 = vunpack.c.h.b16 %v1055
        %v1528 = vunpack.c.l.b16 %v1056
        %v1529 = vunpack.c.h.b16 %v1056
        %v1530 = vunpack.c.l.b16 %v1057
        %v1531 = vunpack.c.h.b16 %v1057
        %v1532 = vunpack.c.l.b16 %v1058
        %v1533 = vunpack.c.h.b16 %v1058
        %v1534 = vunpack.c.l.b16 %v1059
        %v1535 = vunpack.c.h.b16 %v1059
        %v1536 = vunpack.c.l.b16 %v1060
        %v1537 = vunpack.c.h.b16 %v1060
        %v1538 = vunpack.c.l.b16 %v1061
        %v1539 = vunpack.c.h.b16 %v1061
        %v1540 = vunpack.c.l.b16 %v1062
        %v1541 = vunpack.c.h.b16 %v1062
        %v1542 = vunpack.c.l.b16 %v1063
        %v1543 = vunpack.c.h.b16 %v1063
        %v1544 = vunpack.c.l.b16 %v1064
        %v1545 = vunpack.c.h.b16 %v1064
        %v1546 = vunpack.c.l.b16 %v1065
        %v1547 = vunpack.c.h.b16 %v1065
        %v1548 = vunpack.c.l.b16 %v1066
        %v1549 = vunpack.c.l.b16 %v1067
        %v1550 = vunpack.c.h.b16 %v1067
        %v1551 = vunpack.c.l.b16 %v1068
        %v1552 = vunpack.c.h.b16 %v1068
        %v1553 = vunpack.c.l.b16 %v1069
        %v1554 = vunpack.c.h.b16 %v1069
        %v1555 = vunpack.c.l.b16 %v1070
        %v1556 = vunpack.c.h.b16 %v1070
        %v1557 = vunpack.c.l.b16 %v1071
        %v1558 = vunpack.c.h.b16 %v1071
        %v1559 = vunpack.c.l.b16 %v1072
        %v1560 = vunpack.c.h.b16 %v1072
        %v1561 = vunpack.c.l.b16 %v1073
        %v1562 = vunpack.c.h.b16 %v1073
        %v1563 = vunpack.c.l.b16 %v1074
        %v1564 = vunpack.c.h.b16 %v1074
        %v1565 = vunpack.c.l.b16 %v1075
        %v1566 = vunpack.c.h.b16 %v1075
        %v1567 = vunpack.c.l.b16 %v1076
        %v1568 = vunpack.c.h.b16 %v1076
        %v1569 = vunpack.c.l.b16 %v1077
        %v1570 = vunpack.c.h.b16 %v1077
        %v1571 = vunpack.c.l.b16 %v1078
        %v1572 = vunpack.c.h.b16 %v1078
        %v1573 = vunpack.c.l.b16 %v1079
        %v1574 = vpack.c.b16 %v1274, %v1249
        %v1575 = vpack.c.b16 %v1275, %v1250
        %v1576 = vpack.c.b16 %v1276, %v1251
        %v1577 = vpack.c.b16 %v1277, %v1252
        %v1578 = vpack.c.b16 %v1278, %v1253
        %v1579 = vpack.c.b16 %v1279, %v1254
        %v1580 = vpack.c.b16 %v1280, %v1255
        %v1581 = vpack.c.b16 %v1281, %v1256
        %v1582 = vpack.c.b16 %v1282, %v1257
        %v1583 = vpack.c.b16 %v1283, %v1258
        %v1584 = vpack.c.b16 %v1284, %v1259
        %v1585 = vpack.c.b16 %v1285, %v1260
        %v1586 = vpack.c.b16 %v1286, %v1261
        %v1587 = vpack.c.b16 %v1287, %v1262
        %v1588 = vpack.c.b16 %v1288, %v1263
        %v1589 = vpack.c.b16 %v1289, %v1264
        %v1590 = vpack.c.b16 %v1290, %v1265
        %v1591 = vpack.c.b16 %v1291, %v1266
        %v1592 = vpack.c.b16 %v1292, %v1267
        %v1593 = vpack.c.b16 %v1293, %v1268
        %v1594 = vpack.c.b16 %v1294, %v1269
        %v1595 = vpack.c.b16 %v1295, %v1270
        %v1596 = vpack.c.b16 %v1296, %v1271
        %v1597 = vpack.c.b16 %v1297, %v1272
        %v1598 = vpack.c.b16 %v1298, %v1273
        %v1599 = vpack.c.b16 %v1324, %v1299
        %v1600 = vpack.c.b16 %v1325, %v1300
        %v1601 = vpack.c.b16 %v1326, %v1301
        %v1602 = vpack.c.b16 %v1327, %v1302
        %v1603 = vpack.c.b16 %v1328, %v1303
        %v1604 = vpack.c.b16 %v1329, %v1304
        %v1605 = vpack.c.b16 %v1330, %v1305
        %v1606 = vpack.c.b16 %v1331, %v1306
        %v1607 = vpack.c.b16 %v1332, %v1307
        %v1608 = vpack.c.b16 %v1333, %v1308
        %v1609 = vpack.c.b16 %v1334, %v1309
        %v1610 = vpack.c.b16 %v1335, %v1310
        %v1611 = vpack.c.b16 %v1336, %v1311
        %v1612 = vpack.c.b16 %v1337, %v1312
        %v1613 = vpack.c.b16 %v1338, %v1313
        %v1614 = vpack.c.b16 %v1339, %v1314
        %v1615 = vpack.c.b16 %v1340, %v1315
        %v1616 = vpack.c.b16 %v1341, %v1316
        %v1617 = vpack.c.b16 %v1342, %v1317
        %v1618 = vpack.c.b16 %v1343, %v1318
        %v1619 = vpack.c.b16 %v1344, %v1319
        %v1620 = vpack.c.b16 %v1345, %v1320
        %v1621 = vpack.c.b16 %v1346, %v1321
        %v1622 = vpack.c.b16 %v1347, %v1322
        %v1623 = vpack.c.b16 %v1348, %v1323
        %v1624 = vpack.c.b16 %v1374, %v1349
        %v1625 = vpack.c.b16 %v1375, %v1350
        %v1626 = vpack.c.b16 %v1376, %v1351
        %v1627 = vpack.c.b16 %v1377, %v1352
        %v1628 = vpack.c.b16 %v1378, %v1353
        %v1629 = vpack.c.b16 %v1379, %v1354
        %v1630 = vpack.c.b16 %v1380, %v1355
        %v1631 = vpack.c.b16 %v1381, %v1356
        %v1632 = vpack.c.b16 %v1382, %v1357
        %v1633 = vpack.c.b16 %v1383, %v1358
        %v1634 = vpack.c.b16 %v1384, %v1359
        %v1635 = vpack.c.b16 %v1385, %v1360
        %v1636 = vpack.c.b16 %v1386, %v1361
        %v1637 = vpack.c.b16 %v1387, %v1362
        %v1638 = vpack.c.b16 %v1388, %v1363
        %v1639 = vpack.c.b16 %v1389, %v1364
        %v1640 = vpack.c.b16 %v1390, %v1365
        %v1641 = vpack.c.b16 %v1391, %v1366
        %v1642 = vpack.c.b16 %v1392, %v1367
        %v1643 = vpack.c.b16 %v1393, %v1368
        %v1644 = vpack.c.b16 %v1394, %v1369
        %v1645 = vpack.c.b16 %v1395, %v1370
        %v1646 = vpack.c.b16 %v1396, %v1371
        %v1647 = vpack.c.b16 %v1397, %v1372
        %v1648 = vpack.c.b16 %v1398, %v1373
        %v1649 = vpack.c.b16 %v1424, %v1399
        %v1650 = vpack.c.b16 %v1425, %v1400
        %v1651 = vpack.c.b16 %v1426, %v1401
        %v1652 = vpack.c.b16 %v1427, %v1402
        %v1653 = vpack.c.b16 %v1428, %v1403
        %v1654 = vpack.c.b16 %v1429, %v1404
        %v1655 = vpack.c.b16 %v1430, %v1405
        %v1656 = vpack.c.b16 %v1431, %v1406
        %v1657 = vpack.c.b16 %v1432, %v1407
        %v1658 = vpack.c.b16 %v1433, %v1408
        %v1659 = vpack.c.b16 %v1434, %v1409
        %v1660 = vpack.c.b16 %v1435, %v1410
        %v1661 = vpack.c.b16 %v1436, %v1411
        %v1662 = vpack.c.b16 %v1437, %v1412
        %v1663 = vpack.c.b16 %v1438, %v1413
        %v1664 = vpack.c.b16 %v1439, %v1414
        %v1665 = vpack.c.b16 %v1440, %v1415
        %v1666 = vpack.c.b16 %v1441, %v1416
        %v1667 = vpack.c.b16 %v1442, %v1417
        %v1668 = vpack.c.b16 %v1443, %v1418
        %v1669 = vpack.c.b16 %v1444, %v1419
        %v1670 = vpack.c.b16 %v1445, %v1420
        %v1671 = vpack.c.b16 %v1446, %v1421
        %v1672 = vpack.c.b16 %v1447, %v1422
        %v1673 = vpack.c.b16 %v1448, %v1423
        %v1674 = vpack.c.b16 %v1474, %v1449
        %v1675 = vpack.c.b16 %v1475, %v1450
        %v1676 = vpack.c.b16 %v1476, %v1451
        %v1677 = vpack.c.b16 %v1477, %v1452
        %v1678 = vpack.c.b16 %v1478, %v1453
        %v1679 = vpack.c.b16 %v1479, %v1454
        %v1680 = vpack.c.b16 %v1480, %v1455
        %v1681 = vpack.c.b16 %v1481, %v1456
        %v1682 = vpack.c.b16 %v1482, %v1457
        %v1683 = vpack.c.b16 %v1483, %v1458
        %v1684 = vpack.c.b16 %v1484, %v1459
        %v1685 = vpack.c.b16 %v1485, %v1460
        %v1686 = vpack.c.b16 %v1486, %v1461
        %v1687 = vpack.c.b16 %v1487, %v1462
        %v1688 = vpack.c.b16 %v1488, %v1463
        %v1689 = vpack.c.b16 %v1489, %v1464
        %v1690 = vpack.c.b16 %v1490, %v1465
        %v1691 = vpack.c.b16 %v1491, %v1466
        %v1692 = vpack.c.b16 %v1492, %v1467
        %v1693 = vpack.c.b16 %v1493, %v1468
        %v1694 = vpack.c.b16 %v1494, %v1469
        %v1695 = vpack.c.b16 %v1495, %v1470
        %v1696 = vpack.c.b16 %v1496, %v1471
        %v1697 = vpack.c.b16 %v1497, %v1472
        %v1698 = vpack.c.b16 %v1498, %v1473
        %v1699 = vpack.c.b16 %v1524, %v1499
        %v1700 = vpack.c.b16 %v1525, %v1500
        %v1701 = vpack.c.b16 %v1526, %v1501
        %v1702 = vpack.c.b16 %v1527, %v1502
        %v1703 = vpack.c.b16 %v1528, %v1503
        %v1704 = vpack.c.b16 %v1529, %v1504
        %v1705 = vpack.c.b16 %v1530, %v1505
        %v1706 = vpack.c.b16 %v1531, %v1506
        %v1707 = vpack.c.b16 %v1532, %v1507
        %v1708 = vpack.c.b16 %v1533, %v1508
        %v1709 = vpack.c.b16 %v1534, %v1509
        %v1710 = vpack.c.b16 %v1535, %v1510
        %v1711 = vpack.c.b16 %v1536, %v1511
        %v1712 = vpack.c.b16 %v1537, %v1512
        %v1713 = vpack.c.b16 %v1538, %v1513
        %v1714 = vpack.c.b16 %v1539, %v1514
        %v1715 = vpack.c.b16 %v1540, %v1515
        %v1716 = vpack.c.b16 %v1541, %v1516
        %v1717 = vpack.c.b16 %v1542, %v1517
        %v1718 = vpack.c.b16 %v1543, %v1518
        %v1719 = vpack.c.b16 %v1544, %v1519
        %v1720 = vpack.c.b16 %v1545, %v1520
        %v1721 = vpack.c.b16 %v1546, %v1521
        %v1722 = vpack.c.b16 %v1547, %v1522
        %v1723 = vpack.c.b16 %v1548, %v1523
        %v1724 = vpack.c.b16 %v1549, %v1549
        %v1725 = vpack.c.b16 %v1550, %v1550
        %v1726 = vpack.c.b16 %v1551, %v1551
        %v1727 = vpack.c.b16 %v1552, %v1552
        %v1728 = vpack.c.b16 %v1553, %v1553
        %v1729 = vpack.c.b16 %v1554, %v1554
        %v1730 = vpack.c.b16 %v1555, %v1555
        %v1731 = vpack.c.b16 %v1556, %v1556
        %v1732 = vpack.c.b16 %v1557, %v1557
        %v1733 = vpack.c.b16 %v1558, %v1558
        %v1734 = vpack.c.b16 %v1559, %v1559
        %v1735 = vpack.c.b16 %v1560, %v1560
        %v1736 = vpack.c.b16 %v1561, %v1561
        %v1737 = vpack.c.b16 %v1562, %v1562
        %v1738 = vpack.c.b16 %v1563, %v1563
        %v1739 = vpack.c.b16 %v1564, %v1564
        %v1740 = vpack.c.b16 %v1565, %v1565
        %v1741 = vpack.c.b16 %v1566, %v1566
        %v1742 = vpack.c.b16 %v1567, %v1567
        %v1743 = vpack.c.b16 %v1568, %v1568
        %v1744 = vpack.c.b16 %v1569, %v1569
        %v1745 = vpack.c.b16 %v1570, %v1570
        %v1746 = vpack.c.b16 %v1571, %v1571
        %v1747 = vpack.c.b16 %v1572, %v1572
        %v1748 = vpack.c.b16 %v1573, %v1573
        %vm1899 = vcmask 818176
        %v1901 = vsel %vm1899, %v910, 0
        %vm1903 = vcmask 1041408
        %v1905 = vsel %vm1903, %v1724, 0
        %v1908 = vsel %vm1903, %v1725, 0
        %v1911 = vsel %vm1903, %v1726, 0
        %v1914 = vsel %vm1903, %v1727, 0
        %v1917 = vsel %vm1903, %v1728, 0
        %v1920 = vsel %vm1903, %v1729, 0
        %v1923 = vsel %vm1903, %v1730, 0
        %v1926 = vsel %vm1903, %v1731, 0
        %v1929 = vsel %vm1903, %v1732, 0
        %v1932 = vsel %vm1903, %v1733, 0
        %v1935 = vsel %vm1903, %v1734, 0
        %v1938 = vsel %vm1903, %v1735, 0
        %v1941 = vsel %vm1903, %v1736, 0
        %v1944 = vsel %vm1903, %v1737, 0
        %v1947 = vsel %vm1903, %v1738, 0
        %v1950 = vsel %vm1903, %v1739, 0
        %v1953 = vsel %vm1903, %v1740, 0
        %v1956 = vsel %vm1903, %v1741, 0
        %v1959 = vsel %vm1903, %v1742, 0
        %v1962 = vsel %vm1903, %v1743, 0
        %v1965 = vsel %vm1903, %v1744, 0
        %v1968 = vsel %vm1903, %v1745, 0
        %v1971 = vsel %vm1903, %v1746, 0
        %v1974 = vsel %vm1903, %v1747, 0
        %v1977 = vsel %vm1903, %v1748, 0
        %1979 = vmatprep.subr.bf16.mxu0 0
        %1980 = vmatpush1.bf16.msra.mxu0 0
        %1981 = vmatprep.subr.bf16.mxu0 %v1908
        %1982 = vmatpush1.bf16.msra.mxu0 %v1905
        %1983 = vmatprep.subr.bf16.mxu0 %v1700
        %1984 = vmatpush1.bf16.msra.mxu0 %v1699
        %1985 = vmatprep.subr.bf16.mxu0 %v1675
        %1986 = vmatpush1.bf16.msra.mxu0 %v1674
        %1987 = vmatprep.subr.bf16.mxu0 %v1650
        %1988 = vmatpush1.bf16.msra.mxu0 %v1649
        %1989 = vmatprep.subr.bf16.mxu0 %v1625
        %1990 = vmatpush1.bf16.msra.mxu0 %v1624
        %1991 = vmatprep.subr.bf16.mxu0 %v1600
        %1992 = vmatpush1.bf16.msra.mxu0 %v1599
        %1993 = vmatprep.subr.bf16.mxu0 %v1575
        %1994 = vmatpush1.bf16.msra.mxu0 %v1574
        %1995 = vmatprep.subr.bf16.mxu0 0
        %1996 = vmatpush2.bf16.msra.mxu0 0
        %1997 = vmatprep.subr.bf16.mxu0 0
        %1998 = vmatpush2.bf16.msra.mxu0 0
        %1999 = vmatprep.subr.bf16.mxu0 0
        %2000 = vmatpush2.bf16.msra.mxu0 0
        %2001 = vmatprep.subr.bf16.mxu0 0
        %2002 = vmatpush2.bf16.msra.mxu0 0
        %2003 = vmatprep.subr.bf16.mxu0 0
        %2004 = vmatpush2.bf16.msra.mxu0 0
        %2005 = vmatprep.subr.bf16.mxu0 0
        %2006 = vmatpush2.bf16.msra.mxu0 0
        %2007 = vmatprep.subr.bf16.mxu0 0
        %2008 = vmatpush2.bf16.msra.mxu0 0
        %2009 = vmatprep.subr.bf16.mxu0 0
        %2010 = vmatpush2.bf16.msra.mxu0 0
        %2011 = vmatprep.mubr.bf16.mxu0 0
        %2012 = vmatmul.mubr.bf16.gmra.mxu0 %v1901
        %v2013 = vpop.f32.mrf.mxu0
        %v2014 = vadd.f32 0.0, %v2013
        %v2015 = vpop.f32.mrf.mxu0
        %v2016 = vadd.f32 0.0, %v2015
        %v2017 = vpop.f32.mrf.mxu0
        %v2018 = vpop.f32.mrf.mxu0
        %2019 = vdwg.mxu0
        %2020 = vmatprep.subr.bf16.mxu0 0
        %2021 = vmatpush1.bf16.msra.mxu0 0
        %2022 = vmatprep.subr.bf16.mxu0 %v1914
        %2023 = vmatpush1.bf16.msra.mxu0 %v1911
        %2024 = vmatprep.subr.bf16.mxu0 %v1702
        %2025 = vmatpush1.bf16.msra.mxu0 %v1701
        %2026 = vmatprep.subr.bf16.mxu0 %v1677
        %2027 = vmatpush1.bf16.msra.mxu0 %v1676
        %2028 = vmatprep.subr.bf16.mxu0 %v1652
        %2029 = vmatpush1.bf16.msra.mxu0 %v1651
        %2030 = vmatprep.subr.bf16.mxu0 %v1627
        %2031 = vmatpush1.bf16.msra.mxu0 %v1626
        %2032 = vmatprep.subr.bf16.mxu0 %v1602
        %2033 = vmatpush1.bf16.msra.mxu0 %v1601
        %2034 = vmatprep.subr.bf16.mxu0 %v1577
        %2035 = vmatpush1.bf16.msra.mxu0 %v1576
        %2036 = vmatprep.subr.bf16.mxu0 0
        %2037 = vmatpush2.bf16.msra.mxu0 0
        %2038 = vmatprep.subr.bf16.mxu0 0
        %2039 = vmatpush2.bf16.msra.mxu0 0
        %2040 = vmatprep.subr.bf16.mxu0 0
        %2041 = vmatpush2.bf16.msra.mxu0 0
        %2042 = vmatprep.subr.bf16.mxu0 0
        %2043 = vmatpush2.bf16.msra.mxu0 0
        %2044 = vmatprep.subr.bf16.mxu0 0
        %2045 = vmatpush2.bf16.msra.mxu0 0
        %2046 = vmatprep.subr.bf16.mxu0 0
        %2047 = vmatpush2.bf16.msra.mxu0 0
        %2048 = vmatprep.subr.bf16.mxu0 0
        %2049 = vmatpush2.bf16.msra.mxu0 0
        %2050 = vmatprep.subr.bf16.mxu0 0
        %2051 = vmatpush2.bf16.msra.mxu0 0
        %2052 = vmatprep.mubr.bf16.mxu0 0
        %2053 = vmatmul.mubr.bf16.gmra.mxu0 %v1901
        %v2054 = vpop.f32.mrf.mxu0
        %v2055 = vadd.f32 0.0, %v2054
        %v2056 = vpop.f32.mrf.mxu0
        %v2057 = vadd.f32 0.0, %v2056
        %v2058 = vpop.f32.mrf.mxu0
        %v2059 = vpop.f32.mrf.mxu0
        %2060 = vdwg.mxu0
        %2061 = vmatprep.subr.bf16.mxu0 0
        %2062 = vmatpush1.bf16.msra.mxu0 0
        %2063 = vmatprep.subr.bf16.mxu0 %v1920
        %2064 = vmatpush1.bf16.msra.mxu0 %v1917
        %2065 = vmatprep.subr.bf16.mxu0 %v1704
        %2066 = vmatpush1.bf16.msra.mxu0 %v1703
        %2067 = vmatprep.subr.bf16.mxu0 %v1679
        %2068 = vmatpush1.bf16.msra.mxu0 %v1678
        %2069 = vmatprep.subr.bf16.mxu0 %v1654
        %2070 = vmatpush1.bf16.msra.mxu0 %v1653
        %2071 = vmatprep.subr.bf16.mxu0 %v1629
        %2072 = vmatpush1.bf16.msra.mxu0 %v1628
        %2073 = vmatprep.subr.bf16.mxu0 %v1604
        %2074 = vmatpush1.bf16.msra.mxu0 %v1603
        %2075 = vmatprep.subr.bf16.mxu0 %v1579
        %2076 = vmatpush1.bf16.msra.mxu0 %v1578
        %2077 = vmatprep.subr.bf16.mxu0 0
        %2078 = vmatpush2.bf16.msra.mxu0 0
        %2079 = vmatprep.subr.bf16.mxu0 0
        %2080 = vmatpush2.bf16.msra.mxu0 0
        %2081 = vmatprep.subr.bf16.mxu0 0
        %2082 = vmatpush2.bf16.msra.mxu0 0
        %2083 = vmatprep.subr.bf16.mxu0 0
        %2084 = vmatpush2.bf16.msra.mxu0 0
        %2085 = vmatprep.subr.bf16.mxu0 0
        %2086 = vmatpush2.bf16.msra.mxu0 0
        %2087 = vmatprep.subr.bf16.mxu0 0
        %2088 = vmatpush2.bf16.msra.mxu0 0
        %2089 = vmatprep.subr.bf16.mxu0 0
        %2090 = vmatpush2.bf16.msra.mxu0 0
        %2091 = vmatprep.subr.bf16.mxu0 0
        %2092 = vmatpush2.bf16.msra.mxu0 0
        %2093 = vmatprep.mubr.bf16.mxu0 0
        %2094 = vmatmul.mubr.bf16.gmra.mxu0 %v1901
        %v2095 = vpop.f32.mrf.mxu0
        %v2096 = vadd.f32 0.0, %v2095
        %v2097 = vpop.f32.mrf.mxu0
        %v2098 = vadd.f32 0.0, %v2097
        %v2099 = vpop.f32.mrf.mxu0
        %v2100 = vpop.f32.mrf.mxu0
        %2101 = vdwg.mxu0
        %2102 = vmatprep.subr.bf16.mxu0 0
        %2103 = vmatpush1.bf16.msra.mxu0 0
        %2104 = vmatprep.subr.bf16.mxu0 %v1926
        %2105 = vmatpush1.bf16.msra.mxu0 %v1923
        %2106 = vmatprep.subr.bf16.mxu0 %v1706
        %2107 = vmatpush1.bf16.msra.mxu0 %v1705
        %2108 = vmatprep.subr.bf16.mxu0 %v1681
        %2109 = vmatpush1.bf16.msra.mxu0 %v1680
        %2110 = vmatprep.subr.bf16.mxu0 %v1656
        %2111 = vmatpush1.bf16.msra.mxu0 %v1655
        %2112 = vmatprep.subr.bf16.mxu0 %v1631
        %2113 = vmatpush1.bf16.msra.mxu0 %v1630
        %2114 = vmatprep.subr.bf16.mxu0 %v1606
        %2115 = vmatpush1.bf16.msra.mxu0 %v1605
        %2116 = vmatprep.subr.bf16.mxu0 %v1581
        %2117 = vmatpush1.bf16.msra.mxu0 %v1580
        %2118 = vmatprep.subr.bf16.mxu0 0
        %2119 = vmatpush2.bf16.msra.mxu0 0
        %2120 = vmatprep.subr.bf16.mxu0 0
        %2121 = vmatpush2.bf16.msra.mxu0 0
        %2122 = vmatprep.subr.bf16.mxu0 0
        %2123 = vmatpush2.bf16.msra.mxu0 0
        %2124 = vmatprep.subr.bf16.mxu0 0
        %2125 = vmatpush2.bf16.msra.mxu0 0
        %2126 = vmatprep.subr.bf16.mxu0 0
        %2127 = vmatpush2.bf16.msra.mxu0 0
        %2128 = vmatprep.subr.bf16.mxu0 0
        %2129 = vmatpush2.bf16.msra.mxu0 0
        %2130 = vmatprep.subr.bf16.mxu0 0
        %2131 = vmatpush2.bf16.msra.mxu0 0
        %2132 = vmatprep.subr.bf16.mxu0 0
        %2133 = vmatpush2.bf16.msra.mxu0 0
        %2134 = vmatprep.mubr.bf16.mxu0 0
        %2135 = vmatmul.mubr.bf16.gmra.mxu0 %v1901
        %v2136 = vpop.f32.mrf.mxu0
        %v2137 = vadd.f32 0.0, %v2136
        %v2138 = vpop.f32.mrf.mxu0
        %v2139 = vadd.f32 0.0, %v2138
        %v2140 = vpop.f32.mrf.mxu0
        %v2141 = vpop.f32.mrf.mxu0
        %2142 = vdwg.mxu0
        %2143 = vmatprep.subr.bf16.mxu0 0
        %2144 = vmatpush1.bf16.msra.mxu0 0
        %2145 = vmatprep.subr.bf16.mxu0 %v1932
        %2146 = vmatpush1.bf16.msra.mxu0 %v1929
        %2147 = vmatprep.subr.bf16.mxu0 %v1708
        %2148 = vmatpush1.bf16.msra.mxu0 %v1707
        %2149 = vmatprep.subr.bf16.mxu0 %v1683
        %2150 = vmatpush1.bf16.msra.mxu0 %v1682
        %2151 = vmatprep.subr.bf16.mxu0 %v1658
        %2152 = vmatpush1.bf16.msra.mxu0 %v1657
        %2153 = vmatprep.subr.bf16.mxu0 %v1633
        %2154 = vmatpush1.bf16.msra.mxu0 %v1632
        %2155 = vmatprep.subr.bf16.mxu0 %v1608
        %2156 = vmatpush1.bf16.msra.mxu0 %v1607
        %2157 = vmatprep.subr.bf16.mxu0 %v1583
        %2158 = vmatpush1.bf16.msra.mxu0 %v1582
        %2159 = vmatprep.subr.bf16.mxu0 0
        %2160 = vmatpush2.bf16.msra.mxu0 0
        %2161 = vmatprep.subr.bf16.mxu0 0
        %2162 = vmatpush2.bf16.msra.mxu0 0
        %2163 = vmatprep.subr.bf16.mxu0 0
        %2164 = vmatpush2.bf16.msra.mxu0 0
        %2165 = vmatprep.subr.bf16.mxu0 0
        %2166 = vmatpush2.bf16.msra.mxu0 0
        %2167 = vmatprep.subr.bf16.mxu0 0
        %2168 = vmatpush2.bf16.msra.mxu0 0
        %2169 = vmatprep.subr.bf16.mxu0 0
        %2170 = vmatpush2.bf16.msra.mxu0 0
        %2171 = vmatprep.subr.bf16.mxu0 0
        %2172 = vmatpush2.bf16.msra.mxu0 0
        %2173 = vmatprep.subr.bf16.mxu0 0
        %2174 = vmatpush2.bf16.msra.mxu0 0
        %2175 = vmatprep.mubr.bf16.mxu0 0
        %2176 = vmatmul.mubr.bf16.gmra.mxu0 %v1901
        %v2177 = vpop.f32.mrf.mxu0
        %v2178 = vadd.f32 0.0, %v2177
        %v2179 = vpop.f32.mrf.mxu0
        %v2180 = vadd.f32 0.0, %v2179
        %v2181 = vpop.f32.mrf.mxu0
        %v2182 = vpop.f32.mrf.mxu0
        %2183 = vdwg.mxu0
        %2184 = vmatprep.subr.bf16.mxu0 0
        %2185 = vmatpush1.bf16.msra.mxu0 0
        %2186 = vmatprep.subr.bf16.mxu0 %v1938
        %2187 = vmatpush1.bf16.msra.mxu0 %v1935
        %2188 = vmatprep.subr.bf16.mxu0 %v1710
        %2189 = vmatpush1.bf16.msra.mxu0 %v1709
        %2190 = vmatprep.subr.bf16.mxu0 %v1685
        %2191 = vmatpush1.bf16.msra.mxu0 %v1684
        %2192 = vmatprep.subr.bf16.mxu0 %v1660
        %2193 = vmatpush1.bf16.msra.mxu0 %v1659
        %2194 = vmatprep.subr.bf16.mxu0 %v1635
        %2195 = vmatpush1.bf16.msra.mxu0 %v1634
        %2196 = vmatprep.subr.bf16.mxu0 %v1610
        %2197 = vmatpush1.bf16.msra.mxu0 %v1609
        %2198 = vmatprep.subr.bf16.mxu0 %v1585
        %2199 = vmatpush1.bf16.msra.mxu0 %v1584
        %2200 = vmatprep.subr.bf16.mxu0 0
        %2201 = vmatpush2.bf16.msra.mxu0 0
        %2202 = vmatprep.subr.bf16.mxu0 0
        %2203 = vmatpush2.bf16.msra.mxu0 0
        %2204 = vmatprep.subr.bf16.mxu0 0
        %2205 = vmatpush2.bf16.msra.mxu0 0
        %2206 = vmatprep.subr.bf16.mxu0 0
        %2207 = vmatpush2.bf16.msra.mxu0 0
        %2208 = vmatprep.subr.bf16.mxu0 0
        %2209 = vmatpush2.bf16.msra.mxu0 0
        %2210 = vmatprep.subr.bf16.mxu0 0
        %2211 = vmatpush2.bf16.msra.mxu0 0
        %2212 = vmatprep.subr.bf16.mxu0 0
        %2213 = vmatpush2.bf16.msra.mxu0 0
        %2214 = vmatprep.subr.bf16.mxu0 0
        %2215 = vmatpush2.bf16.msra.mxu0 0
        %2216 = vmatprep.mubr.bf16.mxu0 0
        %2217 = vmatmul.mubr.bf16.gmra.mxu0 %v1901
        %v2218 = vpop.f32.mrf.mxu0
        %v2219 = vadd.f32 0.0, %v2218
        %v2220 = vpop.f32.mrf.mxu0
        %v2221 = vadd.f32 0.0, %v2220
        %v2222 = vpop.f32.mrf.mxu0
        %v2223 = vpop.f32.mrf.mxu0
        %2224 = vdwg.mxu0
        %2225 = vmatprep.subr.bf16.mxu0 0
        %2226 = vmatpush1.bf16.msra.mxu0 0
        %2227 = vmatprep.subr.bf16.mxu0 %v1944
        %2228 = vmatpush1.bf16.msra.mxu0 %v1941
        %2229 = vmatprep.subr.bf16.mxu0 %v1712
        %2230 = vmatpush1.bf16.msra.mxu0 %v1711
        %2231 = vmatprep.subr.bf16.mxu0 %v1687
        %2232 = vmatpush1.bf16.msra.mxu0 %v1686
        %2233 = vmatprep.subr.bf16.mxu0 %v1662
        %2234 = vmatpush1.bf16.msra.mxu0 %v1661
        %2235 = vmatprep.subr.bf16.mxu0 %v1637
        %2236 = vmatpush1.bf16.msra.mxu0 %v1636
        %2237 = vmatprep.subr.bf16.mxu0 %v1612
        %2238 = vmatpush1.bf16.msra.mxu0 %v1611
        %2239 = vmatprep.subr.bf16.mxu0 %v1587
        %2240 = vmatpush1.bf16.msra.mxu0 %v1586
        %2241 = vmatprep.subr.bf16.mxu0 0
        %2242 = vmatpush2.bf16.msra.mxu0 0
        %2243 = vmatprep.subr.bf16.mxu0 0
        %2244 = vmatpush2.bf16.msra.mxu0 0
        %2245 = vmatprep.subr.bf16.mxu0 0
        %2246 = vmatpush2.bf16.msra.mxu0 0
        %2247 = vmatprep.subr.bf16.mxu0 0
        %2248 = vmatpush2.bf16.msra.mxu0 0
        %2249 = vmatprep.subr.bf16.mxu0 0
        %2250 = vmatpush2.bf16.msra.mxu0 0
        %2251 = vmatprep.subr.bf16.mxu0 0
        %2252 = vmatpush2.bf16.msra.mxu0 0
        %2253 = vmatprep.subr.bf16.mxu0 0
        %2254 = vmatpush2.bf16.msra.mxu0 0
        %2255 = vmatprep.subr.bf16.mxu0 0
        %2256 = vmatpush2.bf16.msra.mxu0 0
        %2257 = vmatprep.mubr.bf16.mxu0 0
        %2258 = vmatmul.mubr.bf16.gmra.mxu0 %v1901
        %v2259 = vpop.f32.mrf.mxu0
        %v2260 = vadd.f32 0.0, %v2259
        %v2261 = vpop.f32.mrf.mxu0
        %v2262 = vadd.f32 0.0, %v2261
        %v2263 = vpop.f32.mrf.mxu0
        %v2264 = vpop.f32.mrf.mxu0
        %2265 = vdwg.mxu0
        %2266 = vmatprep.subr.bf16.mxu0 0
        %2267 = vmatpush1.bf16.msra.mxu0 0
        %2268 = vmatprep.subr.bf16.mxu0 %v1950
        %2269 = vmatpush1.bf16.msra.mxu0 %v1947
        %2270 = vmatprep.subr.bf16.mxu0 %v1714
        %2271 = vmatpush1.bf16.msra.mxu0 %v1713
        %2272 = vmatprep.subr.bf16.mxu0 %v1689
        %2273 = vmatpush1.bf16.msra.mxu0 %v1688
        %2274 = vmatprep.subr.bf16.mxu0 %v1664
        %2275 = vmatpush1.bf16.msra.mxu0 %v1663
        %2276 = vmatprep.subr.bf16.mxu0 %v1639
        %2277 = vmatpush1.bf16.msra.mxu0 %v1638
        %2278 = vmatprep.subr.bf16.mxu0 %v1614
        %2279 = vmatpush1.bf16.msra.mxu0 %v1613
        %2280 = vmatprep.subr.bf16.mxu0 %v1589
        %2281 = vmatpush1.bf16.msra.mxu0 %v1588
        %2282 = vmatprep.subr.bf16.mxu0 0
        %2283 = vmatpush2.bf16.msra.mxu0 0
        %2284 = vmatprep.subr.bf16.mxu0 0
        %2285 = vmatpush2.bf16.msra.mxu0 0
        %2286 = vmatprep.subr.bf16.mxu0 0
        %2287 = vmatpush2.bf16.msra.mxu0 0
        %2288 = vmatprep.subr.bf16.mxu0 0
        %2289 = vmatpush2.bf16.msra.mxu0 0
        %2290 = vmatprep.subr.bf16.mxu0 0
        %2291 = vmatpush2.bf16.msra.mxu0 0
        %2292 = vmatprep.subr.bf16.mxu0 0
        %2293 = vmatpush2.bf16.msra.mxu0 0
        %2294 = vmatprep.subr.bf16.mxu0 0
        %2295 = vmatpush2.bf16.msra.mxu0 0
        %2296 = vmatprep.subr.bf16.mxu0 0
        %2297 = vmatpush2.bf16.msra.mxu0 0
        %2298 = vmatprep.mubr.bf16.mxu0 0
        %2299 = vmatmul.mubr.bf16.gmra.mxu0 %v1901
        %v2300 = vpop.f32.mrf.mxu0
        %v2301 = vadd.f32 0.0, %v2300
        %v2302 = vpop.f32.mrf.mxu0
        %v2303 = vadd.f32 0.0, %v2302
        %v2304 = vpop.f32.mrf.mxu0
        %v2305 = vpop.f32.mrf.mxu0
        %2306 = vdwg.mxu0
        %2307 = vmatprep.subr.bf16.mxu0 0
        %2308 = vmatpush1.bf16.msra.mxu0 0
        %2309 = vmatprep.subr.bf16.mxu0 %v1956
        %2310 = vmatpush1.bf16.msra.mxu0 %v1953
        %2311 = vmatprep.subr.bf16.mxu0 %v1716
        %2312 = vmatpush1.bf16.msra.mxu0 %v1715
        %2313 = vmatprep.subr.bf16.mxu0 %v1691
        %2314 = vmatpush1.bf16.msra.mxu0 %v1690
        %2315 = vmatprep.subr.bf16.mxu0 %v1666
        %2316 = vmatpush1.bf16.msra.mxu0 %v1665
        %2317 = vmatprep.subr.bf16.mxu0 %v1641
        %2318 = vmatpush1.bf16.msra.mxu0 %v1640
        %2319 = vmatprep.subr.bf16.mxu0 %v1616
        %2320 = vmatpush1.bf16.msra.mxu0 %v1615
        %2321 = vmatprep.subr.bf16.mxu0 %v1591
        %2322 = vmatpush1.bf16.msra.mxu0 %v1590
        %2323 = vmatprep.subr.bf16.mxu0 0
        %2324 = vmatpush2.bf16.msra.mxu0 0
        %2325 = vmatprep.subr.bf16.mxu0 0
        %2326 = vmatpush2.bf16.msra.mxu0 0
        %2327 = vmatprep.subr.bf16.mxu0 0
        %2328 = vmatpush2.bf16.msra.mxu0 0
        %2329 = vmatprep.subr.bf16.mxu0 0
        %2330 = vmatpush2.bf16.msra.mxu0 0
        %2331 = vmatprep.subr.bf16.mxu0 0
        %2332 = vmatpush2.bf16.msra.mxu0 0
        %2333 = vmatprep.subr.bf16.mxu0 0
        %2334 = vmatpush2.bf16.msra.mxu0 0
        %2335 = vmatprep.subr.bf16.mxu0 0
        %2336 = vmatpush2.bf16.msra.mxu0 0
        %2337 = vmatprep.subr.bf16.mxu0 0
        %2338 = vmatpush2.bf16.msra.mxu0 0
        %2339 = vmatprep.mubr.bf16.mxu0 0
        %2340 = vmatmul.mubr.bf16.gmra.mxu0 %v1901
        %v2341 = vpop.f32.mrf.mxu0
        %v2342 = vadd.f32 0.0, %v2341
        %v2343 = vpop.f32.mrf.mxu0
        %v2344 = vadd.f32 0.0, %v2343
        %v2345 = vpop.f32.mrf.mxu0
        %v2346 = vpop.f32.mrf.mxu0
        %2347 = vdwg.mxu0
        %2348 = vmatprep.subr.bf16.mxu0 0
        %2349 = vmatpush1.bf16.msra.mxu0 0
        %2350 = vmatprep.subr.bf16.mxu0 %v1962
        %2351 = vmatpush1.bf16.msra.mxu0 %v1959
        %2352 = vmatprep.subr.bf16.mxu0 %v1718
        %2353 = vmatpush1.bf16.msra.mxu0 %v1717
        %2354 = vmatprep.subr.bf16.mxu0 %v1693
        %2355 = vmatpush1.bf16.msra.mxu0 %v1692
        %2356 = vmatprep.subr.bf16.mxu0 %v1668
        %2357 = vmatpush1.bf16.msra.mxu0 %v1667
        %2358 = vmatprep.subr.bf16.mxu0 %v1643
        %2359 = vmatpush1.bf16.msra.mxu0 %v1642
        %2360 = vmatprep.subr.bf16.mxu0 %v1618
        %2361 = vmatpush1.bf16.msra.mxu0 %v1617
        %2362 = vmatprep.subr.bf16.mxu0 %v1593
        %2363 = vmatpush1.bf16.msra.mxu0 %v1592
        %2364 = vmatprep.subr.bf16.mxu0 0
        %2365 = vmatpush2.bf16.msra.mxu0 0
        %2366 = vmatprep.subr.bf16.mxu0 0
        %2367 = vmatpush2.bf16.msra.mxu0 0
        %2368 = vmatprep.subr.bf16.mxu0 0
        %2369 = vmatpush2.bf16.msra.mxu0 0
        %2370 = vmatprep.subr.bf16.mxu0 0
        %2371 = vmatpush2.bf16.msra.mxu0 0
        %2372 = vmatprep.subr.bf16.mxu0 0
        %2373 = vmatpush2.bf16.msra.mxu0 0
        %2374 = vmatprep.subr.bf16.mxu0 0
        %2375 = vmatpush2.bf16.msra.mxu0 0
        %2376 = vmatprep.subr.bf16.mxu0 0
        %2377 = vmatpush2.bf16.msra.mxu0 0
        %2378 = vmatprep.subr.bf16.mxu0 0
        %2379 = vmatpush2.bf16.msra.mxu0 0
        %2380 = vmatprep.mubr.bf16.mxu0 0
        %2381 = vmatmul.mubr.bf16.gmra.mxu0 %v1901
        %v2382 = vpop.f32.mrf.mxu0
        %v2383 = vadd.f32 0.0, %v2382
        %v2384 = vpop.f32.mrf.mxu0
        %v2385 = vadd.f32 0.0, %v2384
        %v2386 = vpop.f32.mrf.mxu0
        %v2387 = vpop.f32.mrf.mxu0
        %2388 = vdwg.mxu0
        %2389 = vmatprep.subr.bf16.mxu0 0
        %2390 = vmatpush1.bf16.msra.mxu0 0
        %2391 = vmatprep.subr.bf16.mxu0 %v1968
        %2392 = vmatpush1.bf16.msra.mxu0 %v1965
        %2393 = vmatprep.subr.bf16.mxu0 %v1720
        %2394 = vmatpush1.bf16.msra.mxu0 %v1719
        %2395 = vmatprep.subr.bf16.mxu0 %v1695
        %2396 = vmatpush1.bf16.msra.mxu0 %v1694
        %2397 = vmatprep.subr.bf16.mxu0 %v1670
        %2398 = vmatpush1.bf16.msra.mxu0 %v1669
        %2399 = vmatprep.subr.bf16.mxu0 %v1645
        %2400 = vmatpush1.bf16.msra.mxu0 %v1644
        %2401 = vmatprep.subr.bf16.mxu0 %v1620
        %2402 = vmatpush1.bf16.msra.mxu0 %v1619
        %2403 = vmatprep.subr.bf16.mxu0 %v1595
        %2404 = vmatpush1.bf16.msra.mxu0 %v1594
        %2405 = vmatprep.subr.bf16.mxu0 0
        %2406 = vmatpush2.bf16.msra.mxu0 0
        %2407 = vmatprep.subr.bf16.mxu0 0
        %2408 = vmatpush2.bf16.msra.mxu0 0
        %2409 = vmatprep.subr.bf16.mxu0 0
        %2410 = vmatpush2.bf16.msra.mxu0 0
        %2411 = vmatprep.subr.bf16.mxu0 0
        %2412 = vmatpush2.bf16.msra.mxu0 0
        %2413 = vmatprep.subr.bf16.mxu0 0
        %2414 = vmatpush2.bf16.msra.mxu0 0
        %2415 = vmatprep.subr.bf16.mxu0 0
        %2416 = vmatpush2.bf16.msra.mxu0 0
        %2417 = vmatprep.subr.bf16.mxu0 0
        %2418 = vmatpush2.bf16.msra.mxu0 0
        %2419 = vmatprep.subr.bf16.mxu0 0
        %2420 = vmatpush2.bf16.msra.mxu0 0
        %2421 = vmatprep.mubr.bf16.mxu0 0
        %2422 = vmatmul.mubr.bf16.gmra.mxu0 %v1901
        %v2423 = vpop.f32.mrf.mxu0
        %v2424 = vadd.f32 0.0, %v2423
        %v2425 = vpop.f32.mrf.mxu0
        %v2426 = vadd.f32 0.0, %v2425
        %v2427 = vpop.f32.mrf.mxu0
        %v2428 = vpop.f32.mrf.mxu0
        %2429 = vdwg.mxu0
        %2430 = vmatprep.subr.bf16.mxu0 0
        %2431 = vmatpush1.bf16.msra.mxu0 0
        %2432 = vmatprep.subr.bf16.mxu0 %v1974
        %2433 = vmatpush1.bf16.msra.mxu0 %v1971
        %2434 = vmatprep.subr.bf16.mxu0 %v1722
        %2435 = vmatpush1.bf16.msra.mxu0 %v1721
        %2436 = vmatprep.subr.bf16.mxu0 %v1697
        %2437 = vmatpush1.bf16.msra.mxu0 %v1696
        %2438 = vmatprep.subr.bf16.mxu0 %v1672
        %2439 = vmatpush1.bf16.msra.mxu0 %v1671
        %2440 = vmatprep.subr.bf16.mxu0 %v1647
        %2441 = vmatpush1.bf16.msra.mxu0 %v1646
        %2442 = vmatprep.subr.bf16.mxu0 %v1622
        %2443 = vmatpush1.bf16.msra.mxu0 %v1621
        %2444 = vmatprep.subr.bf16.mxu0 %v1597
        %2445 = vmatpush1.bf16.msra.mxu0 %v1596
        %2446 = vmatprep.subr.bf16.mxu0 0
        %2447 = vmatpush2.bf16.msra.mxu0 0
        %2448 = vmatprep.subr.bf16.mxu0 0
        %2449 = vmatpush2.bf16.msra.mxu0 0
        %2450 = vmatprep.subr.bf16.mxu0 0
        %2451 = vmatpush2.bf16.msra.mxu0 0
        %2452 = vmatprep.subr.bf16.mxu0 0
        %2453 = vmatpush2.bf16.msra.mxu0 0
        %2454 = vmatprep.subr.bf16.mxu0 0
        %2455 = vmatpush2.bf16.msra.mxu0 0
        %2456 = vmatprep.subr.bf16.mxu0 0
        %2457 = vmatpush2.bf16.msra.mxu0 0
        %2458 = vmatprep.subr.bf16.mxu0 0
        %2459 = vmatpush2.bf16.msra.mxu0 0
        %2460 = vmatprep.subr.bf16.mxu0 0
        %2461 = vmatpush2.bf16.msra.mxu0 0
        %2462 = vmatprep.mubr.bf16.mxu0 0
        %2463 = vmatmul.mubr.bf16.gmra.mxu0 %v1901
        %v2464 = vpop.f32.mrf.mxu0
        %v2465 = vadd.f32 0.0, %v2464
        %v2466 = vpop.f32.mrf.mxu0
        %v2467 = vadd.f32 0.0, %v2466
        %v2468 = vpop.f32.mrf.mxu0
        %v2469 = vpop.f32.mrf.mxu0
        %2470 = vdwg.mxu0
        %2471 = vmatprep.subr.bf16.mxu0 0
        %2472 = vmatpush1.bf16.msra.mxu0 0
        %2473 = vmatprep.subr.bf16.mxu0 0
        %2474 = vmatpush1.bf16.msra.mxu0 %v1977
        %2475 = vmatprep.subr.bf16.mxu0 0
        %2476 = vmatpush1.bf16.msra.mxu0 %v1723
        %2477 = vmatprep.subr.bf16.mxu0 0
        %2478 = vmatpush1.bf16.msra.mxu0 %v1698
        %2479 = vmatprep.subr.bf16.mxu0 0
        %2480 = vmatpush1.bf16.msra.mxu0 %v1673
        %2481 = vmatprep.subr.bf16.mxu0 0
        %2482 = vmatpush1.bf16.msra.mxu0 %v1648
        %2483 = vmatprep.subr.bf16.mxu0 0
        %2484 = vmatpush1.bf16.msra.mxu0 %v1623
        %2485 = vmatprep.subr.bf16.mxu0 0
        %2486 = vmatpush1.bf16.msra.mxu0 %v1598
        %2487 = vmatprep.subr.bf16.mxu0 0
        %2488 = vmatpush2.bf16.msra.mxu0 0
        %2489 = vmatprep.subr.bf16.mxu0 0
        %2490 = vmatpush2.bf16.msra.mxu0 0
        %2491 = vmatprep.subr.bf16.mxu0 0
        %2492 = vmatpush2.bf16.msra.mxu0 0
        %2493 = vmatprep.subr.bf16.mxu0 0
        %2494 = vmatpush2.bf16.msra.mxu0 0
        %2495 = vmatprep.subr.bf16.mxu0 0
        %2496 = vmatpush2.bf16.msra.mxu0 0
        %2497 = vmatprep.subr.bf16.mxu0 0
        %2498 = vmatpush2.bf16.msra.mxu0 0
        %2499 = vmatprep.subr.bf16.mxu0 0
        %2500 = vmatpush2.bf16.msra.mxu0 0
        %2501 = vmatprep.subr.bf16.mxu0 0
        %2502 = vmatpush2.bf16.msra.mxu0 0
        %2503 = vmatprep.mubr.bf16.mxu0 0
        %2504 = vmatmul.mubr.bf16.gmra.mxu0 %v1901
        %v2505 = vpop.f32.mrf.mxu0
        %v2506 = vadd.f32 0.0, %v2505
        %v2507 = vpop.f32.mrf.mxu0
        %v2508 = vpop.f32.mrf.mxu0
        %v2509 = vpop.f32.mrf.mxu0
        %2510 = vdwg.mxu0
        %v2511 = vld [vmem:[%s3] sm:$0xff]
        %v2512 = vld [vmem:[%s3 + $0x8] sm:$0xff]
        %v2513 = vld [vmem:[%s3 + $0x10] sm:$0xff]
        %v2514 = vld [vmem:[%s3 + $0x18] sm:$0x1]
        %v2519 = vlaneseq
        %v2520 = vshrl.u32 %v2519, 7
        %v2521 = vsub.s32 0, %v2520
        %v2522 = vrot.slane %v2511, %v2521
        %v2523 = vlaneseq
        %v2524 = vshrl.u32 %v2523, 7
        %v2525 = vsub.s32 1, %v2524
        %v2526 = vrot.slane %v2511, %v2525
        %v2527 = vlaneseq
        %v2528 = vshrl.u32 %v2527, 7
        %v2529 = vsub.s32 2, %v2528
        %v2530 = vrot.slane %v2511, %v2529
        %v2531 = vlaneseq
        %v2532 = vshrl.u32 %v2531, 7
        %v2533 = vsub.s32 3, %v2532
        %v2534 = vrot.slane %v2511, %v2533
        %v2535 = vlaneseq
        %v2536 = vshrl.u32 %v2535, 7
        %v2537 = vsub.s32 4, %v2536
        %v2538 = vrot.slane %v2511, %v2537
        %v2539 = vlaneseq
        %v2540 = vshrl.u32 %v2539, 7
        %v2541 = vsub.s32 5, %v2540
        %v2542 = vrot.slane %v2511, %v2541
        %v2543 = vlaneseq
        %v2544 = vshrl.u32 %v2543, 7
        %v2545 = vsub.s32 6, %v2544
        %v2546 = vrot.slane %v2511, %v2545
        %v2547 = vlaneseq
        %v2548 = vshrl.u32 %v2547, 7
        %v2549 = vsub.s32 7, %v2548
        %v2550 = vrot.slane %v2511, %v2549
        %v2551 = vlaneseq
        %v2552 = vshrl.u32 %v2551, 7
        %v2553 = vsub.s32 0, %v2552
        %v2554 = vrot.slane %v2512, %v2553
        %v2555 = vlaneseq
        %v2556 = vshrl.u32 %v2555, 7
        %v2557 = vsub.s32 1, %v2556
        %v2558 = vrot.slane %v2512, %v2557
        %v2559 = vlaneseq
        %v2560 = vshrl.u32 %v2559, 7
        %v2561 = vsub.s32 2, %v2560
        %v2562 = vrot.slane %v2512, %v2561
        %v2563 = vlaneseq
        %v2564 = vshrl.u32 %v2563, 7
        %v2565 = vsub.s32 3, %v2564
        %v2566 = vrot.slane %v2512, %v2565
        %v2567 = vlaneseq
        %v2568 = vshrl.u32 %v2567, 7
        %v2569 = vsub.s32 4, %v2568
        %v2570 = vrot.slane %v2512, %v2569
        %v2571 = vlaneseq
        %v2572 = vshrl.u32 %v2571, 7
        %v2573 = vsub.s32 5, %v2572
        %v2574 = vrot.slane %v2512, %v2573
        %v2575 = vlaneseq
        %v2576 = vshrl.u32 %v2575, 7
        %v2577 = vsub.s32 6, %v2576
        %v2578 = vrot.slane %v2512, %v2577
        %v2579 = vlaneseq
        %v2580 = vshrl.u32 %v2579, 7
        %v2581 = vsub.s32 7, %v2580
        %v2582 = vrot.slane %v2512, %v2581
        %v2583 = vlaneseq
        %v2584 = vshrl.u32 %v2583, 7
        %v2585 = vsub.s32 0, %v2584
        %v2586 = vrot.slane %v2513, %v2585
        %v2587 = vlaneseq
        %v2588 = vshrl.u32 %v2587, 7
        %v2589 = vsub.s32 1, %v2588
        %v2590 = vrot.slane %v2513, %v2589
        %v2591 = vlaneseq
        %v2592 = vshrl.u32 %v2591, 7
        %v2593 = vsub.s32 2, %v2592
        %v2594 = vrot.slane %v2513, %v2593
        %v2595 = vlaneseq
        %v2596 = vshrl.u32 %v2595, 7
        %v2597 = vsub.s32 3, %v2596
        %v2598 = vrot.slane %v2513, %v2597
        %v2599 = vlaneseq
        %v2600 = vshrl.u32 %v2599, 7
        %v2601 = vsub.s32 4, %v2600
        %v2602 = vrot.slane %v2513, %v2601
        %v2603 = vlaneseq
        %v2604 = vshrl.u32 %v2603, 7
        %v2605 = vsub.s32 5, %v2604
        %v2606 = vrot.slane %v2513, %v2605
        %v2607 = vlaneseq
        %v2608 = vshrl.u32 %v2607, 7
        %v2609 = vsub.s32 6, %v2608
        %v2610 = vrot.slane %v2513, %v2609
        %v2611 = vlaneseq
        %v2612 = vshrl.u32 %v2611, 7
        %v2613 = vsub.s32 7, %v2612
        %v2614 = vrot.slane %v2513, %v2613
        %v2615 = vlaneseq
        %v2616 = vshrl.u32 %v2615, 7
        %v2617 = vsub.s32 0, %v2616
        %v2618 = vrot.slane %v2514, %v2617
        %v2644 = vmul.f32 %v2014, %v2522
        %v2645 = vmul.f32 %v2016, %v2526
        %v2646 = vmul.f32 %v2055, %v2530
        %v2647 = vmul.f32 %v2057, %v2534
        %v2648 = vmul.f32 %v2096, %v2538
        %v2649 = vmul.f32 %v2098, %v2542
        %v2650 = vmul.f32 %v2137, %v2546
        %v2651 = vmul.f32 %v2139, %v2550
        %v2652 = vmul.f32 %v2178, %v2554
        %v2653 = vmul.f32 %v2180, %v2558
        %v2654 = vmul.f32 %v2219, %v2562
        %v2655 = vmul.f32 %v2221, %v2566
        %v2656 = vmul.f32 %v2260, %v2570
        %v2657 = vmul.f32 %v2262, %v2574
        %v2658 = vmul.f32 %v2301, %v2578
        %v2659 = vmul.f32 %v2303, %v2582
        %v2660 = vmul.f32 %v2342, %v2586
        %v2661 = vmul.f32 %v2344, %v2590
        %v2662 = vmul.f32 %v2383, %v2594
        %v2663 = vmul.f32 %v2385, %v2598
        %v2664 = vmul.f32 %v2424, %v2602
        %v2665 = vmul.f32 %v2426, %v2606
        %v2666 = vmul.f32 %v2465, %v2610
        %v2667 = vmul.f32 %v2467, %v2614
        %v2668 = vmul.f32 %v2506, %v2618
        %v2669 = vld [vmem:[%s4] sm:$0xff]
        %v2670 = vld [vmem:[%s4 + $0x8] sm:$0xff]
        %v2671 = vld [vmem:[%s4 + $0x10] sm:$0xff]
        %v2672 = vld [vmem:[%s4 + $0x18] sm:$0x1]
        %v2677 = vlaneseq
        %v2678 = vshrl.u32 %v2677, 7
        %v2679 = vsub.s32 0, %v2678
        %v2680 = vrot.slane %v2669, %v2679
        %v2681 = vlaneseq
        %v2682 = vshrl.u32 %v2681, 7
        %v2683 = vsub.s32 1, %v2682
        %v2684 = vrot.slane %v2669, %v2683
        %v2685 = vlaneseq
        %v2686 = vshrl.u32 %v2685, 7
        %v2687 = vsub.s32 2, %v2686
        %v2688 = vrot.slane %v2669, %v2687
        %v2689 = vlaneseq
        %v2690 = vshrl.u32 %v2689, 7
        %v2691 = vsub.s32 3, %v2690
        %v2692 = vrot.slane %v2669, %v2691
        %v2693 = vlaneseq
        %v2694 = vshrl.u32 %v2693, 7
        %v2695 = vsub.s32 4, %v2694
        %v2696 = vrot.slane %v2669, %v2695
        %v2697 = vlaneseq
        %v2698 = vshrl.u32 %v2697, 7
        %v2699 = vsub.s32 5, %v2698
        %v2700 = vrot.slane %v2669, %v2699
        %v2701 = vlaneseq
        %v2702 = vshrl.u32 %v2701, 7
        %v2703 = vsub.s32 6, %v2702
        %v2704 = vrot.slane %v2669, %v2703
        %v2705 = vlaneseq
        %v2706 = vshrl.u32 %v2705, 7
        %v2707 = vsub.s32 7, %v2706
        %v2708 = vrot.slane %v2669, %v2707
        %v2709 = vlaneseq
        %v2710 = vshrl.u32 %v2709, 7
        %v2711 = vsub.s32 0, %v2710
        %v2712 = vrot.slane %v2670, %v2711
        %v2713 = vlaneseq
        %v2714 = vshrl.u32 %v2713, 7
        %v2715 = vsub.s32 1, %v2714
        %v2716 = vrot.slane %v2670, %v2715
        %v2717 = vlaneseq
        %v2718 = vshrl.u32 %v2717, 7
        %v2719 = vsub.s32 2, %v2718
        %v2720 = vrot.slane %v2670, %v2719
        %v2721 = vlaneseq
        %v2722 = vshrl.u32 %v2721, 7
        %v2723 = vsub.s32 3, %v2722
        %v2724 = vrot.slane %v2670, %v2723
        %v2725 = vlaneseq
        %v2726 = vshrl.u32 %v2725, 7
        %v2727 = vsub.s32 4, %v2726
        %v2728 = vrot.slane %v2670, %v2727
        %v2729 = vlaneseq
        %v2730 = vshrl.u32 %v2729, 7
        %v2731 = vsub.s32 5, %v2730
        %v2732 = vrot.slane %v2670, %v2731
        %v2733 = vlaneseq
        %v2734 = vshrl.u32 %v2733, 7
        %v2735 = vsub.s32 6, %v2734
        %v2736 = vrot.slane %v2670, %v2735
        %v2737 = vlaneseq
        %v2738 = vshrl.u32 %v2737, 7
        %v2739 = vsub.s32 7, %v2738
        %v2740 = vrot.slane %v2670, %v2739
        %v2741 = vlaneseq
        %v2742 = vshrl.u32 %v2741, 7
        %v2743 = vsub.s32 0, %v2742
        %v2744 = vrot.slane %v2671, %v2743
        %v2745 = vlaneseq
        %v2746 = vshrl.u32 %v2745, 7
        %v2747 = vsub.s32 1, %v2746
        %v2748 = vrot.slane %v2671, %v2747
        %v2749 = vlaneseq
        %v2750 = vshrl.u32 %v2749, 7
        %v2751 = vsub.s32 2, %v2750
        %v2752 = vrot.slane %v2671, %v2751
        %v2753 = vlaneseq
        %v2754 = vshrl.u32 %v2753, 7
        %v2755 = vsub.s32 3, %v2754
        %v2756 = vrot.slane %v2671, %v2755
        %v2757 = vlaneseq
        %v2758 = vshrl.u32 %v2757, 7
        %v2759 = vsub.s32 4, %v2758
        %v2760 = vrot.slane %v2671, %v2759
        %v2761 = vlaneseq
        %v2762 = vshrl.u32 %v2761, 7
        %v2763 = vsub.s32 5, %v2762
        %v2764 = vrot.slane %v2671, %v2763
        %v2765 = vlaneseq
        %v2766 = vshrl.u32 %v2765, 7
        %v2767 = vsub.s32 6, %v2766
        %v2768 = vrot.slane %v2671, %v2767
        %v2769 = vlaneseq
        %v2770 = vshrl.u32 %v2769, 7
        %v2771 = vsub.s32 7, %v2770
        %v2772 = vrot.slane %v2671, %v2771
        %v2773 = vlaneseq
        %v2774 = vshrl.u32 %v2773, 7
        %v2775 = vsub.s32 0, %v2774
        %v2776 = vrot.slane %v2672, %v2775
        %v2802 = vadd.f32 %v2644, %v2680
        %v2803 = vadd.f32 %v2645, %v2684
        %v2804 = vadd.f32 %v2646, %v2688
        %v2805 = vadd.f32 %v2647, %v2692
        %v2806 = vadd.f32 %v2648, %v2696
        %v2807 = vadd.f32 %v2649, %v2700
        %v2808 = vadd.f32 %v2650, %v2704
        %v2809 = vadd.f32 %v2651, %v2708
        %v2810 = vadd.f32 %v2652, %v2712
        %v2811 = vadd.f32 %v2653, %v2716
        %v2812 = vadd.f32 %v2654, %v2720
        %v2813 = vadd.f32 %v2655, %v2724
        %v2814 = vadd.f32 %v2656, %v2728
        %v2815 = vadd.f32 %v2657, %v2732
        %v2816 = vadd.f32 %v2658, %v2736
        %v2817 = vadd.f32 %v2659, %v2740
        %v2818 = vadd.f32 %v2660, %v2744
        %v2819 = vadd.f32 %v2661, %v2748
        %v2820 = vadd.f32 %v2662, %v2752
        %v2821 = vadd.f32 %v2663, %v2756
        %v2822 = vadd.f32 %v2664, %v2760
        %v2823 = vadd.f32 %v2665, %v2764
        %v2824 = vadd.f32 %v2666, %v2768
        %v2825 = vadd.f32 %v2667, %v2772
        %v2826 = vadd.f32 %v2668, %v2776
        %v2827 = vmax.f32 %v2802, 0.0
        %v2828 = vmax.f32 %v2803, 0.0
        %v2829 = vmax.f32 %v2804, 0.0
        %v2830 = vmax.f32 %v2805, 0.0
        %v2831 = vmax.f32 %v2806, 0.0
        %v2832 = vmax.f32 %v2807, 0.0
        %v2833 = vmax.f32 %v2808, 0.0
        %v2834 = vmax.f32 %v2809, 0.0
        %v2835 = vmax.f32 %v2810, 0.0
        %v2836 = vmax.f32 %v2811, 0.0
        %v2837 = vmax.f32 %v2812, 0.0
        %v2838 = vmax.f32 %v2813, 0.0
        %v2839 = vmax.f32 %v2814, 0.0
        %v2840 = vmax.f32 %v2815, 0.0
        %v2841 = vmax.f32 %v2816, 0.0
        %v2842 = vmax.f32 %v2817, 0.0
        %v2843 = vmax.f32 %v2818, 0.0
        %v2844 = vmax.f32 %v2819, 0.0
        %v2845 = vmax.f32 %v2820, 0.0
        %v2846 = vmax.f32 %v2821, 0.0
        %v2847 = vmax.f32 %v2822, 0.0
        %v2848 = vmax.f32 %v2823, 0.0
        %v2849 = vmax.f32 %v2824, 0.0
        %v2850 = vmax.f32 %v2825, 0.0
        %v2851 = vmax.f32 %v2826, 0.0
        %v2852 = vpack.c.bf16 %v2827, %v2827
        %v2853 = vpack.c.bf16 %v2828, %v2828
        %v2854 = vpack.c.bf16 %v2829, %v2829
        %v2855 = vpack.c.bf16 %v2830, %v2830
        %v2856 = vpack.c.bf16 %v2831, %v2831
        %v2857 = vpack.c.bf16 %v2832, %v2832
        %v2858 = vpack.c.bf16 %v2833, %v2833
        %v2859 = vpack.c.bf16 %v2834, %v2834
        %v2860 = vpack.c.bf16 %v2835, %v2835
        %v2861 = vpack.c.bf16 %v2836, %v2836
        %v2862 = vpack.c.bf16 %v2837, %v2837
        %v2863 = vpack.c.bf16 %v2838, %v2838
        %v2864 = vpack.c.bf16 %v2839, %v2839
        %v2865 = vpack.c.bf16 %v2840, %v2840
        %v2866 = vpack.c.bf16 %v2841, %v2841
        %v2867 = vpack.c.bf16 %v2842, %v2842
        %v2868 = vpack.c.bf16 %v2843, %v2843
        %v2869 = vpack.c.bf16 %v2844, %v2844
        %v2870 = vpack.c.bf16 %v2845, %v2845
        %v2871 = vpack.c.bf16 %v2846, %v2846
        %v2872 = vpack.c.bf16 %v2847, %v2847
        %v2873 = vpack.c.bf16 %v2848, %v2848
        %v2874 = vpack.c.bf16 %v2849, %v2849
        %v2875 = vpack.c.bf16 %v2850, %v2850
        %v2876 = vpack.c.bf16 %v2851, %v2851
        %v2877 = vld [vmem:[%s5] sm:$0xff]
        %v2878 = vld [vmem:[%s5 + $0x8] sm:$0xff]
        %v2879 = vld [vmem:[%s5 + $0x10] sm:$0xff]
        %v2880 = vld [vmem:[%s5 + $0x18] sm:$0xff]
        %v2881 = vld [vmem:[%s5 + $0x20] sm:$0xff]
        %v2882 = vld [vmem:[%s5 + $0x28] sm:$0xff]
        %v2883 = vld [vmem:[%s5 + $0x30] sm:$0xff]
        %v2884 = vld [vmem:[%s5 + $0x38] sm:$0xff]
        %v2885 = vld [vmem:[%s5 + $0x40] sm:$0xff]
        %v2886 = vld [vmem:[%s5 + $0x48] sm:$0xff]
        %v2887 = vld [vmem:[%s5 + $0x50] sm:$0xff]
        %v2888 = vld [vmem:[%s5 + $0x58] sm:$0xff]
        %v2889 = vld [vmem:[%s5 + $0x60] sm:$0xff]
        %v2890 = vld [vmem:[%s5 + $0x68] sm:$0xff]
        %v2891 = vld [vmem:[%s5 + $0x70] sm:$0xff]
        %v2892 = vld [vmem:[%s5 + $0x78] sm:$0xff]
        %v2893 = vld [vmem:[%s5 + $0x80] sm:$0xff]
        %v2894 = vld [vmem:[%s5 + $0x88] sm:$0xff]
        %v2895 = vld [vmem:[%s5 + $0x90] sm:$0xff]
        %v2896 = vld [vmem:[%s5 + $0x98] sm:$0xff]
        %v2897 = vld [vmem:[%s5 + $0xa0] sm:$0xff]
        %v2898 = vld [vmem:[%s5 + $0xa8] sm:$0xff]
        %v2899 = vld [vmem:[%s5 + $0xb0] sm:$0xff]
        %v2900 = vld [vmem:[%s5 + $0xb8] sm:$0xff]
        %v2901 = vld [vmem:[%s5 + $0xc0] sm:$0xff]
        %v2902 = vld [vmem:[%s5 + $0xc8] sm:$0xff]
        %v2903 = vld [vmem:[%s5 + $0xd0] sm:$0xff]
        %v2904 = vld [vmem:[%s5 + $0xd8] sm:$0xff]
        %v2905 = vld [vmem:[%s5 + $0xe0] sm:$0xff]
        %v2906 = vld [vmem:[%s5 + $0xe8] sm:$0xff]
        %v2907 = vld [vmem:[%s5 + $0xf0] sm:$0xff]
        %v2908 = vld [vmem:[%s5 + $0xf8] sm:$0xff]
        %v2909 = vld [vmem:[%s5 + $0x100] sm:$0xff]
        %v2910 = vld [vmem:[%s5 + $0x108] sm:$0xff]
        %v2911 = vld [vmem:[%s5 + $0x110] sm:$0xff]
        %v2912 = vld [vmem:[%s5 + $0x118] sm:$0xff]
        %v2913 = vld [vmem:[%s5 + $0x120] sm:$0xff]
        %v2914 = vld [vmem:[%s5 + $0x128] sm:$0xff]
        %v2915 = vld [vmem:[%s5 + $0x130] sm:$0xff]
        %v2916 = vld [vmem:[%s5 + $0x138] sm:$0xff]
        %v2917 = vld [vmem:[%s5 + $0x140] sm:$0xff]
        %v2918 = vld [vmem:[%s5 + $0x148] sm:$0xff]
        %v2919 = vld [vmem:[%s5 + $0x150] sm:$0xff]
        %v2920 = vld [vmem:[%s5 + $0x158] sm:$0xff]
        %v2921 = vld [vmem:[%s5 + $0x160] sm:$0xff]
        %v2922 = vld [vmem:[%s5 + $0x168] sm:$0xff]
        %v2923 = vld [vmem:[%s5 + $0x170] sm:$0xff]
        %v2924 = vld [vmem:[%s5 + $0x178] sm:$0xff]
        %v2925 = vld [vmem:[%s5 + $0x180] sm:$0xff]
        %v2926 = vld [vmem:[%s5 + $0x188] sm:$0xff]
        %v2927 = vld [vmem:[%s5 + $0x190] sm:$0xff]
        %v2928 = vld [vmem:[%s5 + $0x198] sm:$0xff]
        %v2929 = vld [vmem:[%s5 + $0x1a0] sm:$0xff]
        %v2930 = vld [vmem:[%s5 + $0x1a8] sm:$0xff]
        %v2931 = vld [vmem:[%s5 + $0x1b0] sm:$0xff]
        %v2932 = vld [vmem:[%s5 + $0x1b8] sm:$0xff]
        %v2933 = vld [vmem:[%s5 + $0x1c0] sm:$0xff]
        %v2934 = vld [vmem:[%s5 + $0x1c8] sm:$0xff]
        %v2935 = vld [vmem:[%s5 + $0x1d0] sm:$0xff]
        %v2936 = vld [vmem:[%s5 + $0x1d8] sm:$0xff]
        %v2937 = vld [vmem:[%s5 + $0x1e0] sm:$0xff]
        %v2938 = vld [vmem:[%s5 + $0x1e8] sm:$0xff]
        %v2939 = vld [vmem:[%s5 + $0x1f0] sm:$0xff]
        %v2940 = vld [vmem:[%s5 + $0x1f8] sm:$0xff]
        %v2941 = vld [vmem:[%s5 + $0x200] sm:$0xff]
        %v2942 = vld [vmem:[%s5 + $0x208] sm:$0xff]
        %v2943 = vld [vmem:[%s5 + $0x210] sm:$0xff]
        %v2944 = vld [vmem:[%s5 + $0x218] sm:$0xff]
        %v2945 = vld [vmem:[%s5 + $0x220] sm:$0xff]
        %v2946 = vld [vmem:[%s5 + $0x228] sm:$0xff]
        %v2947 = vld [vmem:[%s5 + $0x230] sm:$0xff]
        %v2948 = vld [vmem:[%s5 + $0x238] sm:$0xff]
        %v2949 = vld [vmem:[%s5 + $0x240] sm:$0xff]
        %v2950 = vld [vmem:[%s5 + $0x248] sm:$0xff]
        %v2951 = vld [vmem:[%s5 + $0x250] sm:$0xff]
        %v2952 = vld [vmem:[%s5 + $0x258] sm:$0xff]
        %v2953 = vld [vmem:[%s5 + $0x260] sm:$0xff]
        %v2954 = vld [vmem:[%s5 + $0x268] sm:$0xff]
        %v2955 = vld [vmem:[%s5 + $0x270] sm:$0xff]
        %v2956 = vld [vmem:[%s5 + $0x278] sm:$0xff]
        %v2957 = vld [vmem:[%s5 + $0x280] sm:$0xff]
        %v2958 = vld [vmem:[%s5 + $0x288] sm:$0xff]
        %v2959 = vld [vmem:[%s5 + $0x290] sm:$0xff]
        %v2960 = vld [vmem:[%s5 + $0x298] sm:$0xff]
        %v2961 = vld [vmem:[%s5 + $0x2a0] sm:$0xff]
        %v2962 = vld [vmem:[%s5 + $0x2a8] sm:$0xff]
        %v2963 = vld [vmem:[%s5 + $0x2b0] sm:$0xff]
        %v2964 = vld [vmem:[%s5 + $0x2b8] sm:$0xff]
        %v2965 = vld [vmem:[%s5 + $0x2c0] sm:$0xff]
        %v2966 = vld [vmem:[%s5 + $0x2c8] sm:$0xff]
        %v2967 = vld [vmem:[%s5 + $0x2d0] sm:$0xff]
        %v2968 = vld [vmem:[%s5 + $0x2d8] sm:$0xff]
        %v2969 = vld [vmem:[%s5 + $0x2e0] sm:$0xff]
        %v2970 = vld [vmem:[%s5 + $0x2e8] sm:$0xff]
        %v2971 = vld [vmem:[%s5 + $0x2f0] sm:$0xff]
        %v2972 = vld [vmem:[%s5 + $0x2f8] sm:$0xff]
        %v2973 = vld [vmem:[%s5 + $0x300] sm:$0xff]
        %v2974 = vld [vmem:[%s5 + $0x308] sm:$0xff]
        %v2975 = vld [vmem:[%s5 + $0x310] sm:$0xff]
        %v2976 = vld [vmem:[%s5 + $0x318] sm:$0xff]
        %v2977 = vld [vmem:[%s5 + $0x320] sm:$0xff]
        %v2978 = vld [vmem:[%s5 + $0x328] sm:$0xff]
        %v2979 = vld [vmem:[%s5 + $0x330] sm:$0xff]
        %v2980 = vld [vmem:[%s5 + $0x338] sm:$0xff]
        %v2981 = vld [vmem:[%s5 + $0x340] sm:$0xff]
        %v2982 = vld [vmem:[%s5 + $0x348] sm:$0xff]
        %v2983 = vld [vmem:[%s5 + $0x350] sm:$0xff]
        %v2984 = vld [vmem:[%s5 + $0x358] sm:$0xff]
        %v2985 = vld [vmem:[%s5 + $0x360] sm:$0xff]
        %v2986 = vld [vmem:[%s5 + $0x368] sm:$0xff]
        %v2987 = vld [vmem:[%s5 + $0x370] sm:$0xff]
        %v2988 = vld [vmem:[%s5 + $0x378] sm:$0xff]
        %v2989 = vld [vmem:[%s5 + $0x380] sm:$0xff]
        %v2990 = vld [vmem:[%s5 + $0x388] sm:$0xff]
        %v2991 = vld [vmem:[%s5 + $0x390] sm:$0xff]
        %v2992 = vld [vmem:[%s5 + $0x398] sm:$0xff]
        %v2993 = vld [vmem:[%s5 + $0x3a0] sm:$0xff]
        %v2994 = vld [vmem:[%s5 + $0x3a8] sm:$0xff]
        %v2995 = vld [vmem:[%s5 + $0x3b0] sm:$0xff]
        %v2996 = vld [vmem:[%s5 + $0x3b8] sm:$0xff]
        %v2997 = vld [vmem:[%s5 + $0x3c0] sm:$0xff]
        %v2998 = vld [vmem:[%s5 + $0x3c8] sm:$0xff]
        %v2999 = vld [vmem:[%s5 + $0x3d0] sm:$0xff]
        %v3000 = vld [vmem:[%s5 + $0x3d8] sm:$0xff]
        %v3001 = vld [vmem:[%s5 + $0x3e0] sm:$0xff]
        %v3002 = vld [vmem:[%s5 + $0x3e8] sm:$0xff]
        %v3003 = vld [vmem:[%s5 + $0x3f0] sm:$0xff]
        %v3004 = vld [vmem:[%s5 + $0x3f8] sm:$0xff]
        %v3005 = vld [vmem:[%s5 + $0x400] sm:$0xff]
        %v3006 = vld [vmem:[%s5 + $0x408] sm:$0xff]
        %v3007 = vld [vmem:[%s5 + $0x410] sm:$0xff]
        %v3008 = vld [vmem:[%s5 + $0x418] sm:$0xff]
        %v3009 = vld [vmem:[%s5 + $0x420] sm:$0xff]
        %v3010 = vld [vmem:[%s5 + $0x428] sm:$0xff]
        %v3011 = vld [vmem:[%s5 + $0x430] sm:$0xff]
        %v3012 = vld [vmem:[%s5 + $0x438] sm:$0xff]
        %v3013 = vld [vmem:[%s5 + $0x440] sm:$0xff]
        %v3014 = vld [vmem:[%s5 + $0x448] sm:$0xff]
        %v3015 = vld [vmem:[%s5 + $0x450] sm:$0xff]
        %v3016 = vld [vmem:[%s5 + $0x458] sm:$0xff]
        %v3017 = vld [vmem:[%s5 + $0x460] sm:$0xff]
        %v3018 = vld [vmem:[%s5 + $0x468] sm:$0xff]
        %v3019 = vld [vmem:[%s5 + $0x470] sm:$0xff]
        %v3020 = vld [vmem:[%s5 + $0x478] sm:$0xff]
        %v3021 = vld [vmem:[%s5 + $0x480] sm:$0xff]
        %v3022 = vld [vmem:[%s5 + $0x488] sm:$0xff]
        %v3023 = vld [vmem:[%s5 + $0x490] sm:$0xff]
        %v3024 = vld [vmem:[%s5 + $0x498] sm:$0xff]
        %v3025 = vld [vmem:[%s5 + $0x4a0] sm:$0xff]
        %v3026 = vld [vmem:[%s5 + $0x4a8] sm:$0xff]
        %v3027 = vld [vmem:[%s5 + $0x4b0] sm:$0xff]
        %v3028 = vld [vmem:[%s5 + $0x4b8] sm:$0xff]
        %v3029 = vld [vmem:[%s5 + $0x4c0] sm:$0xff]
        %v3030 = vld [vmem:[%s5 + $0x4c8] sm:$0xff]
        %v3031 = vld [vmem:[%s5 + $0x4d0] sm:$0xff]
        %v3032 = vld [vmem:[%s5 + $0x4d8] sm:$0xff]
        %v3033 = vld [vmem:[%s5 + $0x4e0] sm:$0xff]
        %v3034 = vld [vmem:[%s5 + $0x4e8] sm:$0xff]
        %v3035 = vld [vmem:[%s5 + $0x4f0] sm:$0xff]
        %v3036 = vld [vmem:[%s5 + $0x4f8] sm:$0xff]
        %v3037 = vld [vmem:[%s5 + $0x500] sm:$0xff]
        %v3038 = vld [vmem:[%s5 + $0x508] sm:$0xff]
        %v3039 = vld [vmem:[%s5 + $0x510] sm:$0xff]
        %v3040 = vld [vmem:[%s5 + $0x518] sm:$0xff]
        %v3041 = vld [vmem:[%s5 + $0x520] sm:$0xff]
        %v3042 = vld [vmem:[%s5 + $0x528] sm:$0xff]
        %v3043 = vld [vmem:[%s5 + $0x530] sm:$0xff]
        %v3044 = vld [vmem:[%s5 + $0x538] sm:$0xff]
        %v3045 = vld [vmem:[%s5 + $0x540] sm:$0xff]
        %v3046 = vld [vmem:[%s5 + $0x548] sm:$0xff]
        %v3047 = vld [vmem:[%s5 + $0x550] sm:$0xff]
        %v3048 = vld [vmem:[%s5 + $0x558] sm:$0xff]
        %v3049 = vld [vmem:[%s5 + $0x560] sm:$0xff]
        %v3050 = vld [vmem:[%s5 + $0x568] sm:$0xff]
        %v3051 = vld [vmem:[%s5 + $0x570] sm:$0xff]
        %v3052 = vld [vmem:[%s5 + $0x578] sm:$0xff]
        %v3053 = vld [vmem:[%s5 + $0x580] sm:$0xff]
        %v3054 = vld [vmem:[%s5 + $0x588] sm:$0xff]
        %v3055 = vld [vmem:[%s5 + $0x590] sm:$0xff]
        %v3056 = vld [vmem:[%s5 + $0x598] sm:$0xff]
        %v3057 = vld [vmem:[%s5 + $0x5a0] sm:$0xff]
        %v3058 = vld [vmem:[%s5 + $0x5a8] sm:$0xff]
        %v3059 = vld [vmem:[%s5 + $0x5b0] sm:$0xff]
        %v3060 = vld [vmem:[%s5 + $0x5b8] sm:$0xff]
        %v3061 = vld [vmem:[%s5 + $0x5c0] sm:$0xff]
        %v3062 = vld [vmem:[%s5 + $0x5c8] sm:$0xff]
        %v3063 = vld [vmem:[%s5 + $0x5d0] sm:$0xff]
        %v3064 = vld [vmem:[%s5 + $0x5d8] sm:$0xff]
        %v3065 = vld [vmem:[%s5 + $0x5e0] sm:$0xff]
        %v3066 = vld [vmem:[%s5 + $0x5e8] sm:$0xff]
        %v3067 = vld [vmem:[%s5 + $0x5f0] sm:$0xff]
        %v3068 = vld [vmem:[%s5 + $0x5f8] sm:$0xff]
        %v3069 = vld [vmem:[%s5 + $0x600] sm:$0xff]
        %v3070 = vld [vmem:[%s5 + $0x608] sm:$0xff]
        %v3071 = vld [vmem:[%s5 + $0x610] sm:$0xff]
        %v3072 = vld [vmem:[%s5 + $0x618] sm:$0xff]
        %v3073 = vld [vmem:[%s5 + $0x620] sm:$0xff]
        %v3074 = vld [vmem:[%s5 + $0x628] sm:$0xff]
        %v3075 = vld [vmem:[%s5 + $0x630] sm:$0xff]
        %v3076 = vld [vmem:[%s5 + $0x638] sm:$0xff]
        %v3077 = vld [vmem:[%s5 + $0x640] sm:$0xff]
        %v3078 = vld [vmem:[%s5 + $0x648] sm:$0xff]
        %v3079 = vld [vmem:[%s5 + $0x650] sm:$0xff]
        %v3080 = vld [vmem:[%s5 + $0x658] sm:$0xff]
        %v3081 = vld [vmem:[%s5 + $0x660] sm:$0xff]
        %v3082 = vld [vmem:[%s5 + $0x668] sm:$0xff]
        %v3083 = vld [vmem:[%s5 + $0x670] sm:$0xff]
        %v3084 = vld [vmem:[%s5 + $0x678] sm:$0xff]
        %v3085 = vld [vmem:[%s5 + $0x680] sm:$0xff]
        %v3086 = vld [vmem:[%s5 + $0x688] sm:$0xff]
        %v3087 = vld [vmem:[%s5 + $0x690] sm:$0xff]
        %v3088 = vld [vmem:[%s5 + $0x698] sm:$0xff]
        %v3089 = vld [vmem:[%s5 + $0x6a0] sm:$0xff]
        %v3090 = vld [vmem:[%s5 + $0x6a8] sm:$0xff]
        %v3091 = vld [vmem:[%s5 + $0x6b0] sm:$0xff]
        %v3092 = vld [vmem:[%s5 + $0x6b8] sm:$0xff]
        %v3093 = vld [vmem:[%s5 + $0x6c0] sm:$0xff]
        %v3094 = vld [vmem:[%s5 + $0x6c8] sm:$0xff]
        %v3095 = vld [vmem:[%s5 + $0x6d0] sm:$0xff]
        %v3096 = vld [vmem:[%s5 + $0x6d8] sm:$0xff]
        %v3097 = vld [vmem:[%s5 + $0x6e0] sm:$0xff]
        %v3098 = vld [vmem:[%s5 + $0x6e8] sm:$0xff]
        %v3099 = vld [vmem:[%s5 + $0x6f0] sm:$0xff]
        %v3100 = vld [vmem:[%s5 + $0x6f8] sm:$0xff]
        %v3101 = vld [vmem:[%s5 + $0x700] sm:$0xff]
        %v3102 = vld [vmem:[%s5 + $0x708] sm:$0xff]
        %v3103 = vld [vmem:[%s5 + $0x710] sm:$0xff]
        %v3104 = vld [vmem:[%s5 + $0x718] sm:$0xff]
        %v3105 = vld [vmem:[%s5 + $0x720] sm:$0xff]
        %v3106 = vld [vmem:[%s5 + $0x728] sm:$0xff]
        %v3107 = vld [vmem:[%s5 + $0x730] sm:$0xff]
        %v3108 = vld [vmem:[%s5 + $0x738] sm:$0xff]
        %v3109 = vld [vmem:[%s5 + $0x740] sm:$0xff]
        %v3110 = vld [vmem:[%s5 + $0x748] sm:$0xff]
        %v3111 = vld [vmem:[%s5 + $0x750] sm:$0xff]
        %v3112 = vld [vmem:[%s5 + $0x758] sm:$0xff]
        %v3113 = vld [vmem:[%s5 + $0x760] sm:$0xff]
        %v3114 = vld [vmem:[%s5 + $0x768] sm:$0xff]
        %v3115 = vld [vmem:[%s5 + $0x770] sm:$0xff]
        %v3116 = vld [vmem:[%s5 + $0x778] sm:$0xff]
        %v3117 = vld [vmem:[%s5 + $0x780] sm:$0xff]
        %v3118 = vld [vmem:[%s5 + $0x788] sm:$0xff]
        %v3119 = vld [vmem:[%s5 + $0x790] sm:$0xff]
        %v3120 = vld [vmem:[%s5 + $0x798] sm:$0xff]
        %v3121 = vld [vmem:[%s5 + $0x7a0] sm:$0xff]
        %v3122 = vld [vmem:[%s5 + $0x7a8] sm:$0xff]
        %v3123 = vld [vmem:[%s5 + $0x7b0] sm:$0xff]
        %v3124 = vld [vmem:[%s5 + $0x7b8] sm:$0xff]
        %v3125 = vld [vmem:[%s5 + $0x7c0] sm:$0xff]
        %v3126 = vld [vmem:[%s5 + $0x7c8] sm:$0xff]
        %v3127 = vld [vmem:[%s5 + $0x7d0] sm:$0xff]
        %v3128 = vld [vmem:[%s5 + $0x7d8] sm:$0xff]
        %v3129 = vld [vmem:[%s5 + $0x7e0] sm:$0xff]
        %v3130 = vld [vmem:[%s5 + $0x7e8] sm:$0xff]
        %v3131 = vld [vmem:[%s5 + $0x7f0] sm:$0xff]
        %v3132 = vld [vmem:[%s5 + $0x7f8] sm:$0xff]
        %v3133 = vld [vmem:[%s5 + $0x800] sm:$0xff]
        %v3134 = vld [vmem:[%s5 + $0x808] sm:$0xff]
        %v3135 = vld [vmem:[%s5 + $0x810] sm:$0xff]
        %v3136 = vld [vmem:[%s5 + $0x818] sm:$0xff]
        %v3137 = vld [vmem:[%s5 + $0x820] sm:$0xff]
        %v3138 = vld [vmem:[%s5 + $0x828] sm:$0xff]
        %v3139 = vld [vmem:[%s5 + $0x830] sm:$0xff]
        %v3140 = vld [vmem:[%s5 + $0x838] sm:$0xff]
        %v3141 = vld [vmem:[%s5 + $0x840] sm:$0xff]
        %v3142 = vld [vmem:[%s5 + $0x848] sm:$0xff]
        %v3143 = vld [vmem:[%s5 + $0x850] sm:$0xff]
        %v3144 = vld [vmem:[%s5 + $0x858] sm:$0xff]
        %v3145 = vld [vmem:[%s5 + $0x860] sm:$0xff]
        %v3146 = vld [vmem:[%s5 + $0x868] sm:$0xff]
        %v3147 = vld [vmem:[%s5 + $0x870] sm:$0xff]
        %v3148 = vld [vmem:[%s5 + $0x878] sm:$0xff]
        %v3149 = vld [vmem:[%s5 + $0x880] sm:$0xff]
        %v3150 = vld [vmem:[%s5 + $0x888] sm:$0xff]
        %v3151 = vld [vmem:[%s5 + $0x890] sm:$0xff]
        %v3152 = vld [vmem:[%s5 + $0x898] sm:$0xff]
        %v3153 = vld [vmem:[%s5 + $0x8a0] sm:$0xff]
        %v3154 = vld [vmem:[%s5 + $0x8a8] sm:$0xff]
        %v3155 = vld [vmem:[%s5 + $0x8b0] sm:$0xff]
        %v3156 = vld [vmem:[%s5 + $0x8b8] sm:$0xff]
        %v3157 = vld [vmem:[%s5 + $0x8c0] sm:$0xff]
        %v3158 = vld [vmem:[%s5 + $0x8c8] sm:$0xff]
        %v3159 = vld [vmem:[%s5 + $0x8d0] sm:$0xff]
        %v3160 = vld [vmem:[%s5 + $0x8d8] sm:$0xff]
        %v3161 = vld [vmem:[%s5 + $0x8e0] sm:$0xff]
        %v3162 = vld [vmem:[%s5 + $0x8e8] sm:$0xff]
        %v3163 = vld [vmem:[%s5 + $0x8f0] sm:$0xff]
        %v3164 = vld [vmem:[%s5 + $0x8f8] sm:$0xff]
        %v3165 = vld [vmem:[%s5 + $0x900] sm:$0xff]
        %v3166 = vld [vmem:[%s5 + $0x908] sm:$0xff]
        %v3167 = vld [vmem:[%s5 + $0x910] sm:$0xff]
        %v3168 = vld [vmem:[%s5 + $0x918] sm:$0xff]
        %v3169 = vld [vmem:[%s5 + $0x920] sm:$0xff]
        %v3170 = vld [vmem:[%s5 + $0x928] sm:$0xff]
        %v3171 = vld [vmem:[%s5 + $0x930] sm:$0xff]
        %v3172 = vld [vmem:[%s5 + $0x938] sm:$0xff]
        %v3173 = vld [vmem:[%s5 + $0x940] sm:$0xff]
        %v3174 = vld [vmem:[%s5 + $0x948] sm:$0xff]
        %v3175 = vld [vmem:[%s5 + $0x950] sm:$0xff]
        %v3176 = vld [vmem:[%s5 + $0x958] sm:$0xff]
        %v3177 = vld [vmem:[%s5 + $0x960] sm:$0xff]
        %v3178 = vld [vmem:[%s5 + $0x968] sm:$0xff]
        %v3179 = vld [vmem:[%s5 + $0x970] sm:$0xff]
        %v3180 = vld [vmem:[%s5 + $0x978] sm:$0xff]
        %v3181 = vld [vmem:[%s5 + $0x980] sm:$0xff]
        %v3182 = vld [vmem:[%s5 + $0x988] sm:$0xff]
        %v3183 = vld [vmem:[%s5 + $0x990] sm:$0xff]
        %v3184 = vld [vmem:[%s5 + $0x998] sm:$0xff]
        %v3185 = vld [vmem:[%s5 + $0x9a0] sm:$0xff]
        %v3186 = vld [vmem:[%s5 + $0x9a8] sm:$0xff]
        %v3187 = vld [vmem:[%s5 + $0x9b0] sm:$0xff]
        %v3188 = vld [vmem:[%s5 + $0x9b8] sm:$0xff]
        %v3189 = vld [vmem:[%s5 + $0x9c0] sm:$0xff]
        %v3190 = vld [vmem:[%s5 + $0x9c8] sm:$0xff]
        %v3191 = vld [vmem:[%s5 + $0x9d0] sm:$0xff]
        %v3192 = vld [vmem:[%s5 + $0x9d8] sm:$0xff]
        %v3193 = vld [vmem:[%s5 + $0x9e0] sm:$0xff]
        %v3194 = vld [vmem:[%s5 + $0x9e8] sm:$0xff]
        %v3195 = vld [vmem:[%s5 + $0x9f0] sm:$0xff]
        %v3196 = vld [vmem:[%s5 + $0x9f8] sm:$0xff]
        %v3197 = vld [vmem:[%s5 + $0xa00] sm:$0xff]
        %v3198 = vld [vmem:[%s5 + $0xa08] sm:$0xff]
        %v3199 = vld [vmem:[%s5 + $0xa10] sm:$0xff]
        %v3200 = vld [vmem:[%s5 + $0xa18] sm:$0xff]
        %v3201 = vld [vmem:[%s5 + $0xa20] sm:$0xff]
        %v3202 = vld [vmem:[%s5 + $0xa28] sm:$0xff]
        %v3203 = vld [vmem:[%s5 + $0xa30] sm:$0xff]
        %v3204 = vld [vmem:[%s5 + $0xa38] sm:$0xff]
        %v3205 = vld [vmem:[%s5 + $0xa40] sm:$0xff]
        %v3206 = vld [vmem:[%s5 + $0xa48] sm:$0xff]
        %v3207 = vld [vmem:[%s5 + $0xa50] sm:$0xff]
        %v3208 = vld [vmem:[%s5 + $0xa58] sm:$0xff]
        %v3209 = vld [vmem:[%s5 + $0xa60] sm:$0xff]
        %v3210 = vld [vmem:[%s5 + $0xa68] sm:$0xff]
        %v3211 = vld [vmem:[%s5 + $0xa70] sm:$0xff]
        %v3212 = vld [vmem:[%s5 + $0xa78] sm:$0xff]
        %v3213 = vld [vmem:[%s5 + $0xa80] sm:$0xff]
        %v3214 = vld [vmem:[%s5 + $0xa88] sm:$0xff]
        %v3215 = vld [vmem:[%s5 + $0xa90] sm:$0xff]
        %v3216 = vld [vmem:[%s5 + $0xa98] sm:$0xff]
        %v3217 = vld [vmem:[%s5 + $0xaa0] sm:$0xff]
        %v3218 = vld [vmem:[%s5 + $0xaa8] sm:$0xff]
        %v3219 = vld [vmem:[%s5 + $0xab0] sm:$0xff]
        %v3220 = vld [vmem:[%s5 + $0xab8] sm:$0xff]
        %v3221 = vld [vmem:[%s5 + $0xac0] sm:$0xff]
        %v3222 = vld [vmem:[%s5 + $0xac8] sm:$0xff]
        %v3223 = vld [vmem:[%s5 + $0xad0] sm:$0xff]
        %v3224 = vld [vmem:[%s5 + $0xad8] sm:$0xff]
        %v3225 = vld [vmem:[%s5 + $0xae0] sm:$0xff]
        %v3226 = vld [vmem:[%s5 + $0xae8] sm:$0xff]
        %v3227 = vld [vmem:[%s5 + $0xaf0] sm:$0xff]
        %v3228 = vld [vmem:[%s5 + $0xaf8] sm:$0xff]
        %v3229 = vld [vmem:[%s5 + $0xb00] sm:$0xff]
        %v3230 = vld [vmem:[%s5 + $0xb08] sm:$0xff]
        %v3231 = vld [vmem:[%s5 + $0xb10] sm:$0xff]
        %v3232 = vld [vmem:[%s5 + $0xb18] sm:$0xff]
        %v3233 = vld [vmem:[%s5 + $0xb20] sm:$0xff]
        %v3234 = vld [vmem:[%s5 + $0xb28] sm:$0xff]
        %v3235 = vld [vmem:[%s5 + $0xb30] sm:$0xff]
        %v3236 = vld [vmem:[%s5 + $0xb38] sm:$0xff]
        %v3237 = vld [vmem:[%s5 + $0xb40] sm:$0xff]
        %v3238 = vld [vmem:[%s5 + $0xb48] sm:$0xff]
        %v3239 = vld [vmem:[%s5 + $0xb50] sm:$0xff]
        %v3240 = vld [vmem:[%s5 + $0xb58] sm:$0xff]
        %v3241 = vld [vmem:[%s5 + $0xb60] sm:$0xff]
        %v3242 = vld [vmem:[%s5 + $0xb68] sm:$0xff]
        %v3243 = vld [vmem:[%s5 + $0xb70] sm:$0xff]
        %v3244 = vld [vmem:[%s5 + $0xb78] sm:$0xff]
        %v3245 = vld [vmem:[%s5 + $0xb80] sm:$0xff]
        %v3246 = vld [vmem:[%s5 + $0xb88] sm:$0xff]
        %v3247 = vld [vmem:[%s5 + $0xb90] sm:$0xff]
        %v3248 = vld [vmem:[%s5 + $0xb98] sm:$0xff]
        %v3249 = vld [vmem:[%s5 + $0xba0] sm:$0xff]
        %v3250 = vld [vmem:[%s5 + $0xba8] sm:$0xff]
        %v3251 = vld [vmem:[%s5 + $0xbb0] sm:$0xff]
        %v3252 = vld [vmem:[%s5 + $0xbb8] sm:$0xff]
        %v3253 = vld [vmem:[%s5 + $0xbc0] sm:$0xff]
        %v3254 = vld [vmem:[%s5 + $0xbc8] sm:$0xff]
        %v3255 = vld [vmem:[%s5 + $0xbd0] sm:$0xff]
        %v3256 = vld [vmem:[%s5 + $0xbd8] sm:$0xff]
        %v3257 = vld [vmem:[%s5 + $0xbe0] sm:$0xff]
        %v3258 = vld [vmem:[%s5 + $0xbe8] sm:$0xff]
        %v3259 = vld [vmem:[%s5 + $0xbf0] sm:$0xff]
        %v3260 = vld [vmem:[%s5 + $0xbf8] sm:$0xff]
        %v3261 = vld [vmem:[%s5 + $0xc00] sm:$0xff]
        %v3262 = vld [vmem:[%s5 + $0xc08] sm:$0xff]
        %v3263 = vld [vmem:[%s5 + $0xc10] sm:$0xff]
        %v3264 = vld [vmem:[%s5 + $0xc18] sm:$0xff]
        %v3265 = vld [vmem:[%s5 + $0xc20] sm:$0xff]
        %v3266 = vld [vmem:[%s5 + $0xc28] sm:$0xff]
        %v3267 = vld [vmem:[%s5 + $0xc30] sm:$0xff]
        %v3268 = vld [vmem:[%s5 + $0xc38] sm:$0xff]
        %v3269 = vld [vmem:[%s5 + $0xc40] sm:$0xff]
        %v3270 = vld [vmem:[%s5 + $0xc48] sm:$0xff]
        %v3271 = vld [vmem:[%s5 + $0xc50] sm:$0xff]
        %v3272 = vld [vmem:[%s5 + $0xc58] sm:$0xff]
        %v3273 = vld [vmem:[%s5 + $0xc60] sm:$0xff]
        %v3274 = vld [vmem:[%s5 + $0xc68] sm:$0xff]
        %v3275 = vld [vmem:[%s5 + $0xc70] sm:$0xff]
        %v3276 = vld [vmem:[%s5 + $0xc78] sm:$0xff]
        %v3277 = vld [vmem:[%s5 + $0xc80] sm:$0xff]
        %v3278 = vld [vmem:[%s5 + $0xc88] sm:$0xff]
        %v3279 = vld [vmem:[%s5 + $0xc90] sm:$0xff]
        %v3280 = vld [vmem:[%s5 + $0xc98] sm:$0xff]
        %v3281 = vld [vmem:[%s5 + $0xca0] sm:$0xff]
        %v3282 = vld [vmem:[%s5 + $0xca8] sm:$0xff]
        %v3283 = vld [vmem:[%s5 + $0xcb0] sm:$0xff]
        %v3284 = vld [vmem:[%s5 + $0xcb8] sm:$0xff]
        %v3285 = vld [vmem:[%s5 + $0xcc0] sm:$0xff]
        %v3286 = vld [vmem:[%s5 + $0xcc8] sm:$0xff]
        %v3287 = vld [vmem:[%s5 + $0xcd0] sm:$0xff]
        %v3288 = vld [vmem:[%s5 + $0xcd8] sm:$0xff]
        %v3289 = vld [vmem:[%s5 + $0xce0] sm:$0xff]
        %v3290 = vld [vmem:[%s5 + $0xce8] sm:$0xff]
        %v3291 = vld [vmem:[%s5 + $0xcf0] sm:$0xff]
        %v3292 = vld [vmem:[%s5 + $0xcf8] sm:$0xff]
        %v3293 = vld [vmem:[%s5 + $0xd00] sm:$0xff]
        %v3294 = vld [vmem:[%s5 + $0xd08] sm:$0xff]
        %v3295 = vld [vmem:[%s5 + $0xd10] sm:$0xff]
        %v3296 = vld [vmem:[%s5 + $0xd18] sm:$0xff]
        %v3297 = vld [vmem:[%s5 + $0xd20] sm:$0xff]
        %v3298 = vld [vmem:[%s5 + $0xd28] sm:$0xff]
        %v3299 = vld [vmem:[%s5 + $0xd30] sm:$0xff]
        %v3300 = vld [vmem:[%s5 + $0xd38] sm:$0xff]
        %v3301 = vld [vmem:[%s5 + $0xd40] sm:$0xff]
        %v3302 = vld [vmem:[%s5 + $0xd48] sm:$0xff]
        %v3303 = vld [vmem:[%s5 + $0xd50] sm:$0xff]
        %v3304 = vld [vmem:[%s5 + $0xd58] sm:$0xff]
        %v3305 = vld [vmem:[%s5 + $0xd60] sm:$0xff]
        %v3306 = vld [vmem:[%s5 + $0xd68] sm:$0xff]
        %v3307 = vld [vmem:[%s5 + $0xd70] sm:$0xff]
        %v3308 = vld [vmem:[%s5 + $0xd78] sm:$0xff]
        %v3309 = vld [vmem:[%s5 + $0xd80] sm:$0xff]
        %v3310 = vld [vmem:[%s5 + $0xd88] sm:$0xff]
        %v3311 = vld [vmem:[%s5 + $0xd90] sm:$0xff]
        %v3312 = vld [vmem:[%s5 + $0xd98] sm:$0xff]
        %v3313 = vld [vmem:[%s5 + $0xda0] sm:$0xff]
        %v3314 = vld [vmem:[%s5 + $0xda8] sm:$0xff]
        %v3315 = vld [vmem:[%s5 + $0xdb0] sm:$0xff]
        %v3316 = vld [vmem:[%s5 + $0xdb8] sm:$0xff]
        %v3317 = vld [vmem:[%s5 + $0xdc0] sm:$0xff]
        %v3318 = vld [vmem:[%s5 + $0xdc8] sm:$0xff]
        %v3319 = vld [vmem:[%s5 + $0xdd0] sm:$0xff]
        %v3320 = vld [vmem:[%s5 + $0xdd8] sm:$0xff]
        %v3321 = vld [vmem:[%s5 + $0xde0] sm:$0xff]
        %v3322 = vld [vmem:[%s5 + $0xde8] sm:$0xff]
        %v3323 = vld [vmem:[%s5 + $0xdf0] sm:$0xff]
        %v3324 = vld [vmem:[%s5 + $0xdf8] sm:$0xff]
        %v3325 = vld [vmem:[%s5 + $0xe00] sm:$0xff]
        %v3326 = vld [vmem:[%s5 + $0xe08] sm:$0xff]
        %v3327 = vld [vmem:[%s5 + $0xe10] sm:$0xff]
        %v3328 = vld [vmem:[%s5 + $0xe18] sm:$0xff]
        %v3329 = vld [vmem:[%s5 + $0xe20] sm:$0xff]
        %v3330 = vld [vmem:[%s5 + $0xe28] sm:$0xff]
        %v3331 = vld [vmem:[%s5 + $0xe30] sm:$0xff]
        %v3332 = vld [vmem:[%s5 + $0xe38] sm:$0xff]
        %v3333 = vld [vmem:[%s5 + $0xe40] sm:$0xff]
        %v3334 = vld [vmem:[%s5 + $0xe48] sm:$0xff]
        %v3335 = vld [vmem:[%s5 + $0xe50] sm:$0xff]
        %v3336 = vld [vmem:[%s5 + $0xe58] sm:$0xff]
        %v3337 = vld [vmem:[%s5 + $0xe60] sm:$0xff]
        %v3338 = vld [vmem:[%s5 + $0xe68] sm:$0xff]
        %v3339 = vld [vmem:[%s5 + $0xe70] sm:$0xff]
        %v3340 = vld [vmem:[%s5 + $0xe78] sm:$0xff]
        %v3341 = vld [vmem:[%s5 + $0xe80] sm:$0xff]
        %v3342 = vld [vmem:[%s5 + $0xe88] sm:$0xff]
        %v3343 = vld [vmem:[%s5 + $0xe90] sm:$0xff]
        %v3344 = vld [vmem:[%s5 + $0xe98] sm:$0xff]
        %v3345 = vld [vmem:[%s5 + $0xea0] sm:$0xff]
        %v3346 = vld [vmem:[%s5 + $0xea8] sm:$0xff]
        %v3347 = vld [vmem:[%s5 + $0xeb0] sm:$0xff]
        %v3348 = vld [vmem:[%s5 + $0xeb8] sm:$0xff]
        %v3349 = vld [vmem:[%s5 + $0xec0] sm:$0xff]
        %v3350 = vld [vmem:[%s5 + $0xec8] sm:$0xff]
        %v3351 = vld [vmem:[%s5 + $0xed0] sm:$0xff]
        %v3352 = vld [vmem:[%s5 + $0xed8] sm:$0xff]
        %v3353 = vld [vmem:[%s5 + $0xee0] sm:$0xff]
        %v3354 = vld [vmem:[%s5 + $0xee8] sm:$0xff]
        %v3355 = vld [vmem:[%s5 + $0xef0] sm:$0xff]
        %v3356 = vld [vmem:[%s5 + $0xef8] sm:$0xff]
        %v3357 = vld [vmem:[%s5 + $0xf00] sm:$0xff]
        %v3358 = vld [vmem:[%s5 + $0xf08] sm:$0xff]
        %v3359 = vld [vmem:[%s5 + $0xf10] sm:$0xff]
        %v3360 = vld [vmem:[%s5 + $0xf18] sm:$0xff]
        %v3361 = vld [vmem:[%s5 + $0xf20] sm:$0xff]
        %v3362 = vld [vmem:[%s5 + $0xf28] sm:$0xff]
        %v3363 = vld [vmem:[%s5 + $0xf30] sm:$0xff]
        %v3364 = vld [vmem:[%s5 + $0xf38] sm:$0xff]
        %v3365 = vld [vmem:[%s5 + $0xf40] sm:$0xff]
        %v3366 = vld [vmem:[%s5 + $0xf48] sm:$0xff]
        %v3367 = vld [vmem:[%s5 + $0xf50] sm:$0xff]
        %v3368 = vld [vmem:[%s5 + $0xf58] sm:$0xff]
        %v3369 = vld [vmem:[%s5 + $0xf60] sm:$0xff]
        %v3370 = vld [vmem:[%s5 + $0xf68] sm:$0xff]
        %v3371 = vld [vmem:[%s5 + $0xf70] sm:$0xff]
        %v3372 = vld [vmem:[%s5 + $0xf78] sm:$0xff]
        %v3373 = vld [vmem:[%s5 + $0xf80] sm:$0xff]
        %v3374 = vld [vmem:[%s5 + $0xf88] sm:$0xff]
        %v3375 = vld [vmem:[%s5 + $0xf90] sm:$0xff]
        %v3376 = vld [vmem:[%s5 + $0xf98] sm:$0xff]
        %v3377 = vld [vmem:[%s5 + $0xfa0] sm:$0xff]
        %v3378 = vld [vmem:[%s5 + $0xfa8] sm:$0xff]
        %v3379 = vld [vmem:[%s5 + $0xfb0] sm:$0xff]
        %v3380 = vld [vmem:[%s5 + $0xfb8] sm:$0xff]
        %v3381 = vld [vmem:[%s5 + $0xfc0] sm:$0xff]
        %v3382 = vld [vmem:[%s5 + $0xfc8] sm:$0xff]
        %v3383 = vld [vmem:[%s5 + $0xfd0] sm:$0xff]
        %v3384 = vld [vmem:[%s5 + $0xfd8] sm:$0xff]
        %v3385 = vld [vmem:[%s5 + $0xfe0] sm:$0xff]
        %v3386 = vld [vmem:[%s5 + $0xfe8] sm:$0xff]
        %v3387 = vld [vmem:[%s5 + $0xff0] sm:$0xff]
        %v3388 = vld [vmem:[%s5 + $0xff8] sm:$0xff]
        %v3389 = vld [vmem:[%s5 + $0x1000] sm:$0xff]
        %v3390 = vld [vmem:[%s5 + $0x1008] sm:$0xff]
        %v3391 = vld [vmem:[%s5 + $0x1010] sm:$0xff]
        %v3392 = vld [vmem:[%s5 + $0x1018] sm:$0xff]
        %v3393 = vld [vmem:[%s5 + $0x1020] sm:$0xff]
        %v3394 = vld [vmem:[%s5 + $0x1028] sm:$0xff]
        %v3395 = vld [vmem:[%s5 + $0x1030] sm:$0xff]
        %v3396 = vld [vmem:[%s5 + $0x1038] sm:$0xff]
        %v3397 = vld [vmem:[%s5 + $0x1040] sm:$0xff]
        %v3398 = vld [vmem:[%s5 + $0x1048] sm:$0xff]
        %v3399 = vld [vmem:[%s5 + $0x1050] sm:$0xff]
        %v3400 = vld [vmem:[%s5 + $0x1058] sm:$0xff]
        %v3401 = vld [vmem:[%s5 + $0x1060] sm:$0xff]
        %v3402 = vld [vmem:[%s5 + $0x1068] sm:$0xff]
        %v3403 = vld [vmem:[%s5 + $0x1070] sm:$0xff]
        %v3404 = vld [vmem:[%s5 + $0x1078] sm:$0xff]
        %v3405 = vld [vmem:[%s5 + $0x1080] sm:$0xff]
        %v3406 = vld [vmem:[%s5 + $0x1088] sm:$0xff]
        %v3407 = vld [vmem:[%s5 + $0x1090] sm:$0xff]
        %v3408 = vld [vmem:[%s5 + $0x1098] sm:$0xff]
        %v3409 = vld [vmem:[%s5 + $0x10a0] sm:$0xff]
        %v3410 = vld [vmem:[%s5 + $0x10a8] sm:$0xff]
        %v3411 = vld [vmem:[%s5 + $0x10b0] sm:$0xff]
        %v3412 = vld [vmem:[%s5 + $0x10b8] sm:$0xff]
        %v3413 = vld [vmem:[%s5 + $0x10c0] sm:$0xff]
        %v3414 = vld [vmem:[%s5 + $0x10c8] sm:$0xff]
        %v3415 = vld [vmem:[%s5 + $0x10d0] sm:$0xff]
        %v3416 = vld [vmem:[%s5 + $0x10d8] sm:$0xff]
        %v3417 = vld [vmem:[%s5 + $0x10e0] sm:$0xff]
        %v3418 = vld [vmem:[%s5 + $0x10e8] sm:$0xff]
        %v3419 = vld [vmem:[%s5 + $0x10f0] sm:$0xff]
        %v3420 = vld [vmem:[%s5 + $0x10f8] sm:$0xff]
        %v3421 = vld [vmem:[%s5 + $0x1100] sm:$0xff]
        %v3422 = vld [vmem:[%s5 + $0x1108] sm:$0xff]
        %v3423 = vld [vmem:[%s5 + $0x1110] sm:$0xff]
        %v3424 = vld [vmem:[%s5 + $0x1118] sm:$0xff]
        %v3425 = vld [vmem:[%s5 + $0x1120] sm:$0xff]
        %v3426 = vld [vmem:[%s5 + $0x1128] sm:$0xff]
        %v3427 = vld [vmem:[%s5 + $0x1130] sm:$0xff]
        %v3428 = vld [vmem:[%s5 + $0x1138] sm:$0xff]
        %v3429 = vld [vmem:[%s5 + $0x1140] sm:$0xff]
        %v3430 = vld [vmem:[%s5 + $0x1148] sm:$0xff]
        %v3431 = vld [vmem:[%s5 + $0x1150] sm:$0xff]
        %v3432 = vld [vmem:[%s5 + $0x1158] sm:$0xff]
        %v3433 = vld [vmem:[%s5 + $0x1160] sm:$0xff]
        %v3434 = vld [vmem:[%s5 + $0x1168] sm:$0xff]
        %v3435 = vld [vmem:[%s5 + $0x1170] sm:$0xff]
        %v3436 = vld [vmem:[%s5 + $0x1178] sm:$0xff]
        %v3437 = vld [vmem:[%s5 + $0x1180] sm:$0xff]
        %v3438 = vld [vmem:[%s5 + $0x1188] sm:$0xff]
        %v3439 = vld [vmem:[%s5 + $0x1190] sm:$0xff]
        %v3440 = vld [vmem:[%s5 + $0x1198] sm:$0xff]
        %v3441 = vld [vmem:[%s5 + $0x11a0] sm:$0xff]
        %v3442 = vld [vmem:[%s5 + $0x11a8] sm:$0xff]
        %v3443 = vld [vmem:[%s5 + $0x11b0] sm:$0xff]
        %v3444 = vld [vmem:[%s5 + $0x11b8] sm:$0xff]
        %v3445 = vld [vmem:[%s5 + $0x11c0] sm:$0xff]
        %v3446 = vld [vmem:[%s5 + $0x11c8] sm:$0xff]
        %v3447 = vld [vmem:[%s5 + $0x11d0] sm:$0xff]
        %v3448 = vld [vmem:[%s5 + $0x11d8] sm:$0xff]
        %v3449 = vld [vmem:[%s5 + $0x11e0] sm:$0xff]
        %v3450 = vld [vmem:[%s5 + $0x11e8] sm:$0xff]
        %v3451 = vld [vmem:[%s5 + $0x11f0] sm:$0xff]
        %v3452 = vld [vmem:[%s5 + $0x11f8] sm:$0xff]
        %v3453 = vld [vmem:[%s5 + $0x1200] sm:$0xff]
        %v3454 = vld [vmem:[%s5 + $0x1208] sm:$0xff]
        %v3455 = vld [vmem:[%s5 + $0x1210] sm:$0xff]
        %v3456 = vld [vmem:[%s5 + $0x1218] sm:$0xff]
        %v3457 = vld [vmem:[%s5 + $0x1220] sm:$0xff]
        %v3458 = vld [vmem:[%s5 + $0x1228] sm:$0xff]
        %v3459 = vld [vmem:[%s5 + $0x1230] sm:$0xff]
        %v3460 = vld [vmem:[%s5 + $0x1238] sm:$0xff]
        %v3461 = vld [vmem:[%s5 + $0x1240] sm:$0xff]
        %v3462 = vld [vmem:[%s5 + $0x1248] sm:$0xff]
        %v3463 = vld [vmem:[%s5 + $0x1250] sm:$0xff]
        %v3464 = vld [vmem:[%s5 + $0x1258] sm:$0xff]
        %v3465 = vld [vmem:[%s5 + $0x1260] sm:$0xff]
        %v3466 = vld [vmem:[%s5 + $0x1268] sm:$0xff]
        %v3467 = vld [vmem:[%s5 + $0x1270] sm:$0xff]
        %v3468 = vld [vmem:[%s5 + $0x1278] sm:$0xff]
        %v3469 = vld [vmem:[%s5 + $0x1280] sm:$0xff]
        %v3470 = vld [vmem:[%s5 + $0x1288] sm:$0xff]
        %v3471 = vld [vmem:[%s5 + $0x1290] sm:$0xff]
        %v3472 = vld [vmem:[%s5 + $0x1298] sm:$0xff]
        %v3473 = vld [vmem:[%s5 + $0x12a0] sm:$0xff]
        %v3474 = vld [vmem:[%s5 + $0x12a8] sm:$0xff]
        %v3475 = vld [vmem:[%s5 + $0x12b0] sm:$0xff]
        %v3476 = vld [vmem:[%s5 + $0x12b8] sm:$0xff]
        %v3477 = vld [vmem:[%s5 + $0x12c0] sm:$0xff]
        %v3478 = vld [vmem:[%s5 + $0x12c8] sm:$0xff]
        %v3479 = vld [vmem:[%s5 + $0x12d0] sm:$0xff]
        %v3480 = vld [vmem:[%s5 + $0x12d8] sm:$0xff]
        %v3481 = vld [vmem:[%s5 + $0x12e0] sm:$0xff]
        %v3482 = vld [vmem:[%s5 + $0x12e8] sm:$0xff]
        %v3483 = vld [vmem:[%s5 + $0x12f0] sm:$0xff]
        %v3484 = vld [vmem:[%s5 + $0x12f8] sm:$0xff]
        %v3485 = vld [vmem:[%s5 + $0x1300] sm:$0xff]
        %v3486 = vld [vmem:[%s5 + $0x1308] sm:$0xff]
        %v3487 = vld [vmem:[%s5 + $0x1310] sm:$0xff]
        %v3488 = vld [vmem:[%s5 + $0x1318] sm:$0xff]
        %v3489 = vld [vmem:[%s5 + $0x1320] sm:$0xff]
        %v3490 = vld [vmem:[%s5 + $0x1328] sm:$0xff]
        %v3491 = vld [vmem:[%s5 + $0x1330] sm:$0xff]
        %v3492 = vld [vmem:[%s5 + $0x1338] sm:$0xff]
        %v3493 = vld [vmem:[%s5 + $0x1340] sm:$0xff]
        %v3494 = vld [vmem:[%s5 + $0x1348] sm:$0xff]
        %v3495 = vld [vmem:[%s5 + $0x1350] sm:$0xff]
        %v3496 = vld [vmem:[%s5 + $0x1358] sm:$0xff]
        %v3497 = vld [vmem:[%s5 + $0x1360] sm:$0xff]
        %v3498 = vld [vmem:[%s5 + $0x1368] sm:$0xff]
        %v3499 = vld [vmem:[%s5 + $0x1370] sm:$0xff]
        %v3500 = vld [vmem:[%s5 + $0x1378] sm:$0xff]
        %v3501 = vld [vmem:[%s5 + $0x1380] sm:$0xff]
        %v3502 = vld [vmem:[%s5 + $0x1388] sm:$0xff]
        %v3503 = vld [vmem:[%s5 + $0x1390] sm:$0xff]
        %v3504 = vld [vmem:[%s5 + $0x1398] sm:$0xff]
        %v3505 = vld [vmem:[%s5 + $0x13a0] sm:$0xff]
        %v3506 = vld [vmem:[%s5 + $0x13a8] sm:$0xff]
        %v3507 = vld [vmem:[%s5 + $0x13b0] sm:$0xff]
        %v3508 = vld [vmem:[%s5 + $0x13b8] sm:$0xff]
        %v3509 = vld [vmem:[%s5 + $0x13c0] sm:$0xff]
        %v3510 = vld [vmem:[%s5 + $0x13c8] sm:$0xff]
        %v3511 = vld [vmem:[%s5 + $0x13d0] sm:$0xff]
        %v3512 = vld [vmem:[%s5 + $0x13d8] sm:$0xff]
        %v3513 = vld [vmem:[%s5 + $0x13e0] sm:$0xff]
        %v3514 = vld [vmem:[%s5 + $0x13e8] sm:$0xff]
        %v3515 = vld [vmem:[%s5 + $0x13f0] sm:$0xff]
        %v3516 = vld [vmem:[%s5 + $0x13f8] sm:$0xff]
        %v3517 = vld [vmem:[%s5 + $0x1400] sm:$0xff]
        %v3518 = vld [vmem:[%s5 + $0x1408] sm:$0xff]
        %v3519 = vld [vmem:[%s5 + $0x1410] sm:$0xff]
        %v3520 = vld [vmem:[%s5 + $0x1418] sm:$0xff]
        %v3521 = vld [vmem:[%s5 + $0x1420] sm:$0xff]
        %v3522 = vld [vmem:[%s5 + $0x1428] sm:$0xff]
        %v3523 = vld [vmem:[%s5 + $0x1430] sm:$0xff]
        %v3524 = vld [vmem:[%s5 + $0x1438] sm:$0xff]
        %v3525 = vld [vmem:[%s5 + $0x1440] sm:$0xff]
        %v3526 = vld [vmem:[%s5 + $0x1448] sm:$0xff]
        %v3527 = vld [vmem:[%s5 + $0x1450] sm:$0xff]
        %v3528 = vld [vmem:[%s5 + $0x1458] sm:$0xff]
        %v3529 = vld [vmem:[%s5 + $0x1460] sm:$0xff]
        %v3530 = vld [vmem:[%s5 + $0x1468] sm:$0xff]
        %v3531 = vld [vmem:[%s5 + $0x1470] sm:$0xff]
        %v3532 = vld [vmem:[%s5 + $0x1478] sm:$0xff]
        %v3533 = vld [vmem:[%s5 + $0x1480] sm:$0xff]
        %v3534 = vld [vmem:[%s5 + $0x1488] sm:$0xff]
        %v3535 = vld [vmem:[%s5 + $0x1490] sm:$0xff]
        %v3536 = vld [vmem:[%s5 + $0x1498] sm:$0xff]
        %v3537 = vld [vmem:[%s5 + $0x14a0] sm:$0xff]
        %v3538 = vld [vmem:[%s5 + $0x14a8] sm:$0xff]
        %v3539 = vld [vmem:[%s5 + $0x14b0] sm:$0xff]
        %v3540 = vld [vmem:[%s5 + $0x14b8] sm:$0xff]
        %v3541 = vld [vmem:[%s5 + $0x14c0] sm:$0xff]
        %v3542 = vld [vmem:[%s5 + $0x14c8] sm:$0xff]
        %v3543 = vld [vmem:[%s5 + $0x14d0] sm:$0xff]
        %v3544 = vld [vmem:[%s5 + $0x14d8] sm:$0xff]
        %v3545 = vld [vmem:[%s5 + $0x14e0] sm:$0xff]
        %v3546 = vld [vmem:[%s5 + $0x14e8] sm:$0xff]
        %v3547 = vld [vmem:[%s5 + $0x14f0] sm:$0xff]
        %v3548 = vld [vmem:[%s5 + $0x14f8] sm:$0xff]
        %v3549 = vld [vmem:[%s5 + $0x1500] sm:$0xff]
        %v3550 = vld [vmem:[%s5 + $0x1508] sm:$0xff]
        %v3551 = vld [vmem:[%s5 + $0x1510] sm:$0xff]
        %v3552 = vld [vmem:[%s5 + $0x1518] sm:$0xff]
        %v3553 = vld [vmem:[%s5 + $0x1520] sm:$0xff]
        %v3554 = vld [vmem:[%s5 + $0x1528] sm:$0xff]
        %v3555 = vld [vmem:[%s5 + $0x1530] sm:$0xff]
        %v3556 = vld [vmem:[%s5 + $0x1538] sm:$0xff]
        %v3557 = vld [vmem:[%s5 + $0x1540] sm:$0xff]
        %v3558 = vld [vmem:[%s5 + $0x1548] sm:$0xff]
        %v3559 = vld [vmem:[%s5 + $0x1550] sm:$0xff]
        %v3560 = vld [vmem:[%s5 + $0x1558] sm:$0xff]
        %v3561 = vld [vmem:[%s5 + $0x1560] sm:$0xff]
        %v3562 = vld [vmem:[%s5 + $0x1568] sm:$0xff]
        %v3563 = vld [vmem:[%s5 + $0x1570] sm:$0xff]
        %v3564 = vld [vmem:[%s5 + $0x1578] sm:$0xff]
        %v3565 = vld [vmem:[%s5 + $0x1580] sm:$0xff]
        %v3566 = vld [vmem:[%s5 + $0x1588] sm:$0xff]
        %v3567 = vld [vmem:[%s5 + $0x1590] sm:$0xff]
        %v3568 = vld [vmem:[%s5 + $0x1598] sm:$0xff]
        %v3569 = vld [vmem:[%s5 + $0x15a0] sm:$0xff]
        %v3570 = vld [vmem:[%s5 + $0x15a8] sm:$0xff]
        %v3571 = vld [vmem:[%s5 + $0x15b0] sm:$0xff]
        %v3572 = vld [vmem:[%s5 + $0x15b8] sm:$0xff]
        %v3573 = vld [vmem:[%s5 + $0x15c0] sm:$0xff]
        %v3574 = vld [vmem:[%s5 + $0x15c8] sm:$0xff]
        %v3575 = vld [vmem:[%s5 + $0x15d0] sm:$0xff]
        %v3576 = vld [vmem:[%s5 + $0x15d8] sm:$0xff]
        %v3577 = vld [vmem:[%s5 + $0x15e0] sm:$0xff]
        %v3578 = vld [vmem:[%s5 + $0x15e8] sm:$0xff]
        %v3579 = vld [vmem:[%s5 + $0x15f0] sm:$0xff]
        %v3580 = vld [vmem:[%s5 + $0x15f8] sm:$0xff]
        %v3581 = vld [vmem:[%s5 + $0x1600] sm:$0xff]
        %v3582 = vld [vmem:[%s5 + $0x1608] sm:$0xff]
        %v3583 = vld [vmem:[%s5 + $0x1610] sm:$0xff]
        %v3584 = vld [vmem:[%s5 + $0x1618] sm:$0xff]
        %v3585 = vld [vmem:[%s5 + $0x1620] sm:$0xff]
        %v3586 = vld [vmem:[%s5 + $0x1628] sm:$0xff]
        %v3587 = vld [vmem:[%s5 + $0x1630] sm:$0xff]
        %v3588 = vld [vmem:[%s5 + $0x1638] sm:$0xff]
        %v3589 = vld [vmem:[%s5 + $0x1640] sm:$0xff]
        %v3590 = vld [vmem:[%s5 + $0x1648] sm:$0xff]
        %v3591 = vld [vmem:[%s5 + $0x1650] sm:$0xff]
        %v3592 = vld [vmem:[%s5 + $0x1658] sm:$0xff]
        %v3593 = vld [vmem:[%s5 + $0x1660] sm:$0xff]
        %v3594 = vld [vmem:[%s5 + $0x1668] sm:$0xff]
        %v3595 = vld [vmem:[%s5 + $0x1670] sm:$0xff]
        %v3596 = vld [vmem:[%s5 + $0x1678] sm:$0xff]
        %v3597 = vld [vmem:[%s5 + $0x1680] sm:$0xff]
        %v3598 = vld [vmem:[%s5 + $0x1688] sm:$0xff]
        %v3599 = vld [vmem:[%s5 + $0x1690] sm:$0xff]
        %v3600 = vld [vmem:[%s5 + $0x1698] sm:$0xff]
        %v3601 = vld [vmem:[%s5 + $0x16a0] sm:$0xff]
        %v3602 = vld [vmem:[%s5 + $0x16a8] sm:$0xff]
        %v3603 = vld [vmem:[%s5 + $0x16b0] sm:$0xff]
        %v3604 = vld [vmem:[%s5 + $0x16b8] sm:$0xff]
        %v3605 = vld [vmem:[%s5 + $0x16c0] sm:$0xff]
        %v3606 = vld [vmem:[%s5 + $0x16c8] sm:$0xff]
        %v3607 = vld [vmem:[%s5 + $0x16d0] sm:$0xff]
        %v3608 = vld [vmem:[%s5 + $0x16d8] sm:$0xff]
        %v3609 = vld [vmem:[%s5 + $0x16e0] sm:$0xff]
        %v3610 = vld [vmem:[%s5 + $0x16e8] sm:$0xff]
        %v3611 = vld [vmem:[%s5 + $0x16f0] sm:$0xff]
        %v3612 = vld [vmem:[%s5 + $0x16f8] sm:$0xff]
        %v3613 = vld [vmem:[%s5 + $0x1700] sm:$0xff]
        %v3614 = vld [vmem:[%s5 + $0x1708] sm:$0xff]
        %v3615 = vld [vmem:[%s5 + $0x1710] sm:$0xff]
        %v3616 = vld [vmem:[%s5 + $0x1718] sm:$0xff]
        %v3617 = vld [vmem:[%s5 + $0x1720] sm:$0xff]
        %v3618 = vld [vmem:[%s5 + $0x1728] sm:$0xff]
        %v3619 = vld [vmem:[%s5 + $0x1730] sm:$0xff]
        %v3620 = vld [vmem:[%s5 + $0x1738] sm:$0xff]
        %v3621 = vld [vmem:[%s5 + $0x1740] sm:$0xff]
        %v3622 = vld [vmem:[%s5 + $0x1748] sm:$0xff]
        %v3623 = vld [vmem:[%s5 + $0x1750] sm:$0xff]
        %v3624 = vld [vmem:[%s5 + $0x1758] sm:$0xff]
        %v3625 = vld [vmem:[%s5 + $0x1760] sm:$0xff]
        %v3626 = vld [vmem:[%s5 + $0x1768] sm:$0xff]
        %v3627 = vld [vmem:[%s5 + $0x1770] sm:$0xff]
        %v3628 = vld [vmem:[%s5 + $0x1778] sm:$0xff]
        %v3629 = vld [vmem:[%s5 + $0x1780] sm:$0xff]
        %v3630 = vld [vmem:[%s5 + $0x1788] sm:$0xff]
        %v3631 = vld [vmem:[%s5 + $0x1790] sm:$0xff]
        %v3632 = vld [vmem:[%s5 + $0x1798] sm:$0xff]
        %v3633 = vld [vmem:[%s5 + $0x17a0] sm:$0xff]
        %v3634 = vld [vmem:[%s5 + $0x17a8] sm:$0xff]
        %v3635 = vld [vmem:[%s5 + $0x17b0] sm:$0xff]
        %v3636 = vld [vmem:[%s5 + $0x17b8] sm:$0xff]
        %v3637 = vld [vmem:[%s5 + $0x17c0] sm:$0xff]
        %v3638 = vld [vmem:[%s5 + $0x17c8] sm:$0xff]
        %v3639 = vld [vmem:[%s5 + $0x17d0] sm:$0xff]
        %v3640 = vld [vmem:[%s5 + $0x17d8] sm:$0xff]
        %v3641 = vld [vmem:[%s5 + $0x17e0] sm:$0xff]
        %v3642 = vld [vmem:[%s5 + $0x17e8] sm:$0xff]
        %v3643 = vld [vmem:[%s5 + $0x17f0] sm:$0xff]
        %v3644 = vld [vmem:[%s5 + $0x17f8] sm:$0xff]
        %v3645 = vld [vmem:[%s5 + $0x1800] sm:$0xff]
        %v3646 = vld [vmem:[%s5 + $0x1808] sm:$0xff]
        %v3647 = vld [vmem:[%s5 + $0x1810] sm:$0xff]
        %v3648 = vld [vmem:[%s5 + $0x1818] sm:$0xff]
        %v3649 = vld [vmem:[%s5 + $0x1820] sm:$0xff]
        %v3650 = vld [vmem:[%s5 + $0x1828] sm:$0xff]
        %v3651 = vld [vmem:[%s5 + $0x1830] sm:$0xff]
        %v3652 = vld [vmem:[%s5 + $0x1838] sm:$0xff]
        %v3653 = vld [vmem:[%s5 + $0x1840] sm:$0xff]
        %v3654 = vld [vmem:[%s5 + $0x1848] sm:$0xff]
        %v3655 = vld [vmem:[%s5 + $0x1850] sm:$0xff]
        %v3656 = vld [vmem:[%s5 + $0x1858] sm:$0xff]
        %v3657 = vld [vmem:[%s5 + $0x1860] sm:$0xff]
        %v3658 = vld [vmem:[%s5 + $0x1868] sm:$0xff]
        %v3659 = vld [vmem:[%s5 + $0x1870] sm:$0xff]
        %v3660 = vld [vmem:[%s5 + $0x1878] sm:$0xff]
        %v3661 = vld [vmem:[%s5 + $0x1880] sm:$0xff]
        %v3662 = vld [vmem:[%s5 + $0x1888] sm:$0xff]
        %v3663 = vld [vmem:[%s5 + $0x1890] sm:$0xff]
        %v3664 = vld [vmem:[%s5 + $0x1898] sm:$0xff]
        %v3665 = vld [vmem:[%s5 + $0x18a0] sm:$0xff]
        %v3666 = vld [vmem:[%s5 + $0x18a8] sm:$0xff]
        %v3667 = vld [vmem:[%s5 + $0x18b0] sm:$0xff]
        %v3668 = vld [vmem:[%s5 + $0x18b8] sm:$0xff]
        %v3669 = vld [vmem:[%s5 + $0x18c0] sm:$0xff]
        %v3670 = vld [vmem:[%s5 + $0x18c8] sm:$0xff]
        %v3671 = vld [vmem:[%s5 + $0x18d0] sm:$0xff]
        %v3672 = vld [vmem:[%s5 + $0x18d8] sm:$0xff]
        %v3673 = vld [vmem:[%s5 + $0x18e0] sm:$0xff]
        %v3674 = vld [vmem:[%s5 + $0x18e8] sm:$0xff]
        %v3675 = vld [vmem:[%s5 + $0x18f0] sm:$0xff]
        %v3676 = vld [vmem:[%s5 + $0x18f8] sm:$0xff]
        %v3677 = vld [vmem:[%s5 + $0x1900] sm:$0xff]
        %v3678 = vld [vmem:[%s5 + $0x1908] sm:$0xff]
        %v3679 = vld [vmem:[%s5 + $0x1910] sm:$0xff]
        %v3680 = vld [vmem:[%s5 + $0x1918] sm:$0xff]
        %v3681 = vld [vmem:[%s5 + $0x1920] sm:$0xff]
        %v3682 = vld [vmem:[%s5 + $0x1928] sm:$0xff]
        %v3683 = vld [vmem:[%s5 + $0x1930] sm:$0xff]
        %v3684 = vld [vmem:[%s5 + $0x1938] sm:$0xff]
        %v3685 = vld [vmem:[%s5 + $0x1940] sm:$0xff]
        %v3686 = vld [vmem:[%s5 + $0x1948] sm:$0xff]
        %v3687 = vld [vmem:[%s5 + $0x1950] sm:$0xff]
        %v3688 = vld [vmem:[%s5 + $0x1958] sm:$0xff]
        %v3689 = vld [vmem:[%s5 + $0x1960] sm:$0xff]
        %v3690 = vld [vmem:[%s5 + $0x1968] sm:$0xff]
        %v3691 = vld [vmem:[%s5 + $0x1970] sm:$0xff]
        %v3692 = vld [vmem:[%s5 + $0x1978] sm:$0xff]
        %v3693 = vld [vmem:[%s5 + $0x1980] sm:$0xff]
        %v3694 = vld [vmem:[%s5 + $0x1988] sm:$0xff]
        %v3695 = vld [vmem:[%s5 + $0x1990] sm:$0xff]
        %v3696 = vld [vmem:[%s5 + $0x1998] sm:$0xff]
        %v3697 = vld [vmem:[%s5 + $0x19a0] sm:$0xff]
        %v3698 = vld [vmem:[%s5 + $0x19a8] sm:$0xff]
        %v3699 = vld [vmem:[%s5 + $0x19b0] sm:$0xff]
        %v3700 = vld [vmem:[%s5 + $0x19b8] sm:$0xff]
        %v3701 = vld [vmem:[%s5 + $0x19c0] sm:$0xff]
        %v3702 = vld [vmem:[%s5 + $0x19c8] sm:$0xff]
        %v3703 = vld [vmem:[%s5 + $0x19d0] sm:$0xff]
        %v3704 = vld [vmem:[%s5 + $0x19d8] sm:$0xff]
        %v3705 = vld [vmem:[%s5 + $0x19e0] sm:$0xff]
        %v3706 = vld [vmem:[%s5 + $0x19e8] sm:$0xff]
        %v3707 = vld [vmem:[%s5 + $0x19f0] sm:$0xff]
        %v3708 = vld [vmem:[%s5 + $0x19f8] sm:$0xff]
        %v3709 = vld [vmem:[%s5 + $0x1a00] sm:$0xff]
        %v3710 = vld [vmem:[%s5 + $0x1a08] sm:$0xff]
        %v3711 = vld [vmem:[%s5 + $0x1a10] sm:$0xff]
        %v3712 = vld [vmem:[%s5 + $0x1a18] sm:$0xff]
        %v3713 = vld [vmem:[%s5 + $0x1a20] sm:$0xff]
        %v3714 = vld [vmem:[%s5 + $0x1a28] sm:$0xff]
        %v3715 = vld [vmem:[%s5 + $0x1a30] sm:$0xff]
        %v3716 = vld [vmem:[%s5 + $0x1a38] sm:$0xff]
        %v3717 = vld [vmem:[%s5 + $0x1a40] sm:$0xff]
        %v3718 = vld [vmem:[%s5 + $0x1a48] sm:$0xff]
        %v3719 = vld [vmem:[%s5 + $0x1a50] sm:$0xff]
        %v3720 = vld [vmem:[%s5 + $0x1a58] sm:$0xff]
        %v3721 = vld [vmem:[%s5 + $0x1a60] sm:$0xff]
        %v3722 = vld [vmem:[%s5 + $0x1a68] sm:$0xff]
        %v3723 = vld [vmem:[%s5 + $0x1a70] sm:$0xff]
        %v3724 = vld [vmem:[%s5 + $0x1a78] sm:$0xff]
        %v3725 = vld [vmem:[%s5 + $0x1a80] sm:$0xff]
        %v3726 = vld [vmem:[%s5 + $0x1a88] sm:$0xff]
        %v3727 = vld [vmem:[%s5 + $0x1a90] sm:$0xff]
        %v3728 = vld [vmem:[%s5 + $0x1a98] sm:$0xff]
        %v3729 = vld [vmem:[%s5 + $0x1aa0] sm:$0xff]
        %v3730 = vld [vmem:[%s5 + $0x1aa8] sm:$0xff]
        %v3731 = vld [vmem:[%s5 + $0x1ab0] sm:$0xff]
        %v3732 = vld [vmem:[%s5 + $0x1ab8] sm:$0xff]
        %v3733 = vld [vmem:[%s5 + $0x1ac0] sm:$0xff]
        %v3734 = vld [vmem:[%s5 + $0x1ac8] sm:$0xff]
        %v3735 = vld [vmem:[%s5 + $0x1ad0] sm:$0xff]
        %v3736 = vld [vmem:[%s5 + $0x1ad8] sm:$0xff]
        %v3737 = vld [vmem:[%s5 + $0x1ae0] sm:$0xff]
        %v3738 = vld [vmem:[%s5 + $0x1ae8] sm:$0xff]
        %v3739 = vld [vmem:[%s5 + $0x1af0] sm:$0xff]
        %v3740 = vld [vmem:[%s5 + $0x1af8] sm:$0xff]
        %v3741 = vld [vmem:[%s5 + $0x1b00] sm:$0xff]
        %v3742 = vld [vmem:[%s5 + $0x1b08] sm:$0xff]
        %v3743 = vld [vmem:[%s5 + $0x1b10] sm:$0xff]
        %v3744 = vld [vmem:[%s5 + $0x1b18] sm:$0xff]
        %v3745 = vld [vmem:[%s5 + $0x1b20] sm:$0xff]
        %v3746 = vld [vmem:[%s5 + $0x1b28] sm:$0xff]
        %v3747 = vld [vmem:[%s5 + $0x1b30] sm:$0xff]
        %v3748 = vld [vmem:[%s5 + $0x1b38] sm:$0xff]
        %v3749 = vld [vmem:[%s5 + $0x1b40] sm:$0xff]
        %v3750 = vld [vmem:[%s5 + $0x1b48] sm:$0xff]
        %v3751 = vld [vmem:[%s5 + $0x1b50] sm:$0xff]
        %v3752 = vld [vmem:[%s5 + $0x1b58] sm:$0xff]
        %v3753 = vld [vmem:[%s5 + $0x1b60] sm:$0xff]
        %v3754 = vld [vmem:[%s5 + $0x1b68] sm:$0xff]
        %v3755 = vld [vmem:[%s5 + $0x1b70] sm:$0xff]
        %v3756 = vld [vmem:[%s5 + $0x1b78] sm:$0xff]
        %v3757 = vld [vmem:[%s5 + $0x1b80] sm:$0xff]
        %v3758 = vld [vmem:[%s5 + $0x1b88] sm:$0xff]
        %v3759 = vld [vmem:[%s5 + $0x1b90] sm:$0xff]
        %v3760 = vld [vmem:[%s5 + $0x1b98] sm:$0xff]
        %v3761 = vld [vmem:[%s5 + $0x1ba0] sm:$0xff]
        %v3762 = vld [vmem:[%s5 + $0x1ba8] sm:$0xff]
        %v3763 = vld [vmem:[%s5 + $0x1bb0] sm:$0xff]
        %v3764 = vld [vmem:[%s5 + $0x1bb8] sm:$0xff]
        %v3765 = vld [vmem:[%s5 + $0x1bc0] sm:$0xff]
        %v3766 = vld [vmem:[%s5 + $0x1bc8] sm:$0xff]
        %v3767 = vld [vmem:[%s5 + $0x1bd0] sm:$0xff]
        %v3768 = vld [vmem:[%s5 + $0x1bd8] sm:$0xff]
        %v3769 = vld [vmem:[%s5 + $0x1be0] sm:$0xff]
        %v3770 = vld [vmem:[%s5 + $0x1be8] sm:$0xff]
        %v3771 = vld [vmem:[%s5 + $0x1bf0] sm:$0xff]
        %v3772 = vld [vmem:[%s5 + $0x1bf8] sm:$0xff]
        %v3773 = vld [vmem:[%s5 + $0x1c00] sm:$0xff]
        %v3774 = vld [vmem:[%s5 + $0x1c08] sm:$0xff]
        %v3775 = vld [vmem:[%s5 + $0x1c10] sm:$0xff]
        %v3776 = vld [vmem:[%s5 + $0x1c18] sm:$0xff]
        %v3777 = vld [vmem:[%s5 + $0x1c20] sm:$0xff]
        %v3778 = vld [vmem:[%s5 + $0x1c28] sm:$0xff]
        %v3779 = vld [vmem:[%s5 + $0x1c30] sm:$0xff]
        %v3780 = vld [vmem:[%s5 + $0x1c38] sm:$0xff]
        %v3781 = vld [vmem:[%s5 + $0x1c40] sm:$0xff]
        %v3782 = vld [vmem:[%s5 + $0x1c48] sm:$0xff]
        %v3783 = vld [vmem:[%s5 + $0x1c50] sm:$0xff]
        %v3784 = vld [vmem:[%s5 + $0x1c58] sm:$0xff]
        %v3785 = vld [vmem:[%s5 + $0x1c60] sm:$0xff]
        %v3786 = vld [vmem:[%s5 + $0x1c68] sm:$0xff]
        %v3787 = vld [vmem:[%s5 + $0x1c70] sm:$0xff]
        %v3788 = vld [vmem:[%s5 + $0x1c78] sm:$0xff]
        %v3789 = vld [vmem:[%s5 + $0x1c80] sm:$0xff]
        %v3790 = vld [vmem:[%s5 + $0x1c88] sm:$0xff]
        %v3791 = vld [vmem:[%s5 + $0x1c90] sm:$0xff]
        %v3792 = vld [vmem:[%s5 + $0x1c98] sm:$0xff]
        %v3793 = vld [vmem:[%s5 + $0x1ca0] sm:$0xff]
        %v3794 = vld [vmem:[%s5 + $0x1ca8] sm:$0xff]
        %v3795 = vld [vmem:[%s5 + $0x1cb0] sm:$0xff]
        %v3796 = vld [vmem:[%s5 + $0x1cb8] sm:$0xff]
        %v3797 = vld [vmem:[%s5 + $0x1cc0] sm:$0xff]
        %v3798 = vld [vmem:[%s5 + $0x1cc8] sm:$0xff]
        %v3799 = vld [vmem:[%s5 + $0x1cd0] sm:$0xff]
        %v3800 = vld [vmem:[%s5 + $0x1cd8] sm:$0xff]
        %v3801 = vld [vmem:[%s5 + $0x1ce0] sm:$0xff]
        %v3802 = vld [vmem:[%s5 + $0x1ce8] sm:$0xff]
        %v3803 = vld [vmem:[%s5 + $0x1cf0] sm:$0xff]
        %v3804 = vld [vmem:[%s5 + $0x1cf8] sm:$0xff]
        %v3805 = vld [vmem:[%s5 + $0x1d00] sm:$0xff]
        %v3806 = vld [vmem:[%s5 + $0x1d08] sm:$0xff]
        %v3807 = vld [vmem:[%s5 + $0x1d10] sm:$0xff]
        %v3808 = vld [vmem:[%s5 + $0x1d18] sm:$0xff]
        %v3809 = vld [vmem:[%s5 + $0x1d20] sm:$0xff]
        %v3810 = vld [vmem:[%s5 + $0x1d28] sm:$0xff]
        %v3811 = vld [vmem:[%s5 + $0x1d30] sm:$0xff]
        %v3812 = vld [vmem:[%s5 + $0x1d38] sm:$0xff]
        %v3813 = vld [vmem:[%s5 + $0x1d40] sm:$0xff]
        %v3814 = vld [vmem:[%s5 + $0x1d48] sm:$0xff]
        %v3815 = vld [vmem:[%s5 + $0x1d50] sm:$0xff]
        %v3816 = vld [vmem:[%s5 + $0x1d58] sm:$0xff]
        %v3817 = vld [vmem:[%s5 + $0x1d60] sm:$0xff]
        %v3818 = vld [vmem:[%s5 + $0x1d68] sm:$0xff]
        %v3819 = vld [vmem:[%s5 + $0x1d70] sm:$0xff]
        %v3820 = vld [vmem:[%s5 + $0x1d78] sm:$0xff]
        %v3821 = vld [vmem:[%s5 + $0x1d80] sm:$0xff]
        %v3822 = vld [vmem:[%s5 + $0x1d88] sm:$0xff]
        %v3823 = vld [vmem:[%s5 + $0x1d90] sm:$0xff]
        %v3824 = vld [vmem:[%s5 + $0x1d98] sm:$0xff]
        %v3825 = vld [vmem:[%s5 + $0x1da0] sm:$0xff]
        %v3826 = vld [vmem:[%s5 + $0x1da8] sm:$0xff]
        %v3827 = vld [vmem:[%s5 + $0x1db0] sm:$0xff]
        %v3828 = vld [vmem:[%s5 + $0x1db8] sm:$0xff]
        %v3829 = vld [vmem:[%s5 + $0x1dc0] sm:$0xff]
        %v3830 = vld [vmem:[%s5 + $0x1dc8] sm:$0xff]
        %v3831 = vld [vmem:[%s5 + $0x1dd0] sm:$0xff]
        %v3832 = vld [vmem:[%s5 + $0x1dd8] sm:$0xff]
        %v3833 = vld [vmem:[%s5 + $0x1de0] sm:$0xff]
        %v3834 = vld [vmem:[%s5 + $0x1de8] sm:$0xff]
        %v3835 = vld [vmem:[%s5 + $0x1df0] sm:$0xff]
        %v3836 = vld [vmem:[%s5 + $0x1df8] sm:$0xff]
        %v3837 = vld [vmem:[%s5 + $0x1e00] sm:$0xff]
        %v3838 = vld [vmem:[%s5 + $0x1e08] sm:$0xff]
        %v3839 = vld [vmem:[%s5 + $0x1e10] sm:$0xff]
        %v3840 = vld [vmem:[%s5 + $0x1e18] sm:$0xff]
        %v3841 = vld [vmem:[%s5 + $0x1e20] sm:$0xff]
        %v3842 = vld [vmem:[%s5 + $0x1e28] sm:$0xff]
        %v3843 = vld [vmem:[%s5 + $0x1e30] sm:$0xff]
        %v3844 = vld [vmem:[%s5 + $0x1e38] sm:$0xff]
        %v3845 = vld [vmem:[%s5 + $0x1e40] sm:$0xff]
        %v3846 = vld [vmem:[%s5 + $0x1e48] sm:$0xff]
        %v3847 = vld [vmem:[%s5 + $0x1e50] sm:$0xff]
        %v3848 = vld [vmem:[%s5 + $0x1e58] sm:$0xff]
        %v3849 = vld [vmem:[%s5 + $0x1e60] sm:$0xff]
        %v3850 = vld [vmem:[%s5 + $0x1e68] sm:$0xff]
        %v3851 = vld [vmem:[%s5 + $0x1e70] sm:$0xff]
        %v3852 = vld [vmem:[%s5 + $0x1e78] sm:$0xff]
        %v3853 = vld [vmem:[%s5 + $0x1e80] sm:$0xff]
        %v3854 = vld [vmem:[%s5 + $0x1e88] sm:$0xff]
        %v3855 = vld [vmem:[%s5 + $0x1e90] sm:$0xff]
        %v3856 = vld [vmem:[%s5 + $0x1e98] sm:$0xff]
        %v3857 = vld [vmem:[%s5 + $0x1ea0] sm:$0xff]
        %v3858 = vld [vmem:[%s5 + $0x1ea8] sm:$0xff]
        %v3859 = vld [vmem:[%s5 + $0x1eb0] sm:$0xff]
        %v3860 = vld [vmem:[%s5 + $0x1eb8] sm:$0xff]
        %v3861 = vld [vmem:[%s5 + $0x1ec0] sm:$0xff]
        %v3862 = vld [vmem:[%s5 + $0x1ec8] sm:$0xff]
        %v3863 = vld [vmem:[%s5 + $0x1ed0] sm:$0xff]
        %v3864 = vld [vmem:[%s5 + $0x1ed8] sm:$0xff]
        %v3865 = vld [vmem:[%s5 + $0x1ee0] sm:$0xff]
        %v3866 = vld [vmem:[%s5 + $0x1ee8] sm:$0xff]
        %v3867 = vld [vmem:[%s5 + $0x1ef0] sm:$0xff]
        %v3868 = vld [vmem:[%s5 + $0x1ef8] sm:$0xff]
        %v3869 = vld [vmem:[%s5 + $0x1f00] sm:$0xff]
        %v3870 = vld [vmem:[%s5 + $0x1f08] sm:$0xff]
        %v3871 = vld [vmem:[%s5 + $0x1f10] sm:$0xff]
        %v3872 = vld [vmem:[%s5 + $0x1f18] sm:$0xff]
        %v3873 = vld [vmem:[%s5 + $0x1f20] sm:$0xff]
        %v3874 = vld [vmem:[%s5 + $0x1f28] sm:$0xff]
        %v3875 = vld [vmem:[%s5 + $0x1f30] sm:$0xff]
        %v3876 = vld [vmem:[%s5 + $0x1f38] sm:$0xff]
        %v3877 = vld [vmem:[%s5 + $0x1f40] sm:$0xff]
        %v3878 = vld [vmem:[%s5 + $0x1f48] sm:$0xff]
        %v3879 = vld [vmem:[%s5 + $0x1f50] sm:$0xff]
        %v3880 = vld [vmem:[%s5 + $0x1f58] sm:$0xff]
        %v3881 = vld [vmem:[%s5 + $0x1f60] sm:$0xff]
        %v3882 = vld [vmem:[%s5 + $0x1f68] sm:$0xff]
        %v3883 = vld [vmem:[%s5 + $0x1f70] sm:$0xff]
        %v3884 = vld [vmem:[%s5 + $0x1f78] sm:$0xff]
        %v3885 = vld [vmem:[%s5 + $0x1f80] sm:$0xff]
        %v3886 = vld [vmem:[%s5 + $0x1f88] sm:$0xff]
        %v3887 = vld [vmem:[%s5 + $0x1f90] sm:$0xff]
        %v3888 = vld [vmem:[%s5 + $0x1f98] sm:$0xff]
        %v3889 = vld [vmem:[%s5 + $0x1fa0] sm:$0xff]
        %v3890 = vld [vmem:[%s5 + $0x1fa8] sm:$0xff]
        %v3891 = vld [vmem:[%s5 + $0x1fb0] sm:$0xff]
        %v3892 = vld [vmem:[%s5 + $0x1fb8] sm:$0xff]
        %v3893 = vld [vmem:[%s5 + $0x1fc0] sm:$0xff]
        %v3894 = vld [vmem:[%s5 + $0x1fc8] sm:$0xff]
        %v3895 = vld [vmem:[%s5 + $0x1fd0] sm:$0xff]
        %v3896 = vld [vmem:[%s5 + $0x1fd8] sm:$0xff]
        %v3897 = vld [vmem:[%s5 + $0x1fe0] sm:$0xff]
        %v3898 = vld [vmem:[%s5 + $0x1fe8] sm:$0xff]
        %v3899 = vld [vmem:[%s5 + $0x1ff0] sm:$0xff]
        %v3900 = vld [vmem:[%s5 + $0x1ff8] sm:$0xff]
        %v3901 = vld [vmem:[%s5 + $0x2000] sm:$0xff]
        %v3902 = vld [vmem:[%s5 + $0x2008] sm:$0xff]
        %v3903 = vld [vmem:[%s5 + $0x2010] sm:$0xff]
        %v3904 = vld [vmem:[%s5 + $0x2018] sm:$0xff]
        %v3905 = vld [vmem:[%s5 + $0x2020] sm:$0xff]
        %v3906 = vld [vmem:[%s5 + $0x2028] sm:$0xff]
        %v3907 = vld [vmem:[%s5 + $0x2030] sm:$0xff]
        %v3908 = vld [vmem:[%s5 + $0x2038] sm:$0xff]
        %v3909 = vld [vmem:[%s5 + $0x2040] sm:$0xff]
        %v3910 = vld [vmem:[%s5 + $0x2048] sm:$0xff]
        %v3911 = vld [vmem:[%s5 + $0x2050] sm:$0xff]
        %v3912 = vld [vmem:[%s5 + $0x2058] sm:$0xff]
        %v3913 = vld [vmem:[%s5 + $0x2060] sm:$0xff]
        %v3914 = vld [vmem:[%s5 + $0x2068] sm:$0xff]
        %v3915 = vld [vmem:[%s5 + $0x2070] sm:$0xff]
        %v3916 = vld [vmem:[%s5 + $0x2078] sm:$0xff]
        %v3917 = vld [vmem:[%s5 + $0x2080] sm:$0xff]
        %v3918 = vld [vmem:[%s5 + $0x2088] sm:$0xff]
        %v3919 = vld [vmem:[%s5 + $0x2090] sm:$0xff]
        %v3920 = vld [vmem:[%s5 + $0x2098] sm:$0xff]
        %v3921 = vld [vmem:[%s5 + $0x20a0] sm:$0xff]
        %v3922 = vld [vmem:[%s5 + $0x20a8] sm:$0xff]
        %v3923 = vld [vmem:[%s5 + $0x20b0] sm:$0xff]
        %v3924 = vld [vmem:[%s5 + $0x20b8] sm:$0xff]
        %v3925 = vld [vmem:[%s5 + $0x20c0] sm:$0xff]
        %v3926 = vld [vmem:[%s5 + $0x20c8] sm:$0xff]
        %v3927 = vld [vmem:[%s5 + $0x20d0] sm:$0xff]
        %v3928 = vld [vmem:[%s5 + $0x20d8] sm:$0xff]
        %v3929 = vld [vmem:[%s5 + $0x20e0] sm:$0xff]
        %v3930 = vld [vmem:[%s5 + $0x20e8] sm:$0xff]
        %v3931 = vld [vmem:[%s5 + $0x20f0] sm:$0xff]
        %v3932 = vld [vmem:[%s5 + $0x20f8] sm:$0xff]
        %v3933 = vld [vmem:[%s5 + $0x2100] sm:$0xff]
        %v3934 = vld [vmem:[%s5 + $0x2108] sm:$0xff]
        %v3935 = vld [vmem:[%s5 + $0x2110] sm:$0xff]
        %v3936 = vld [vmem:[%s5 + $0x2118] sm:$0xff]
        %v3937 = vld [vmem:[%s5 + $0x2120] sm:$0xff]
        %v3938 = vld [vmem:[%s5 + $0x2128] sm:$0xff]
        %v3939 = vld [vmem:[%s5 + $0x2130] sm:$0xff]
        %v3940 = vld [vmem:[%s5 + $0x2138] sm:$0xff]
        %v3941 = vld [vmem:[%s5 + $0x2140] sm:$0xff]
        %v3942 = vld [vmem:[%s5 + $0x2148] sm:$0xff]
        %v3943 = vld [vmem:[%s5 + $0x2150] sm:$0xff]
        %v3944 = vld [vmem:[%s5 + $0x2158] sm:$0xff]
        %v3945 = vld [vmem:[%s5 + $0x2160] sm:$0xff]
        %v3946 = vld [vmem:[%s5 + $0x2168] sm:$0xff]
        %v3947 = vld [vmem:[%s5 + $0x2170] sm:$0xff]
        %v3948 = vld [vmem:[%s5 + $0x2178] sm:$0xff]
        %v3949 = vld [vmem:[%s5 + $0x2180] sm:$0xff]
        %v3950 = vld [vmem:[%s5 + $0x2188] sm:$0xff]
        %v3951 = vld [vmem:[%s5 + $0x2190] sm:$0xff]
        %v3952 = vld [vmem:[%s5 + $0x2198] sm:$0xff]
        %v3953 = vld [vmem:[%s5 + $0x21a0] sm:$0xff]
        %v3954 = vld [vmem:[%s5 + $0x21a8] sm:$0xff]
        %v3955 = vld [vmem:[%s5 + $0x21b0] sm:$0xff]
        %v3956 = vld [vmem:[%s5 + $0x21b8] sm:$0xff]
        %v3957 = vld [vmem:[%s5 + $0x21c0] sm:$0xff]
        %v3958 = vld [vmem:[%s5 + $0x21c8] sm:$0xff]
        %v3959 = vld [vmem:[%s5 + $0x21d0] sm:$0xff]
        %v3960 = vld [vmem:[%s5 + $0x21d8] sm:$0xff]
        %v3961 = vld [vmem:[%s5 + $0x21e0] sm:$0xff]
        %v3962 = vld [vmem:[%s5 + $0x21e8] sm:$0xff]
        %v3963 = vld [vmem:[%s5 + $0x21f0] sm:$0xff]
        %v3964 = vld [vmem:[%s5 + $0x21f8] sm:$0xff]
        %v3965 = vld [vmem:[%s5 + $0x2200] sm:$0xff]
        %v3966 = vld [vmem:[%s5 + $0x2208] sm:$0xff]
        %v3967 = vld [vmem:[%s5 + $0x2210] sm:$0xff]
        %v3968 = vld [vmem:[%s5 + $0x2218] sm:$0xff]
        %v3969 = vld [vmem:[%s5 + $0x2220] sm:$0xff]
        %v3970 = vld [vmem:[%s5 + $0x2228] sm:$0xff]
        %v3971 = vld [vmem:[%s5 + $0x2230] sm:$0xff]
        %v3972 = vld [vmem:[%s5 + $0x2238] sm:$0xff]
        %v3973 = vld [vmem:[%s5 + $0x2240] sm:$0xff]
        %v3974 = vld [vmem:[%s5 + $0x2248] sm:$0xff]
        %v3975 = vld [vmem:[%s5 + $0x2250] sm:$0xff]
        %v3976 = vld [vmem:[%s5 + $0x2258] sm:$0xff]
        %v3977 = vld [vmem:[%s5 + $0x2260] sm:$0xff]
        %v3978 = vld [vmem:[%s5 + $0x2268] sm:$0xff]
        %v3979 = vld [vmem:[%s5 + $0x2270] sm:$0xff]
        %v3980 = vld [vmem:[%s5 + $0x2278] sm:$0xff]
        %v3981 = vld [vmem:[%s5 + $0x2280] sm:$0xff]
        %v3982 = vld [vmem:[%s5 + $0x2288] sm:$0xff]
        %v3983 = vld [vmem:[%s5 + $0x2290] sm:$0xff]
        %v3984 = vld [vmem:[%s5 + $0x2298] sm:$0xff]
        %v3985 = vld [vmem:[%s5 + $0x22a0] sm:$0xff]
        %v3986 = vld [vmem:[%s5 + $0x22a8] sm:$0xff]
        %v3987 = vld [vmem:[%s5 + $0x22b0] sm:$0xff]
        %v3988 = vld [vmem:[%s5 + $0x22b8] sm:$0xff]
        %v3989 = vld [vmem:[%s5 + $0x22c0] sm:$0xff]
        %v3990 = vld [vmem:[%s5 + $0x22c8] sm:$0xff]
        %v3991 = vld [vmem:[%s5 + $0x22d0] sm:$0xff]
        %v3992 = vld [vmem:[%s5 + $0x22d8] sm:$0xff]
        %v3993 = vld [vmem:[%s5 + $0x22e0] sm:$0xff]
        %v3994 = vld [vmem:[%s5 + $0x22e8] sm:$0xff]
        %v3995 = vld [vmem:[%s5 + $0x22f0] sm:$0xff]
        %v3996 = vld [vmem:[%s5 + $0x22f8] sm:$0xff]
        %v3997 = vld [vmem:[%s5 + $0x2300] sm:$0xff]
        %v3998 = vld [vmem:[%s5 + $0x2308] sm:$0xff]
        %v3999 = vld [vmem:[%s5 + $0x2310] sm:$0xff]
        %v4000 = vld [vmem:[%s5 + $0x2318] sm:$0xff]
        %v4001 = vld [vmem:[%s5 + $0x2320] sm:$0xff]
        %v4002 = vld [vmem:[%s5 + $0x2328] sm:$0xff]
        %v4003 = vld [vmem:[%s5 + $0x2330] sm:$0xff]
        %v4004 = vld [vmem:[%s5 + $0x2338] sm:$0xff]
        %v4005 = vld [vmem:[%s5 + $0x2340] sm:$0xff]
        %v4006 = vld [vmem:[%s5 + $0x2348] sm:$0xff]
        %v4007 = vld [vmem:[%s5 + $0x2350] sm:$0xff]
        %v4008 = vld [vmem:[%s5 + $0x2358] sm:$0xff]
        %v4009 = vld [vmem:[%s5 + $0x2360] sm:$0xff]
        %v4010 = vld [vmem:[%s5 + $0x2368] sm:$0xff]
        %v4011 = vld [vmem:[%s5 + $0x2370] sm:$0xff]
        %v4012 = vld [vmem:[%s5 + $0x2378] sm:$0xff]
        %v4013 = vld [vmem:[%s5 + $0x2380] sm:$0xff]
        %v4014 = vld [vmem:[%s5 + $0x2388] sm:$0xff]
        %v4015 = vld [vmem:[%s5 + $0x2390] sm:$0xff]
        %v4016 = vld [vmem:[%s5 + $0x2398] sm:$0xff]
        %v4017 = vld [vmem:[%s5 + $0x23a0] sm:$0xff]
        %v4018 = vld [vmem:[%s5 + $0x23a8] sm:$0xff]
        %v4019 = vld [vmem:[%s5 + $0x23b0] sm:$0xff]
        %v4020 = vld [vmem:[%s5 + $0x23b8] sm:$0xff]
        %v4021 = vld [vmem:[%s5 + $0x23c0] sm:$0xff]
        %v4022 = vld [vmem:[%s5 + $0x23c8] sm:$0xff]
        %v4023 = vld [vmem:[%s5 + $0x23d0] sm:$0xff]
        %v4024 = vld [vmem:[%s5 + $0x23d8] sm:$0xff]
        %v4025 = vld [vmem:[%s5 + $0x23e0] sm:$0xff]
        %v4026 = vld [vmem:[%s5 + $0x23e8] sm:$0xff]
        %v4027 = vld [vmem:[%s5 + $0x23f0] sm:$0xff]
        %v4028 = vld [vmem:[%s5 + $0x23f8] sm:$0xff]
        %v4029 = vld [vmem:[%s5 + $0x2400] sm:$0xff]
        %v4030 = vld [vmem:[%s5 + $0x2408] sm:$0xff]
        %v4031 = vld [vmem:[%s5 + $0x2410] sm:$0xff]
        %v4032 = vld [vmem:[%s5 + $0x2418] sm:$0xff]
        %v4033 = vld [vmem:[%s5 + $0x2420] sm:$0xff]
        %v4034 = vld [vmem:[%s5 + $0x2428] sm:$0xff]
        %v4035 = vld [vmem:[%s5 + $0x2430] sm:$0xff]
        %v4036 = vld [vmem:[%s5 + $0x2438] sm:$0xff]
        %v4037 = vld [vmem:[%s5 + $0x2440] sm:$0xff]
        %v4038 = vld [vmem:[%s5 + $0x2448] sm:$0xff]
        %v4039 = vld [vmem:[%s5 + $0x2450] sm:$0xff]
        %v4040 = vld [vmem:[%s5 + $0x2458] sm:$0xff]
        %v4041 = vld [vmem:[%s5 + $0x2460] sm:$0xff]
        %v4042 = vld [vmem:[%s5 + $0x2468] sm:$0xff]
        %v4043 = vld [vmem:[%s5 + $0x2470] sm:$0xff]
        %v4044 = vld [vmem:[%s5 + $0x2478] sm:$0xff]
        %v4045 = vld [vmem:[%s5 + $0x2480] sm:$0xff]
        %v4046 = vld [vmem:[%s5 + $0x2488] sm:$0xff]
        %v4047 = vld [vmem:[%s5 + $0x2490] sm:$0xff]
        %v4048 = vld [vmem:[%s5 + $0x2498] sm:$0xff]
        %v4049 = vld [vmem:[%s5 + $0x24a0] sm:$0xff]
        %v4050 = vld [vmem:[%s5 + $0x24a8] sm:$0xff]
        %v4051 = vld [vmem:[%s5 + $0x24b0] sm:$0xff]
        %v4052 = vld [vmem:[%s5 + $0x24b8] sm:$0xff]
        %v4053 = vld [vmem:[%s5 + $0x24c0] sm:$0xff]
        %v4054 = vld [vmem:[%s5 + $0x24c8] sm:$0xff]
        %v4055 = vld [vmem:[%s5 + $0x24d0] sm:$0xff]
        %v4056 = vld [vmem:[%s5 + $0x24d8] sm:$0xff]
        %v4057 = vld [vmem:[%s5 + $0x24e0] sm:$0xff]
        %v4058 = vld [vmem:[%s5 + $0x24e8] sm:$0xff]
        %v4059 = vld [vmem:[%s5 + $0x24f0] sm:$0xff]
        %v4060 = vld [vmem:[%s5 + $0x24f8] sm:$0xff]
        %v4061 = vld [vmem:[%s5 + $0x2500] sm:$0xff]
        %v4062 = vld [vmem:[%s5 + $0x2508] sm:$0xff]
        %v4063 = vld [vmem:[%s5 + $0x2510] sm:$0xff]
        %v4064 = vld [vmem:[%s5 + $0x2518] sm:$0xff]
        %v4065 = vld [vmem:[%s5 + $0x2520] sm:$0xff]
        %v4066 = vld [vmem:[%s5 + $0x2528] sm:$0xff]
        %v4067 = vld [vmem:[%s5 + $0x2530] sm:$0xff]
        %v4068 = vld [vmem:[%s5 + $0x2538] sm:$0xff]
        %v4069 = vld [vmem:[%s5 + $0x2540] sm:$0xff]
        %v4070 = vld [vmem:[%s5 + $0x2548] sm:$0xff]
        %v4071 = vld [vmem:[%s5 + $0x2550] sm:$0xff]
        %v4072 = vld [vmem:[%s5 + $0x2558] sm:$0xff]
        %v4073 = vld [vmem:[%s5 + $0x2560] sm:$0xff]
        %v4074 = vld [vmem:[%s5 + $0x2568] sm:$0xff]
        %v4075 = vld [vmem:[%s5 + $0x2570] sm:$0xff]
        %v4076 = vld [vmem:[%s5 + $0x2578] sm:$0xff]
        %v5277 = vunpack.c.l.b16 %v2877
        %v5278 = vunpack.c.h.b16 %v2877
        %v5279 = vunpack.c.l.b16 %v2878
        %v5280 = vunpack.c.h.b16 %v2878
        %v5281 = vunpack.c.l.b16 %v2879
        %v5282 = vunpack.c.h.b16 %v2879
        %v5283 = vunpack.c.l.b16 %v2880
        %v5284 = vunpack.c.h.b16 %v2880
        %v5285 = vunpack.c.l.b16 %v2881
        %v5286 = vunpack.c.h.b16 %v2881
        %v5287 = vunpack.c.l.b16 %v2882
        %v5288 = vunpack.c.h.b16 %v2882
        %v5289 = vunpack.c.l.b16 %v2883
        %v5290 = vunpack.c.h.b16 %v2883
        %v5291 = vunpack.c.l.b16 %v2884
        %v5292 = vunpack.c.h.b16 %v2884
        %v5293 = vunpack.c.l.b16 %v2885
        %v5294 = vunpack.c.h.b16 %v2885
        %v5295 = vunpack.c.l.b16 %v2886
        %v5296 = vunpack.c.h.b16 %v2886
        %v5297 = vunpack.c.l.b16 %v2887
        %v5298 = vunpack.c.h.b16 %v2887
        %v5299 = vunpack.c.l.b16 %v2888
        %v5300 = vunpack.c.h.b16 %v2888
        %v5301 = vunpack.c.l.b16 %v2889
        %v5302 = vunpack.c.h.b16 %v2889
        %v5303 = vunpack.c.l.b16 %v2890
        %v5304 = vunpack.c.h.b16 %v2890
        %v5305 = vunpack.c.l.b16 %v2891
        %v5306 = vunpack.c.h.b16 %v2891
        %v5307 = vunpack.c.l.b16 %v2892
        %v5308 = vunpack.c.h.b16 %v2892
        %v5309 = vunpack.c.l.b16 %v2893
        %v5310 = vunpack.c.h.b16 %v2893
        %v5311 = vunpack.c.l.b16 %v2894
        %v5312 = vunpack.c.h.b16 %v2894
        %v5313 = vunpack.c.l.b16 %v2895
        %v5314 = vunpack.c.h.b16 %v2895
        %v5315 = vunpack.c.l.b16 %v2896
        %v5316 = vunpack.c.h.b16 %v2896
        %v5317 = vunpack.c.l.b16 %v2897
        %v5318 = vunpack.c.h.b16 %v2897
        %v5319 = vunpack.c.l.b16 %v2898
        %v5320 = vunpack.c.h.b16 %v2898
        %v5321 = vunpack.c.l.b16 %v2899
        %v5322 = vunpack.c.h.b16 %v2899
        %v5323 = vunpack.c.l.b16 %v2900
        %v5324 = vunpack.c.h.b16 %v2900
        %v5325 = vunpack.c.l.b16 %v2901
        %v5326 = vunpack.c.h.b16 %v2901
        %v5327 = vunpack.c.l.b16 %v2902
        %v5328 = vunpack.c.h.b16 %v2902
        %v5329 = vunpack.c.l.b16 %v2903
        %v5330 = vunpack.c.h.b16 %v2903
        %v5331 = vunpack.c.l.b16 %v2904
        %v5332 = vunpack.c.h.b16 %v2904
        %v5333 = vunpack.c.l.b16 %v2905
        %v5334 = vunpack.c.h.b16 %v2905
        %v5335 = vunpack.c.l.b16 %v2906
        %v5336 = vunpack.c.h.b16 %v2906
        %v5337 = vunpack.c.l.b16 %v2907
        %v5338 = vunpack.c.h.b16 %v2907
        %v5339 = vunpack.c.l.b16 %v2908
        %v5340 = vunpack.c.h.b16 %v2908
        %v5341 = vunpack.c.l.b16 %v2909
        %v5342 = vunpack.c.h.b16 %v2909
        %v5343 = vunpack.c.l.b16 %v2910
        %v5344 = vunpack.c.h.b16 %v2910
        %v5345 = vunpack.c.l.b16 %v2911
        %v5346 = vunpack.c.h.b16 %v2911
        %v5347 = vunpack.c.l.b16 %v2912
        %v5348 = vunpack.c.h.b16 %v2912
        %v5349 = vunpack.c.l.b16 %v2913
        %v5350 = vunpack.c.h.b16 %v2913
        %v5351 = vunpack.c.l.b16 %v2914
        %v5352 = vunpack.c.h.b16 %v2914
        %v5353 = vunpack.c.l.b16 %v2915
        %v5354 = vunpack.c.h.b16 %v2915
        %v5355 = vunpack.c.l.b16 %v2916
        %v5356 = vunpack.c.h.b16 %v2916
        %v5357 = vunpack.c.l.b16 %v2917
        %v5358 = vunpack.c.h.b16 %v2917
        %v5359 = vunpack.c.l.b16 %v2918
        %v5360 = vunpack.c.h.b16 %v2918
        %v5361 = vunpack.c.l.b16 %v2919
        %v5362 = vunpack.c.h.b16 %v2919
        %v5363 = vunpack.c.l.b16 %v2920
        %v5364 = vunpack.c.h.b16 %v2920
        %v5365 = vunpack.c.l.b16 %v2921
        %v5366 = vunpack.c.h.b16 %v2921
        %v5367 = vunpack.c.l.b16 %v2922
        %v5368 = vunpack.c.h.b16 %v2922
        %v5369 = vunpack.c.l.b16 %v2923
        %v5370 = vunpack.c.h.b16 %v2923
        %v5371 = vunpack.c.l.b16 %v2924
        %v5372 = vunpack.c.h.b16 %v2924
        %v5373 = vunpack.c.l.b16 %v2925
        %v5374 = vunpack.c.h.b16 %v2925
        %v5375 = vunpack.c.l.b16 %v2926
        %v5376 = vunpack.c.h.b16 %v2926
        %v5377 = vunpack.c.l.b16 %v2927
        %v5378 = vunpack.c.h.b16 %v2927
        %v5379 = vunpack.c.l.b16 %v2928
        %v5380 = vunpack.c.h.b16 %v2928
        %v5381 = vunpack.c.l.b16 %v2929
        %v5382 = vunpack.c.h.b16 %v2929
        %v5383 = vunpack.c.l.b16 %v2930
        %v5384 = vunpack.c.h.b16 %v2930
        %v5385 = vunpack.c.l.b16 %v2931
        %v5386 = vunpack.c.h.b16 %v2931
        %v5387 = vunpack.c.l.b16 %v2932
        %v5388 = vunpack.c.h.b16 %v2932
        %v5389 = vunpack.c.l.b16 %v2933
        %v5390 = vunpack.c.h.b16 %v2933
        %v5391 = vunpack.c.l.b16 %v2934
        %v5392 = vunpack.c.h.b16 %v2934
        %v5393 = vunpack.c.l.b16 %v2935
        %v5394 = vunpack.c.h.b16 %v2935
        %v5395 = vunpack.c.l.b16 %v2936
        %v5396 = vunpack.c.h.b16 %v2936
        %v5397 = vunpack.c.l.b16 %v2937
        %v5398 = vunpack.c.h.b16 %v2937
        %v5399 = vunpack.c.l.b16 %v2938
        %v5400 = vunpack.c.h.b16 %v2938
        %v5401 = vunpack.c.l.b16 %v2939
        %v5402 = vunpack.c.h.b16 %v2939
        %v5403 = vunpack.c.l.b16 %v2940
        %v5404 = vunpack.c.h.b16 %v2940
        %v5405 = vunpack.c.l.b16 %v2941
        %v5406 = vunpack.c.h.b16 %v2941
        %v5407 = vunpack.c.l.b16 %v2942
        %v5408 = vunpack.c.h.b16 %v2942
        %v5409 = vunpack.c.l.b16 %v2943
        %v5410 = vunpack.c.h.b16 %v2943
        %v5411 = vunpack.c.l.b16 %v2944
        %v5412 = vunpack.c.h.b16 %v2944
        %v5413 = vunpack.c.l.b16 %v2945
        %v5414 = vunpack.c.h.b16 %v2945
        %v5415 = vunpack.c.l.b16 %v2946
        %v5416 = vunpack.c.h.b16 %v2946
        %v5417 = vunpack.c.l.b16 %v2947
        %v5418 = vunpack.c.h.b16 %v2947
        %v5419 = vunpack.c.l.b16 %v2948
        %v5420 = vunpack.c.h.b16 %v2948
        %v5421 = vunpack.c.l.b16 %v2949
        %v5422 = vunpack.c.h.b16 %v2949
        %v5423 = vunpack.c.l.b16 %v2950
        %v5424 = vunpack.c.h.b16 %v2950
        %v5425 = vunpack.c.l.b16 %v2951
        %v5426 = vunpack.c.h.b16 %v2951
        %v5427 = vunpack.c.l.b16 %v2952
        %v5428 = vunpack.c.h.b16 %v2952
        %v5429 = vunpack.c.l.b16 %v2953
        %v5430 = vunpack.c.h.b16 %v2953
        %v5431 = vunpack.c.l.b16 %v2954
        %v5432 = vunpack.c.h.b16 %v2954
        %v5433 = vunpack.c.l.b16 %v2955
        %v5434 = vunpack.c.h.b16 %v2955
        %v5435 = vunpack.c.l.b16 %v2956
        %v5436 = vunpack.c.h.b16 %v2956
        %v5437 = vunpack.c.l.b16 %v2957
        %v5438 = vunpack.c.h.b16 %v2957
        %v5439 = vunpack.c.l.b16 %v2958
        %v5440 = vunpack.c.h.b16 %v2958
        %v5441 = vunpack.c.l.b16 %v2959
        %v5442 = vunpack.c.h.b16 %v2959
        %v5443 = vunpack.c.l.b16 %v2960
        %v5444 = vunpack.c.h.b16 %v2960
        %v5445 = vunpack.c.l.b16 %v2961
        %v5446 = vunpack.c.h.b16 %v2961
        %v5447 = vunpack.c.l.b16 %v2962
        %v5448 = vunpack.c.h.b16 %v2962
        %v5449 = vunpack.c.l.b16 %v2963
        %v5450 = vunpack.c.h.b16 %v2963
        %v5451 = vunpack.c.l.b16 %v2964
        %v5452 = vunpack.c.h.b16 %v2964
        %v5453 = vunpack.c.l.b16 %v2965
        %v5454 = vunpack.c.h.b16 %v2965
        %v5455 = vunpack.c.l.b16 %v2966
        %v5456 = vunpack.c.h.b16 %v2966
        %v5457 = vunpack.c.l.b16 %v2967
        %v5458 = vunpack.c.h.b16 %v2967
        %v5459 = vunpack.c.l.b16 %v2968
        %v5460 = vunpack.c.h.b16 %v2968
        %v5461 = vunpack.c.l.b16 %v2969
        %v5462 = vunpack.c.h.b16 %v2969
        %v5463 = vunpack.c.l.b16 %v2970
        %v5464 = vunpack.c.h.b16 %v2970
        %v5465 = vunpack.c.l.b16 %v2971
        %v5466 = vunpack.c.h.b16 %v2971
        %v5467 = vunpack.c.l.b16 %v2972
        %v5468 = vunpack.c.h.b16 %v2972
        %v5469 = vunpack.c.l.b16 %v2973
        %v5470 = vunpack.c.h.b16 %v2973
        %v5471 = vunpack.c.l.b16 %v2974
        %v5472 = vunpack.c.h.b16 %v2974
        %v5473 = vunpack.c.l.b16 %v2975
        %v5474 = vunpack.c.h.b16 %v2975
        %v5475 = vunpack.c.l.b16 %v2976
        %v5476 = vunpack.c.h.b16 %v2976
        %v5477 = vunpack.c.l.b16 %v2977
        %v5478 = vunpack.c.h.b16 %v2977
        %v5479 = vunpack.c.l.b16 %v2978
        %v5480 = vunpack.c.h.b16 %v2978
        %v5481 = vunpack.c.l.b16 %v2979
        %v5482 = vunpack.c.h.b16 %v2979
        %v5483 = vunpack.c.l.b16 %v2980
        %v5484 = vunpack.c.h.b16 %v2980
        %v5485 = vunpack.c.l.b16 %v2981
        %v5486 = vunpack.c.h.b16 %v2981
        %v5487 = vunpack.c.l.b16 %v2982
        %v5488 = vunpack.c.h.b16 %v2982
        %v5489 = vunpack.c.l.b16 %v2983
        %v5490 = vunpack.c.h.b16 %v2983
        %v5491 = vunpack.c.l.b16 %v2984
        %v5492 = vunpack.c.h.b16 %v2984
        %v5493 = vunpack.c.l.b16 %v2985
        %v5494 = vunpack.c.h.b16 %v2985
        %v5495 = vunpack.c.l.b16 %v2986
        %v5496 = vunpack.c.h.b16 %v2986
        %v5497 = vunpack.c.l.b16 %v2987
        %v5498 = vunpack.c.h.b16 %v2987
        %v5499 = vunpack.c.l.b16 %v2988
        %v5500 = vunpack.c.h.b16 %v2988
        %v5501 = vunpack.c.l.b16 %v2989
        %v5502 = vunpack.c.h.b16 %v2989
        %v5503 = vunpack.c.l.b16 %v2990
        %v5504 = vunpack.c.h.b16 %v2990
        %v5505 = vunpack.c.l.b16 %v2991
        %v5506 = vunpack.c.h.b16 %v2991
        %v5507 = vunpack.c.l.b16 %v2992
        %v5508 = vunpack.c.h.b16 %v2992
        %v5509 = vunpack.c.l.b16 %v2993
        %v5510 = vunpack.c.h.b16 %v2993
        %v5511 = vunpack.c.l.b16 %v2994
        %v5512 = vunpack.c.h.b16 %v2994
        %v5513 = vunpack.c.l.b16 %v2995
        %v5514 = vunpack.c.h.b16 %v2995
        %v5515 = vunpack.c.l.b16 %v2996
        %v5516 = vunpack.c.h.b16 %v2996
        %v5517 = vunpack.c.l.b16 %v2997
        %v5518 = vunpack.c.h.b16 %v2997
        %v5519 = vunpack.c.l.b16 %v2998
        %v5520 = vunpack.c.h.b16 %v2998
        %v5521 = vunpack.c.l.b16 %v2999
        %v5522 = vunpack.c.h.b16 %v2999
        %v5523 = vunpack.c.l.b16 %v3000
        %v5524 = vunpack.c.h.b16 %v3000
        %v5525 = vunpack.c.l.b16 %v3001
        %v5526 = vunpack.c.h.b16 %v3001
        %v5527 = vunpack.c.l.b16 %v3002
        %v5528 = vunpack.c.h.b16 %v3002
        %v5529 = vunpack.c.l.b16 %v3003
        %v5530 = vunpack.c.h.b16 %v3003
        %v5531 = vunpack.c.l.b16 %v3004
        %v5532 = vunpack.c.h.b16 %v3004
        %v5533 = vunpack.c.l.b16 %v3005
        %v5534 = vunpack.c.h.b16 %v3005
        %v5535 = vunpack.c.l.b16 %v3006
        %v5536 = vunpack.c.h.b16 %v3006
        %v5537 = vunpack.c.l.b16 %v3007
        %v5538 = vunpack.c.h.b16 %v3007
        %v5539 = vunpack.c.l.b16 %v3008
        %v5540 = vunpack.c.h.b16 %v3008
        %v5541 = vunpack.c.l.b16 %v3009
        %v5542 = vunpack.c.h.b16 %v3009
        %v5543 = vunpack.c.l.b16 %v3010
        %v5544 = vunpack.c.h.b16 %v3010
        %v5545 = vunpack.c.l.b16 %v3011
        %v5546 = vunpack.c.h.b16 %v3011
        %v5547 = vunpack.c.l.b16 %v3012
        %v5548 = vunpack.c.h.b16 %v3012
        %v5549 = vunpack.c.l.b16 %v3013
        %v5550 = vunpack.c.h.b16 %v3013
        %v5551 = vunpack.c.l.b16 %v3014
        %v5552 = vunpack.c.h.b16 %v3014
        %v5553 = vunpack.c.l.b16 %v3015
        %v5554 = vunpack.c.h.b16 %v3015
        %v5555 = vunpack.c.l.b16 %v3016
        %v5556 = vunpack.c.h.b16 %v3016
        %v5557 = vunpack.c.l.b16 %v3017
        %v5558 = vunpack.c.h.b16 %v3017
        %v5559 = vunpack.c.l.b16 %v3018
        %v5560 = vunpack.c.h.b16 %v3018
        %v5561 = vunpack.c.l.b16 %v3019
        %v5562 = vunpack.c.h.b16 %v3019
        %v5563 = vunpack.c.l.b16 %v3020
        %v5564 = vunpack.c.h.b16 %v3020
        %v5565 = vunpack.c.l.b16 %v3021
        %v5566 = vunpack.c.h.b16 %v3021
        %v5567 = vunpack.c.l.b16 %v3022
        %v5568 = vunpack.c.h.b16 %v3022
        %v5569 = vunpack.c.l.b16 %v3023
        %v5570 = vunpack.c.h.b16 %v3023
        %v5571 = vunpack.c.l.b16 %v3024
        %v5572 = vunpack.c.h.b16 %v3024
        %v5573 = vunpack.c.l.b16 %v3025
        %v5574 = vunpack.c.h.b16 %v3025
        %v5575 = vunpack.c.l.b16 %v3026
        %v5576 = vunpack.c.h.b16 %v3026
        %v5577 = vunpack.c.l.b16 %v3027
        %v5578 = vunpack.c.h.b16 %v3027
        %v5579 = vunpack.c.l.b16 %v3028
        %v5580 = vunpack.c.h.b16 %v3028
        %v5581 = vunpack.c.l.b16 %v3029
        %v5582 = vunpack.c.h.b16 %v3029
        %v5583 = vunpack.c.l.b16 %v3030
        %v5584 = vunpack.c.h.b16 %v3030
        %v5585 = vunpack.c.l.b16 %v3031
        %v5586 = vunpack.c.h.b16 %v3031
        %v5587 = vunpack.c.l.b16 %v3032
        %v5588 = vunpack.c.h.b16 %v3032
        %v5589 = vunpack.c.l.b16 %v3033
        %v5590 = vunpack.c.h.b16 %v3033
        %v5591 = vunpack.c.l.b16 %v3034
        %v5592 = vunpack.c.h.b16 %v3034
        %v5593 = vunpack.c.l.b16 %v3035
        %v5594 = vunpack.c.h.b16 %v3035
        %v5595 = vunpack.c.l.b16 %v3036
        %v5596 = vunpack.c.h.b16 %v3036
        %v5597 = vunpack.c.l.b16 %v3037
        %v5598 = vunpack.c.h.b16 %v3037
        %v5599 = vunpack.c.l.b16 %v3038
        %v5600 = vunpack.c.h.b16 %v3038
        %v5601 = vunpack.c.l.b16 %v3039
        %v5602 = vunpack.c.h.b16 %v3039
        %v5603 = vunpack.c.l.b16 %v3040
        %v5604 = vunpack.c.h.b16 %v3040
        %v5605 = vunpack.c.l.b16 %v3041
        %v5606 = vunpack.c.h.b16 %v3041
        %v5607 = vunpack.c.l.b16 %v3042
        %v5608 = vunpack.c.h.b16 %v3042
        %v5609 = vunpack.c.l.b16 %v3043
        %v5610 = vunpack.c.h.b16 %v3043
        %v5611 = vunpack.c.l.b16 %v3044
        %v5612 = vunpack.c.h.b16 %v3044
        %v5613 = vunpack.c.l.b16 %v3045
        %v5614 = vunpack.c.h.b16 %v3045
        %v5615 = vunpack.c.l.b16 %v3046
        %v5616 = vunpack.c.h.b16 %v3046
        %v5617 = vunpack.c.l.b16 %v3047
        %v5618 = vunpack.c.h.b16 %v3047
        %v5619 = vunpack.c.l.b16 %v3048
        %v5620 = vunpack.c.h.b16 %v3048
        %v5621 = vunpack.c.l.b16 %v3049
        %v5622 = vunpack.c.h.b16 %v3049
        %v5623 = vunpack.c.l.b16 %v3050
        %v5624 = vunpack.c.h.b16 %v3050
        %v5625 = vunpack.c.l.b16 %v3051
        %v5626 = vunpack.c.h.b16 %v3051
        %v5627 = vunpack.c.l.b16 %v3052
        %v5628 = vunpack.c.h.b16 %v3052
        %v5629 = vunpack.c.l.b16 %v3053
        %v5630 = vunpack.c.h.b16 %v3053
        %v5631 = vunpack.c.l.b16 %v3054
        %v5632 = vunpack.c.h.b16 %v3054
        %v5633 = vunpack.c.l.b16 %v3055
        %v5634 = vunpack.c.h.b16 %v3055
        %v5635 = vunpack.c.l.b16 %v3056
        %v5636 = vunpack.c.h.b16 %v3056
        %v5637 = vunpack.c.l.b16 %v3057
        %v5638 = vunpack.c.h.b16 %v3057
        %v5639 = vunpack.c.l.b16 %v3058
        %v5640 = vunpack.c.h.b16 %v3058
        %v5641 = vunpack.c.l.b16 %v3059
        %v5642 = vunpack.c.h.b16 %v3059
        %v5643 = vunpack.c.l.b16 %v3060
        %v5644 = vunpack.c.h.b16 %v3060
        %v5645 = vunpack.c.l.b16 %v3061
        %v5646 = vunpack.c.h.b16 %v3061
        %v5647 = vunpack.c.l.b16 %v3062
        %v5648 = vunpack.c.h.b16 %v3062
        %v5649 = vunpack.c.l.b16 %v3063
        %v5650 = vunpack.c.h.b16 %v3063
        %v5651 = vunpack.c.l.b16 %v3064
        %v5652 = vunpack.c.h.b16 %v3064
        %v5653 = vunpack.c.l.b16 %v3065
        %v5654 = vunpack.c.h.b16 %v3065
        %v5655 = vunpack.c.l.b16 %v3066
        %v5656 = vunpack.c.h.b16 %v3066
        %v5657 = vunpack.c.l.b16 %v3067
        %v5658 = vunpack.c.h.b16 %v3067
        %v5659 = vunpack.c.l.b16 %v3068
        %v5660 = vunpack.c.h.b16 %v3068
        %v5661 = vunpack.c.l.b16 %v3069
        %v5662 = vunpack.c.h.b16 %v3069
        %v5663 = vunpack.c.l.b16 %v3070
        %v5664 = vunpack.c.h.b16 %v3070
        %v5665 = vunpack.c.l.b16 %v3071
        %v5666 = vunpack.c.h.b16 %v3071
        %v5667 = vunpack.c.l.b16 %v3072
        %v5668 = vunpack.c.h.b16 %v3072
        %v5669 = vunpack.c.l.b16 %v3073
        %v5670 = vunpack.c.h.b16 %v3073
        %v5671 = vunpack.c.l.b16 %v3074
        %v5672 = vunpack.c.h.b16 %v3074
        %v5673 = vunpack.c.l.b16 %v3075
        %v5674 = vunpack.c.h.b16 %v3075
        %v5675 = vunpack.c.l.b16 %v3076
        %v5676 = vunpack.c.h.b16 %v3076
        %v5677 = vunpack.c.l.b16 %v3077
        %v5678 = vunpack.c.h.b16 %v3077
        %v5679 = vunpack.c.l.b16 %v3078
        %v5680 = vunpack.c.h.b16 %v3078
        %v5681 = vunpack.c.l.b16 %v3079
        %v5682 = vunpack.c.h.b16 %v3079
        %v5683 = vunpack.c.l.b16 %v3080
        %v5684 = vunpack.c.h.b16 %v3080
        %v5685 = vunpack.c.l.b16 %v3081
        %v5686 = vunpack.c.h.b16 %v3081
        %v5687 = vunpack.c.l.b16 %v3082
        %v5688 = vunpack.c.h.b16 %v3082
        %v5689 = vunpack.c.l.b16 %v3083
        %v5690 = vunpack.c.h.b16 %v3083
        %v5691 = vunpack.c.l.b16 %v3084
        %v5692 = vunpack.c.h.b16 %v3084
        %v5693 = vunpack.c.l.b16 %v3085
        %v5694 = vunpack.c.h.b16 %v3085
        %v5695 = vunpack.c.l.b16 %v3086
        %v5696 = vunpack.c.h.b16 %v3086
        %v5697 = vunpack.c.l.b16 %v3087
        %v5698 = vunpack.c.h.b16 %v3087
        %v5699 = vunpack.c.l.b16 %v3088
        %v5700 = vunpack.c.h.b16 %v3088
        %v5701 = vunpack.c.l.b16 %v3089
        %v5702 = vunpack.c.h.b16 %v3089
        %v5703 = vunpack.c.l.b16 %v3090
        %v5704 = vunpack.c.h.b16 %v3090
        %v5705 = vunpack.c.l.b16 %v3091
        %v5706 = vunpack.c.h.b16 %v3091
        %v5707 = vunpack.c.l.b16 %v3092
        %v5708 = vunpack.c.h.b16 %v3092
        %v5709 = vunpack.c.l.b16 %v3093
        %v5710 = vunpack.c.h.b16 %v3093
        %v5711 = vunpack.c.l.b16 %v3094
        %v5712 = vunpack.c.h.b16 %v3094
        %v5713 = vunpack.c.l.b16 %v3095
        %v5714 = vunpack.c.h.b16 %v3095
        %v5715 = vunpack.c.l.b16 %v3096
        %v5716 = vunpack.c.h.b16 %v3096
        %v5717 = vunpack.c.l.b16 %v3097
        %v5718 = vunpack.c.h.b16 %v3097
        %v5719 = vunpack.c.l.b16 %v3098
        %v5720 = vunpack.c.h.b16 %v3098
        %v5721 = vunpack.c.l.b16 %v3099
        %v5722 = vunpack.c.h.b16 %v3099
        %v5723 = vunpack.c.l.b16 %v3100
        %v5724 = vunpack.c.h.b16 %v3100
        %v5725 = vunpack.c.l.b16 %v3101
        %v5726 = vunpack.c.h.b16 %v3101
        %v5727 = vunpack.c.l.b16 %v3102
        %v5728 = vunpack.c.h.b16 %v3102
        %v5729 = vunpack.c.l.b16 %v3103
        %v5730 = vunpack.c.h.b16 %v3103
        %v5731 = vunpack.c.l.b16 %v3104
        %v5732 = vunpack.c.h.b16 %v3104
        %v5733 = vunpack.c.l.b16 %v3105
        %v5734 = vunpack.c.h.b16 %v3105
        %v5735 = vunpack.c.l.b16 %v3106
        %v5736 = vunpack.c.h.b16 %v3106
        %v5737 = vunpack.c.l.b16 %v3107
        %v5738 = vunpack.c.h.b16 %v3107
        %v5739 = vunpack.c.l.b16 %v3108
        %v5740 = vunpack.c.h.b16 %v3108
        %v5741 = vunpack.c.l.b16 %v3109
        %v5742 = vunpack.c.h.b16 %v3109
        %v5743 = vunpack.c.l.b16 %v3110
        %v5744 = vunpack.c.h.b16 %v3110
        %v5745 = vunpack.c.l.b16 %v3111
        %v5746 = vunpack.c.h.b16 %v3111
        %v5747 = vunpack.c.l.b16 %v3112
        %v5748 = vunpack.c.h.b16 %v3112
        %v5749 = vunpack.c.l.b16 %v3113
        %v5750 = vunpack.c.h.b16 %v3113
        %v5751 = vunpack.c.l.b16 %v3114
        %v5752 = vunpack.c.h.b16 %v3114
        %v5753 = vunpack.c.l.b16 %v3115
        %v5754 = vunpack.c.h.b16 %v3115
        %v5755 = vunpack.c.l.b16 %v3116
        %v5756 = vunpack.c.h.b16 %v3116
        %v5757 = vunpack.c.l.b16 %v3117
        %v5758 = vunpack.c.h.b16 %v3117
        %v5759 = vunpack.c.l.b16 %v3118
        %v5760 = vunpack.c.h.b16 %v3118
        %v5761 = vunpack.c.l.b16 %v3119
        %v5762 = vunpack.c.h.b16 %v3119
        %v5763 = vunpack.c.l.b16 %v3120
        %v5764 = vunpack.c.h.b16 %v3120
        %v5765 = vunpack.c.l.b16 %v3121
        %v5766 = vunpack.c.h.b16 %v3121
        %v5767 = vunpack.c.l.b16 %v3122
        %v5768 = vunpack.c.h.b16 %v3122
        %v5769 = vunpack.c.l.b16 %v3123
        %v5770 = vunpack.c.h.b16 %v3123
        %v5771 = vunpack.c.l.b16 %v3124
        %v5772 = vunpack.c.h.b16 %v3124
        %v5773 = vunpack.c.l.b16 %v3125
        %v5774 = vunpack.c.h.b16 %v3125
        %v5775 = vunpack.c.l.b16 %v3126
        %v5776 = vunpack.c.h.b16 %v3126
        %v5777 = vunpack.c.l.b16 %v3127
        %v5778 = vunpack.c.h.b16 %v3127
        %v5779 = vunpack.c.l.b16 %v3128
        %v5780 = vunpack.c.h.b16 %v3128
        %v5781 = vunpack.c.l.b16 %v3129
        %v5782 = vunpack.c.h.b16 %v3129
        %v5783 = vunpack.c.l.b16 %v3130
        %v5784 = vunpack.c.h.b16 %v3130
        %v5785 = vunpack.c.l.b16 %v3131
        %v5786 = vunpack.c.h.b16 %v3131
        %v5787 = vunpack.c.l.b16 %v3132
        %v5788 = vunpack.c.h.b16 %v3132
        %v5789 = vunpack.c.l.b16 %v3133
        %v5790 = vunpack.c.h.b16 %v3133
        %v5791 = vunpack.c.l.b16 %v3134
        %v5792 = vunpack.c.h.b16 %v3134
        %v5793 = vunpack.c.l.b16 %v3135
        %v5794 = vunpack.c.h.b16 %v3135
        %v5795 = vunpack.c.l.b16 %v3136
        %v5796 = vunpack.c.h.b16 %v3136
        %v5797 = vunpack.c.l.b16 %v3137
        %v5798 = vunpack.c.h.b16 %v3137
        %v5799 = vunpack.c.l.b16 %v3138
        %v5800 = vunpack.c.h.b16 %v3138
        %v5801 = vunpack.c.l.b16 %v3139
        %v5802 = vunpack.c.h.b16 %v3139
        %v5803 = vunpack.c.l.b16 %v3140
        %v5804 = vunpack.c.h.b16 %v3140
        %v5805 = vunpack.c.l.b16 %v3141
        %v5806 = vunpack.c.h.b16 %v3141
        %v5807 = vunpack.c.l.b16 %v3142
        %v5808 = vunpack.c.h.b16 %v3142
        %v5809 = vunpack.c.l.b16 %v3143
        %v5810 = vunpack.c.h.b16 %v3143
        %v5811 = vunpack.c.l.b16 %v3144
        %v5812 = vunpack.c.h.b16 %v3144
        %v5813 = vunpack.c.l.b16 %v3145
        %v5814 = vunpack.c.h.b16 %v3145
        %v5815 = vunpack.c.l.b16 %v3146
        %v5816 = vunpack.c.h.b16 %v3146
        %v5817 = vunpack.c.l.b16 %v3147
        %v5818 = vunpack.c.h.b16 %v3147
        %v5819 = vunpack.c.l.b16 %v3148
        %v5820 = vunpack.c.h.b16 %v3148
        %v5821 = vunpack.c.l.b16 %v3149
        %v5822 = vunpack.c.h.b16 %v3149
        %v5823 = vunpack.c.l.b16 %v3150
        %v5824 = vunpack.c.h.b16 %v3150
        %v5825 = vunpack.c.l.b16 %v3151
        %v5826 = vunpack.c.h.b16 %v3151
        %v5827 = vunpack.c.l.b16 %v3152
        %v5828 = vunpack.c.h.b16 %v3152
        %v5829 = vunpack.c.l.b16 %v3153
        %v5830 = vunpack.c.h.b16 %v3153
        %v5831 = vunpack.c.l.b16 %v3154
        %v5832 = vunpack.c.h.b16 %v3154
        %v5833 = vunpack.c.l.b16 %v3155
        %v5834 = vunpack.c.h.b16 %v3155
        %v5835 = vunpack.c.l.b16 %v3156
        %v5836 = vunpack.c.h.b16 %v3156
        %v5837 = vunpack.c.l.b16 %v3157
        %v5838 = vunpack.c.h.b16 %v3157
        %v5839 = vunpack.c.l.b16 %v3158
        %v5840 = vunpack.c.h.b16 %v3158
        %v5841 = vunpack.c.l.b16 %v3159
        %v5842 = vunpack.c.h.b16 %v3159
        %v5843 = vunpack.c.l.b16 %v3160
        %v5844 = vunpack.c.h.b16 %v3160
        %v5845 = vunpack.c.l.b16 %v3161
        %v5846 = vunpack.c.h.b16 %v3161
        %v5847 = vunpack.c.l.b16 %v3162
        %v5848 = vunpack.c.h.b16 %v3162
        %v5849 = vunpack.c.l.b16 %v3163
        %v5850 = vunpack.c.h.b16 %v3163
        %v5851 = vunpack.c.l.b16 %v3164
        %v5852 = vunpack.c.h.b16 %v3164
        %v5853 = vunpack.c.l.b16 %v3165
        %v5854 = vunpack.c.h.b16 %v3165
        %v5855 = vunpack.c.l.b16 %v3166
        %v5856 = vunpack.c.h.b16 %v3166
        %v5857 = vunpack.c.l.b16 %v3167
        %v5858 = vunpack.c.h.b16 %v3167
        %v5859 = vunpack.c.l.b16 %v3168
        %v5860 = vunpack.c.h.b16 %v3168
        %v5861 = vunpack.c.l.b16 %v3169
        %v5862 = vunpack.c.h.b16 %v3169
        %v5863 = vunpack.c.l.b16 %v3170
        %v5864 = vunpack.c.h.b16 %v3170
        %v5865 = vunpack.c.l.b16 %v3171
        %v5866 = vunpack.c.h.b16 %v3171
        %v5867 = vunpack.c.l.b16 %v3172
        %v5868 = vunpack.c.h.b16 %v3172
        %v5869 = vunpack.c.l.b16 %v3173
        %v5870 = vunpack.c.h.b16 %v3173
        %v5871 = vunpack.c.l.b16 %v3174
        %v5872 = vunpack.c.h.b16 %v3174
        %v5873 = vunpack.c.l.b16 %v3175
        %v5874 = vunpack.c.h.b16 %v3175
        %v5875 = vunpack.c.l.b16 %v3176
        %v5876 = vunpack.c.h.b16 %v3176
        %v5877 = vunpack.c.l.b16 %v3177
        %v5878 = vunpack.c.h.b16 %v3177
        %v5879 = vunpack.c.l.b16 %v3178
        %v5880 = vunpack.c.h.b16 %v3178
        %v5881 = vunpack.c.l.b16 %v3179
        %v5882 = vunpack.c.h.b16 %v3179
        %v5883 = vunpack.c.l.b16 %v3180
        %v5884 = vunpack.c.h.b16 %v3180
        %v5885 = vunpack.c.l.b16 %v3181
        %v5886 = vunpack.c.h.b16 %v3181
        %v5887 = vunpack.c.l.b16 %v3182
        %v5888 = vunpack.c.h.b16 %v3182
        %v5889 = vunpack.c.l.b16 %v3183
        %v5890 = vunpack.c.h.b16 %v3183
        %v5891 = vunpack.c.l.b16 %v3184
        %v5892 = vunpack.c.h.b16 %v3184
        %v5893 = vunpack.c.l.b16 %v3185
        %v5894 = vunpack.c.h.b16 %v3185
        %v5895 = vunpack.c.l.b16 %v3186
        %v5896 = vunpack.c.h.b16 %v3186
        %v5897 = vunpack.c.l.b16 %v3187
        %v5898 = vunpack.c.h.b16 %v3187
        %v5899 = vunpack.c.l.b16 %v3188
        %v5900 = vunpack.c.h.b16 %v3188
        %v5901 = vunpack.c.l.b16 %v3189
        %v5902 = vunpack.c.h.b16 %v3189
        %v5903 = vunpack.c.l.b16 %v3190
        %v5904 = vunpack.c.h.b16 %v3190
        %v5905 = vunpack.c.l.b16 %v3191
        %v5906 = vunpack.c.h.b16 %v3191
        %v5907 = vunpack.c.l.b16 %v3192
        %v5908 = vunpack.c.h.b16 %v3192
        %v5909 = vunpack.c.l.b16 %v3193
        %v5910 = vunpack.c.h.b16 %v3193
        %v5911 = vunpack.c.l.b16 %v3194
        %v5912 = vunpack.c.h.b16 %v3194
        %v5913 = vunpack.c.l.b16 %v3195
        %v5914 = vunpack.c.h.b16 %v3195
        %v5915 = vunpack.c.l.b16 %v3196
        %v5916 = vunpack.c.h.b16 %v3196
        %v5917 = vunpack.c.l.b16 %v3197
        %v5918 = vunpack.c.h.b16 %v3197
        %v5919 = vunpack.c.l.b16 %v3198
        %v5920 = vunpack.c.h.b16 %v3198
        %v5921 = vunpack.c.l.b16 %v3199
        %v5922 = vunpack.c.h.b16 %v3199
        %v5923 = vunpack.c.l.b16 %v3200
        %v5924 = vunpack.c.h.b16 %v3200
        %v5925 = vunpack.c.l.b16 %v3201
        %v5926 = vunpack.c.h.b16 %v3201
        %v5927 = vunpack.c.l.b16 %v3202
        %v5928 = vunpack.c.h.b16 %v3202
        %v5929 = vunpack.c.l.b16 %v3203
        %v5930 = vunpack.c.h.b16 %v3203
        %v5931 = vunpack.c.l.b16 %v3204
        %v5932 = vunpack.c.h.b16 %v3204
        %v5933 = vunpack.c.l.b16 %v3205
        %v5934 = vunpack.c.h.b16 %v3205
        %v5935 = vunpack.c.l.b16 %v3206
        %v5936 = vunpack.c.h.b16 %v3206
        %v5937 = vunpack.c.l.b16 %v3207
        %v5938 = vunpack.c.h.b16 %v3207
        %v5939 = vunpack.c.l.b16 %v3208
        %v5940 = vunpack.c.h.b16 %v3208
        %v5941 = vunpack.c.l.b16 %v3209
        %v5942 = vunpack.c.h.b16 %v3209
        %v5943 = vunpack.c.l.b16 %v3210
        %v5944 = vunpack.c.h.b16 %v3210
        %v5945 = vunpack.c.l.b16 %v3211
        %v5946 = vunpack.c.h.b16 %v3211
        %v5947 = vunpack.c.l.b16 %v3212
        %v5948 = vunpack.c.h.b16 %v3212
        %v5949 = vunpack.c.l.b16 %v3213
        %v5950 = vunpack.c.h.b16 %v3213
        %v5951 = vunpack.c.l.b16 %v3214
        %v5952 = vunpack.c.h.b16 %v3214
        %v5953 = vunpack.c.l.b16 %v3215
        %v5954 = vunpack.c.h.b16 %v3215
        %v5955 = vunpack.c.l.b16 %v3216
        %v5956 = vunpack.c.h.b16 %v3216
        %v5957 = vunpack.c.l.b16 %v3217
        %v5958 = vunpack.c.h.b16 %v3217
        %v5959 = vunpack.c.l.b16 %v3218
        %v5960 = vunpack.c.h.b16 %v3218
        %v5961 = vunpack.c.l.b16 %v3219
        %v5962 = vunpack.c.h.b16 %v3219
        %v5963 = vunpack.c.l.b16 %v3220
        %v5964 = vunpack.c.h.b16 %v3220
        %v5965 = vunpack.c.l.b16 %v3221
        %v5966 = vunpack.c.h.b16 %v3221
        %v5967 = vunpack.c.l.b16 %v3222
        %v5968 = vunpack.c.h.b16 %v3222
        %v5969 = vunpack.c.l.b16 %v3223
        %v5970 = vunpack.c.h.b16 %v3223
        %v5971 = vunpack.c.l.b16 %v3224
        %v5972 = vunpack.c.h.b16 %v3224
        %v5973 = vunpack.c.l.b16 %v3225
        %v5974 = vunpack.c.h.b16 %v3225
        %v5975 = vunpack.c.l.b16 %v3226
        %v5976 = vunpack.c.h.b16 %v3226
        %v5977 = vunpack.c.l.b16 %v3227
        %v5978 = vunpack.c.h.b16 %v3227
        %v5979 = vunpack.c.l.b16 %v3228
        %v5980 = vunpack.c.h.b16 %v3228
        %v5981 = vunpack.c.l.b16 %v3229
        %v5982 = vunpack.c.h.b16 %v3229
        %v5983 = vunpack.c.l.b16 %v3230
        %v5984 = vunpack.c.h.b16 %v3230
        %v5985 = vunpack.c.l.b16 %v3231
        %v5986 = vunpack.c.h.b16 %v3231
        %v5987 = vunpack.c.l.b16 %v3232
        %v5988 = vunpack.c.h.b16 %v3232
        %v5989 = vunpack.c.l.b16 %v3233
        %v5990 = vunpack.c.h.b16 %v3233
        %v5991 = vunpack.c.l.b16 %v3234
        %v5992 = vunpack.c.h.b16 %v3234
        %v5993 = vunpack.c.l.b16 %v3235
        %v5994 = vunpack.c.h.b16 %v3235
        %v5995 = vunpack.c.l.b16 %v3236
        %v5996 = vunpack.c.h.b16 %v3236
        %v5997 = vunpack.c.l.b16 %v3237
        %v5998 = vunpack.c.h.b16 %v3237
        %v5999 = vunpack.c.l.b16 %v3238
        %v6000 = vunpack.c.h.b16 %v3238
        %v6001 = vunpack.c.l.b16 %v3239
        %v6002 = vunpack.c.h.b16 %v3239
        %v6003 = vunpack.c.l.b16 %v3240
        %v6004 = vunpack.c.h.b16 %v3240
        %v6005 = vunpack.c.l.b16 %v3241
        %v6006 = vunpack.c.h.b16 %v3241
        %v6007 = vunpack.c.l.b16 %v3242
        %v6008 = vunpack.c.h.b16 %v3242
        %v6009 = vunpack.c.l.b16 %v3243
        %v6010 = vunpack.c.h.b16 %v3243
        %v6011 = vunpack.c.l.b16 %v3244
        %v6012 = vunpack.c.h.b16 %v3244
        %v6013 = vunpack.c.l.b16 %v3245
        %v6014 = vunpack.c.h.b16 %v3245
        %v6015 = vunpack.c.l.b16 %v3246
        %v6016 = vunpack.c.h.b16 %v3246
        %v6017 = vunpack.c.l.b16 %v3247
        %v6018 = vunpack.c.h.b16 %v3247
        %v6019 = vunpack.c.l.b16 %v3248
        %v6020 = vunpack.c.h.b16 %v3248
        %v6021 = vunpack.c.l.b16 %v3249
        %v6022 = vunpack.c.h.b16 %v3249
        %v6023 = vunpack.c.l.b16 %v3250
        %v6024 = vunpack.c.h.b16 %v3250
        %v6025 = vunpack.c.l.b16 %v3251
        %v6026 = vunpack.c.h.b16 %v3251
        %v6027 = vunpack.c.l.b16 %v3252
        %v6028 = vunpack.c.h.b16 %v3252
        %v6029 = vunpack.c.l.b16 %v3253
        %v6030 = vunpack.c.h.b16 %v3253
        %v6031 = vunpack.c.l.b16 %v3254
        %v6032 = vunpack.c.h.b16 %v3254
        %v6033 = vunpack.c.l.b16 %v3255
        %v6034 = vunpack.c.h.b16 %v3255
        %v6035 = vunpack.c.l.b16 %v3256
        %v6036 = vunpack.c.h.b16 %v3256
        %v6037 = vunpack.c.l.b16 %v3257
        %v6038 = vunpack.c.h.b16 %v3257
        %v6039 = vunpack.c.l.b16 %v3258
        %v6040 = vunpack.c.h.b16 %v3258
        %v6041 = vunpack.c.l.b16 %v3259
        %v6042 = vunpack.c.h.b16 %v3259
        %v6043 = vunpack.c.l.b16 %v3260
        %v6044 = vunpack.c.h.b16 %v3260
        %v6045 = vunpack.c.l.b16 %v3261
        %v6046 = vunpack.c.h.b16 %v3261
        %v6047 = vunpack.c.l.b16 %v3262
        %v6048 = vunpack.c.h.b16 %v3262
        %v6049 = vunpack.c.l.b16 %v3263
        %v6050 = vunpack.c.h.b16 %v3263
        %v6051 = vunpack.c.l.b16 %v3264
        %v6052 = vunpack.c.h.b16 %v3264
        %v6053 = vunpack.c.l.b16 %v3265
        %v6054 = vunpack.c.h.b16 %v3265
        %v6055 = vunpack.c.l.b16 %v3266
        %v6056 = vunpack.c.h.b16 %v3266
        %v6057 = vunpack.c.l.b16 %v3267
        %v6058 = vunpack.c.h.b16 %v3267
        %v6059 = vunpack.c.l.b16 %v3268
        %v6060 = vunpack.c.h.b16 %v3268
        %v6061 = vunpack.c.l.b16 %v3269
        %v6062 = vunpack.c.h.b16 %v3269
        %v6063 = vunpack.c.l.b16 %v3270
        %v6064 = vunpack.c.h.b16 %v3270
        %v6065 = vunpack.c.l.b16 %v3271
        %v6066 = vunpack.c.h.b16 %v3271
        %v6067 = vunpack.c.l.b16 %v3272
        %v6068 = vunpack.c.h.b16 %v3272
        %v6069 = vunpack.c.l.b16 %v3273
        %v6070 = vunpack.c.h.b16 %v3273
        %v6071 = vunpack.c.l.b16 %v3274
        %v6072 = vunpack.c.h.b16 %v3274
        %v6073 = vunpack.c.l.b16 %v3275
        %v6074 = vunpack.c.h.b16 %v3275
        %v6075 = vunpack.c.l.b16 %v3276
        %v6076 = vunpack.c.h.b16 %v3276
        %v6077 = vunpack.c.l.b16 %v3277
        %v6078 = vunpack.c.h.b16 %v3277
        %v6079 = vunpack.c.l.b16 %v3278
        %v6080 = vunpack.c.h.b16 %v3278
        %v6081 = vunpack.c.l.b16 %v3279
        %v6082 = vunpack.c.h.b16 %v3279
        %v6083 = vunpack.c.l.b16 %v3280
        %v6084 = vunpack.c.h.b16 %v3280
        %v6085 = vunpack.c.l.b16 %v3281
        %v6086 = vunpack.c.h.b16 %v3281
        %v6087 = vunpack.c.l.b16 %v3282
        %v6088 = vunpack.c.h.b16 %v3282
        %v6089 = vunpack.c.l.b16 %v3283
        %v6090 = vunpack.c.h.b16 %v3283
        %v6091 = vunpack.c.l.b16 %v3284
        %v6092 = vunpack.c.h.b16 %v3284
        %v6093 = vunpack.c.l.b16 %v3285
        %v6094 = vunpack.c.h.b16 %v3285
        %v6095 = vunpack.c.l.b16 %v3286
        %v6096 = vunpack.c.h.b16 %v3286
        %v6097 = vunpack.c.l.b16 %v3287
        %v6098 = vunpack.c.h.b16 %v3287
        %v6099 = vunpack.c.l.b16 %v3288
        %v6100 = vunpack.c.h.b16 %v3288
        %v6101 = vunpack.c.l.b16 %v3289
        %v6102 = vunpack.c.h.b16 %v3289
        %v6103 = vunpack.c.l.b16 %v3290
        %v6104 = vunpack.c.h.b16 %v3290
        %v6105 = vunpack.c.l.b16 %v3291
        %v6106 = vunpack.c.h.b16 %v3291
        %v6107 = vunpack.c.l.b16 %v3292
        %v6108 = vunpack.c.h.b16 %v3292
        %v6109 = vunpack.c.l.b16 %v3293
        %v6110 = vunpack.c.h.b16 %v3293
        %v6111 = vunpack.c.l.b16 %v3294
        %v6112 = vunpack.c.h.b16 %v3294
        %v6113 = vunpack.c.l.b16 %v3295
        %v6114 = vunpack.c.h.b16 %v3295
        %v6115 = vunpack.c.l.b16 %v3296
        %v6116 = vunpack.c.h.b16 %v3296
        %v6117 = vunpack.c.l.b16 %v3297
        %v6118 = vunpack.c.h.b16 %v3297
        %v6119 = vunpack.c.l.b16 %v3298
        %v6120 = vunpack.c.h.b16 %v3298
        %v6121 = vunpack.c.l.b16 %v3299
        %v6122 = vunpack.c.h.b16 %v3299
        %v6123 = vunpack.c.l.b16 %v3300
        %v6124 = vunpack.c.h.b16 %v3300
        %v6125 = vunpack.c.l.b16 %v3301
        %v6126 = vunpack.c.h.b16 %v3301
        %v6127 = vunpack.c.l.b16 %v3302
        %v6128 = vunpack.c.h.b16 %v3302
        %v6129 = vunpack.c.l.b16 %v3303
        %v6130 = vunpack.c.h.b16 %v3303
        %v6131 = vunpack.c.l.b16 %v3304
        %v6132 = vunpack.c.h.b16 %v3304
        %v6133 = vunpack.c.l.b16 %v3305
        %v6134 = vunpack.c.h.b16 %v3305
        %v6135 = vunpack.c.l.b16 %v3306
        %v6136 = vunpack.c.h.b16 %v3306
        %v6137 = vunpack.c.l.b16 %v3307
        %v6138 = vunpack.c.h.b16 %v3307
        %v6139 = vunpack.c.l.b16 %v3308
        %v6140 = vunpack.c.h.b16 %v3308
        %v6141 = vunpack.c.l.b16 %v3309
        %v6142 = vunpack.c.h.b16 %v3309
        %v6143 = vunpack.c.l.b16 %v3310
        %v6144 = vunpack.c.h.b16 %v3310
        %v6145 = vunpack.c.l.b16 %v3311
        %v6146 = vunpack.c.h.b16 %v3311
        %v6147 = vunpack.c.l.b16 %v3312
        %v6148 = vunpack.c.h.b16 %v3312
        %v6149 = vunpack.c.l.b16 %v3313
        %v6150 = vunpack.c.h.b16 %v3313
        %v6151 = vunpack.c.l.b16 %v3314
        %v6152 = vunpack.c.h.b16 %v3314
        %v6153 = vunpack.c.l.b16 %v3315
        %v6154 = vunpack.c.h.b16 %v3315
        %v6155 = vunpack.c.l.b16 %v3316
        %v6156 = vunpack.c.h.b16 %v3316
        %v6157 = vunpack.c.l.b16 %v3317
        %v6158 = vunpack.c.h.b16 %v3317
        %v6159 = vunpack.c.l.b16 %v3318
        %v6160 = vunpack.c.h.b16 %v3318
        %v6161 = vunpack.c.l.b16 %v3319
        %v6162 = vunpack.c.h.b16 %v3319
        %v6163 = vunpack.c.l.b16 %v3320
        %v6164 = vunpack.c.h.b16 %v3320
        %v6165 = vunpack.c.l.b16 %v3321
        %v6166 = vunpack.c.h.b16 %v3321
        %v6167 = vunpack.c.l.b16 %v3322
        %v6168 = vunpack.c.h.b16 %v3322
        %v6169 = vunpack.c.l.b16 %v3323
        %v6170 = vunpack.c.h.b16 %v3323
        %v6171 = vunpack.c.l.b16 %v3324
        %v6172 = vunpack.c.h.b16 %v3324
        %v6173 = vunpack.c.l.b16 %v3325
        %v6174 = vunpack.c.h.b16 %v3325
        %v6175 = vunpack.c.l.b16 %v3326
        %v6176 = vunpack.c.h.b16 %v3326
        %v6177 = vunpack.c.l.b16 %v3327
        %v6178 = vunpack.c.h.b16 %v3327
        %v6179 = vunpack.c.l.b16 %v3328
        %v6180 = vunpack.c.h.b16 %v3328
        %v6181 = vunpack.c.l.b16 %v3329
        %v6182 = vunpack.c.h.b16 %v3329
        %v6183 = vunpack.c.l.b16 %v3330
        %v6184 = vunpack.c.h.b16 %v3330
        %v6185 = vunpack.c.l.b16 %v3331
        %v6186 = vunpack.c.h.b16 %v3331
        %v6187 = vunpack.c.l.b16 %v3332
        %v6188 = vunpack.c.h.b16 %v3332
        %v6189 = vunpack.c.l.b16 %v3333
        %v6190 = vunpack.c.h.b16 %v3333
        %v6191 = vunpack.c.l.b16 %v3334
        %v6192 = vunpack.c.h.b16 %v3334
        %v6193 = vunpack.c.l.b16 %v3335
        %v6194 = vunpack.c.h.b16 %v3335
        %v6195 = vunpack.c.l.b16 %v3336
        %v6196 = vunpack.c.h.b16 %v3336
        %v6197 = vunpack.c.l.b16 %v3337
        %v6198 = vunpack.c.h.b16 %v3337
        %v6199 = vunpack.c.l.b16 %v3338
        %v6200 = vunpack.c.h.b16 %v3338
        %v6201 = vunpack.c.l.b16 %v3339
        %v6202 = vunpack.c.h.b16 %v3339
        %v6203 = vunpack.c.l.b16 %v3340
        %v6204 = vunpack.c.h.b16 %v3340
        %v6205 = vunpack.c.l.b16 %v3341
        %v6206 = vunpack.c.h.b16 %v3341
        %v6207 = vunpack.c.l.b16 %v3342
        %v6208 = vunpack.c.h.b16 %v3342
        %v6209 = vunpack.c.l.b16 %v3343
        %v6210 = vunpack.c.h.b16 %v3343
        %v6211 = vunpack.c.l.b16 %v3344
        %v6212 = vunpack.c.h.b16 %v3344
        %v6213 = vunpack.c.l.b16 %v3345
        %v6214 = vunpack.c.h.b16 %v3345
        %v6215 = vunpack.c.l.b16 %v3346
        %v6216 = vunpack.c.h.b16 %v3346
        %v6217 = vunpack.c.l.b16 %v3347
        %v6218 = vunpack.c.h.b16 %v3347
        %v6219 = vunpack.c.l.b16 %v3348
        %v6220 = vunpack.c.h.b16 %v3348
        %v6221 = vunpack.c.l.b16 %v3349
        %v6222 = vunpack.c.h.b16 %v3349
        %v6223 = vunpack.c.l.b16 %v3350
        %v6224 = vunpack.c.h.b16 %v3350
        %v6225 = vunpack.c.l.b16 %v3351
        %v6226 = vunpack.c.h.b16 %v3351
        %v6227 = vunpack.c.l.b16 %v3352
        %v6228 = vunpack.c.h.b16 %v3352
        %v6229 = vunpack.c.l.b16 %v3353
        %v6230 = vunpack.c.h.b16 %v3353
        %v6231 = vunpack.c.l.b16 %v3354
        %v6232 = vunpack.c.h.b16 %v3354
        %v6233 = vunpack.c.l.b16 %v3355
        %v6234 = vunpack.c.h.b16 %v3355
        %v6235 = vunpack.c.l.b16 %v3356
        %v6236 = vunpack.c.h.b16 %v3356
        %v6237 = vunpack.c.l.b16 %v3357
        %v6238 = vunpack.c.h.b16 %v3357
        %v6239 = vunpack.c.l.b16 %v3358
        %v6240 = vunpack.c.h.b16 %v3358
        %v6241 = vunpack.c.l.b16 %v3359
        %v6242 = vunpack.c.h.b16 %v3359
        %v6243 = vunpack.c.l.b16 %v3360
        %v6244 = vunpack.c.h.b16 %v3360
        %v6245 = vunpack.c.l.b16 %v3361
        %v6246 = vunpack.c.h.b16 %v3361
        %v6247 = vunpack.c.l.b16 %v3362
        %v6248 = vunpack.c.h.b16 %v3362
        %v6249 = vunpack.c.l.b16 %v3363
        %v6250 = vunpack.c.h.b16 %v3363
        %v6251 = vunpack.c.l.b16 %v3364
        %v6252 = vunpack.c.h.b16 %v3364
        %v6253 = vunpack.c.l.b16 %v3365
        %v6254 = vunpack.c.h.b16 %v3365
        %v6255 = vunpack.c.l.b16 %v3366
        %v6256 = vunpack.c.h.b16 %v3366
        %v6257 = vunpack.c.l.b16 %v3367
        %v6258 = vunpack.c.h.b16 %v3367
        %v6259 = vunpack.c.l.b16 %v3368
        %v6260 = vunpack.c.h.b16 %v3368
        %v6261 = vunpack.c.l.b16 %v3369
        %v6262 = vunpack.c.h.b16 %v3369
        %v6263 = vunpack.c.l.b16 %v3370
        %v6264 = vunpack.c.h.b16 %v3370
        %v6265 = vunpack.c.l.b16 %v3371
        %v6266 = vunpack.c.h.b16 %v3371
        %v6267 = vunpack.c.l.b16 %v3372
        %v6268 = vunpack.c.h.b16 %v3372
        %v6269 = vunpack.c.l.b16 %v3373
        %v6270 = vunpack.c.h.b16 %v3373
        %v6271 = vunpack.c.l.b16 %v3374
        %v6272 = vunpack.c.h.b16 %v3374
        %v6273 = vunpack.c.l.b16 %v3375
        %v6274 = vunpack.c.h.b16 %v3375
        %v6275 = vunpack.c.l.b16 %v3376
        %v6276 = vunpack.c.h.b16 %v3376
        %v6277 = vunpack.c.l.b16 %v3377
        %v6278 = vunpack.c.h.b16 %v3377
        %v6279 = vunpack.c.l.b16 %v3378
        %v6280 = vunpack.c.h.b16 %v3378
        %v6281 = vunpack.c.l.b16 %v3379
        %v6282 = vunpack.c.h.b16 %v3379
        %v6283 = vunpack.c.l.b16 %v3380
        %v6284 = vunpack.c.h.b16 %v3380
        %v6285 = vunpack.c.l.b16 %v3381
        %v6286 = vunpack.c.h.b16 %v3381
        %v6287 = vunpack.c.l.b16 %v3382
        %v6288 = vunpack.c.h.b16 %v3382
        %v6289 = vunpack.c.l.b16 %v3383
        %v6290 = vunpack.c.h.b16 %v3383
        %v6291 = vunpack.c.l.b16 %v3384
        %v6292 = vunpack.c.h.b16 %v3384
        %v6293 = vunpack.c.l.b16 %v3385
        %v6294 = vunpack.c.h.b16 %v3385
        %v6295 = vunpack.c.l.b16 %v3386
        %v6296 = vunpack.c.h.b16 %v3386
        %v6297 = vunpack.c.l.b16 %v3387
        %v6298 = vunpack.c.h.b16 %v3387
        %v6299 = vunpack.c.l.b16 %v3388
        %v6300 = vunpack.c.h.b16 %v3388
        %v6301 = vunpack.c.l.b16 %v3389
        %v6302 = vunpack.c.h.b16 %v3389
        %v6303 = vunpack.c.l.b16 %v3390
        %v6304 = vunpack.c.h.b16 %v3390
        %v6305 = vunpack.c.l.b16 %v3391
        %v6306 = vunpack.c.h.b16 %v3391
        %v6307 = vunpack.c.l.b16 %v3392
        %v6308 = vunpack.c.h.b16 %v3392
        %v6309 = vunpack.c.l.b16 %v3393
        %v6310 = vunpack.c.h.b16 %v3393
        %v6311 = vunpack.c.l.b16 %v3394
        %v6312 = vunpack.c.h.b16 %v3394
        %v6313 = vunpack.c.l.b16 %v3395
        %v6314 = vunpack.c.h.b16 %v3395
        %v6315 = vunpack.c.l.b16 %v3396
        %v6316 = vunpack.c.h.b16 %v3396
        %v6317 = vunpack.c.l.b16 %v3397
        %v6318 = vunpack.c.h.b16 %v3397
        %v6319 = vunpack.c.l.b16 %v3398
        %v6320 = vunpack.c.h.b16 %v3398
        %v6321 = vunpack.c.l.b16 %v3399
        %v6322 = vunpack.c.h.b16 %v3399
        %v6323 = vunpack.c.l.b16 %v3400
        %v6324 = vunpack.c.h.b16 %v3400
        %v6325 = vunpack.c.l.b16 %v3401
        %v6326 = vunpack.c.h.b16 %v3401
        %v6327 = vunpack.c.l.b16 %v3402
        %v6328 = vunpack.c.h.b16 %v3402
        %v6329 = vunpack.c.l.b16 %v3403
        %v6330 = vunpack.c.h.b16 %v3403
        %v6331 = vunpack.c.l.b16 %v3404
        %v6332 = vunpack.c.h.b16 %v3404
        %v6333 = vunpack.c.l.b16 %v3405
        %v6334 = vunpack.c.h.b16 %v3405
        %v6335 = vunpack.c.l.b16 %v3406
        %v6336 = vunpack.c.h.b16 %v3406
        %v6337 = vunpack.c.l.b16 %v3407
        %v6338 = vunpack.c.h.b16 %v3407
        %v6339 = vunpack.c.l.b16 %v3408
        %v6340 = vunpack.c.h.b16 %v3408
        %v6341 = vunpack.c.l.b16 %v3409
        %v6342 = vunpack.c.h.b16 %v3409
        %v6343 = vunpack.c.l.b16 %v3410
        %v6344 = vunpack.c.h.b16 %v3410
        %v6345 = vunpack.c.l.b16 %v3411
        %v6346 = vunpack.c.h.b16 %v3411
        %v6347 = vunpack.c.l.b16 %v3412
        %v6348 = vunpack.c.h.b16 %v3412
        %v6349 = vunpack.c.l.b16 %v3413
        %v6350 = vunpack.c.h.b16 %v3413
        %v6351 = vunpack.c.l.b16 %v3414
        %v6352 = vunpack.c.h.b16 %v3414
        %v6353 = vunpack.c.l.b16 %v3415
        %v6354 = vunpack.c.h.b16 %v3415
        %v6355 = vunpack.c.l.b16 %v3416
        %v6356 = vunpack.c.h.b16 %v3416
        %v6357 = vunpack.c.l.b16 %v3417
        %v6358 = vunpack.c.h.b16 %v3417
        %v6359 = vunpack.c.l.b16 %v3418
        %v6360 = vunpack.c.h.b16 %v3418
        %v6361 = vunpack.c.l.b16 %v3419
        %v6362 = vunpack.c.h.b16 %v3419
        %v6363 = vunpack.c.l.b16 %v3420
        %v6364 = vunpack.c.h.b16 %v3420
        %v6365 = vunpack.c.l.b16 %v3421
        %v6366 = vunpack.c.h.b16 %v3421
        %v6367 = vunpack.c.l.b16 %v3422
        %v6368 = vunpack.c.h.b16 %v3422
        %v6369 = vunpack.c.l.b16 %v3423
        %v6370 = vunpack.c.h.b16 %v3423
        %v6371 = vunpack.c.l.b16 %v3424
        %v6372 = vunpack.c.h.b16 %v3424
        %v6373 = vunpack.c.l.b16 %v3425
        %v6374 = vunpack.c.h.b16 %v3425
        %v6375 = vunpack.c.l.b16 %v3426
        %v6376 = vunpack.c.h.b16 %v3426
        %v6377 = vunpack.c.l.b16 %v3427
        %v6378 = vunpack.c.h.b16 %v3427
        %v6379 = vunpack.c.l.b16 %v3428
        %v6380 = vunpack.c.h.b16 %v3428
        %v6381 = vunpack.c.l.b16 %v3429
        %v6382 = vunpack.c.h.b16 %v3429
        %v6383 = vunpack.c.l.b16 %v3430
        %v6384 = vunpack.c.h.b16 %v3430
        %v6385 = vunpack.c.l.b16 %v3431
        %v6386 = vunpack.c.h.b16 %v3431
        %v6387 = vunpack.c.l.b16 %v3432
        %v6388 = vunpack.c.h.b16 %v3432
        %v6389 = vunpack.c.l.b16 %v3433
        %v6390 = vunpack.c.h.b16 %v3433
        %v6391 = vunpack.c.l.b16 %v3434
        %v6392 = vunpack.c.h.b16 %v3434
        %v6393 = vunpack.c.l.b16 %v3435
        %v6394 = vunpack.c.h.b16 %v3435
        %v6395 = vunpack.c.l.b16 %v3436
        %v6396 = vunpack.c.h.b16 %v3436
        %v6397 = vunpack.c.l.b16 %v3437
        %v6398 = vunpack.c.h.b16 %v3437
        %v6399 = vunpack.c.l.b16 %v3438
        %v6400 = vunpack.c.h.b16 %v3438
        %v6401 = vunpack.c.l.b16 %v3439
        %v6402 = vunpack.c.h.b16 %v3439
        %v6403 = vunpack.c.l.b16 %v3440
        %v6404 = vunpack.c.h.b16 %v3440
        %v6405 = vunpack.c.l.b16 %v3441
        %v6406 = vunpack.c.h.b16 %v3441
        %v6407 = vunpack.c.l.b16 %v3442
        %v6408 = vunpack.c.h.b16 %v3442
        %v6409 = vunpack.c.l.b16 %v3443
        %v6410 = vunpack.c.h.b16 %v3443
        %v6411 = vunpack.c.l.b16 %v3444
        %v6412 = vunpack.c.h.b16 %v3444
        %v6413 = vunpack.c.l.b16 %v3445
        %v6414 = vunpack.c.h.b16 %v3445
        %v6415 = vunpack.c.l.b16 %v3446
        %v6416 = vunpack.c.h.b16 %v3446
        %v6417 = vunpack.c.l.b16 %v3447
        %v6418 = vunpack.c.h.b16 %v3447
        %v6419 = vunpack.c.l.b16 %v3448
        %v6420 = vunpack.c.h.b16 %v3448
        %v6421 = vunpack.c.l.b16 %v3449
        %v6422 = vunpack.c.h.b16 %v3449
        %v6423 = vunpack.c.l.b16 %v3450
        %v6424 = vunpack.c.h.b16 %v3450
        %v6425 = vunpack.c.l.b16 %v3451
        %v6426 = vunpack.c.h.b16 %v3451
        %v6427 = vunpack.c.l.b16 %v3452
        %v6428 = vunpack.c.h.b16 %v3452
        %v6429 = vunpack.c.l.b16 %v3453
        %v6430 = vunpack.c.h.b16 %v3453
        %v6431 = vunpack.c.l.b16 %v3454
        %v6432 = vunpack.c.h.b16 %v3454
        %v6433 = vunpack.c.l.b16 %v3455
        %v6434 = vunpack.c.h.b16 %v3455
        %v6435 = vunpack.c.l.b16 %v3456
        %v6436 = vunpack.c.h.b16 %v3456
        %v6437 = vunpack.c.l.b16 %v3457
        %v6438 = vunpack.c.h.b16 %v3457
        %v6439 = vunpack.c.l.b16 %v3458
        %v6440 = vunpack.c.h.b16 %v3458
        %v6441 = vunpack.c.l.b16 %v3459
        %v6442 = vunpack.c.h.b16 %v3459
        %v6443 = vunpack.c.l.b16 %v3460
        %v6444 = vunpack.c.h.b16 %v3460
        %v6445 = vunpack.c.l.b16 %v3461
        %v6446 = vunpack.c.h.b16 %v3461
        %v6447 = vunpack.c.l.b16 %v3462
        %v6448 = vunpack.c.h.b16 %v3462
        %v6449 = vunpack.c.l.b16 %v3463
        %v6450 = vunpack.c.h.b16 %v3463
        %v6451 = vunpack.c.l.b16 %v3464
        %v6452 = vunpack.c.h.b16 %v3464
        %v6453 = vunpack.c.l.b16 %v3465
        %v6454 = vunpack.c.h.b16 %v3465
        %v6455 = vunpack.c.l.b16 %v3466
        %v6456 = vunpack.c.h.b16 %v3466
        %v6457 = vunpack.c.l.b16 %v3467
        %v6458 = vunpack.c.h.b16 %v3467
        %v6459 = vunpack.c.l.b16 %v3468
        %v6460 = vunpack.c.h.b16 %v3468
        %v6461 = vunpack.c.l.b16 %v3469
        %v6462 = vunpack.c.h.b16 %v3469
        %v6463 = vunpack.c.l.b16 %v3470
        %v6464 = vunpack.c.h.b16 %v3470
        %v6465 = vunpack.c.l.b16 %v3471
        %v6466 = vunpack.c.h.b16 %v3471
        %v6467 = vunpack.c.l.b16 %v3472
        %v6468 = vunpack.c.h.b16 %v3472
        %v6469 = vunpack.c.l.b16 %v3473
        %v6470 = vunpack.c.h.b16 %v3473
        %v6471 = vunpack.c.l.b16 %v3474
        %v6472 = vunpack.c.h.b16 %v3474
        %v6473 = vunpack.c.l.b16 %v3475
        %v6474 = vunpack.c.h.b16 %v3475
        %v6475 = vunpack.c.l.b16 %v3476
        %v6476 = vunpack.c.h.b16 %v3476
        %v6477 = vunpack.c.l.b16 %v3477
        %v6478 = vunpack.c.h.b16 %v3477
        %v6479 = vunpack.c.l.b16 %v3478
        %v6480 = vunpack.c.h.b16 %v3478
        %v6481 = vunpack.c.l.b16 %v3479
        %v6482 = vunpack.c.h.b16 %v3479
        %v6483 = vunpack.c.l.b16 %v3480
        %v6484 = vunpack.c.h.b16 %v3480
        %v6485 = vunpack.c.l.b16 %v3481
        %v6486 = vunpack.c.h.b16 %v3481
        %v6487 = vunpack.c.l.b16 %v3482
        %v6488 = vunpack.c.h.b16 %v3482
        %v6489 = vunpack.c.l.b16 %v3483
        %v6490 = vunpack.c.h.b16 %v3483
        %v6491 = vunpack.c.l.b16 %v3484
        %v6492 = vunpack.c.h.b16 %v3484
        %v6493 = vunpack.c.l.b16 %v3485
        %v6494 = vunpack.c.h.b16 %v3485
        %v6495 = vunpack.c.l.b16 %v3486
        %v6496 = vunpack.c.h.b16 %v3486
        %v6497 = vunpack.c.l.b16 %v3487
        %v6498 = vunpack.c.h.b16 %v3487
        %v6499 = vunpack.c.l.b16 %v3488
        %v6500 = vunpack.c.h.b16 %v3488
        %v6501 = vunpack.c.l.b16 %v3489
        %v6502 = vunpack.c.h.b16 %v3489
        %v6503 = vunpack.c.l.b16 %v3490
        %v6504 = vunpack.c.h.b16 %v3490
        %v6505 = vunpack.c.l.b16 %v3491
        %v6506 = vunpack.c.h.b16 %v3491
        %v6507 = vunpack.c.l.b16 %v3492
        %v6508 = vunpack.c.h.b16 %v3492
        %v6509 = vunpack.c.l.b16 %v3493
        %v6510 = vunpack.c.h.b16 %v3493
        %v6511 = vunpack.c.l.b16 %v3494
        %v6512 = vunpack.c.h.b16 %v3494
        %v6513 = vunpack.c.l.b16 %v3495
        %v6514 = vunpack.c.h.b16 %v3495
        %v6515 = vunpack.c.l.b16 %v3496
        %v6516 = vunpack.c.h.b16 %v3496
        %v6517 = vunpack.c.l.b16 %v3497
        %v6518 = vunpack.c.h.b16 %v3497
        %v6519 = vunpack.c.l.b16 %v3498
        %v6520 = vunpack.c.h.b16 %v3498
        %v6521 = vunpack.c.l.b16 %v3499
        %v6522 = vunpack.c.h.b16 %v3499
        %v6523 = vunpack.c.l.b16 %v3500
        %v6524 = vunpack.c.h.b16 %v3500
        %v6525 = vunpack.c.l.b16 %v3501
        %v6526 = vunpack.c.h.b16 %v3501
        %v6527 = vunpack.c.l.b16 %v3502
        %v6528 = vunpack.c.h.b16 %v3502
        %v6529 = vunpack.c.l.b16 %v3503
        %v6530 = vunpack.c.h.b16 %v3503
        %v6531 = vunpack.c.l.b16 %v3504
        %v6532 = vunpack.c.h.b16 %v3504
        %v6533 = vunpack.c.l.b16 %v3505
        %v6534 = vunpack.c.h.b16 %v3505
        %v6535 = vunpack.c.l.b16 %v3506
        %v6536 = vunpack.c.h.b16 %v3506
        %v6537 = vunpack.c.l.b16 %v3507
        %v6538 = vunpack.c.h.b16 %v3507
        %v6539 = vunpack.c.l.b16 %v3508
        %v6540 = vunpack.c.h.b16 %v3508
        %v6541 = vunpack.c.l.b16 %v3509
        %v6542 = vunpack.c.h.b16 %v3509
        %v6543 = vunpack.c.l.b16 %v3510
        %v6544 = vunpack.c.h.b16 %v3510
        %v6545 = vunpack.c.l.b16 %v3511
        %v6546 = vunpack.c.h.b16 %v3511
        %v6547 = vunpack.c.l.b16 %v3512
        %v6548 = vunpack.c.h.b16 %v3512
        %v6549 = vunpack.c.l.b16 %v3513
        %v6550 = vunpack.c.h.b16 %v3513
        %v6551 = vunpack.c.l.b16 %v3514
        %v6552 = vunpack.c.h.b16 %v3514
        %v6553 = vunpack.c.l.b16 %v3515
        %v6554 = vunpack.c.h.b16 %v3515
        %v6555 = vunpack.c.l.b16 %v3516
        %v6556 = vunpack.c.h.b16 %v3516
        %v6557 = vunpack.c.l.b16 %v3517
        %v6558 = vunpack.c.h.b16 %v3517
        %v6559 = vunpack.c.l.b16 %v3518
        %v6560 = vunpack.c.h.b16 %v3518
        %v6561 = vunpack.c.l.b16 %v3519
        %v6562 = vunpack.c.h.b16 %v3519
        %v6563 = vunpack.c.l.b16 %v3520
        %v6564 = vunpack.c.h.b16 %v3520
        %v6565 = vunpack.c.l.b16 %v3521
        %v6566 = vunpack.c.h.b16 %v3521
        %v6567 = vunpack.c.l.b16 %v3522
        %v6568 = vunpack.c.h.b16 %v3522
        %v6569 = vunpack.c.l.b16 %v3523
        %v6570 = vunpack.c.h.b16 %v3523
        %v6571 = vunpack.c.l.b16 %v3524
        %v6572 = vunpack.c.h.b16 %v3524
        %v6573 = vunpack.c.l.b16 %v3525
        %v6574 = vunpack.c.h.b16 %v3525
        %v6575 = vunpack.c.l.b16 %v3526
        %v6576 = vunpack.c.h.b16 %v3526
        %v6577 = vunpack.c.l.b16 %v3527
        %v6578 = vunpack.c.h.b16 %v3527
        %v6579 = vunpack.c.l.b16 %v3528
        %v6580 = vunpack.c.h.b16 %v3528
        %v6581 = vunpack.c.l.b16 %v3529
        %v6582 = vunpack.c.h.b16 %v3529
        %v6583 = vunpack.c.l.b16 %v3530
        %v6584 = vunpack.c.h.b16 %v3530
        %v6585 = vunpack.c.l.b16 %v3531
        %v6586 = vunpack.c.h.b16 %v3531
        %v6587 = vunpack.c.l.b16 %v3532
        %v6588 = vunpack.c.h.b16 %v3532
        %v6589 = vunpack.c.l.b16 %v3533
        %v6590 = vunpack.c.h.b16 %v3533
        %v6591 = vunpack.c.l.b16 %v3534
        %v6592 = vunpack.c.h.b16 %v3534
        %v6593 = vunpack.c.l.b16 %v3535
        %v6594 = vunpack.c.h.b16 %v3535
        %v6595 = vunpack.c.l.b16 %v3536
        %v6596 = vunpack.c.h.b16 %v3536
        %v6597 = vunpack.c.l.b16 %v3537
        %v6598 = vunpack.c.h.b16 %v3537
        %v6599 = vunpack.c.l.b16 %v3538
        %v6600 = vunpack.c.h.b16 %v3538
        %v6601 = vunpack.c.l.b16 %v3539
        %v6602 = vunpack.c.h.b16 %v3539
        %v6603 = vunpack.c.l.b16 %v3540
        %v6604 = vunpack.c.h.b16 %v3540
        %v6605 = vunpack.c.l.b16 %v3541
        %v6606 = vunpack.c.h.b16 %v3541
        %v6607 = vunpack.c.l.b16 %v3542
        %v6608 = vunpack.c.h.b16 %v3542
        %v6609 = vunpack.c.l.b16 %v3543
        %v6610 = vunpack.c.h.b16 %v3543
        %v6611 = vunpack.c.l.b16 %v3544
        %v6612 = vunpack.c.h.b16 %v3544
        %v6613 = vunpack.c.l.b16 %v3545
        %v6614 = vunpack.c.h.b16 %v3545
        %v6615 = vunpack.c.l.b16 %v3546
        %v6616 = vunpack.c.h.b16 %v3546
        %v6617 = vunpack.c.l.b16 %v3547
        %v6618 = vunpack.c.h.b16 %v3547
        %v6619 = vunpack.c.l.b16 %v3548
        %v6620 = vunpack.c.h.b16 %v3548
        %v6621 = vunpack.c.l.b16 %v3549
        %v6622 = vunpack.c.h.b16 %v3549
        %v6623 = vunpack.c.l.b16 %v3550
        %v6624 = vunpack.c.h.b16 %v3550
        %v6625 = vunpack.c.l.b16 %v3551
        %v6626 = vunpack.c.h.b16 %v3551
        %v6627 = vunpack.c.l.b16 %v3552
        %v6628 = vunpack.c.h.b16 %v3552
        %v6629 = vunpack.c.l.b16 %v3553
        %v6630 = vunpack.c.h.b16 %v3553
        %v6631 = vunpack.c.l.b16 %v3554
        %v6632 = vunpack.c.h.b16 %v3554
        %v6633 = vunpack.c.l.b16 %v3555
        %v6634 = vunpack.c.h.b16 %v3555
        %v6635 = vunpack.c.l.b16 %v3556
        %v6636 = vunpack.c.h.b16 %v3556
        %v6637 = vunpack.c.l.b16 %v3557
        %v6638 = vunpack.c.h.b16 %v3557
        %v6639 = vunpack.c.l.b16 %v3558
        %v6640 = vunpack.c.h.b16 %v3558
        %v6641 = vunpack.c.l.b16 %v3559
        %v6642 = vunpack.c.h.b16 %v3559
        %v6643 = vunpack.c.l.b16 %v3560
        %v6644 = vunpack.c.h.b16 %v3560
        %v6645 = vunpack.c.l.b16 %v3561
        %v6646 = vunpack.c.h.b16 %v3561
        %v6647 = vunpack.c.l.b16 %v3562
        %v6648 = vunpack.c.h.b16 %v3562
        %v6649 = vunpack.c.l.b16 %v3563
        %v6650 = vunpack.c.h.b16 %v3563
        %v6651 = vunpack.c.l.b16 %v3564
        %v6652 = vunpack.c.h.b16 %v3564
        %v6653 = vunpack.c.l.b16 %v3565
        %v6654 = vunpack.c.h.b16 %v3565
        %v6655 = vunpack.c.l.b16 %v3566
        %v6656 = vunpack.c.h.b16 %v3566
        %v6657 = vunpack.c.l.b16 %v3567
        %v6658 = vunpack.c.h.b16 %v3567
        %v6659 = vunpack.c.l.b16 %v3568
        %v6660 = vunpack.c.h.b16 %v3568
        %v6661 = vunpack.c.l.b16 %v3569
        %v6662 = vunpack.c.h.b16 %v3569
        %v6663 = vunpack.c.l.b16 %v3570
        %v6664 = vunpack.c.h.b16 %v3570
        %v6665 = vunpack.c.l.b16 %v3571
        %v6666 = vunpack.c.h.b16 %v3571
        %v6667 = vunpack.c.l.b16 %v3572
        %v6668 = vunpack.c.h.b16 %v3572
        %v6669 = vunpack.c.l.b16 %v3573
        %v6670 = vunpack.c.h.b16 %v3573
        %v6671 = vunpack.c.l.b16 %v3574
        %v6672 = vunpack.c.h.b16 %v3574
        %v6673 = vunpack.c.l.b16 %v3575
        %v6674 = vunpack.c.h.b16 %v3575
        %v6675 = vunpack.c.l.b16 %v3576
        %v6676 = vunpack.c.h.b16 %v3576
        %v6677 = vunpack.c.l.b16 %v3577
        %v6678 = vunpack.c.h.b16 %v3577
        %v6679 = vunpack.c.l.b16 %v3578
        %v6680 = vunpack.c.h.b16 %v3578
        %v6681 = vunpack.c.l.b16 %v3579
        %v6682 = vunpack.c.h.b16 %v3579
        %v6683 = vunpack.c.l.b16 %v3580
        %v6684 = vunpack.c.h.b16 %v3580
        %v6685 = vunpack.c.l.b16 %v3581
        %v6686 = vunpack.c.h.b16 %v3581
        %v6687 = vunpack.c.l.b16 %v3582
        %v6688 = vunpack.c.h.b16 %v3582
        %v6689 = vunpack.c.l.b16 %v3583
        %v6690 = vunpack.c.h.b16 %v3583
        %v6691 = vunpack.c.l.b16 %v3584
        %v6692 = vunpack.c.h.b16 %v3584
        %v6693 = vunpack.c.l.b16 %v3585
        %v6694 = vunpack.c.h.b16 %v3585
        %v6695 = vunpack.c.l.b16 %v3586
        %v6696 = vunpack.c.h.b16 %v3586
        %v6697 = vunpack.c.l.b16 %v3587
        %v6698 = vunpack.c.h.b16 %v3587
        %v6699 = vunpack.c.l.b16 %v3588
        %v6700 = vunpack.c.h.b16 %v3588
        %v6701 = vunpack.c.l.b16 %v3589
        %v6702 = vunpack.c.h.b16 %v3589
        %v6703 = vunpack.c.l.b16 %v3590
        %v6704 = vunpack.c.h.b16 %v3590
        %v6705 = vunpack.c.l.b16 %v3591
        %v6706 = vunpack.c.h.b16 %v3591
        %v6707 = vunpack.c.l.b16 %v3592
        %v6708 = vunpack.c.h.b16 %v3592
        %v6709 = vunpack.c.l.b16 %v3593
        %v6710 = vunpack.c.h.b16 %v3593
        %v6711 = vunpack.c.l.b16 %v3594
        %v6712 = vunpack.c.h.b16 %v3594
        %v6713 = vunpack.c.l.b16 %v3595
        %v6714 = vunpack.c.h.b16 %v3595
        %v6715 = vunpack.c.l.b16 %v3596
        %v6716 = vunpack.c.h.b16 %v3596
        %v6717 = vunpack.c.l.b16 %v3597
        %v6718 = vunpack.c.h.b16 %v3597
        %v6719 = vunpack.c.l.b16 %v3598
        %v6720 = vunpack.c.h.b16 %v3598
        %v6721 = vunpack.c.l.b16 %v3599
        %v6722 = vunpack.c.h.b16 %v3599
        %v6723 = vunpack.c.l.b16 %v3600
        %v6724 = vunpack.c.h.b16 %v3600
        %v6725 = vunpack.c.l.b16 %v3601
        %v6726 = vunpack.c.h.b16 %v3601
        %v6727 = vunpack.c.l.b16 %v3602
        %v6728 = vunpack.c.h.b16 %v3602
        %v6729 = vunpack.c.l.b16 %v3603
        %v6730 = vunpack.c.h.b16 %v3603
        %v6731 = vunpack.c.l.b16 %v3604
        %v6732 = vunpack.c.h.b16 %v3604
        %v6733 = vunpack.c.l.b16 %v3605
        %v6734 = vunpack.c.h.b16 %v3605
        %v6735 = vunpack.c.l.b16 %v3606
        %v6736 = vunpack.c.h.b16 %v3606
        %v6737 = vunpack.c.l.b16 %v3607
        %v6738 = vunpack.c.h.b16 %v3607
        %v6739 = vunpack.c.l.b16 %v3608
        %v6740 = vunpack.c.h.b16 %v3608
        %v6741 = vunpack.c.l.b16 %v3609
        %v6742 = vunpack.c.h.b16 %v3609
        %v6743 = vunpack.c.l.b16 %v3610
        %v6744 = vunpack.c.h.b16 %v3610
        %v6745 = vunpack.c.l.b16 %v3611
        %v6746 = vunpack.c.h.b16 %v3611
        %v6747 = vunpack.c.l.b16 %v3612
        %v6748 = vunpack.c.h.b16 %v3612
        %v6749 = vunpack.c.l.b16 %v3613
        %v6750 = vunpack.c.h.b16 %v3613
        %v6751 = vunpack.c.l.b16 %v3614
        %v6752 = vunpack.c.h.b16 %v3614
        %v6753 = vunpack.c.l.b16 %v3615
        %v6754 = vunpack.c.h.b16 %v3615
        %v6755 = vunpack.c.l.b16 %v3616
        %v6756 = vunpack.c.h.b16 %v3616
        %v6757 = vunpack.c.l.b16 %v3617
        %v6758 = vunpack.c.h.b16 %v3617
        %v6759 = vunpack.c.l.b16 %v3618
        %v6760 = vunpack.c.h.b16 %v3618
        %v6761 = vunpack.c.l.b16 %v3619
        %v6762 = vunpack.c.h.b16 %v3619
        %v6763 = vunpack.c.l.b16 %v3620
        %v6764 = vunpack.c.h.b16 %v3620
        %v6765 = vunpack.c.l.b16 %v3621
        %v6766 = vunpack.c.h.b16 %v3621
        %v6767 = vunpack.c.l.b16 %v3622
        %v6768 = vunpack.c.h.b16 %v3622
        %v6769 = vunpack.c.l.b16 %v3623
        %v6770 = vunpack.c.h.b16 %v3623
        %v6771 = vunpack.c.l.b16 %v3624
        %v6772 = vunpack.c.h.b16 %v3624
        %v6773 = vunpack.c.l.b16 %v3625
        %v6774 = vunpack.c.h.b16 %v3625
        %v6775 = vunpack.c.l.b16 %v3626
        %v6776 = vunpack.c.h.b16 %v3626
        %v6777 = vunpack.c.l.b16 %v3627
        %v6778 = vunpack.c.h.b16 %v3627
        %v6779 = vunpack.c.l.b16 %v3628
        %v6780 = vunpack.c.h.b16 %v3628
        %v6781 = vunpack.c.l.b16 %v3629
        %v6782 = vunpack.c.h.b16 %v3629
        %v6783 = vunpack.c.l.b16 %v3630
        %v6784 = vunpack.c.h.b16 %v3630
        %v6785 = vunpack.c.l.b16 %v3631
        %v6786 = vunpack.c.h.b16 %v3631
        %v6787 = vunpack.c.l.b16 %v3632
        %v6788 = vunpack.c.h.b16 %v3632
        %v6789 = vunpack.c.l.b16 %v3633
        %v6790 = vunpack.c.h.b16 %v3633
        %v6791 = vunpack.c.l.b16 %v3634
        %v6792 = vunpack.c.h.b16 %v3634
        %v6793 = vunpack.c.l.b16 %v3635
        %v6794 = vunpack.c.h.b16 %v3635
        %v6795 = vunpack.c.l.b16 %v3636
        %v6796 = vunpack.c.h.b16 %v3636
        %v6797 = vunpack.c.l.b16 %v3637
        %v6798 = vunpack.c.h.b16 %v3637
        %v6799 = vunpack.c.l.b16 %v3638
        %v6800 = vunpack.c.h.b16 %v3638
        %v6801 = vunpack.c.l.b16 %v3639
        %v6802 = vunpack.c.h.b16 %v3639
        %v6803 = vunpack.c.l.b16 %v3640
        %v6804 = vunpack.c.h.b16 %v3640
        %v6805 = vunpack.c.l.b16 %v3641
        %v6806 = vunpack.c.h.b16 %v3641
        %v6807 = vunpack.c.l.b16 %v3642
        %v6808 = vunpack.c.h.b16 %v3642
        %v6809 = vunpack.c.l.b16 %v3643
        %v6810 = vunpack.c.h.b16 %v3643
        %v6811 = vunpack.c.l.b16 %v3644
        %v6812 = vunpack.c.h.b16 %v3644
        %v6813 = vunpack.c.l.b16 %v3645
        %v6814 = vunpack.c.h.b16 %v3645
        %v6815 = vunpack.c.l.b16 %v3646
        %v6816 = vunpack.c.h.b16 %v3646
        %v6817 = vunpack.c.l.b16 %v3647
        %v6818 = vunpack.c.h.b16 %v3647
        %v6819 = vunpack.c.l.b16 %v3648
        %v6820 = vunpack.c.h.b16 %v3648
        %v6821 = vunpack.c.l.b16 %v3649
        %v6822 = vunpack.c.h.b16 %v3649
        %v6823 = vunpack.c.l.b16 %v3650
        %v6824 = vunpack.c.h.b16 %v3650
        %v6825 = vunpack.c.l.b16 %v3651
        %v6826 = vunpack.c.h.b16 %v3651
        %v6827 = vunpack.c.l.b16 %v3652
        %v6828 = vunpack.c.h.b16 %v3652
        %v6829 = vunpack.c.l.b16 %v3653
        %v6830 = vunpack.c.h.b16 %v3653
        %v6831 = vunpack.c.l.b16 %v3654
        %v6832 = vunpack.c.h.b16 %v3654
        %v6833 = vunpack.c.l.b16 %v3655
        %v6834 = vunpack.c.h.b16 %v3655
        %v6835 = vunpack.c.l.b16 %v3656
        %v6836 = vunpack.c.h.b16 %v3656
        %v6837 = vunpack.c.l.b16 %v3657
        %v6838 = vunpack.c.h.b16 %v3657
        %v6839 = vunpack.c.l.b16 %v3658
        %v6840 = vunpack.c.h.b16 %v3658
        %v6841 = vunpack.c.l.b16 %v3659
        %v6842 = vunpack.c.h.b16 %v3659
        %v6843 = vunpack.c.l.b16 %v3660
        %v6844 = vunpack.c.h.b16 %v3660
        %v6845 = vunpack.c.l.b16 %v3661
        %v6846 = vunpack.c.h.b16 %v3661
        %v6847 = vunpack.c.l.b16 %v3662
        %v6848 = vunpack.c.h.b16 %v3662
        %v6849 = vunpack.c.l.b16 %v3663
        %v6850 = vunpack.c.h.b16 %v3663
        %v6851 = vunpack.c.l.b16 %v3664
        %v6852 = vunpack.c.h.b16 %v3664
        %v6853 = vunpack.c.l.b16 %v3665
        %v6854 = vunpack.c.h.b16 %v3665
        %v6855 = vunpack.c.l.b16 %v3666
        %v6856 = vunpack.c.h.b16 %v3666
        %v6857 = vunpack.c.l.b16 %v3667
        %v6858 = vunpack.c.h.b16 %v3667
        %v6859 = vunpack.c.l.b16 %v3668
        %v6860 = vunpack.c.h.b16 %v3668
        %v6861 = vunpack.c.l.b16 %v3669
        %v6862 = vunpack.c.h.b16 %v3669
        %v6863 = vunpack.c.l.b16 %v3670
        %v6864 = vunpack.c.h.b16 %v3670
        %v6865 = vunpack.c.l.b16 %v3671
        %v6866 = vunpack.c.h.b16 %v3671
        %v6867 = vunpack.c.l.b16 %v3672
        %v6868 = vunpack.c.h.b16 %v3672
        %v6869 = vunpack.c.l.b16 %v3673
        %v6870 = vunpack.c.h.b16 %v3673
        %v6871 = vunpack.c.l.b16 %v3674
        %v6872 = vunpack.c.h.b16 %v3674
        %v6873 = vunpack.c.l.b16 %v3675
        %v6874 = vunpack.c.h.b16 %v3675
        %v6875 = vunpack.c.l.b16 %v3676
        %v6876 = vunpack.c.h.b16 %v3676
        %v6877 = vunpack.c.l.b16 %v3677
        %v6878 = vunpack.c.h.b16 %v3677
        %v6879 = vunpack.c.l.b16 %v3678
        %v6880 = vunpack.c.h.b16 %v3678
        %v6881 = vunpack.c.l.b16 %v3679
        %v6882 = vunpack.c.h.b16 %v3679
        %v6883 = vunpack.c.l.b16 %v3680
        %v6884 = vunpack.c.h.b16 %v3680
        %v6885 = vunpack.c.l.b16 %v3681
        %v6886 = vunpack.c.h.b16 %v3681
        %v6887 = vunpack.c.l.b16 %v3682
        %v6888 = vunpack.c.h.b16 %v3682
        %v6889 = vunpack.c.l.b16 %v3683
        %v6890 = vunpack.c.h.b16 %v3683
        %v6891 = vunpack.c.l.b16 %v3684
        %v6892 = vunpack.c.h.b16 %v3684
        %v6893 = vunpack.c.l.b16 %v3685
        %v6894 = vunpack.c.h.b16 %v3685
        %v6895 = vunpack.c.l.b16 %v3686
        %v6896 = vunpack.c.h.b16 %v3686
        %v6897 = vunpack.c.l.b16 %v3687
        %v6898 = vunpack.c.h.b16 %v3687
        %v6899 = vunpack.c.l.b16 %v3688
        %v6900 = vunpack.c.h.b16 %v3688
        %v6901 = vunpack.c.l.b16 %v3689
        %v6902 = vunpack.c.h.b16 %v3689
        %v6903 = vunpack.c.l.b16 %v3690
        %v6904 = vunpack.c.h.b16 %v3690
        %v6905 = vunpack.c.l.b16 %v3691
        %v6906 = vunpack.c.h.b16 %v3691
        %v6907 = vunpack.c.l.b16 %v3692
        %v6908 = vunpack.c.h.b16 %v3692
        %v6909 = vunpack.c.l.b16 %v3693
        %v6910 = vunpack.c.h.b16 %v3693
        %v6911 = vunpack.c.l.b16 %v3694
        %v6912 = vunpack.c.h.b16 %v3694
        %v6913 = vunpack.c.l.b16 %v3695
        %v6914 = vunpack.c.h.b16 %v3695
        %v6915 = vunpack.c.l.b16 %v3696
        %v6916 = vunpack.c.h.b16 %v3696
        %v6917 = vunpack.c.l.b16 %v3697
        %v6918 = vunpack.c.h.b16 %v3697
        %v6919 = vunpack.c.l.b16 %v3698
        %v6920 = vunpack.c.h.b16 %v3698
        %v6921 = vunpack.c.l.b16 %v3699
        %v6922 = vunpack.c.h.b16 %v3699
        %v6923 = vunpack.c.l.b16 %v3700
        %v6924 = vunpack.c.h.b16 %v3700
        %v6925 = vunpack.c.l.b16 %v3701
        %v6926 = vunpack.c.h.b16 %v3701
        %v6927 = vunpack.c.l.b16 %v3702
        %v6928 = vunpack.c.h.b16 %v3702
        %v6929 = vunpack.c.l.b16 %v3703
        %v6930 = vunpack.c.h.b16 %v3703
        %v6931 = vunpack.c.l.b16 %v3704
        %v6932 = vunpack.c.h.b16 %v3704
        %v6933 = vunpack.c.l.b16 %v3705
        %v6934 = vunpack.c.h.b16 %v3705
        %v6935 = vunpack.c.l.b16 %v3706
        %v6936 = vunpack.c.h.b16 %v3706
        %v6937 = vunpack.c.l.b16 %v3707
        %v6938 = vunpack.c.h.b16 %v3707
        %v6939 = vunpack.c.l.b16 %v3708
        %v6940 = vunpack.c.h.b16 %v3708
        %v6941 = vunpack.c.l.b16 %v3709
        %v6942 = vunpack.c.h.b16 %v3709
        %v6943 = vunpack.c.l.b16 %v3710
        %v6944 = vunpack.c.h.b16 %v3710
        %v6945 = vunpack.c.l.b16 %v3711
        %v6946 = vunpack.c.h.b16 %v3711
        %v6947 = vunpack.c.l.b16 %v3712
        %v6948 = vunpack.c.h.b16 %v3712
        %v6949 = vunpack.c.l.b16 %v3713
        %v6950 = vunpack.c.h.b16 %v3713
        %v6951 = vunpack.c.l.b16 %v3714
        %v6952 = vunpack.c.h.b16 %v3714
        %v6953 = vunpack.c.l.b16 %v3715
        %v6954 = vunpack.c.h.b16 %v3715
        %v6955 = vunpack.c.l.b16 %v3716
        %v6956 = vunpack.c.h.b16 %v3716
        %v6957 = vunpack.c.l.b16 %v3717
        %v6958 = vunpack.c.h.b16 %v3717
        %v6959 = vunpack.c.l.b16 %v3718
        %v6960 = vunpack.c.h.b16 %v3718
        %v6961 = vunpack.c.l.b16 %v3719
        %v6962 = vunpack.c.h.b16 %v3719
        %v6963 = vunpack.c.l.b16 %v3720
        %v6964 = vunpack.c.h.b16 %v3720
        %v6965 = vunpack.c.l.b16 %v3721
        %v6966 = vunpack.c.h.b16 %v3721
        %v6967 = vunpack.c.l.b16 %v3722
        %v6968 = vunpack.c.h.b16 %v3722
        %v6969 = vunpack.c.l.b16 %v3723
        %v6970 = vunpack.c.h.b16 %v3723
        %v6971 = vunpack.c.l.b16 %v3724
        %v6972 = vunpack.c.h.b16 %v3724
        %v6973 = vunpack.c.l.b16 %v3725
        %v6974 = vunpack.c.h.b16 %v3725
        %v6975 = vunpack.c.l.b16 %v3726
        %v6976 = vunpack.c.h.b16 %v3726
        %v6977 = vunpack.c.l.b16 %v3727
        %v6978 = vunpack.c.h.b16 %v3727
        %v6979 = vunpack.c.l.b16 %v3728
        %v6980 = vunpack.c.h.b16 %v3728
        %v6981 = vunpack.c.l.b16 %v3729
        %v6982 = vunpack.c.h.b16 %v3729
        %v6983 = vunpack.c.l.b16 %v3730
        %v6984 = vunpack.c.h.b16 %v3730
        %v6985 = vunpack.c.l.b16 %v3731
        %v6986 = vunpack.c.h.b16 %v3731
        %v6987 = vunpack.c.l.b16 %v3732
        %v6988 = vunpack.c.h.b16 %v3732
        %v6989 = vunpack.c.l.b16 %v3733
        %v6990 = vunpack.c.h.b16 %v3733
        %v6991 = vunpack.c.l.b16 %v3734
        %v6992 = vunpack.c.h.b16 %v3734
        %v6993 = vunpack.c.l.b16 %v3735
        %v6994 = vunpack.c.h.b16 %v3735
        %v6995 = vunpack.c.l.b16 %v3736
        %v6996 = vunpack.c.h.b16 %v3736
        %v6997 = vunpack.c.l.b16 %v3737
        %v6998 = vunpack.c.h.b16 %v3737
        %v6999 = vunpack.c.l.b16 %v3738
        %v7000 = vunpack.c.h.b16 %v3738
        %v7001 = vunpack.c.l.b16 %v3739
        %v7002 = vunpack.c.h.b16 %v3739
        %v7003 = vunpack.c.l.b16 %v3740
        %v7004 = vunpack.c.h.b16 %v3740
        %v7005 = vunpack.c.l.b16 %v3741
        %v7006 = vunpack.c.h.b16 %v3741
        %v7007 = vunpack.c.l.b16 %v3742
        %v7008 = vunpack.c.h.b16 %v3742
        %v7009 = vunpack.c.l.b16 %v3743
        %v7010 = vunpack.c.h.b16 %v3743
        %v7011 = vunpack.c.l.b16 %v3744
        %v7012 = vunpack.c.h.b16 %v3744
        %v7013 = vunpack.c.l.b16 %v3745
        %v7014 = vunpack.c.h.b16 %v3745
        %v7015 = vunpack.c.l.b16 %v3746
        %v7016 = vunpack.c.h.b16 %v3746
        %v7017 = vunpack.c.l.b16 %v3747
        %v7018 = vunpack.c.h.b16 %v3747
        %v7019 = vunpack.c.l.b16 %v3748
        %v7020 = vunpack.c.h.b16 %v3748
        %v7021 = vunpack.c.l.b16 %v3749
        %v7022 = vunpack.c.h.b16 %v3749
        %v7023 = vunpack.c.l.b16 %v3750
        %v7024 = vunpack.c.h.b16 %v3750
        %v7025 = vunpack.c.l.b16 %v3751
        %v7026 = vunpack.c.h.b16 %v3751
        %v7027 = vunpack.c.l.b16 %v3752
        %v7028 = vunpack.c.h.b16 %v3752
        %v7029 = vunpack.c.l.b16 %v3753
        %v7030 = vunpack.c.h.b16 %v3753
        %v7031 = vunpack.c.l.b16 %v3754
        %v7032 = vunpack.c.h.b16 %v3754
        %v7033 = vunpack.c.l.b16 %v3755
        %v7034 = vunpack.c.h.b16 %v3755
        %v7035 = vunpack.c.l.b16 %v3756
        %v7036 = vunpack.c.h.b16 %v3756
        %v7037 = vunpack.c.l.b16 %v3757
        %v7038 = vunpack.c.h.b16 %v3757
        %v7039 = vunpack.c.l.b16 %v3758
        %v7040 = vunpack.c.h.b16 %v3758
        %v7041 = vunpack.c.l.b16 %v3759
        %v7042 = vunpack.c.h.b16 %v3759
        %v7043 = vunpack.c.l.b16 %v3760
        %v7044 = vunpack.c.h.b16 %v3760
        %v7045 = vunpack.c.l.b16 %v3761
        %v7046 = vunpack.c.h.b16 %v3761
        %v7047 = vunpack.c.l.b16 %v3762
        %v7048 = vunpack.c.h.b16 %v3762
        %v7049 = vunpack.c.l.b16 %v3763
        %v7050 = vunpack.c.h.b16 %v3763
        %v7051 = vunpack.c.l.b16 %v3764
        %v7052 = vunpack.c.h.b16 %v3764
        %v7053 = vunpack.c.l.b16 %v3765
        %v7054 = vunpack.c.h.b16 %v3765
        %v7055 = vunpack.c.l.b16 %v3766
        %v7056 = vunpack.c.h.b16 %v3766
        %v7057 = vunpack.c.l.b16 %v3767
        %v7058 = vunpack.c.h.b16 %v3767
        %v7059 = vunpack.c.l.b16 %v3768
        %v7060 = vunpack.c.h.b16 %v3768
        %v7061 = vunpack.c.l.b16 %v3769
        %v7062 = vunpack.c.h.b16 %v3769
        %v7063 = vunpack.c.l.b16 %v3770
        %v7064 = vunpack.c.h.b16 %v3770
        %v7065 = vunpack.c.l.b16 %v3771
        %v7066 = vunpack.c.h.b16 %v3771
        %v7067 = vunpack.c.l.b16 %v3772
        %v7068 = vunpack.c.h.b16 %v3772
        %v7069 = vunpack.c.l.b16 %v3773
        %v7070 = vunpack.c.h.b16 %v3773
        %v7071 = vunpack.c.l.b16 %v3774
        %v7072 = vunpack.c.h.b16 %v3774
        %v7073 = vunpack.c.l.b16 %v3775
        %v7074 = vunpack.c.h.b16 %v3775
        %v7075 = vunpack.c.l.b16 %v3776
        %v7076 = vunpack.c.h.b16 %v3776
        %v7077 = vunpack.c.l.b16 %v3777
        %v7078 = vunpack.c.h.b16 %v3777
        %v7079 = vunpack.c.l.b16 %v3778
        %v7080 = vunpack.c.h.b16 %v3778
        %v7081 = vunpack.c.l.b16 %v3779
        %v7082 = vunpack.c.h.b16 %v3779
        %v7083 = vunpack.c.l.b16 %v3780
        %v7084 = vunpack.c.h.b16 %v3780
        %v7085 = vunpack.c.l.b16 %v3781
        %v7086 = vunpack.c.h.b16 %v3781
        %v7087 = vunpack.c.l.b16 %v3782
        %v7088 = vunpack.c.h.b16 %v3782
        %v7089 = vunpack.c.l.b16 %v3783
        %v7090 = vunpack.c.h.b16 %v3783
        %v7091 = vunpack.c.l.b16 %v3784
        %v7092 = vunpack.c.h.b16 %v3784
        %v7093 = vunpack.c.l.b16 %v3785
        %v7094 = vunpack.c.h.b16 %v3785
        %v7095 = vunpack.c.l.b16 %v3786
        %v7096 = vunpack.c.h.b16 %v3786
        %v7097 = vunpack.c.l.b16 %v3787
        %v7098 = vunpack.c.h.b16 %v3787
        %v7099 = vunpack.c.l.b16 %v3788
        %v7100 = vunpack.c.h.b16 %v3788
        %v7101 = vunpack.c.l.b16 %v3789
        %v7102 = vunpack.c.h.b16 %v3789
        %v7103 = vunpack.c.l.b16 %v3790
        %v7104 = vunpack.c.h.b16 %v3790
        %v7105 = vunpack.c.l.b16 %v3791
        %v7106 = vunpack.c.h.b16 %v3791
        %v7107 = vunpack.c.l.b16 %v3792
        %v7108 = vunpack.c.h.b16 %v3792
        %v7109 = vunpack.c.l.b16 %v3793
        %v7110 = vunpack.c.h.b16 %v3793
        %v7111 = vunpack.c.l.b16 %v3794
        %v7112 = vunpack.c.h.b16 %v3794
        %v7113 = vunpack.c.l.b16 %v3795
        %v7114 = vunpack.c.h.b16 %v3795
        %v7115 = vunpack.c.l.b16 %v3796
        %v7116 = vunpack.c.h.b16 %v3796
        %v7117 = vunpack.c.l.b16 %v3797
        %v7118 = vunpack.c.h.b16 %v3797
        %v7119 = vunpack.c.l.b16 %v3798
        %v7120 = vunpack.c.h.b16 %v3798
        %v7121 = vunpack.c.l.b16 %v3799
        %v7122 = vunpack.c.h.b16 %v3799
        %v7123 = vunpack.c.l.b16 %v3800
        %v7124 = vunpack.c.h.b16 %v3800
        %v7125 = vunpack.c.l.b16 %v3801
        %v7126 = vunpack.c.h.b16 %v3801
        %v7127 = vunpack.c.l.b16 %v3802
        %v7128 = vunpack.c.h.b16 %v3802
        %v7129 = vunpack.c.l.b16 %v3803
        %v7130 = vunpack.c.h.b16 %v3803
        %v7131 = vunpack.c.l.b16 %v3804
        %v7132 = vunpack.c.h.b16 %v3804
        %v7133 = vunpack.c.l.b16 %v3805
        %v7134 = vunpack.c.h.b16 %v3805
        %v7135 = vunpack.c.l.b16 %v3806
        %v7136 = vunpack.c.h.b16 %v3806
        %v7137 = vunpack.c.l.b16 %v3807
        %v7138 = vunpack.c.h.b16 %v3807
        %v7139 = vunpack.c.l.b16 %v3808
        %v7140 = vunpack.c.h.b16 %v3808
        %v7141 = vunpack.c.l.b16 %v3809
        %v7142 = vunpack.c.h.b16 %v3809
        %v7143 = vunpack.c.l.b16 %v3810
        %v7144 = vunpack.c.h.b16 %v3810
        %v7145 = vunpack.c.l.b16 %v3811
        %v7146 = vunpack.c.h.b16 %v3811
        %v7147 = vunpack.c.l.b16 %v3812
        %v7148 = vunpack.c.h.b16 %v3812
        %v7149 = vunpack.c.l.b16 %v3813
        %v7150 = vunpack.c.h.b16 %v3813
        %v7151 = vunpack.c.l.b16 %v3814
        %v7152 = vunpack.c.h.b16 %v3814
        %v7153 = vunpack.c.l.b16 %v3815
        %v7154 = vunpack.c.h.b16 %v3815
        %v7155 = vunpack.c.l.b16 %v3816
        %v7156 = vunpack.c.h.b16 %v3816
        %v7157 = vunpack.c.l.b16 %v3817
        %v7158 = vunpack.c.h.b16 %v3817
        %v7159 = vunpack.c.l.b16 %v3818
        %v7160 = vunpack.c.h.b16 %v3818
        %v7161 = vunpack.c.l.b16 %v3819
        %v7162 = vunpack.c.h.b16 %v3819
        %v7163 = vunpack.c.l.b16 %v3820
        %v7164 = vunpack.c.h.b16 %v3820
        %v7165 = vunpack.c.l.b16 %v3821
        %v7166 = vunpack.c.h.b16 %v3821
        %v7167 = vunpack.c.l.b16 %v3822
        %v7168 = vunpack.c.h.b16 %v3822
        %v7169 = vunpack.c.l.b16 %v3823
        %v7170 = vunpack.c.h.b16 %v3823
        %v7171 = vunpack.c.l.b16 %v3824
        %v7172 = vunpack.c.h.b16 %v3824
        %v7173 = vunpack.c.l.b16 %v3825
        %v7174 = vunpack.c.h.b16 %v3825
        %v7175 = vunpack.c.l.b16 %v3826
        %v7176 = vunpack.c.h.b16 %v3826
        %v7177 = vunpack.c.l.b16 %v3827
        %v7178 = vunpack.c.h.b16 %v3827
        %v7179 = vunpack.c.l.b16 %v3828
        %v7180 = vunpack.c.h.b16 %v3828
        %v7181 = vunpack.c.l.b16 %v3829
        %v7182 = vunpack.c.h.b16 %v3829
        %v7183 = vunpack.c.l.b16 %v3830
        %v7184 = vunpack.c.h.b16 %v3830
        %v7185 = vunpack.c.l.b16 %v3831
        %v7186 = vunpack.c.h.b16 %v3831
        %v7187 = vunpack.c.l.b16 %v3832
        %v7188 = vunpack.c.h.b16 %v3832
        %v7189 = vunpack.c.l.b16 %v3833
        %v7190 = vunpack.c.h.b16 %v3833
        %v7191 = vunpack.c.l.b16 %v3834
        %v7192 = vunpack.c.h.b16 %v3834
        %v7193 = vunpack.c.l.b16 %v3835
        %v7194 = vunpack.c.h.b16 %v3835
        %v7195 = vunpack.c.l.b16 %v3836
        %v7196 = vunpack.c.h.b16 %v3836
        %v7197 = vunpack.c.l.b16 %v3837
        %v7198 = vunpack.c.h.b16 %v3837
        %v7199 = vunpack.c.l.b16 %v3838
        %v7200 = vunpack.c.h.b16 %v3838
        %v7201 = vunpack.c.l.b16 %v3839
        %v7202 = vunpack.c.h.b16 %v3839
        %v7203 = vunpack.c.l.b16 %v3840
        %v7204 = vunpack.c.h.b16 %v3840
        %v7205 = vunpack.c.l.b16 %v3841
        %v7206 = vunpack.c.h.b16 %v3841
        %v7207 = vunpack.c.l.b16 %v3842
        %v7208 = vunpack.c.h.b16 %v3842
        %v7209 = vunpack.c.l.b16 %v3843
        %v7210 = vunpack.c.h.b16 %v3843
        %v7211 = vunpack.c.l.b16 %v3844
        %v7212 = vunpack.c.h.b16 %v3844
        %v7213 = vunpack.c.l.b16 %v3845
        %v7214 = vunpack.c.h.b16 %v3845
        %v7215 = vunpack.c.l.b16 %v3846
        %v7216 = vunpack.c.h.b16 %v3846
        %v7217 = vunpack.c.l.b16 %v3847
        %v7218 = vunpack.c.h.b16 %v3847
        %v7219 = vunpack.c.l.b16 %v3848
        %v7220 = vunpack.c.h.b16 %v3848
        %v7221 = vunpack.c.l.b16 %v3849
        %v7222 = vunpack.c.h.b16 %v3849
        %v7223 = vunpack.c.l.b16 %v3850
        %v7224 = vunpack.c.h.b16 %v3850
        %v7225 = vunpack.c.l.b16 %v3851
        %v7226 = vunpack.c.h.b16 %v3851
        %v7227 = vunpack.c.l.b16 %v3852
        %v7228 = vunpack.c.h.b16 %v3852
        %v7229 = vunpack.c.l.b16 %v3853
        %v7230 = vunpack.c.h.b16 %v3853
        %v7231 = vunpack.c.l.b16 %v3854
        %v7232 = vunpack.c.h.b16 %v3854
        %v7233 = vunpack.c.l.b16 %v3855
        %v7234 = vunpack.c.h.b16 %v3855
        %v7235 = vunpack.c.l.b16 %v3856
        %v7236 = vunpack.c.h.b16 %v3856
        %v7237 = vunpack.c.l.b16 %v3857
        %v7238 = vunpack.c.h.b16 %v3857
        %v7239 = vunpack.c.l.b16 %v3858
        %v7240 = vunpack.c.h.b16 %v3858
        %v7241 = vunpack.c.l.b16 %v3859
        %v7242 = vunpack.c.h.b16 %v3859
        %v7243 = vunpack.c.l.b16 %v3860
        %v7244 = vunpack.c.h.b16 %v3860
        %v7245 = vunpack.c.l.b16 %v3861
        %v7246 = vunpack.c.h.b16 %v3861
        %v7247 = vunpack.c.l.b16 %v3862
        %v7248 = vunpack.c.h.b16 %v3862
        %v7249 = vunpack.c.l.b16 %v3863
        %v7250 = vunpack.c.h.b16 %v3863
        %v7251 = vunpack.c.l.b16 %v3864
        %v7252 = vunpack.c.h.b16 %v3864
        %v7253 = vunpack.c.l.b16 %v3865
        %v7254 = vunpack.c.h.b16 %v3865
        %v7255 = vunpack.c.l.b16 %v3866
        %v7256 = vunpack.c.h.b16 %v3866
        %v7257 = vunpack.c.l.b16 %v3867
        %v7258 = vunpack.c.h.b16 %v3867
        %v7259 = vunpack.c.l.b16 %v3868
        %v7260 = vunpack.c.h.b16 %v3868
        %v7261 = vunpack.c.l.b16 %v3869
        %v7262 = vunpack.c.h.b16 %v3869
        %v7263 = vunpack.c.l.b16 %v3870
        %v7264 = vunpack.c.h.b16 %v3870
        %v7265 = vunpack.c.l.b16 %v3871
        %v7266 = vunpack.c.h.b16 %v3871
        %v7267 = vunpack.c.l.b16 %v3872
        %v7268 = vunpack.c.h.b16 %v3872
        %v7269 = vunpack.c.l.b16 %v3873
        %v7270 = vunpack.c.h.b16 %v3873
        %v7271 = vunpack.c.l.b16 %v3874
        %v7272 = vunpack.c.h.b16 %v3874
        %v7273 = vunpack.c.l.b16 %v3875
        %v7274 = vunpack.c.h.b16 %v3875
        %v7275 = vunpack.c.l.b16 %v3876
        %v7276 = vunpack.c.h.b16 %v3876
        %v7277 = vunpack.c.l.b16 %v3877
        %v7278 = vunpack.c.h.b16 %v3877
        %v7279 = vunpack.c.l.b16 %v3878
        %v7280 = vunpack.c.h.b16 %v3878
        %v7281 = vunpack.c.l.b16 %v3879
        %v7282 = vunpack.c.h.b16 %v3879
        %v7283 = vunpack.c.l.b16 %v3880
        %v7284 = vunpack.c.h.b16 %v3880
        %v7285 = vunpack.c.l.b16 %v3881
        %v7286 = vunpack.c.h.b16 %v3881
        %v7287 = vunpack.c.l.b16 %v3882
        %v7288 = vunpack.c.h.b16 %v3882
        %v7289 = vunpack.c.l.b16 %v3883
        %v7290 = vunpack.c.h.b16 %v3883
        %v7291 = vunpack.c.l.b16 %v3884
        %v7292 = vunpack.c.h.b16 %v3884
        %v7293 = vunpack.c.l.b16 %v3885
        %v7294 = vunpack.c.h.b16 %v3885
        %v7295 = vunpack.c.l.b16 %v3886
        %v7296 = vunpack.c.h.b16 %v3886
        %v7297 = vunpack.c.l.b16 %v3887
        %v7298 = vunpack.c.h.b16 %v3887
        %v7299 = vunpack.c.l.b16 %v3888
        %v7300 = vunpack.c.h.b16 %v3888
        %v7301 = vunpack.c.l.b16 %v3889
        %v7302 = vunpack.c.h.b16 %v3889
        %v7303 = vunpack.c.l.b16 %v3890
        %v7304 = vunpack.c.h.b16 %v3890
        %v7305 = vunpack.c.l.b16 %v3891
        %v7306 = vunpack.c.h.b16 %v3891
        %v7307 = vunpack.c.l.b16 %v3892
        %v7308 = vunpack.c.h.b16 %v3892
        %v7309 = vunpack.c.l.b16 %v3893
        %v7310 = vunpack.c.h.b16 %v3893
        %v7311 = vunpack.c.l.b16 %v3894
        %v7312 = vunpack.c.h.b16 %v3894
        %v7313 = vunpack.c.l.b16 %v3895
        %v7314 = vunpack.c.h.b16 %v3895
        %v7315 = vunpack.c.l.b16 %v3896
        %v7316 = vunpack.c.h.b16 %v3896
        %v7317 = vunpack.c.l.b16 %v3897
        %v7318 = vunpack.c.h.b16 %v3897
        %v7319 = vunpack.c.l.b16 %v3898
        %v7320 = vunpack.c.h.b16 %v3898
        %v7321 = vunpack.c.l.b16 %v3899
        %v7322 = vunpack.c.h.b16 %v3899
        %v7323 = vunpack.c.l.b16 %v3900
        %v7324 = vunpack.c.h.b16 %v3900
        %v7325 = vunpack.c.l.b16 %v3901
        %v7326 = vunpack.c.h.b16 %v3901
        %v7327 = vunpack.c.l.b16 %v3902
        %v7328 = vunpack.c.h.b16 %v3902
        %v7329 = vunpack.c.l.b16 %v3903
        %v7330 = vunpack.c.h.b16 %v3903
        %v7331 = vunpack.c.l.b16 %v3904
        %v7332 = vunpack.c.h.b16 %v3904
        %v7333 = vunpack.c.l.b16 %v3905
        %v7334 = vunpack.c.h.b16 %v3905
        %v7335 = vunpack.c.l.b16 %v3906
        %v7336 = vunpack.c.h.b16 %v3906
        %v7337 = vunpack.c.l.b16 %v3907
        %v7338 = vunpack.c.h.b16 %v3907
        %v7339 = vunpack.c.l.b16 %v3908
        %v7340 = vunpack.c.h.b16 %v3908
        %v7341 = vunpack.c.l.b16 %v3909
        %v7342 = vunpack.c.h.b16 %v3909
        %v7343 = vunpack.c.l.b16 %v3910
        %v7344 = vunpack.c.h.b16 %v3910
        %v7345 = vunpack.c.l.b16 %v3911
        %v7346 = vunpack.c.h.b16 %v3911
        %v7347 = vunpack.c.l.b16 %v3912
        %v7348 = vunpack.c.h.b16 %v3912
        %v7349 = vunpack.c.l.b16 %v3913
        %v7350 = vunpack.c.h.b16 %v3913
        %v7351 = vunpack.c.l.b16 %v3914
        %v7352 = vunpack.c.h.b16 %v3914
        %v7353 = vunpack.c.l.b16 %v3915
        %v7354 = vunpack.c.h.b16 %v3915
        %v7355 = vunpack.c.l.b16 %v3916
        %v7356 = vunpack.c.h.b16 %v3916
        %v7357 = vunpack.c.l.b16 %v3917
        %v7358 = vunpack.c.h.b16 %v3917
        %v7359 = vunpack.c.l.b16 %v3918
        %v7360 = vunpack.c.h.b16 %v3918
        %v7361 = vunpack.c.l.b16 %v3919
        %v7362 = vunpack.c.h.b16 %v3919
        %v7363 = vunpack.c.l.b16 %v3920
        %v7364 = vunpack.c.h.b16 %v3920
        %v7365 = vunpack.c.l.b16 %v3921
        %v7366 = vunpack.c.h.b16 %v3921
        %v7367 = vunpack.c.l.b16 %v3922
        %v7368 = vunpack.c.h.b16 %v3922
        %v7369 = vunpack.c.l.b16 %v3923
        %v7370 = vunpack.c.h.b16 %v3923
        %v7371 = vunpack.c.l.b16 %v3924
        %v7372 = vunpack.c.h.b16 %v3924
        %v7373 = vunpack.c.l.b16 %v3925
        %v7374 = vunpack.c.h.b16 %v3925
        %v7375 = vunpack.c.l.b16 %v3926
        %v7376 = vunpack.c.h.b16 %v3926
        %v7377 = vunpack.c.l.b16 %v3927
        %v7378 = vunpack.c.h.b16 %v3927
        %v7379 = vunpack.c.l.b16 %v3928
        %v7380 = vunpack.c.h.b16 %v3928
        %v7381 = vunpack.c.l.b16 %v3929
        %v7382 = vunpack.c.h.b16 %v3929
        %v7383 = vunpack.c.l.b16 %v3930
        %v7384 = vunpack.c.h.b16 %v3930
        %v7385 = vunpack.c.l.b16 %v3931
        %v7386 = vunpack.c.h.b16 %v3931
        %v7387 = vunpack.c.l.b16 %v3932
        %v7388 = vunpack.c.h.b16 %v3932
        %v7389 = vunpack.c.l.b16 %v3933
        %v7390 = vunpack.c.h.b16 %v3933
        %v7391 = vunpack.c.l.b16 %v3934
        %v7392 = vunpack.c.h.b16 %v3934
        %v7393 = vunpack.c.l.b16 %v3935
        %v7394 = vunpack.c.h.b16 %v3935
        %v7395 = vunpack.c.l.b16 %v3936
        %v7396 = vunpack.c.h.b16 %v3936
        %v7397 = vunpack.c.l.b16 %v3937
        %v7398 = vunpack.c.h.b16 %v3937
        %v7399 = vunpack.c.l.b16 %v3938
        %v7400 = vunpack.c.h.b16 %v3938
        %v7401 = vunpack.c.l.b16 %v3939
        %v7402 = vunpack.c.h.b16 %v3939
        %v7403 = vunpack.c.l.b16 %v3940
        %v7404 = vunpack.c.h.b16 %v3940
        %v7405 = vunpack.c.l.b16 %v3941
        %v7406 = vunpack.c.h.b16 %v3941
        %v7407 = vunpack.c.l.b16 %v3942
        %v7408 = vunpack.c.h.b16 %v3942
        %v7409 = vunpack.c.l.b16 %v3943
        %v7410 = vunpack.c.h.b16 %v3943
        %v7411 = vunpack.c.l.b16 %v3944
        %v7412 = vunpack.c.h.b16 %v3944
        %v7413 = vunpack.c.l.b16 %v3945
        %v7414 = vunpack.c.h.b16 %v3945
        %v7415 = vunpack.c.l.b16 %v3946
        %v7416 = vunpack.c.h.b16 %v3946
        %v7417 = vunpack.c.l.b16 %v3947
        %v7418 = vunpack.c.h.b16 %v3947
        %v7419 = vunpack.c.l.b16 %v3948
        %v7420 = vunpack.c.h.b16 %v3948
        %v7421 = vunpack.c.l.b16 %v3949
        %v7422 = vunpack.c.h.b16 %v3949
        %v7423 = vunpack.c.l.b16 %v3950
        %v7424 = vunpack.c.h.b16 %v3950
        %v7425 = vunpack.c.l.b16 %v3951
        %v7426 = vunpack.c.h.b16 %v3951
        %v7427 = vunpack.c.l.b16 %v3952
        %v7428 = vunpack.c.h.b16 %v3952
        %v7429 = vunpack.c.l.b16 %v3953
        %v7430 = vunpack.c.h.b16 %v3953
        %v7431 = vunpack.c.l.b16 %v3954
        %v7432 = vunpack.c.h.b16 %v3954
        %v7433 = vunpack.c.l.b16 %v3955
        %v7434 = vunpack.c.h.b16 %v3955
        %v7435 = vunpack.c.l.b16 %v3956
        %v7436 = vunpack.c.h.b16 %v3956
        %v7437 = vunpack.c.l.b16 %v3957
        %v7438 = vunpack.c.h.b16 %v3957
        %v7439 = vunpack.c.l.b16 %v3958
        %v7440 = vunpack.c.h.b16 %v3958
        %v7441 = vunpack.c.l.b16 %v3959
        %v7442 = vunpack.c.h.b16 %v3959
        %v7443 = vunpack.c.l.b16 %v3960
        %v7444 = vunpack.c.h.b16 %v3960
        %v7445 = vunpack.c.l.b16 %v3961
        %v7446 = vunpack.c.h.b16 %v3961
        %v7447 = vunpack.c.l.b16 %v3962
        %v7448 = vunpack.c.h.b16 %v3962
        %v7449 = vunpack.c.l.b16 %v3963
        %v7450 = vunpack.c.h.b16 %v3963
        %v7451 = vunpack.c.l.b16 %v3964
        %v7452 = vunpack.c.h.b16 %v3964
        %v7453 = vunpack.c.l.b16 %v3965
        %v7454 = vunpack.c.h.b16 %v3965
        %v7455 = vunpack.c.l.b16 %v3966
        %v7456 = vunpack.c.h.b16 %v3966
        %v7457 = vunpack.c.l.b16 %v3967
        %v7458 = vunpack.c.h.b16 %v3967
        %v7459 = vunpack.c.l.b16 %v3968
        %v7460 = vunpack.c.h.b16 %v3968
        %v7461 = vunpack.c.l.b16 %v3969
        %v7462 = vunpack.c.h.b16 %v3969
        %v7463 = vunpack.c.l.b16 %v3970
        %v7464 = vunpack.c.h.b16 %v3970
        %v7465 = vunpack.c.l.b16 %v3971
        %v7466 = vunpack.c.h.b16 %v3971
        %v7467 = vunpack.c.l.b16 %v3972
        %v7468 = vunpack.c.h.b16 %v3972
        %v7469 = vunpack.c.l.b16 %v3973
        %v7470 = vunpack.c.h.b16 %v3973
        %v7471 = vunpack.c.l.b16 %v3974
        %v7472 = vunpack.c.h.b16 %v3974
        %v7473 = vunpack.c.l.b16 %v3975
        %v7474 = vunpack.c.h.b16 %v3975
        %v7475 = vunpack.c.l.b16 %v3976
        %v7476 = vunpack.c.h.b16 %v3976
        %v7477 = vunpack.c.l.b16 %v3977
        %v7478 = vunpack.c.h.b16 %v3977
        %v7479 = vunpack.c.l.b16 %v3978
        %v7480 = vunpack.c.h.b16 %v3978
        %v7481 = vunpack.c.l.b16 %v3979
        %v7482 = vunpack.c.h.b16 %v3979
        %v7483 = vunpack.c.l.b16 %v3980
        %v7484 = vunpack.c.h.b16 %v3980
        %v7485 = vunpack.c.l.b16 %v3981
        %v7486 = vunpack.c.h.b16 %v3981
        %v7487 = vunpack.c.l.b16 %v3982
        %v7488 = vunpack.c.h.b16 %v3982
        %v7489 = vunpack.c.l.b16 %v3983
        %v7490 = vunpack.c.h.b16 %v3983
        %v7491 = vunpack.c.l.b16 %v3984
        %v7492 = vunpack.c.h.b16 %v3984
        %v7493 = vunpack.c.l.b16 %v3985
        %v7494 = vunpack.c.h.b16 %v3985
        %v7495 = vunpack.c.l.b16 %v3986
        %v7496 = vunpack.c.h.b16 %v3986
        %v7497 = vunpack.c.l.b16 %v3987
        %v7498 = vunpack.c.h.b16 %v3987
        %v7499 = vunpack.c.l.b16 %v3988
        %v7500 = vunpack.c.h.b16 %v3988
        %v7501 = vunpack.c.l.b16 %v3989
        %v7502 = vunpack.c.h.b16 %v3989
        %v7503 = vunpack.c.l.b16 %v3990
        %v7504 = vunpack.c.h.b16 %v3990
        %v7505 = vunpack.c.l.b16 %v3991
        %v7506 = vunpack.c.h.b16 %v3991
        %v7507 = vunpack.c.l.b16 %v3992
        %v7508 = vunpack.c.h.b16 %v3992
        %v7509 = vunpack.c.l.b16 %v3993
        %v7510 = vunpack.c.h.b16 %v3993
        %v7511 = vunpack.c.l.b16 %v3994
        %v7512 = vunpack.c.h.b16 %v3994
        %v7513 = vunpack.c.l.b16 %v3995
        %v7514 = vunpack.c.h.b16 %v3995
        %v7515 = vunpack.c.l.b16 %v3996
        %v7516 = vunpack.c.h.b16 %v3996
        %v7517 = vunpack.c.l.b16 %v3997
        %v7518 = vunpack.c.h.b16 %v3997
        %v7519 = vunpack.c.l.b16 %v3998
        %v7520 = vunpack.c.h.b16 %v3998
        %v7521 = vunpack.c.l.b16 %v3999
        %v7522 = vunpack.c.h.b16 %v3999
        %v7523 = vunpack.c.l.b16 %v4000
        %v7524 = vunpack.c.h.b16 %v4000
        %v7525 = vunpack.c.l.b16 %v4001
        %v7526 = vunpack.c.h.b16 %v4001
        %v7527 = vunpack.c.l.b16 %v4002
        %v7528 = vunpack.c.h.b16 %v4002
        %v7529 = vunpack.c.l.b16 %v4003
        %v7530 = vunpack.c.h.b16 %v4003
        %v7531 = vunpack.c.l.b16 %v4004
        %v7532 = vunpack.c.h.b16 %v4004
        %v7533 = vunpack.c.l.b16 %v4005
        %v7534 = vunpack.c.h.b16 %v4005
        %v7535 = vunpack.c.l.b16 %v4006
        %v7536 = vunpack.c.h.b16 %v4006
        %v7537 = vunpack.c.l.b16 %v4007
        %v7538 = vunpack.c.h.b16 %v4007
        %v7539 = vunpack.c.l.b16 %v4008
        %v7540 = vunpack.c.h.b16 %v4008
        %v7541 = vunpack.c.l.b16 %v4009
        %v7542 = vunpack.c.h.b16 %v4009
        %v7543 = vunpack.c.l.b16 %v4010
        %v7544 = vunpack.c.h.b16 %v4010
        %v7545 = vunpack.c.l.b16 %v4011
        %v7546 = vunpack.c.h.b16 %v4011
        %v7547 = vunpack.c.l.b16 %v4012
        %v7548 = vunpack.c.h.b16 %v4012
        %v7549 = vunpack.c.l.b16 %v4013
        %v7550 = vunpack.c.h.b16 %v4013
        %v7551 = vunpack.c.l.b16 %v4014
        %v7552 = vunpack.c.h.b16 %v4014
        %v7553 = vunpack.c.l.b16 %v4015
        %v7554 = vunpack.c.h.b16 %v4015
        %v7555 = vunpack.c.l.b16 %v4016
        %v7556 = vunpack.c.h.b16 %v4016
        %v7557 = vunpack.c.l.b16 %v4017
        %v7558 = vunpack.c.h.b16 %v4017
        %v7559 = vunpack.c.l.b16 %v4018
        %v7560 = vunpack.c.h.b16 %v4018
        %v7561 = vunpack.c.l.b16 %v4019
        %v7562 = vunpack.c.h.b16 %v4019
        %v7563 = vunpack.c.l.b16 %v4020
        %v7564 = vunpack.c.h.b16 %v4020
        %v7565 = vunpack.c.l.b16 %v4021
        %v7566 = vunpack.c.h.b16 %v4021
        %v7567 = vunpack.c.l.b16 %v4022
        %v7568 = vunpack.c.h.b16 %v4022
        %v7569 = vunpack.c.l.b16 %v4023
        %v7570 = vunpack.c.h.b16 %v4023
        %v7571 = vunpack.c.l.b16 %v4024
        %v7572 = vunpack.c.h.b16 %v4024
        %v7573 = vunpack.c.l.b16 %v4025
        %v7574 = vunpack.c.h.b16 %v4025
        %v7575 = vunpack.c.l.b16 %v4026
        %v7576 = vunpack.c.h.b16 %v4026
        %v7577 = vunpack.c.l.b16 %v4027
        %v7578 = vunpack.c.h.b16 %v4027
        %v7579 = vunpack.c.l.b16 %v4028
        %v7580 = vunpack.c.h.b16 %v4028
        %v7581 = vunpack.c.l.b16 %v4029
        %v7582 = vunpack.c.h.b16 %v4029
        %v7583 = vunpack.c.l.b16 %v4030
        %v7584 = vunpack.c.h.b16 %v4030
        %v7585 = vunpack.c.l.b16 %v4031
        %v7586 = vunpack.c.h.b16 %v4031
        %v7587 = vunpack.c.l.b16 %v4032
        %v7588 = vunpack.c.h.b16 %v4032
        %v7589 = vunpack.c.l.b16 %v4033
        %v7590 = vunpack.c.h.b16 %v4033
        %v7591 = vunpack.c.l.b16 %v4034
        %v7592 = vunpack.c.h.b16 %v4034
        %v7593 = vunpack.c.l.b16 %v4035
        %v7594 = vunpack.c.h.b16 %v4035
        %v7595 = vunpack.c.l.b16 %v4036
        %v7596 = vunpack.c.h.b16 %v4036
        %v7597 = vunpack.c.l.b16 %v4037
        %v7598 = vunpack.c.h.b16 %v4037
        %v7599 = vunpack.c.l.b16 %v4038
        %v7600 = vunpack.c.h.b16 %v4038
        %v7601 = vunpack.c.l.b16 %v4039
        %v7602 = vunpack.c.h.b16 %v4039
        %v7603 = vunpack.c.l.b16 %v4040
        %v7604 = vunpack.c.h.b16 %v4040
        %v7605 = vunpack.c.l.b16 %v4041
        %v7606 = vunpack.c.h.b16 %v4041
        %v7607 = vunpack.c.l.b16 %v4042
        %v7608 = vunpack.c.h.b16 %v4042
        %v7609 = vunpack.c.l.b16 %v4043
        %v7610 = vunpack.c.h.b16 %v4043
        %v7611 = vunpack.c.l.b16 %v4044
        %v7612 = vunpack.c.h.b16 %v4044
        %v7613 = vunpack.c.l.b16 %v4045
        %v7614 = vunpack.c.h.b16 %v4045
        %v7615 = vunpack.c.l.b16 %v4046
        %v7616 = vunpack.c.h.b16 %v4046
        %v7617 = vunpack.c.l.b16 %v4047
        %v7618 = vunpack.c.h.b16 %v4047
        %v7619 = vunpack.c.l.b16 %v4048
        %v7620 = vunpack.c.h.b16 %v4048
        %v7621 = vunpack.c.l.b16 %v4049
        %v7622 = vunpack.c.h.b16 %v4049
        %v7623 = vunpack.c.l.b16 %v4050
        %v7624 = vunpack.c.h.b16 %v4050
        %v7625 = vunpack.c.l.b16 %v4051
        %v7626 = vunpack.c.h.b16 %v4051
        %v7627 = vunpack.c.l.b16 %v4052
        %v7628 = vunpack.c.h.b16 %v4052
        %v7629 = vunpack.c.l.b16 %v4053
        %v7630 = vunpack.c.h.b16 %v4053
        %v7631 = vunpack.c.l.b16 %v4054
        %v7632 = vunpack.c.h.b16 %v4054
        %v7633 = vunpack.c.l.b16 %v4055
        %v7634 = vunpack.c.h.b16 %v4055
        %v7635 = vunpack.c.l.b16 %v4056
        %v7636 = vunpack.c.h.b16 %v4056
        %v7637 = vunpack.c.l.b16 %v4057
        %v7638 = vunpack.c.h.b16 %v4057
        %v7639 = vunpack.c.l.b16 %v4058
        %v7640 = vunpack.c.h.b16 %v4058
        %v7641 = vunpack.c.l.b16 %v4059
        %v7642 = vunpack.c.h.b16 %v4059
        %v7643 = vunpack.c.l.b16 %v4060
        %v7644 = vunpack.c.h.b16 %v4060
        %v7645 = vunpack.c.l.b16 %v4061
        %v7646 = vunpack.c.h.b16 %v4061
        %v7647 = vunpack.c.l.b16 %v4062
        %v7648 = vunpack.c.h.b16 %v4062
        %v7649 = vunpack.c.l.b16 %v4063
        %v7650 = vunpack.c.h.b16 %v4063
        %v7651 = vunpack.c.l.b16 %v4064
        %v7652 = vunpack.c.h.b16 %v4064
        %v7653 = vunpack.c.l.b16 %v4065
        %v7654 = vunpack.c.h.b16 %v4065
        %v7655 = vunpack.c.l.b16 %v4066
        %v7656 = vunpack.c.h.b16 %v4066
        %v7657 = vunpack.c.l.b16 %v4067
        %v7658 = vunpack.c.h.b16 %v4067
        %v7659 = vunpack.c.l.b16 %v4068
        %v7660 = vunpack.c.h.b16 %v4068
        %v7661 = vunpack.c.l.b16 %v4069
        %v7662 = vunpack.c.h.b16 %v4069
        %v7663 = vunpack.c.l.b16 %v4070
        %v7664 = vunpack.c.h.b16 %v4070
        %v7665 = vunpack.c.l.b16 %v4071
        %v7666 = vunpack.c.h.b16 %v4071
        %v7667 = vunpack.c.l.b16 %v4072
        %v7668 = vunpack.c.h.b16 %v4072
        %v7669 = vunpack.c.l.b16 %v4073
        %v7670 = vunpack.c.h.b16 %v4073
        %v7671 = vunpack.c.l.b16 %v4074
        %v7672 = vunpack.c.h.b16 %v4074
        %v7673 = vunpack.c.l.b16 %v4075
        %v7674 = vunpack.c.h.b16 %v4075
        %v7675 = vunpack.c.l.b16 %v4076
        %v7676 = vunpack.c.h.b16 %v4076
        %v7677 = vpack.c.b16 %v5283, %v5277
        %v7678 = vpack.c.b16 %v5284, %v5278
        %v7679 = vpack.c.b16 %v5285, %v5279
        %v7680 = vpack.c.b16 %v5286, %v5280
        %v7681 = vpack.c.b16 %v5287, %v5281
        %v7682 = vpack.c.b16 %v5288, %v5282
        %v7683 = vpack.c.b16 %v5295, %v5289
        %v7684 = vpack.c.b16 %v5296, %v5290
        %v7685 = vpack.c.b16 %v5297, %v5291
        %v7686 = vpack.c.b16 %v5298, %v5292
        %v7687 = vpack.c.b16 %v5299, %v5293
        %v7688 = vpack.c.b16 %v5300, %v5294
        %v7689 = vpack.c.b16 %v5307, %v5301
        %v7690 = vpack.c.b16 %v5308, %v5302
        %v7691 = vpack.c.b16 %v5309, %v5303
        %v7692 = vpack.c.b16 %v5310, %v5304
        %v7693 = vpack.c.b16 %v5311, %v5305
        %v7694 = vpack.c.b16 %v5312, %v5306
        %v7695 = vpack.c.b16 %v5319, %v5313
        %v7696 = vpack.c.b16 %v5320, %v5314
        %v7697 = vpack.c.b16 %v5321, %v5315
        %v7698 = vpack.c.b16 %v5322, %v5316
        %v7699 = vpack.c.b16 %v5323, %v5317
        %v7700 = vpack.c.b16 %v5324, %v5318
        %v7701 = vpack.c.b16 %v5331, %v5325
        %v7702 = vpack.c.b16 %v5332, %v5326
        %v7703 = vpack.c.b16 %v5333, %v5327
        %v7704 = vpack.c.b16 %v5334, %v5328
        %v7705 = vpack.c.b16 %v5335, %v5329
        %v7706 = vpack.c.b16 %v5336, %v5330
        %v7707 = vpack.c.b16 %v5343, %v5337
        %v7708 = vpack.c.b16 %v5344, %v5338
        %v7709 = vpack.c.b16 %v5345, %v5339
        %v7710 = vpack.c.b16 %v5346, %v5340
        %v7711 = vpack.c.b16 %v5347, %v5341
        %v7712 = vpack.c.b16 %v5348, %v5342
        %v7713 = vpack.c.b16 %v5355, %v5349
        %v7714 = vpack.c.b16 %v5356, %v5350
        %v7715 = vpack.c.b16 %v5357, %v5351
        %v7716 = vpack.c.b16 %v5358, %v5352
        %v7717 = vpack.c.b16 %v5359, %v5353
        %v7718 = vpack.c.b16 %v5360, %v5354
        %v7719 = vpack.c.b16 %v5367, %v5361
        %v7720 = vpack.c.b16 %v5368, %v5362
        %v7721 = vpack.c.b16 %v5369, %v5363
        %v7722 = vpack.c.b16 %v5370, %v5364
        %v7723 = vpack.c.b16 %v5371, %v5365
        %v7724 = vpack.c.b16 %v5372, %v5366
        %v7725 = vpack.c.b16 %v5379, %v5373
        %v7726 = vpack.c.b16 %v5380, %v5374
        %v7727 = vpack.c.b16 %v5381, %v5375
        %v7728 = vpack.c.b16 %v5382, %v5376
        %v7729 = vpack.c.b16 %v5383, %v5377
        %v7730 = vpack.c.b16 %v5384, %v5378
        %v7731 = vpack.c.b16 %v5391, %v5385
        %v7732 = vpack.c.b16 %v5392, %v5386
        %v7733 = vpack.c.b16 %v5393, %v5387
        %v7734 = vpack.c.b16 %v5394, %v5388
        %v7735 = vpack.c.b16 %v5395, %v5389
        %v7736 = vpack.c.b16 %v5396, %v5390
        %v7737 = vpack.c.b16 %v5403, %v5397
        %v7738 = vpack.c.b16 %v5404, %v5398
        %v7739 = vpack.c.b16 %v5405, %v5399
        %v7740 = vpack.c.b16 %v5406, %v5400
        %v7741 = vpack.c.b16 %v5407, %v5401
        %v7742 = vpack.c.b16 %v5408, %v5402
        %v7743 = vpack.c.b16 %v5415, %v5409
        %v7744 = vpack.c.b16 %v5416, %v5410
        %v7745 = vpack.c.b16 %v5417, %v5411
        %v7746 = vpack.c.b16 %v5418, %v5412
        %v7747 = vpack.c.b16 %v5419, %v5413
        %v7748 = vpack.c.b16 %v5420, %v5414
        %v7749 = vpack.c.b16 %v5427, %v5421
        %v7750 = vpack.c.b16 %v5428, %v5422
        %v7751 = vpack.c.b16 %v5429, %v5423
        %v7752 = vpack.c.b16 %v5430, %v5424
        %v7753 = vpack.c.b16 %v5431, %v5425
        %v7754 = vpack.c.b16 %v5432, %v5426
        %v7755 = vpack.c.b16 %v5439, %v5433
        %v7756 = vpack.c.b16 %v5440, %v5434
        %v7757 = vpack.c.b16 %v5441, %v5435
        %v7758 = vpack.c.b16 %v5442, %v5436
        %v7759 = vpack.c.b16 %v5443, %v5437
        %v7760 = vpack.c.b16 %v5444, %v5438
        %v7761 = vpack.c.b16 %v5451, %v5445
        %v7762 = vpack.c.b16 %v5452, %v5446
        %v7763 = vpack.c.b16 %v5453, %v5447
        %v7764 = vpack.c.b16 %v5454, %v5448
        %v7765 = vpack.c.b16 %v5455, %v5449
        %v7766 = vpack.c.b16 %v5456, %v5450
        %v7767 = vpack.c.b16 %v5463, %v5457
        %v7768 = vpack.c.b16 %v5464, %v5458
        %v7769 = vpack.c.b16 %v5465, %v5459
        %v7770 = vpack.c.b16 %v5466, %v5460
        %v7771 = vpack.c.b16 %v5467, %v5461
        %v7772 = vpack.c.b16 %v5468, %v5462
        %v7773 = vpack.c.b16 %v5475, %v5469
        %v7774 = vpack.c.b16 %v5476, %v5470
        %v7775 = vpack.c.b16 %v5477, %v5471
        %v7776 = vpack.c.b16 %v5478, %v5472
        %v7777 = vpack.c.b16 %v5479, %v5473
        %v7778 = vpack.c.b16 %v5480, %v5474
        %v7779 = vpack.c.b16 %v5487, %v5481
        %v7780 = vpack.c.b16 %v5488, %v5482
        %v7781 = vpack.c.b16 %v5489, %v5483
        %v7782 = vpack.c.b16 %v5490, %v5484
        %v7783 = vpack.c.b16 %v5491, %v5485
        %v7784 = vpack.c.b16 %v5492, %v5486
        %v7785 = vpack.c.b16 %v5499, %v5493
        %v7786 = vpack.c.b16 %v5500, %v5494
        %v7787 = vpack.c.b16 %v5501, %v5495
        %v7788 = vpack.c.b16 %v5502, %v5496
        %v7789 = vpack.c.b16 %v5503, %v5497
        %v7790 = vpack.c.b16 %v5504, %v5498
        %v7791 = vpack.c.b16 %v5511, %v5505
        %v7792 = vpack.c.b16 %v5512, %v5506
        %v7793 = vpack.c.b16 %v5513, %v5507
        %v7794 = vpack.c.b16 %v5514, %v5508
        %v7795 = vpack.c.b16 %v5515, %v5509
        %v7796 = vpack.c.b16 %v5516, %v5510
        %v7797 = vpack.c.b16 %v5523, %v5517
        %v7798 = vpack.c.b16 %v5524, %v5518
        %v7799 = vpack.c.b16 %v5525, %v5519
        %v7800 = vpack.c.b16 %v5526, %v5520
        %v7801 = vpack.c.b16 %v5527, %v5521
        %v7802 = vpack.c.b16 %v5528, %v5522
        %v7803 = vpack.c.b16 %v5535, %v5529
        %v7804 = vpack.c.b16 %v5536, %v5530
        %v7805 = vpack.c.b16 %v5537, %v5531
        %v7806 = vpack.c.b16 %v5538, %v5532
        %v7807 = vpack.c.b16 %v5539, %v5533
        %v7808 = vpack.c.b16 %v5540, %v5534
        %v7809 = vpack.c.b16 %v5547, %v5541
        %v7810 = vpack.c.b16 %v5548, %v5542
        %v7811 = vpack.c.b16 %v5549, %v5543
        %v7812 = vpack.c.b16 %v5550, %v5544
        %v7813 = vpack.c.b16 %v5551, %v5545
        %v7814 = vpack.c.b16 %v5552, %v5546
        %v7815 = vpack.c.b16 %v5559, %v5553
        %v7816 = vpack.c.b16 %v5560, %v5554
        %v7817 = vpack.c.b16 %v5561, %v5555
        %v7818 = vpack.c.b16 %v5562, %v5556
        %v7819 = vpack.c.b16 %v5563, %v5557
        %v7820 = vpack.c.b16 %v5564, %v5558
        %v7821 = vpack.c.b16 %v5571, %v5565
        %v7822 = vpack.c.b16 %v5572, %v5566
        %v7823 = vpack.c.b16 %v5573, %v5567
        %v7824 = vpack.c.b16 %v5574, %v5568
        %v7825 = vpack.c.b16 %v5575, %v5569
        %v7826 = vpack.c.b16 %v5576, %v5570
        %v7827 = vpack.c.b16 %v5583, %v5577
        %v7828 = vpack.c.b16 %v5584, %v5578
        %v7829 = vpack.c.b16 %v5585, %v5579
        %v7830 = vpack.c.b16 %v5586, %v5580
        %v7831 = vpack.c.b16 %v5587, %v5581
        %v7832 = vpack.c.b16 %v5588, %v5582
        %v7833 = vpack.c.b16 %v5595, %v5589
        %v7834 = vpack.c.b16 %v5596, %v5590
        %v7835 = vpack.c.b16 %v5597, %v5591
        %v7836 = vpack.c.b16 %v5598, %v5592
        %v7837 = vpack.c.b16 %v5599, %v5593
        %v7838 = vpack.c.b16 %v5600, %v5594
        %v7839 = vpack.c.b16 %v5607, %v5601
        %v7840 = vpack.c.b16 %v5608, %v5602
        %v7841 = vpack.c.b16 %v5609, %v5603
        %v7842 = vpack.c.b16 %v5610, %v5604
        %v7843 = vpack.c.b16 %v5611, %v5605
        %v7844 = vpack.c.b16 %v5612, %v5606
        %v7845 = vpack.c.b16 %v5619, %v5613
        %v7846 = vpack.c.b16 %v5620, %v5614
        %v7847 = vpack.c.b16 %v5621, %v5615
        %v7848 = vpack.c.b16 %v5622, %v5616
        %v7849 = vpack.c.b16 %v5623, %v5617
        %v7850 = vpack.c.b16 %v5624, %v5618
        %v7851 = vpack.c.b16 %v5631, %v5625
        %v7852 = vpack.c.b16 %v5632, %v5626
        %v7853 = vpack.c.b16 %v5633, %v5627
        %v7854 = vpack.c.b16 %v5634, %v5628
        %v7855 = vpack.c.b16 %v5635, %v5629
        %v7856 = vpack.c.b16 %v5636, %v5630
        %v7857 = vpack.c.b16 %v5643, %v5637
        %v7858 = vpack.c.b16 %v5644, %v5638
        %v7859 = vpack.c.b16 %v5645, %v5639
        %v7860 = vpack.c.b16 %v5646, %v5640
        %v7861 = vpack.c.b16 %v5647, %v5641
        %v7862 = vpack.c.b16 %v5648, %v5642
        %v7863 = vpack.c.b16 %v5655, %v5649
        %v7864 = vpack.c.b16 %v5656, %v5650
        %v7865 = vpack.c.b16 %v5657, %v5651
        %v7866 = vpack.c.b16 %v5658, %v5652
        %v7867 = vpack.c.b16 %v5659, %v5653
        %v7868 = vpack.c.b16 %v5660, %v5654
        %v7869 = vpack.c.b16 %v5667, %v5661
        %v7870 = vpack.c.b16 %v5668, %v5662
        %v7871 = vpack.c.b16 %v5669, %v5663
        %v7872 = vpack.c.b16 %v5670, %v5664
        %v7873 = vpack.c.b16 %v5671, %v5665
        %v7874 = vpack.c.b16 %v5672, %v5666
        %v7875 = vpack.c.b16 %v5679, %v5673
        %v7876 = vpack.c.b16 %v5680, %v5674
        %v7877 = vpack.c.b16 %v5681, %v5675
        %v7878 = vpack.c.b16 %v5682, %v5676
        %v7879 = vpack.c.b16 %v5683, %v5677
        %v7880 = vpack.c.b16 %v5684, %v5678
        %v7881 = vpack.c.b16 %v5691, %v5685
        %v7882 = vpack.c.b16 %v5692, %v5686
        %v7883 = vpack.c.b16 %v5693, %v5687
        %v7884 = vpack.c.b16 %v5694, %v5688
        %v7885 = vpack.c.b16 %v5695, %v5689
        %v7886 = vpack.c.b16 %v5696, %v5690
        %v7887 = vpack.c.b16 %v5703, %v5697
        %v7888 = vpack.c.b16 %v5704, %v5698
        %v7889 = vpack.c.b16 %v5705, %v5699
        %v7890 = vpack.c.b16 %v5706, %v5700
        %v7891 = vpack.c.b16 %v5707, %v5701
        %v7892 = vpack.c.b16 %v5708, %v5702
        %v7893 = vpack.c.b16 %v5715, %v5709
        %v7894 = vpack.c.b16 %v5716, %v5710
        %v7895 = vpack.c.b16 %v5717, %v5711
        %v7896 = vpack.c.b16 %v5718, %v5712
        %v7897 = vpack.c.b16 %v5719, %v5713
        %v7898 = vpack.c.b16 %v5720, %v5714
        %v7899 = vpack.c.b16 %v5727, %v5721
        %v7900 = vpack.c.b16 %v5728, %v5722
        %v7901 = vpack.c.b16 %v5729, %v5723
        %v7902 = vpack.c.b16 %v5730, %v5724
        %v7903 = vpack.c.b16 %v5731, %v5725
        %v7904 = vpack.c.b16 %v5732, %v5726
        %v7905 = vpack.c.b16 %v5739, %v5733
        %v7906 = vpack.c.b16 %v5740, %v5734
        %v7907 = vpack.c.b16 %v5741, %v5735
        %v7908 = vpack.c.b16 %v5742, %v5736
        %v7909 = vpack.c.b16 %v5743, %v5737
        %v7910 = vpack.c.b16 %v5744, %v5738
        %v7911 = vpack.c.b16 %v5751, %v5745
        %v7912 = vpack.c.b16 %v5752, %v5746
        %v7913 = vpack.c.b16 %v5753, %v5747
        %v7914 = vpack.c.b16 %v5754, %v5748
        %v7915 = vpack.c.b16 %v5755, %v5749
        %v7916 = vpack.c.b16 %v5756, %v5750
        %v7917 = vpack.c.b16 %v5763, %v5757
        %v7918 = vpack.c.b16 %v5764, %v5758
        %v7919 = vpack.c.b16 %v5765, %v5759
        %v7920 = vpack.c.b16 %v5766, %v5760
        %v7921 = vpack.c.b16 %v5767, %v5761
        %v7922 = vpack.c.b16 %v5768, %v5762
        %v7923 = vpack.c.b16 %v5775, %v5769
        %v7924 = vpack.c.b16 %v5776, %v5770
        %v7925 = vpack.c.b16 %v5777, %v5771
        %v7926 = vpack.c.b16 %v5778, %v5772
        %v7927 = vpack.c.b16 %v5779, %v5773
        %v7928 = vpack.c.b16 %v5780, %v5774
        %v7929 = vpack.c.b16 %v5787, %v5781
        %v7930 = vpack.c.b16 %v5788, %v5782
        %v7931 = vpack.c.b16 %v5789, %v5783
        %v7932 = vpack.c.b16 %v5790, %v5784
        %v7933 = vpack.c.b16 %v5791, %v5785
        %v7934 = vpack.c.b16 %v5792, %v5786
        %v7935 = vpack.c.b16 %v5799, %v5793
        %v7936 = vpack.c.b16 %v5800, %v5794
        %v7937 = vpack.c.b16 %v5801, %v5795
        %v7938 = vpack.c.b16 %v5802, %v5796
        %v7939 = vpack.c.b16 %v5803, %v5797
        %v7940 = vpack.c.b16 %v5804, %v5798
        %v7941 = vpack.c.b16 %v5811, %v5805
        %v7942 = vpack.c.b16 %v5812, %v5806
        %v7943 = vpack.c.b16 %v5813, %v5807
        %v7944 = vpack.c.b16 %v5814, %v5808
        %v7945 = vpack.c.b16 %v5815, %v5809
        %v7946 = vpack.c.b16 %v5816, %v5810
        %v7947 = vpack.c.b16 %v5823, %v5817
        %v7948 = vpack.c.b16 %v5824, %v5818
        %v7949 = vpack.c.b16 %v5825, %v5819
        %v7950 = vpack.c.b16 %v5826, %v5820
        %v7951 = vpack.c.b16 %v5827, %v5821
        %v7952 = vpack.c.b16 %v5828, %v5822
        %v7953 = vpack.c.b16 %v5835, %v5829
        %v7954 = vpack.c.b16 %v5836, %v5830
        %v7955 = vpack.c.b16 %v5837, %v5831
        %v7956 = vpack.c.b16 %v5838, %v5832
        %v7957 = vpack.c.b16 %v5839, %v5833
        %v7958 = vpack.c.b16 %v5840, %v5834
        %v7959 = vpack.c.b16 %v5847, %v5841
        %v7960 = vpack.c.b16 %v5848, %v5842
        %v7961 = vpack.c.b16 %v5849, %v5843
        %v7962 = vpack.c.b16 %v5850, %v5844
        %v7963 = vpack.c.b16 %v5851, %v5845
        %v7964 = vpack.c.b16 %v5852, %v5846
        %v7965 = vpack.c.b16 %v5859, %v5853
        %v7966 = vpack.c.b16 %v5860, %v5854
        %v7967 = vpack.c.b16 %v5861, %v5855
        %v7968 = vpack.c.b16 %v5862, %v5856
        %v7969 = vpack.c.b16 %v5863, %v5857
        %v7970 = vpack.c.b16 %v5864, %v5858
        %v7971 = vpack.c.b16 %v5871, %v5865
        %v7972 = vpack.c.b16 %v5872, %v5866
        %v7973 = vpack.c.b16 %v5873, %v5867
        %v7974 = vpack.c.b16 %v5874, %v5868
        %v7975 = vpack.c.b16 %v5875, %v5869
        %v7976 = vpack.c.b16 %v5876, %v5870
        %v7977 = vpack.c.b16 %v5883, %v5877
        %v7978 = vpack.c.b16 %v5884, %v5878
        %v7979 = vpack.c.b16 %v5885, %v5879
        %v7980 = vpack.c.b16 %v5886, %v5880
        %v7981 = vpack.c.b16 %v5887, %v5881
        %v7982 = vpack.c.b16 %v5888, %v5882
        %v7983 = vpack.c.b16 %v5895, %v5889
        %v7984 = vpack.c.b16 %v5896, %v5890
        %v7985 = vpack.c.b16 %v5897, %v5891
        %v7986 = vpack.c.b16 %v5898, %v5892
        %v7987 = vpack.c.b16 %v5899, %v5893
        %v7988 = vpack.c.b16 %v5900, %v5894
        %v7989 = vpack.c.b16 %v5907, %v5901
        %v7990 = vpack.c.b16 %v5908, %v5902
        %v7991 = vpack.c.b16 %v5909, %v5903
        %v7992 = vpack.c.b16 %v5910, %v5904
        %v7993 = vpack.c.b16 %v5911, %v5905
        %v7994 = vpack.c.b16 %v5912, %v5906
        %v7995 = vpack.c.b16 %v5919, %v5913
        %v7996 = vpack.c.b16 %v5920, %v5914
        %v7997 = vpack.c.b16 %v5921, %v5915
        %v7998 = vpack.c.b16 %v5922, %v5916
        %v7999 = vpack.c.b16 %v5923, %v5917
        %v8000 = vpack.c.b16 %v5924, %v5918
        %v8001 = vpack.c.b16 %v5931, %v5925
        %v8002 = vpack.c.b16 %v5932, %v5926
        %v8003 = vpack.c.b16 %v5933, %v5927
        %v8004 = vpack.c.b16 %v5934, %v5928
        %v8005 = vpack.c.b16 %v5935, %v5929
        %v8006 = vpack.c.b16 %v5936, %v5930
        %v8007 = vpack.c.b16 %v5943, %v5937
        %v8008 = vpack.c.b16 %v5944, %v5938
        %v8009 = vpack.c.b16 %v5945, %v5939
        %v8010 = vpack.c.b16 %v5946, %v5940
        %v8011 = vpack.c.b16 %v5947, %v5941
        %v8012 = vpack.c.b16 %v5948, %v5942
        %v8013 = vpack.c.b16 %v5955, %v5949
        %v8014 = vpack.c.b16 %v5956, %v5950
        %v8015 = vpack.c.b16 %v5957, %v5951
        %v8016 = vpack.c.b16 %v5958, %v5952
        %v8017 = vpack.c.b16 %v5959, %v5953
        %v8018 = vpack.c.b16 %v5960, %v5954
        %v8019 = vpack.c.b16 %v5967, %v5961
        %v8020 = vpack.c.b16 %v5968, %v5962
        %v8021 = vpack.c.b16 %v5969, %v5963
        %v8022 = vpack.c.b16 %v5970, %v5964
        %v8023 = vpack.c.b16 %v5971, %v5965
        %v8024 = vpack.c.b16 %v5972, %v5966
        %v8025 = vpack.c.b16 %v5979, %v5973
        %v8026 = vpack.c.b16 %v5980, %v5974
        %v8027 = vpack.c.b16 %v5981, %v5975
        %v8028 = vpack.c.b16 %v5982, %v5976
        %v8029 = vpack.c.b16 %v5983, %v5977
        %v8030 = vpack.c.b16 %v5984, %v5978
        %v8031 = vpack.c.b16 %v5991, %v5985
        %v8032 = vpack.c.b16 %v5992, %v5986
        %v8033 = vpack.c.b16 %v5993, %v5987
        %v8034 = vpack.c.b16 %v5994, %v5988
        %v8035 = vpack.c.b16 %v5995, %v5989
        %v8036 = vpack.c.b16 %v5996, %v5990
        %v8037 = vpack.c.b16 %v6003, %v5997
        %v8038 = vpack.c.b16 %v6004, %v5998
        %v8039 = vpack.c.b16 %v6005, %v5999
        %v8040 = vpack.c.b16 %v6006, %v6000
        %v8041 = vpack.c.b16 %v6007, %v6001
        %v8042 = vpack.c.b16 %v6008, %v6002
        %v8043 = vpack.c.b16 %v6015, %v6009
        %v8044 = vpack.c.b16 %v6016, %v6010
        %v8045 = vpack.c.b16 %v6017, %v6011
        %v8046 = vpack.c.b16 %v6018, %v6012
        %v8047 = vpack.c.b16 %v6019, %v6013
        %v8048 = vpack.c.b16 %v6020, %v6014
        %v8049 = vpack.c.b16 %v6027, %v6021
        %v8050 = vpack.c.b16 %v6028, %v6022
        %v8051 = vpack.c.b16 %v6029, %v6023
        %v8052 = vpack.c.b16 %v6030, %v6024
        %v8053 = vpack.c.b16 %v6031, %v6025
        %v8054 = vpack.c.b16 %v6032, %v6026
        %v8055 = vpack.c.b16 %v6039, %v6033
        %v8056 = vpack.c.b16 %v6040, %v6034
        %v8057 = vpack.c.b16 %v6041, %v6035
        %v8058 = vpack.c.b16 %v6042, %v6036
        %v8059 = vpack.c.b16 %v6043, %v6037
        %v8060 = vpack.c.b16 %v6044, %v6038
        %v8061 = vpack.c.b16 %v6051, %v6045
        %v8062 = vpack.c.b16 %v6052, %v6046
        %v8063 = vpack.c.b16 %v6053, %v6047
        %v8064 = vpack.c.b16 %v6054, %v6048
        %v8065 = vpack.c.b16 %v6055, %v6049
        %v8066 = vpack.c.b16 %v6056, %v6050
        %v8067 = vpack.c.b16 %v6063, %v6057
        %v8068 = vpack.c.b16 %v6064, %v6058
        %v8069 = vpack.c.b16 %v6065, %v6059
        %v8070 = vpack.c.b16 %v6066, %v6060
        %v8071 = vpack.c.b16 %v6067, %v6061
        %v8072 = vpack.c.b16 %v6068, %v6062
        %v8073 = vpack.c.b16 %v6075, %v6069
        %v8074 = vpack.c.b16 %v6076, %v6070
        %v8075 = vpack.c.b16 %v6077, %v6071
        %v8076 = vpack.c.b16 %v6078, %v6072
        %v8077 = vpack.c.b16 %v6079, %v6073
        %v8078 = vpack.c.b16 %v6080, %v6074
        %v8079 = vpack.c.b16 %v6087, %v6081
        %v8080 = vpack.c.b16 %v6088, %v6082
        %v8081 = vpack.c.b16 %v6089, %v6083
        %v8082 = vpack.c.b16 %v6090, %v6084
        %v8083 = vpack.c.b16 %v6091, %v6085
        %v8084 = vpack.c.b16 %v6092, %v6086
        %v8085 = vpack.c.b16 %v6099, %v6093
        %v8086 = vpack.c.b16 %v6100, %v6094
        %v8087 = vpack.c.b16 %v6101, %v6095
        %v8088 = vpack.c.b16 %v6102, %v6096
        %v8089 = vpack.c.b16 %v6103, %v6097
        %v8090 = vpack.c.b16 %v6104, %v6098
        %v8091 = vpack.c.b16 %v6111, %v6105
        %v8092 = vpack.c.b16 %v6112, %v6106
        %v8093 = vpack.c.b16 %v6113, %v6107
        %v8094 = vpack.c.b16 %v6114, %v6108
        %v8095 = vpack.c.b16 %v6115, %v6109
        %v8096 = vpack.c.b16 %v6116, %v6110
        %v8097 = vpack.c.b16 %v6123, %v6117
        %v8098 = vpack.c.b16 %v6124, %v6118
        %v8099 = vpack.c.b16 %v6125, %v6119
        %v8100 = vpack.c.b16 %v6126, %v6120
        %v8101 = vpack.c.b16 %v6127, %v6121
        %v8102 = vpack.c.b16 %v6128, %v6122
        %v8103 = vpack.c.b16 %v6135, %v6129
        %v8104 = vpack.c.b16 %v6136, %v6130
        %v8105 = vpack.c.b16 %v6137, %v6131
        %v8106 = vpack.c.b16 %v6138, %v6132
        %v8107 = vpack.c.b16 %v6139, %v6133
        %v8108 = vpack.c.b16 %v6140, %v6134
        %v8109 = vpack.c.b16 %v6147, %v6141
        %v8110 = vpack.c.b16 %v6148, %v6142
        %v8111 = vpack.c.b16 %v6149, %v6143
        %v8112 = vpack.c.b16 %v6150, %v6144
        %v8113 = vpack.c.b16 %v6151, %v6145
        %v8114 = vpack.c.b16 %v6152, %v6146
        %v8115 = vpack.c.b16 %v6159, %v6153
        %v8116 = vpack.c.b16 %v6160, %v6154
        %v8117 = vpack.c.b16 %v6161, %v6155
        %v8118 = vpack.c.b16 %v6162, %v6156
        %v8119 = vpack.c.b16 %v6163, %v6157
        %v8120 = vpack.c.b16 %v6164, %v6158
        %v8121 = vpack.c.b16 %v6171, %v6165
        %v8122 = vpack.c.b16 %v6172, %v6166
        %v8123 = vpack.c.b16 %v6173, %v6167
        %v8124 = vpack.c.b16 %v6174, %v6168
        %v8125 = vpack.c.b16 %v6175, %v6169
        %v8126 = vpack.c.b16 %v6176, %v6170
        %v8127 = vpack.c.b16 %v6183, %v6177
        %v8128 = vpack.c.b16 %v6184, %v6178
        %v8129 = vpack.c.b16 %v6185, %v6179
        %v8130 = vpack.c.b16 %v6186, %v6180
        %v8131 = vpack.c.b16 %v6187, %v6181
        %v8132 = vpack.c.b16 %v6188, %v6182
        %v8133 = vpack.c.b16 %v6195, %v6189
        %v8134 = vpack.c.b16 %v6196, %v6190
        %v8135 = vpack.c.b16 %v6197, %v6191
        %v8136 = vpack.c.b16 %v6198, %v6192
        %v8137 = vpack.c.b16 %v6199, %v6193
        %v8138 = vpack.c.b16 %v6200, %v6194
        %v8139 = vpack.c.b16 %v6207, %v6201
        %v8140 = vpack.c.b16 %v6208, %v6202
        %v8141 = vpack.c.b16 %v6209, %v6203
        %v8142 = vpack.c.b16 %v6210, %v6204
        %v8143 = vpack.c.b16 %v6211, %v6205
        %v8144 = vpack.c.b16 %v6212, %v6206
        %v8145 = vpack.c.b16 %v6219, %v6213
        %v8146 = vpack.c.b16 %v6220, %v6214
        %v8147 = vpack.c.b16 %v6221, %v6215
        %v8148 = vpack.c.b16 %v6222, %v6216
        %v8149 = vpack.c.b16 %v6223, %v6217
        %v8150 = vpack.c.b16 %v6224, %v6218
        %v8151 = vpack.c.b16 %v6231, %v6225
        %v8152 = vpack.c.b16 %v6232, %v6226
        %v8153 = vpack.c.b16 %v6233, %v6227
        %v8154 = vpack.c.b16 %v6234, %v6228
        %v8155 = vpack.c.b16 %v6235, %v6229
        %v8156 = vpack.c.b16 %v6236, %v6230
        %v8157 = vpack.c.b16 %v6243, %v6237
        %v8158 = vpack.c.b16 %v6244, %v6238
        %v8159 = vpack.c.b16 %v6245, %v6239
        %v8160 = vpack.c.b16 %v6246, %v6240
        %v8161 = vpack.c.b16 %v6247, %v6241
        %v8162 = vpack.c.b16 %v6248, %v6242
        %v8163 = vpack.c.b16 %v6255, %v6249
        %v8164 = vpack.c.b16 %v6256, %v6250
        %v8165 = vpack.c.b16 %v6257, %v6251
        %v8166 = vpack.c.b16 %v6258, %v6252
        %v8167 = vpack.c.b16 %v6259, %v6253
        %v8168 = vpack.c.b16 %v6260, %v6254
        %v8169 = vpack.c.b16 %v6267, %v6261
        %v8170 = vpack.c.b16 %v6268, %v6262
        %v8171 = vpack.c.b16 %v6269, %v6263
        %v8172 = vpack.c.b16 %v6270, %v6264
        %v8173 = vpack.c.b16 %v6271, %v6265
        %v8174 = vpack.c.b16 %v6272, %v6266
        %v8175 = vpack.c.b16 %v6279, %v6273
        %v8176 = vpack.c.b16 %v6280, %v6274
        %v8177 = vpack.c.b16 %v6281, %v6275
        %v8178 = vpack.c.b16 %v6282, %v6276
        %v8179 = vpack.c.b16 %v6283, %v6277
        %v8180 = vpack.c.b16 %v6284, %v6278
        %v8181 = vpack.c.b16 %v6291, %v6285
        %v8182 = vpack.c.b16 %v6292, %v6286
        %v8183 = vpack.c.b16 %v6293, %v6287
        %v8184 = vpack.c.b16 %v6294, %v6288
        %v8185 = vpack.c.b16 %v6295, %v6289
        %v8186 = vpack.c.b16 %v6296, %v6290
        %v8187 = vpack.c.b16 %v6303, %v6297
        %v8188 = vpack.c.b16 %v6304, %v6298
        %v8189 = vpack.c.b16 %v6305, %v6299
        %v8190 = vpack.c.b16 %v6306, %v6300
        %v8191 = vpack.c.b16 %v6307, %v6301
        %v8192 = vpack.c.b16 %v6308, %v6302
        %v8193 = vpack.c.b16 %v6315, %v6309
        %v8194 = vpack.c.b16 %v6316, %v6310
        %v8195 = vpack.c.b16 %v6317, %v6311
        %v8196 = vpack.c.b16 %v6318, %v6312
        %v8197 = vpack.c.b16 %v6319, %v6313
        %v8198 = vpack.c.b16 %v6320, %v6314
        %v8199 = vpack.c.b16 %v6327, %v6321
        %v8200 = vpack.c.b16 %v6328, %v6322
        %v8201 = vpack.c.b16 %v6329, %v6323
        %v8202 = vpack.c.b16 %v6330, %v6324
        %v8203 = vpack.c.b16 %v6331, %v6325
        %v8204 = vpack.c.b16 %v6332, %v6326
        %v8205 = vpack.c.b16 %v6339, %v6333
        %v8206 = vpack.c.b16 %v6340, %v6334
        %v8207 = vpack.c.b16 %v6341, %v6335
        %v8208 = vpack.c.b16 %v6342, %v6336
        %v8209 = vpack.c.b16 %v6343, %v6337
        %v8210 = vpack.c.b16 %v6344, %v6338
        %v8211 = vpack.c.b16 %v6351, %v6345
        %v8212 = vpack.c.b16 %v6352, %v6346
        %v8213 = vpack.c.b16 %v6353, %v6347
        %v8214 = vpack.c.b16 %v6354, %v6348
        %v8215 = vpack.c.b16 %v6355, %v6349
        %v8216 = vpack.c.b16 %v6356, %v6350
        %v8217 = vpack.c.b16 %v6363, %v6357
        %v8218 = vpack.c.b16 %v6364, %v6358
        %v8219 = vpack.c.b16 %v6365, %v6359
        %v8220 = vpack.c.b16 %v6366, %v6360
        %v8221 = vpack.c.b16 %v6367, %v6361
        %v8222 = vpack.c.b16 %v6368, %v6362
        %v8223 = vpack.c.b16 %v6375, %v6369
        %v8224 = vpack.c.b16 %v6376, %v6370
        %v8225 = vpack.c.b16 %v6377, %v6371
        %v8226 = vpack.c.b16 %v6378, %v6372
        %v8227 = vpack.c.b16 %v6379, %v6373
        %v8228 = vpack.c.b16 %v6380, %v6374
        %v8229 = vpack.c.b16 %v6387, %v6381
        %v8230 = vpack.c.b16 %v6388, %v6382
        %v8231 = vpack.c.b16 %v6389, %v6383
        %v8232 = vpack.c.b16 %v6390, %v6384
        %v8233 = vpack.c.b16 %v6391, %v6385
        %v8234 = vpack.c.b16 %v6392, %v6386
        %v8235 = vpack.c.b16 %v6399, %v6393
        %v8236 = vpack.c.b16 %v6400, %v6394
        %v8237 = vpack.c.b16 %v6401, %v6395
        %v8238 = vpack.c.b16 %v6402, %v6396
        %v8239 = vpack.c.b16 %v6403, %v6397
        %v8240 = vpack.c.b16 %v6404, %v6398
        %v8241 = vpack.c.b16 %v6411, %v6405
        %v8242 = vpack.c.b16 %v6412, %v6406
        %v8243 = vpack.c.b16 %v6413, %v6407
        %v8244 = vpack.c.b16 %v6414, %v6408
        %v8245 = vpack.c.b16 %v6415, %v6409
        %v8246 = vpack.c.b16 %v6416, %v6410
        %v8247 = vpack.c.b16 %v6423, %v6417
        %v8248 = vpack.c.b16 %v6424, %v6418
        %v8249 = vpack.c.b16 %v6425, %v6419
        %v8250 = vpack.c.b16 %v6426, %v6420
        %v8251 = vpack.c.b16 %v6427, %v6421
        %v8252 = vpack.c.b16 %v6428, %v6422
        %v8253 = vpack.c.b16 %v6435, %v6429
        %v8254 = vpack.c.b16 %v6436, %v6430
        %v8255 = vpack.c.b16 %v6437, %v6431
        %v8256 = vpack.c.b16 %v6438, %v6432
        %v8257 = vpack.c.b16 %v6439, %v6433
        %v8258 = vpack.c.b16 %v6440, %v6434
        %v8259 = vpack.c.b16 %v6447, %v6441
        %v8260 = vpack.c.b16 %v6448, %v6442
        %v8261 = vpack.c.b16 %v6449, %v6443
        %v8262 = vpack.c.b16 %v6450, %v6444
        %v8263 = vpack.c.b16 %v6451, %v6445
        %v8264 = vpack.c.b16 %v6452, %v6446
        %v8265 = vpack.c.b16 %v6459, %v6453
        %v8266 = vpack.c.b16 %v6460, %v6454
        %v8267 = vpack.c.b16 %v6461, %v6455
        %v8268 = vpack.c.b16 %v6462, %v6456
        %v8269 = vpack.c.b16 %v6463, %v6457
        %v8270 = vpack.c.b16 %v6464, %v6458
        %v8271 = vpack.c.b16 %v6471, %v6465
        %v8272 = vpack.c.b16 %v6472, %v6466
        %v8273 = vpack.c.b16 %v6473, %v6467
        %v8274 = vpack.c.b16 %v6474, %v6468
        %v8275 = vpack.c.b16 %v6475, %v6469
        %v8276 = vpack.c.b16 %v6476, %v6470
        %v8277 = vpack.c.b16 %v6483, %v6477
        %v8278 = vpack.c.b16 %v6484, %v6478
        %v8279 = vpack.c.b16 %v6485, %v6479
        %v8280 = vpack.c.b16 %v6486, %v6480
        %v8281 = vpack.c.b16 %v6487, %v6481
        %v8282 = vpack.c.b16 %v6488, %v6482
        %v8283 = vpack.c.b16 %v6495, %v6489
        %v8284 = vpack.c.b16 %v6496, %v6490
        %v8285 = vpack.c.b16 %v6497, %v6491
        %v8286 = vpack.c.b16 %v6498, %v6492
        %v8287 = vpack.c.b16 %v6499, %v6493
        %v8288 = vpack.c.b16 %v6500, %v6494
        %v8289 = vpack.c.b16 %v6507, %v6501
        %v8290 = vpack.c.b16 %v6508, %v6502
        %v8291 = vpack.c.b16 %v6509, %v6503
        %v8292 = vpack.c.b16 %v6510, %v6504
        %v8293 = vpack.c.b16 %v6511, %v6505
        %v8294 = vpack.c.b16 %v6512, %v6506
        %v8295 = vpack.c.b16 %v6519, %v6513
        %v8296 = vpack.c.b16 %v6520, %v6514
        %v8297 = vpack.c.b16 %v6521, %v6515
        %v8298 = vpack.c.b16 %v6522, %v6516
        %v8299 = vpack.c.b16 %v6523, %v6517
        %v8300 = vpack.c.b16 %v6524, %v6518
        %v8301 = vpack.c.b16 %v6531, %v6525
        %v8302 = vpack.c.b16 %v6532, %v6526
        %v8303 = vpack.c.b16 %v6533, %v6527
        %v8304 = vpack.c.b16 %v6534, %v6528
        %v8305 = vpack.c.b16 %v6535, %v6529
        %v8306 = vpack.c.b16 %v6536, %v6530
        %v8307 = vpack.c.b16 %v6543, %v6537
        %v8308 = vpack.c.b16 %v6544, %v6538
        %v8309 = vpack.c.b16 %v6545, %v6539
        %v8310 = vpack.c.b16 %v6546, %v6540
        %v8311 = vpack.c.b16 %v6547, %v6541
        %v8312 = vpack.c.b16 %v6548, %v6542
        %v8313 = vpack.c.b16 %v6555, %v6549
        %v8314 = vpack.c.b16 %v6556, %v6550
        %v8315 = vpack.c.b16 %v6557, %v6551
        %v8316 = vpack.c.b16 %v6558, %v6552
        %v8317 = vpack.c.b16 %v6559, %v6553
        %v8318 = vpack.c.b16 %v6560, %v6554
        %v8319 = vpack.c.b16 %v6567, %v6561
        %v8320 = vpack.c.b16 %v6568, %v6562
        %v8321 = vpack.c.b16 %v6569, %v6563
        %v8322 = vpack.c.b16 %v6570, %v6564
        %v8323 = vpack.c.b16 %v6571, %v6565
        %v8324 = vpack.c.b16 %v6572, %v6566
        %v8325 = vpack.c.b16 %v6579, %v6573
        %v8326 = vpack.c.b16 %v6580, %v6574
        %v8327 = vpack.c.b16 %v6581, %v6575
        %v8328 = vpack.c.b16 %v6582, %v6576
        %v8329 = vpack.c.b16 %v6583, %v6577
        %v8330 = vpack.c.b16 %v6584, %v6578
        %v8331 = vpack.c.b16 %v6591, %v6585
        %v8332 = vpack.c.b16 %v6592, %v6586
        %v8333 = vpack.c.b16 %v6593, %v6587
        %v8334 = vpack.c.b16 %v6594, %v6588
        %v8335 = vpack.c.b16 %v6595, %v6589
        %v8336 = vpack.c.b16 %v6596, %v6590
        %v8337 = vpack.c.b16 %v6603, %v6597
        %v8338 = vpack.c.b16 %v6604, %v6598
        %v8339 = vpack.c.b16 %v6605, %v6599
        %v8340 = vpack.c.b16 %v6606, %v6600
        %v8341 = vpack.c.b16 %v6607, %v6601
        %v8342 = vpack.c.b16 %v6608, %v6602
        %v8343 = vpack.c.b16 %v6615, %v6609
        %v8344 = vpack.c.b16 %v6616, %v6610
        %v8345 = vpack.c.b16 %v6617, %v6611
        %v8346 = vpack.c.b16 %v6618, %v6612
        %v8347 = vpack.c.b16 %v6619, %v6613
        %v8348 = vpack.c.b16 %v6620, %v6614
        %v8349 = vpack.c.b16 %v6627, %v6621
        %v8350 = vpack.c.b16 %v6628, %v6622
        %v8351 = vpack.c.b16 %v6629, %v6623
        %v8352 = vpack.c.b16 %v6630, %v6624
        %v8353 = vpack.c.b16 %v6631, %v6625
        %v8354 = vpack.c.b16 %v6632, %v6626
        %v8355 = vpack.c.b16 %v6639, %v6633
        %v8356 = vpack.c.b16 %v6640, %v6634
        %v8357 = vpack.c.b16 %v6641, %v6635
        %v8358 = vpack.c.b16 %v6642, %v6636
        %v8359 = vpack.c.b16 %v6643, %v6637
        %v8360 = vpack.c.b16 %v6644, %v6638
        %v8361 = vpack.c.b16 %v6651, %v6645
        %v8362 = vpack.c.b16 %v6652, %v6646
        %v8363 = vpack.c.b16 %v6653, %v6647
        %v8364 = vpack.c.b16 %v6654, %v6648
        %v8365 = vpack.c.b16 %v6655, %v6649
        %v8366 = vpack.c.b16 %v6656, %v6650
        %v8367 = vpack.c.b16 %v6663, %v6657
        %v8368 = vpack.c.b16 %v6664, %v6658
        %v8369 = vpack.c.b16 %v6665, %v6659
        %v8370 = vpack.c.b16 %v6666, %v6660
        %v8371 = vpack.c.b16 %v6667, %v6661
        %v8372 = vpack.c.b16 %v6668, %v6662
        %v8373 = vpack.c.b16 %v6675, %v6669
        %v8374 = vpack.c.b16 %v6676, %v6670
        %v8375 = vpack.c.b16 %v6677, %v6671
        %v8376 = vpack.c.b16 %v6678, %v6672
        %v8377 = vpack.c.b16 %v6679, %v6673
        %v8378 = vpack.c.b16 %v6680, %v6674
        %v8379 = vpack.c.b16 %v6687, %v6681
        %v8380 = vpack.c.b16 %v6688, %v6682
        %v8381 = vpack.c.b16 %v6689, %v6683
        %v8382 = vpack.c.b16 %v6690, %v6684
        %v8383 = vpack.c.b16 %v6691, %v6685
        %v8384 = vpack.c.b16 %v6692, %v6686
        %v8385 = vpack.c.b16 %v6699, %v6693
        %v8386 = vpack.c.b16 %v6700, %v6694
        %v8387 = vpack.c.b16 %v6701, %v6695
        %v8388 = vpack.c.b16 %v6702, %v6696
        %v8389 = vpack.c.b16 %v6703, %v6697
        %v8390 = vpack.c.b16 %v6704, %v6698
        %v8391 = vpack.c.b16 %v6711, %v6705
        %v8392 = vpack.c.b16 %v6712, %v6706
        %v8393 = vpack.c.b16 %v6713, %v6707
        %v8394 = vpack.c.b16 %v6714, %v6708
        %v8395 = vpack.c.b16 %v6715, %v6709
        %v8396 = vpack.c.b16 %v6716, %v6710
        %v8397 = vpack.c.b16 %v6723, %v6717
        %v8398 = vpack.c.b16 %v6724, %v6718
        %v8399 = vpack.c.b16 %v6725, %v6719
        %v8400 = vpack.c.b16 %v6726, %v6720
        %v8401 = vpack.c.b16 %v6727, %v6721
        %v8402 = vpack.c.b16 %v6728, %v6722
        %v8403 = vpack.c.b16 %v6735, %v6729
        %v8404 = vpack.c.b16 %v6736, %v6730
        %v8405 = vpack.c.b16 %v6737, %v6731
        %v8406 = vpack.c.b16 %v6738, %v6732
        %v8407 = vpack.c.b16 %v6739, %v6733
        %v8408 = vpack.c.b16 %v6740, %v6734
        %v8409 = vpack.c.b16 %v6747, %v6741
        %v8410 = vpack.c.b16 %v6748, %v6742
        %v8411 = vpack.c.b16 %v6749, %v6743
        %v8412 = vpack.c.b16 %v6750, %v6744
        %v8413 = vpack.c.b16 %v6751, %v6745
        %v8414 = vpack.c.b16 %v6752, %v6746
        %v8415 = vpack.c.b16 %v6759, %v6753
        %v8416 = vpack.c.b16 %v6760, %v6754
        %v8417 = vpack.c.b16 %v6761, %v6755
        %v8418 = vpack.c.b16 %v6762, %v6756
        %v8419 = vpack.c.b16 %v6763, %v6757
        %v8420 = vpack.c.b16 %v6764, %v6758
        %v8421 = vpack.c.b16 %v6771, %v6765
        %v8422 = vpack.c.b16 %v6772, %v6766
        %v8423 = vpack.c.b16 %v6773, %v6767
        %v8424 = vpack.c.b16 %v6774, %v6768
        %v8425 = vpack.c.b16 %v6775, %v6769
        %v8426 = vpack.c.b16 %v6776, %v6770
        %v8427 = vpack.c.b16 %v6783, %v6777
        %v8428 = vpack.c.b16 %v6784, %v6778
        %v8429 = vpack.c.b16 %v6785, %v6779
        %v8430 = vpack.c.b16 %v6786, %v6780
        %v8431 = vpack.c.b16 %v6787, %v6781
        %v8432 = vpack.c.b16 %v6788, %v6782
        %v8433 = vpack.c.b16 %v6795, %v6789
        %v8434 = vpack.c.b16 %v6796, %v6790
        %v8435 = vpack.c.b16 %v6797, %v6791
        %v8436 = vpack.c.b16 %v6798, %v6792
        %v8437 = vpack.c.b16 %v6799, %v6793
        %v8438 = vpack.c.b16 %v6800, %v6794
        %v8439 = vpack.c.b16 %v6807, %v6801
        %v8440 = vpack.c.b16 %v6808, %v6802
        %v8441 = vpack.c.b16 %v6809, %v6803
        %v8442 = vpack.c.b16 %v6810, %v6804
        %v8443 = vpack.c.b16 %v6811, %v6805
        %v8444 = vpack.c.b16 %v6812, %v6806
        %v8445 = vpack.c.b16 %v6819, %v6813
        %v8446 = vpack.c.b16 %v6820, %v6814
        %v8447 = vpack.c.b16 %v6821, %v6815
        %v8448 = vpack.c.b16 %v6822, %v6816
        %v8449 = vpack.c.b16 %v6823, %v6817
        %v8450 = vpack.c.b16 %v6824, %v6818
        %v8451 = vpack.c.b16 %v6831, %v6825
        %v8452 = vpack.c.b16 %v6832, %v6826
        %v8453 = vpack.c.b16 %v6833, %v6827
        %v8454 = vpack.c.b16 %v6834, %v6828
        %v8455 = vpack.c.b16 %v6835, %v6829
        %v8456 = vpack.c.b16 %v6836, %v6830
        %v8457 = vpack.c.b16 %v6843, %v6837
        %v8458 = vpack.c.b16 %v6844, %v6838
        %v8459 = vpack.c.b16 %v6845, %v6839
        %v8460 = vpack.c.b16 %v6846, %v6840
        %v8461 = vpack.c.b16 %v6847, %v6841
        %v8462 = vpack.c.b16 %v6848, %v6842
        %v8463 = vpack.c.b16 %v6855, %v6849
        %v8464 = vpack.c.b16 %v6856, %v6850
        %v8465 = vpack.c.b16 %v6857, %v6851
        %v8466 = vpack.c.b16 %v6858, %v6852
        %v8467 = vpack.c.b16 %v6859, %v6853
        %v8468 = vpack.c.b16 %v6860, %v6854
        %v8469 = vpack.c.b16 %v6867, %v6861
        %v8470 = vpack.c.b16 %v6868, %v6862
        %v8471 = vpack.c.b16 %v6869, %v6863
        %v8472 = vpack.c.b16 %v6870, %v6864
        %v8473 = vpack.c.b16 %v6871, %v6865
        %v8474 = vpack.c.b16 %v6872, %v6866
        %v8475 = vpack.c.b16 %v6879, %v6873
        %v8476 = vpack.c.b16 %v6880, %v6874
        %v8477 = vpack.c.b16 %v6881, %v6875
        %v8478 = vpack.c.b16 %v6882, %v6876
        %v8479 = vpack.c.b16 %v6883, %v6877
        %v8480 = vpack.c.b16 %v6884, %v6878
        %v8481 = vpack.c.b16 %v6891, %v6885
        %v8482 = vpack.c.b16 %v6892, %v6886
        %v8483 = vpack.c.b16 %v6893, %v6887
        %v8484 = vpack.c.b16 %v6894, %v6888
        %v8485 = vpack.c.b16 %v6895, %v6889
        %v8486 = vpack.c.b16 %v6896, %v6890
        %v8487 = vpack.c.b16 %v6903, %v6897
        %v8488 = vpack.c.b16 %v6904, %v6898
        %v8489 = vpack.c.b16 %v6905, %v6899
        %v8490 = vpack.c.b16 %v6906, %v6900
        %v8491 = vpack.c.b16 %v6907, %v6901
        %v8492 = vpack.c.b16 %v6908, %v6902
        %v8493 = vpack.c.b16 %v6915, %v6909
        %v8494 = vpack.c.b16 %v6916, %v6910
        %v8495 = vpack.c.b16 %v6917, %v6911
        %v8496 = vpack.c.b16 %v6918, %v6912
        %v8497 = vpack.c.b16 %v6919, %v6913
        %v8498 = vpack.c.b16 %v6920, %v6914
        %v8499 = vpack.c.b16 %v6927, %v6921
        %v8500 = vpack.c.b16 %v6928, %v6922
        %v8501 = vpack.c.b16 %v6929, %v6923
        %v8502 = vpack.c.b16 %v6930, %v6924
        %v8503 = vpack.c.b16 %v6931, %v6925
        %v8504 = vpack.c.b16 %v6932, %v6926
        %v8505 = vpack.c.b16 %v6939, %v6933
        %v8506 = vpack.c.b16 %v6940, %v6934
        %v8507 = vpack.c.b16 %v6941, %v6935
        %v8508 = vpack.c.b16 %v6942, %v6936
        %v8509 = vpack.c.b16 %v6943, %v6937
        %v8510 = vpack.c.b16 %v6944, %v6938
        %v8511 = vpack.c.b16 %v6951, %v6945
        %v8512 = vpack.c.b16 %v6952, %v6946
        %v8513 = vpack.c.b16 %v6953, %v6947
        %v8514 = vpack.c.b16 %v6954, %v6948
        %v8515 = vpack.c.b16 %v6955, %v6949
        %v8516 = vpack.c.b16 %v6956, %v6950
        %v8517 = vpack.c.b16 %v6963, %v6957
        %v8518 = vpack.c.b16 %v6964, %v6958
        %v8519 = vpack.c.b16 %v6965, %v6959
        %v8520 = vpack.c.b16 %v6966, %v6960
        %v8521 = vpack.c.b16 %v6967, %v6961
        %v8522 = vpack.c.b16 %v6968, %v6962
        %v8523 = vpack.c.b16 %v6975, %v6969
        %v8524 = vpack.c.b16 %v6976, %v6970
        %v8525 = vpack.c.b16 %v6977, %v6971
        %v8526 = vpack.c.b16 %v6978, %v6972
        %v8527 = vpack.c.b16 %v6979, %v6973
        %v8528 = vpack.c.b16 %v6980, %v6974
        %v8529 = vpack.c.b16 %v6987, %v6981
        %v8530 = vpack.c.b16 %v6988, %v6982
        %v8531 = vpack.c.b16 %v6989, %v6983
        %v8532 = vpack.c.b16 %v6990, %v6984
        %v8533 = vpack.c.b16 %v6991, %v6985
        %v8534 = vpack.c.b16 %v6992, %v6986
        %v8535 = vpack.c.b16 %v6999, %v6993
        %v8536 = vpack.c.b16 %v7000, %v6994
        %v8537 = vpack.c.b16 %v7001, %v6995
        %v8538 = vpack.c.b16 %v7002, %v6996
        %v8539 = vpack.c.b16 %v7003, %v6997
        %v8540 = vpack.c.b16 %v7004, %v6998
        %v8541 = vpack.c.b16 %v7011, %v7005
        %v8542 = vpack.c.b16 %v7012, %v7006
        %v8543 = vpack.c.b16 %v7013, %v7007
        %v8544 = vpack.c.b16 %v7014, %v7008
        %v8545 = vpack.c.b16 %v7015, %v7009
        %v8546 = vpack.c.b16 %v7016, %v7010
        %v8547 = vpack.c.b16 %v7023, %v7017
        %v8548 = vpack.c.b16 %v7024, %v7018
        %v8549 = vpack.c.b16 %v7025, %v7019
        %v8550 = vpack.c.b16 %v7026, %v7020
        %v8551 = vpack.c.b16 %v7027, %v7021
        %v8552 = vpack.c.b16 %v7028, %v7022
        %v8553 = vpack.c.b16 %v7035, %v7029
        %v8554 = vpack.c.b16 %v7036, %v7030
        %v8555 = vpack.c.b16 %v7037, %v7031
        %v8556 = vpack.c.b16 %v7038, %v7032
        %v8557 = vpack.c.b16 %v7039, %v7033
        %v8558 = vpack.c.b16 %v7040, %v7034
        %v8559 = vpack.c.b16 %v7047, %v7041
        %v8560 = vpack.c.b16 %v7048, %v7042
        %v8561 = vpack.c.b16 %v7049, %v7043
        %v8562 = vpack.c.b16 %v7050, %v7044
        %v8563 = vpack.c.b16 %v7051, %v7045
        %v8564 = vpack.c.b16 %v7052, %v7046
        %v8565 = vpack.c.b16 %v7059, %v7053
        %v8566 = vpack.c.b16 %v7060, %v7054
        %v8567 = vpack.c.b16 %v7061, %v7055
        %v8568 = vpack.c.b16 %v7062, %v7056
        %v8569 = vpack.c.b16 %v7063, %v7057
        %v8570 = vpack.c.b16 %v7064, %v7058
        %v8571 = vpack.c.b16 %v7071, %v7065
        %v8572 = vpack.c.b16 %v7072, %v7066
        %v8573 = vpack.c.b16 %v7073, %v7067
        %v8574 = vpack.c.b16 %v7074, %v7068
        %v8575 = vpack.c.b16 %v7075, %v7069
        %v8576 = vpack.c.b16 %v7076, %v7070
        %v8577 = vpack.c.b16 %v7083, %v7077
        %v8578 = vpack.c.b16 %v7084, %v7078
        %v8579 = vpack.c.b16 %v7085, %v7079
        %v8580 = vpack.c.b16 %v7086, %v7080
        %v8581 = vpack.c.b16 %v7087, %v7081
        %v8582 = vpack.c.b16 %v7088, %v7082
        %v8583 = vpack.c.b16 %v7095, %v7089
        %v8584 = vpack.c.b16 %v7096, %v7090
        %v8585 = vpack.c.b16 %v7097, %v7091
        %v8586 = vpack.c.b16 %v7098, %v7092
        %v8587 = vpack.c.b16 %v7099, %v7093
        %v8588 = vpack.c.b16 %v7100, %v7094
        %v8589 = vpack.c.b16 %v7107, %v7101
        %v8590 = vpack.c.b16 %v7108, %v7102
        %v8591 = vpack.c.b16 %v7109, %v7103
        %v8592 = vpack.c.b16 %v7110, %v7104
        %v8593 = vpack.c.b16 %v7111, %v7105
        %v8594 = vpack.c.b16 %v7112, %v7106
        %v8595 = vpack.c.b16 %v7119, %v7113
        %v8596 = vpack.c.b16 %v7120, %v7114
        %v8597 = vpack.c.b16 %v7121, %v7115
        %v8598 = vpack.c.b16 %v7122, %v7116
        %v8599 = vpack.c.b16 %v7123, %v7117
        %v8600 = vpack.c.b16 %v7124, %v7118
        %v8601 = vpack.c.b16 %v7131, %v7125
        %v8602 = vpack.c.b16 %v7132, %v7126
        %v8603 = vpack.c.b16 %v7133, %v7127
        %v8604 = vpack.c.b16 %v7134, %v7128
        %v8605 = vpack.c.b16 %v7135, %v7129
        %v8606 = vpack.c.b16 %v7136, %v7130
        %v8607 = vpack.c.b16 %v7143, %v7137
        %v8608 = vpack.c.b16 %v7144, %v7138
        %v8609 = vpack.c.b16 %v7145, %v7139
        %v8610 = vpack.c.b16 %v7146, %v7140
        %v8611 = vpack.c.b16 %v7147, %v7141
        %v8612 = vpack.c.b16 %v7148, %v7142
        %v8613 = vpack.c.b16 %v7155, %v7149
        %v8614 = vpack.c.b16 %v7156, %v7150
        %v8615 = vpack.c.b16 %v7157, %v7151
        %v8616 = vpack.c.b16 %v7158, %v7152
        %v8617 = vpack.c.b16 %v7159, %v7153
        %v8618 = vpack.c.b16 %v7160, %v7154
        %v8619 = vpack.c.b16 %v7167, %v7161
        %v8620 = vpack.c.b16 %v7168, %v7162
        %v8621 = vpack.c.b16 %v7169, %v7163
        %v8622 = vpack.c.b16 %v7170, %v7164
        %v8623 = vpack.c.b16 %v7171, %v7165
        %v8624 = vpack.c.b16 %v7172, %v7166
        %v8625 = vpack.c.b16 %v7179, %v7173
        %v8626 = vpack.c.b16 %v7180, %v7174
        %v8627 = vpack.c.b16 %v7181, %v7175
        %v8628 = vpack.c.b16 %v7182, %v7176
        %v8629 = vpack.c.b16 %v7183, %v7177
        %v8630 = vpack.c.b16 %v7184, %v7178
        %v8631 = vpack.c.b16 %v7191, %v7185
        %v8632 = vpack.c.b16 %v7192, %v7186
        %v8633 = vpack.c.b16 %v7193, %v7187
        %v8634 = vpack.c.b16 %v7194, %v7188
        %v8635 = vpack.c.b16 %v7195, %v7189
        %v8636 = vpack.c.b16 %v7196, %v7190
        %v8637 = vpack.c.b16 %v7203, %v7197
        %v8638 = vpack.c.b16 %v7204, %v7198
        %v8639 = vpack.c.b16 %v7205, %v7199
        %v8640 = vpack.c.b16 %v7206, %v7200
        %v8641 = vpack.c.b16 %v7207, %v7201
        %v8642 = vpack.c.b16 %v7208, %v7202
        %v8643 = vpack.c.b16 %v7215, %v7209
        %v8644 = vpack.c.b16 %v7216, %v7210
        %v8645 = vpack.c.b16 %v7217, %v7211
        %v8646 = vpack.c.b16 %v7218, %v7212
        %v8647 = vpack.c.b16 %v7219, %v7213
        %v8648 = vpack.c.b16 %v7220, %v7214
        %v8649 = vpack.c.b16 %v7227, %v7221
        %v8650 = vpack.c.b16 %v7228, %v7222
        %v8651 = vpack.c.b16 %v7229, %v7223
        %v8652 = vpack.c.b16 %v7230, %v7224
        %v8653 = vpack.c.b16 %v7231, %v7225
        %v8654 = vpack.c.b16 %v7232, %v7226
        %v8655 = vpack.c.b16 %v7239, %v7233
        %v8656 = vpack.c.b16 %v7240, %v7234
        %v8657 = vpack.c.b16 %v7241, %v7235
        %v8658 = vpack.c.b16 %v7242, %v7236
        %v8659 = vpack.c.b16 %v7243, %v7237
        %v8660 = vpack.c.b16 %v7244, %v7238
        %v8661 = vpack.c.b16 %v7251, %v7245
        %v8662 = vpack.c.b16 %v7252, %v7246
        %v8663 = vpack.c.b16 %v7253, %v7247
        %v8664 = vpack.c.b16 %v7254, %v7248
        %v8665 = vpack.c.b16 %v7255, %v7249
        %v8666 = vpack.c.b16 %v7256, %v7250
        %v8667 = vpack.c.b16 %v7263, %v7257
        %v8668 = vpack.c.b16 %v7264, %v7258
        %v8669 = vpack.c.b16 %v7265, %v7259
        %v8670 = vpack.c.b16 %v7266, %v7260
        %v8671 = vpack.c.b16 %v7267, %v7261
        %v8672 = vpack.c.b16 %v7268, %v7262
        %v8673 = vpack.c.b16 %v7275, %v7269
        %v8674 = vpack.c.b16 %v7276, %v7270
        %v8675 = vpack.c.b16 %v7277, %v7271
        %v8676 = vpack.c.b16 %v7278, %v7272
        %v8677 = vpack.c.b16 %v7279, %v7273
        %v8678 = vpack.c.b16 %v7280, %v7274
        %v8679 = vpack.c.b16 %v7287, %v7281
        %v8680 = vpack.c.b16 %v7288, %v7282
        %v8681 = vpack.c.b16 %v7289, %v7283
        %v8682 = vpack.c.b16 %v7290, %v7284
        %v8683 = vpack.c.b16 %v7291, %v7285
        %v8684 = vpack.c.b16 %v7292, %v7286
        %v8685 = vpack.c.b16 %v7299, %v7293
        %v8686 = vpack.c.b16 %v7300, %v7294
        %v8687 = vpack.c.b16 %v7301, %v7295
        %v8688 = vpack.c.b16 %v7302, %v7296
        %v8689 = vpack.c.b16 %v7303, %v7297
        %v8690 = vpack.c.b16 %v7304, %v7298
        %v8691 = vpack.c.b16 %v7311, %v7305
        %v8692 = vpack.c.b16 %v7312, %v7306
        %v8693 = vpack.c.b16 %v7313, %v7307
        %v8694 = vpack.c.b16 %v7314, %v7308
        %v8695 = vpack.c.b16 %v7315, %v7309
        %v8696 = vpack.c.b16 %v7316, %v7310
        %v8697 = vpack.c.b16 %v7323, %v7317
        %v8698 = vpack.c.b16 %v7324, %v7318
        %v8699 = vpack.c.b16 %v7325, %v7319
        %v8700 = vpack.c.b16 %v7326, %v7320
        %v8701 = vpack.c.b16 %v7327, %v7321
        %v8702 = vpack.c.b16 %v7328, %v7322
        %v8703 = vpack.c.b16 %v7335, %v7329
        %v8704 = vpack.c.b16 %v7336, %v7330
        %v8705 = vpack.c.b16 %v7337, %v7331
        %v8706 = vpack.c.b16 %v7338, %v7332
        %v8707 = vpack.c.b16 %v7339, %v7333
        %v8708 = vpack.c.b16 %v7340, %v7334
        %v8709 = vpack.c.b16 %v7347, %v7341
        %v8710 = vpack.c.b16 %v7348, %v7342
        %v8711 = vpack.c.b16 %v7349, %v7343
        %v8712 = vpack.c.b16 %v7350, %v7344
        %v8713 = vpack.c.b16 %v7351, %v7345
        %v8714 = vpack.c.b16 %v7352, %v7346
        %v8715 = vpack.c.b16 %v7359, %v7353
        %v8716 = vpack.c.b16 %v7360, %v7354
        %v8717 = vpack.c.b16 %v7361, %v7355
        %v8718 = vpack.c.b16 %v7362, %v7356
        %v8719 = vpack.c.b16 %v7363, %v7357
        %v8720 = vpack.c.b16 %v7364, %v7358
        %v8721 = vpack.c.b16 %v7371, %v7365
        %v8722 = vpack.c.b16 %v7372, %v7366
        %v8723 = vpack.c.b16 %v7373, %v7367
        %v8724 = vpack.c.b16 %v7374, %v7368
        %v8725 = vpack.c.b16 %v7375, %v7369
        %v8726 = vpack.c.b16 %v7376, %v7370
        %v8727 = vpack.c.b16 %v7383, %v7377
        %v8728 = vpack.c.b16 %v7384, %v7378
        %v8729 = vpack.c.b16 %v7385, %v7379
        %v8730 = vpack.c.b16 %v7386, %v7380
        %v8731 = vpack.c.b16 %v7387, %v7381
        %v8732 = vpack.c.b16 %v7388, %v7382
        %v8733 = vpack.c.b16 %v7395, %v7389
        %v8734 = vpack.c.b16 %v7396, %v7390
        %v8735 = vpack.c.b16 %v7397, %v7391
        %v8736 = vpack.c.b16 %v7398, %v7392
        %v8737 = vpack.c.b16 %v7399, %v7393
        %v8738 = vpack.c.b16 %v7400, %v7394
        %v8739 = vpack.c.b16 %v7407, %v7401
        %v8740 = vpack.c.b16 %v7408, %v7402
        %v8741 = vpack.c.b16 %v7409, %v7403
        %v8742 = vpack.c.b16 %v7410, %v7404
        %v8743 = vpack.c.b16 %v7411, %v7405
        %v8744 = vpack.c.b16 %v7412, %v7406
        %v8745 = vpack.c.b16 %v7419, %v7413
        %v8746 = vpack.c.b16 %v7420, %v7414
        %v8747 = vpack.c.b16 %v7421, %v7415
        %v8748 = vpack.c.b16 %v7422, %v7416
        %v8749 = vpack.c.b16 %v7423, %v7417
        %v8750 = vpack.c.b16 %v7424, %v7418
        %v8751 = vpack.c.b16 %v7431, %v7425
        %v8752 = vpack.c.b16 %v7432, %v7426
        %v8753 = vpack.c.b16 %v7433, %v7427
        %v8754 = vpack.c.b16 %v7434, %v7428
        %v8755 = vpack.c.b16 %v7435, %v7429
        %v8756 = vpack.c.b16 %v7436, %v7430
        %v8757 = vpack.c.b16 %v7443, %v7437
        %v8758 = vpack.c.b16 %v7444, %v7438
        %v8759 = vpack.c.b16 %v7445, %v7439
        %v8760 = vpack.c.b16 %v7446, %v7440
        %v8761 = vpack.c.b16 %v7447, %v7441
        %v8762 = vpack.c.b16 %v7448, %v7442
        %v8763 = vpack.c.b16 %v7455, %v7449
        %v8764 = vpack.c.b16 %v7456, %v7450
        %v8765 = vpack.c.b16 %v7457, %v7451
        %v8766 = vpack.c.b16 %v7458, %v7452
        %v8767 = vpack.c.b16 %v7459, %v7453
        %v8768 = vpack.c.b16 %v7460, %v7454
        %v8769 = vpack.c.b16 %v7467, %v7461
        %v8770 = vpack.c.b16 %v7468, %v7462
        %v8771 = vpack.c.b16 %v7469, %v7463
        %v8772 = vpack.c.b16 %v7470, %v7464
        %v8773 = vpack.c.b16 %v7471, %v7465
        %v8774 = vpack.c.b16 %v7472, %v7466
        %v8775 = vpack.c.b16 %v7479, %v7473
        %v8776 = vpack.c.b16 %v7480, %v7474
        %v8777 = vpack.c.b16 %v7481, %v7475
        %v8778 = vpack.c.b16 %v7482, %v7476
        %v8779 = vpack.c.b16 %v7483, %v7477
        %v8780 = vpack.c.b16 %v7484, %v7478
        %v8781 = vpack.c.b16 %v7491, %v7485
        %v8782 = vpack.c.b16 %v7492, %v7486
        %v8783 = vpack.c.b16 %v7493, %v7487
        %v8784 = vpack.c.b16 %v7494, %v7488
        %v8785 = vpack.c.b16 %v7495, %v7489
        %v8786 = vpack.c.b16 %v7496, %v7490
        %v8787 = vpack.c.b16 %v7503, %v7497
        %v8788 = vpack.c.b16 %v7504, %v7498
        %v8789 = vpack.c.b16 %v7505, %v7499
        %v8790 = vpack.c.b16 %v7506, %v7500
        %v8791 = vpack.c.b16 %v7507, %v7501
        %v8792 = vpack.c.b16 %v7508, %v7502
        %v8793 = vpack.c.b16 %v7515, %v7509
        %v8794 = vpack.c.b16 %v7516, %v7510
        %v8795 = vpack.c.b16 %v7517, %v7511
        %v8796 = vpack.c.b16 %v7518, %v7512
        %v8797 = vpack.c.b16 %v7519, %v7513
        %v8798 = vpack.c.b16 %v7520, %v7514
        %v8799 = vpack.c.b16 %v7527, %v7521
        %v8800 = vpack.c.b16 %v7528, %v7522
        %v8801 = vpack.c.b16 %v7529, %v7523
        %v8802 = vpack.c.b16 %v7530, %v7524
        %v8803 = vpack.c.b16 %v7531, %v7525
        %v8804 = vpack.c.b16 %v7532, %v7526
        %v8805 = vpack.c.b16 %v7539, %v7533
        %v8806 = vpack.c.b16 %v7540, %v7534
        %v8807 = vpack.c.b16 %v7541, %v7535
        %v8808 = vpack.c.b16 %v7542, %v7536
        %v8809 = vpack.c.b16 %v7543, %v7537
        %v8810 = vpack.c.b16 %v7544, %v7538
        %v8811 = vpack.c.b16 %v7551, %v7545
        %v8812 = vpack.c.b16 %v7552, %v7546
        %v8813 = vpack.c.b16 %v7553, %v7547
        %v8814 = vpack.c.b16 %v7554, %v7548
        %v8815 = vpack.c.b16 %v7555, %v7549
        %v8816 = vpack.c.b16 %v7556, %v7550
        %v8817 = vpack.c.b16 %v7563, %v7557
        %v8818 = vpack.c.b16 %v7564, %v7558
        %v8819 = vpack.c.b16 %v7565, %v7559
        %v8820 = vpack.c.b16 %v7566, %v7560
        %v8821 = vpack.c.b16 %v7567, %v7561
        %v8822 = vpack.c.b16 %v7568, %v7562
        %v8823 = vpack.c.b16 %v7575, %v7569
        %v8824 = vpack.c.b16 %v7576, %v7570
        %v8825 = vpack.c.b16 %v7577, %v7571
        %v8826 = vpack.c.b16 %v7578, %v7572
        %v8827 = vpack.c.b16 %v7579, %v7573
        %v8828 = vpack.c.b16 %v7580, %v7574
        %v8829 = vpack.c.b16 %v7587, %v7581
        %v8830 = vpack.c.b16 %v7588, %v7582
        %v8831 = vpack.c.b16 %v7589, %v7583
        %v8832 = vpack.c.b16 %v7590, %v7584
        %v8833 = vpack.c.b16 %v7591, %v7585
        %v8834 = vpack.c.b16 %v7592, %v7586
        %v8835 = vpack.c.b16 %v7599, %v7593
        %v8836 = vpack.c.b16 %v7600, %v7594
        %v8837 = vpack.c.b16 %v7601, %v7595
        %v8838 = vpack.c.b16 %v7602, %v7596
        %v8839 = vpack.c.b16 %v7603, %v7597
        %v8840 = vpack.c.b16 %v7604, %v7598
        %v8841 = vpack.c.b16 %v7611, %v7605
        %v8842 = vpack.c.b16 %v7612, %v7606
        %v8843 = vpack.c.b16 %v7613, %v7607
        %v8844 = vpack.c.b16 %v7614, %v7608
        %v8845 = vpack.c.b16 %v7615, %v7609
        %v8846 = vpack.c.b16 %v7616, %v7610
        %v8847 = vpack.c.b16 %v7623, %v7617
        %v8848 = vpack.c.b16 %v7624, %v7618
        %v8849 = vpack.c.b16 %v7625, %v7619
        %v8850 = vpack.c.b16 %v7626, %v7620
        %v8851 = vpack.c.b16 %v7627, %v7621
        %v8852 = vpack.c.b16 %v7628, %v7622
        %v8853 = vpack.c.b16 %v7635, %v7629
        %v8854 = vpack.c.b16 %v7636, %v7630
        %v8855 = vpack.c.b16 %v7637, %v7631
        %v8856 = vpack.c.b16 %v7638, %v7632
        %v8857 = vpack.c.b16 %v7639, %v7633
        %v8858 = vpack.c.b16 %v7640, %v7634
        %v8859 = vpack.c.b16 %v7647, %v7641
        %v8860 = vpack.c.b16 %v7648, %v7642
        %v8861 = vpack.c.b16 %v7649, %v7643
        %v8862 = vpack.c.b16 %v7650, %v7644
        %v8863 = vpack.c.b16 %v7651, %v7645
        %v8864 = vpack.c.b16 %v7652, %v7646
        %v8865 = vpack.c.b16 %v7659, %v7653
        %v8866 = vpack.c.b16 %v7660, %v7654
        %v8867 = vpack.c.b16 %v7661, %v7655
        %v8868 = vpack.c.b16 %v7662, %v7656
        %v8869 = vpack.c.b16 %v7663, %v7657
        %v8870 = vpack.c.b16 %v7664, %v7658
        %v8871 = vpack.c.b16 %v7671, %v7665
        %v8872 = vpack.c.b16 %v7672, %v7666
        %v8873 = vpack.c.b16 %v7673, %v7667
        %v8874 = vpack.c.b16 %v7674, %v7668
        %v8875 = vpack.c.b16 %v7675, %v7669
        %v8876 = vpack.c.b16 %v7676, %v7670
        %10077 = vmatprep.subr.bf16.mxu0 %v7720
        %10078 = vmatpush1.bf16.msra.mxu0 %v7719
        %10079 = vmatprep.subr.bf16.mxu0 %v7714
        %10080 = vmatpush1.bf16.msra.mxu0 %v7713
        %10081 = vmatprep.subr.bf16.mxu0 %v7708
        %10082 = vmatpush1.bf16.msra.mxu0 %v7707
        %10083 = vmatprep.subr.bf16.mxu0 %v7702
        %10084 = vmatpush1.bf16.msra.mxu0 %v7701
        %10085 = vmatprep.subr.bf16.mxu0 %v7696
        %10086 = vmatpush1.bf16.msra.mxu0 %v7695
        %10087 = vmatprep.subr.bf16.mxu0 %v7690
        %10088 = vmatpush1.bf16.msra.mxu0 %v7689
        %10089 = vmatprep.subr.bf16.mxu0 %v7684
        %10090 = vmatpush1.bf16.msra.mxu0 %v7683
        %10091 = vmatprep.subr.bf16.mxu0 %v7678
        %10092 = vmatpush1.bf16.msra.mxu0 %v7677
        %10093 = vmatprep.subr.bf16.mxu0 %v7768
        %10094 = vmatpush2.bf16.msra.mxu0 %v7767
        %10095 = vmatprep.subr.bf16.mxu0 %v7762
        %10096 = vmatpush2.bf16.msra.mxu0 %v7761
        %10097 = vmatprep.subr.bf16.mxu0 %v7756
        %10098 = vmatpush2.bf16.msra.mxu0 %v7755
        %10099 = vmatprep.subr.bf16.mxu0 %v7750
        %10100 = vmatpush2.bf16.msra.mxu0 %v7749
        %10101 = vmatprep.subr.bf16.mxu0 %v7744
        %10102 = vmatpush2.bf16.msra.mxu0 %v7743
        %10103 = vmatprep.subr.bf16.mxu0 %v7738
        %10104 = vmatpush2.bf16.msra.mxu0 %v7737
        %10105 = vmatprep.subr.bf16.mxu0 %v7732
        %10106 = vmatpush2.bf16.msra.mxu0 %v7731
        %10107 = vmatprep.subr.bf16.mxu0 %v7726
        %10108 = vmatpush2.bf16.msra.mxu0 %v7725
        %10109 = vmatprep.mubr.bf16.mxu0 %v2853
        %10110 = vmatmul.mubr.bf16.gmra.mxu0 %v2852
        %v10111 = vpop.f32.mrf.mxu0
        %v10112 = vadd.f32 0.0, %v10111
        %v10113 = vpop.f32.mrf.mxu0
        %v10114 = vadd.f32 0.0, %v10113
        %v10115 = vpop.f32.mrf.mxu0
        %v10116 = vpop.f32.mrf.mxu0
        %10117 = vdwg.mxu0
        %10118 = vmatprep.subr.bf16.mxu0 %v7816
        %10119 = vmatpush1.bf16.msra.mxu0 %v7815
        %10120 = vmatprep.subr.bf16.mxu0 %v7810
        %10121 = vmatpush1.bf16.msra.mxu0 %v7809
        %10122 = vmatprep.subr.bf16.mxu0 %v7804
        %10123 = vmatpush1.bf16.msra.mxu0 %v7803
        %10124 = vmatprep.subr.bf16.mxu0 %v7798
        %10125 = vmatpush1.bf16.msra.mxu0 %v7797
        %10126 = vmatprep.subr.bf16.mxu0 %v7792
        %10127 = vmatpush1.bf16.msra.mxu0 %v7791
        %10128 = vmatprep.subr.bf16.mxu0 %v7786
        %10129 = vmatpush1.bf16.msra.mxu0 %v7785
        %10130 = vmatprep.subr.bf16.mxu0 %v7780
        %10131 = vmatpush1.bf16.msra.mxu0 %v7779
        %10132 = vmatprep.subr.bf16.mxu0 %v7774
        %10133 = vmatpush1.bf16.msra.mxu0 %v7773
        %10134 = vmatprep.subr.bf16.mxu0 %v7864
        %10135 = vmatpush2.bf16.msra.mxu0 %v7863
        %10136 = vmatprep.subr.bf16.mxu0 %v7858
        %10137 = vmatpush2.bf16.msra.mxu0 %v7857
        %10138 = vmatprep.subr.bf16.mxu0 %v7852
        %10139 = vmatpush2.bf16.msra.mxu0 %v7851
        %10140 = vmatprep.subr.bf16.mxu0 %v7846
        %10141 = vmatpush2.bf16.msra.mxu0 %v7845
        %10142 = vmatprep.subr.bf16.mxu0 %v7840
        %10143 = vmatpush2.bf16.msra.mxu0 %v7839
        %10144 = vmatprep.subr.bf16.mxu0 %v7834
        %10145 = vmatpush2.bf16.msra.mxu0 %v7833
        %10146 = vmatprep.subr.bf16.mxu0 %v7828
        %10147 = vmatpush2.bf16.msra.mxu0 %v7827
        %10148 = vmatprep.subr.bf16.mxu0 %v7822
        %10149 = vmatpush2.bf16.msra.mxu0 %v7821
        %10150 = vmatprep.mubr.bf16.mxu0 %v2855
        %10151 = vmatmul.mubr.bf16.gmra.mxu0 %v2854
        %v10152 = vpop.f32.mrf.mxu0
        %v10153 = vadd.f32 %v10112, %v10152
        %v10154 = vpop.f32.mrf.mxu0
        %v10155 = vadd.f32 %v10114, %v10154
        %v10156 = vpop.f32.mrf.mxu0
        %v10157 = vpop.f32.mrf.mxu0
        %10158 = vdwg.mxu0
        %10159 = vmatprep.subr.bf16.mxu0 %v7912
        %10160 = vmatpush1.bf16.msra.mxu0 %v7911
        %10161 = vmatprep.subr.bf16.mxu0 %v7906
        %10162 = vmatpush1.bf16.msra.mxu0 %v7905
        %10163 = vmatprep.subr.bf16.mxu0 %v7900
        %10164 = vmatpush1.bf16.msra.mxu0 %v7899
        %10165 = vmatprep.subr.bf16.mxu0 %v7894
        %10166 = vmatpush1.bf16.msra.mxu0 %v7893
        %10167 = vmatprep.subr.bf16.mxu0 %v7888
        %10168 = vmatpush1.bf16.msra.mxu0 %v7887
        %10169 = vmatprep.subr.bf16.mxu0 %v7882
        %10170 = vmatpush1.bf16.msra.mxu0 %v7881
        %10171 = vmatprep.subr.bf16.mxu0 %v7876
        %10172 = vmatpush1.bf16.msra.mxu0 %v7875
        %10173 = vmatprep.subr.bf16.mxu0 %v7870
        %10174 = vmatpush1.bf16.msra.mxu0 %v7869
        %10175 = vmatprep.subr.bf16.mxu0 %v7960
        %10176 = vmatpush2.bf16.msra.mxu0 %v7959
        %10177 = vmatprep.subr.bf16.mxu0 %v7954
        %10178 = vmatpush2.bf16.msra.mxu0 %v7953
        %10179 = vmatprep.subr.bf16.mxu0 %v7948
        %10180 = vmatpush2.bf16.msra.mxu0 %v7947
        %10181 = vmatprep.subr.bf16.mxu0 %v7942
        %10182 = vmatpush2.bf16.msra.mxu0 %v7941
        %10183 = vmatprep.subr.bf16.mxu0 %v7936
        %10184 = vmatpush2.bf16.msra.mxu0 %v7935
        %10185 = vmatprep.subr.bf16.mxu0 %v7930
        %10186 = vmatpush2.bf16.msra.mxu0 %v7929
        %10187 = vmatprep.subr.bf16.mxu0 %v7924
        %10188 = vmatpush2.bf16.msra.mxu0 %v7923
        %10189 = vmatprep.subr.bf16.mxu0 %v7918
        %10190 = vmatpush2.bf16.msra.mxu0 %v7917
        %10191 = vmatprep.mubr.bf16.mxu0 %v2857
        %10192 = vmatmul.mubr.bf16.gmra.mxu0 %v2856
        %v10193 = vpop.f32.mrf.mxu0
        %v10194 = vadd.f32 %v10153, %v10193
        %v10195 = vpop.f32.mrf.mxu0
        %v10196 = vadd.f32 %v10155, %v10195
        %v10197 = vpop.f32.mrf.mxu0
        %v10198 = vpop.f32.mrf.mxu0
        %10199 = vdwg.mxu0
        %10200 = vmatprep.subr.bf16.mxu0 %v8008
        %10201 = vmatpush1.bf16.msra.mxu0 %v8007
        %10202 = vmatprep.subr.bf16.mxu0 %v8002
        %10203 = vmatpush1.bf16.msra.mxu0 %v8001
        %10204 = vmatprep.subr.bf16.mxu0 %v7996
        %10205 = vmatpush1.bf16.msra.mxu0 %v7995
        %10206 = vmatprep.subr.bf16.mxu0 %v7990
        %10207 = vmatpush1.bf16.msra.mxu0 %v7989
        %10208 = vmatprep.subr.bf16.mxu0 %v7984
        %10209 = vmatpush1.bf16.msra.mxu0 %v7983
        %10210 = vmatprep.subr.bf16.mxu0 %v7978
        %10211 = vmatpush1.bf16.msra.mxu0 %v7977
        %10212 = vmatprep.subr.bf16.mxu0 %v7972
        %10213 = vmatpush1.bf16.msra.mxu0 %v7971
        %10214 = vmatprep.subr.bf16.mxu0 %v7966
        %10215 = vmatpush1.bf16.msra.mxu0 %v7965
        %10216 = vmatprep.subr.bf16.mxu0 %v8056
        %10217 = vmatpush2.bf16.msra.mxu0 %v8055
        %10218 = vmatprep.subr.bf16.mxu0 %v8050
        %10219 = vmatpush2.bf16.msra.mxu0 %v8049
        %10220 = vmatprep.subr.bf16.mxu0 %v8044
        %10221 = vmatpush2.bf16.msra.mxu0 %v8043
        %10222 = vmatprep.subr.bf16.mxu0 %v8038
        %10223 = vmatpush2.bf16.msra.mxu0 %v8037
        %10224 = vmatprep.subr.bf16.mxu0 %v8032
        %10225 = vmatpush2.bf16.msra.mxu0 %v8031
        %10226 = vmatprep.subr.bf16.mxu0 %v8026
        %10227 = vmatpush2.bf16.msra.mxu0 %v8025
        %10228 = vmatprep.subr.bf16.mxu0 %v8020
        %10229 = vmatpush2.bf16.msra.mxu0 %v8019
        %10230 = vmatprep.subr.bf16.mxu0 %v8014
        %10231 = vmatpush2.bf16.msra.mxu0 %v8013
        %10232 = vmatprep.mubr.bf16.mxu0 %v2859
        %10233 = vmatmul.mubr.bf16.gmra.mxu0 %v2858
        %v10234 = vpop.f32.mrf.mxu0
        %v10235 = vadd.f32 %v10194, %v10234
        %v10236 = vpop.f32.mrf.mxu0
        %v10237 = vadd.f32 %v10196, %v10236
        %v10238 = vpop.f32.mrf.mxu0
        %v10239 = vpop.f32.mrf.mxu0
        %10240 = vdwg.mxu0
        %10241 = vmatprep.subr.bf16.mxu0 %v8104
        %10242 = vmatpush1.bf16.msra.mxu0 %v8103
        %10243 = vmatprep.subr.bf16.mxu0 %v8098
        %10244 = vmatpush1.bf16.msra.mxu0 %v8097
        %10245 = vmatprep.subr.bf16.mxu0 %v8092
        %10246 = vmatpush1.bf16.msra.mxu0 %v8091
        %10247 = vmatprep.subr.bf16.mxu0 %v8086
        %10248 = vmatpush1.bf16.msra.mxu0 %v8085
        %10249 = vmatprep.subr.bf16.mxu0 %v8080
        %10250 = vmatpush1.bf16.msra.mxu0 %v8079
        %10251 = vmatprep.subr.bf16.mxu0 %v8074
        %10252 = vmatpush1.bf16.msra.mxu0 %v8073
        %10253 = vmatprep.subr.bf16.mxu0 %v8068
        %10254 = vmatpush1.bf16.msra.mxu0 %v8067
        %10255 = vmatprep.subr.bf16.mxu0 %v8062
        %10256 = vmatpush1.bf16.msra.mxu0 %v8061
        %10257 = vmatprep.subr.bf16.mxu0 %v8152
        %10258 = vmatpush2.bf16.msra.mxu0 %v8151
        %10259 = vmatprep.subr.bf16.mxu0 %v8146
        %10260 = vmatpush2.bf16.msra.mxu0 %v8145
        %10261 = vmatprep.subr.bf16.mxu0 %v8140
        %10262 = vmatpush2.bf16.msra.mxu0 %v8139
        %10263 = vmatprep.subr.bf16.mxu0 %v8134
        %10264 = vmatpush2.bf16.msra.mxu0 %v8133
        %10265 = vmatprep.subr.bf16.mxu0 %v8128
        %10266 = vmatpush2.bf16.msra.mxu0 %v8127
        %10267 = vmatprep.subr.bf16.mxu0 %v8122
        %10268 = vmatpush2.bf16.msra.mxu0 %v8121
        %10269 = vmatprep.subr.bf16.mxu0 %v8116
        %10270 = vmatpush2.bf16.msra.mxu0 %v8115
        %10271 = vmatprep.subr.bf16.mxu0 %v8110
        %10272 = vmatpush2.bf16.msra.mxu0 %v8109
        %10273 = vmatprep.mubr.bf16.mxu0 %v2861
        %10274 = vmatmul.mubr.bf16.gmra.mxu0 %v2860
        %v10275 = vpop.f32.mrf.mxu0
        %v10276 = vadd.f32 %v10235, %v10275
        %v10277 = vpop.f32.mrf.mxu0
        %v10278 = vadd.f32 %v10237, %v10277
        %v10279 = vpop.f32.mrf.mxu0
        %v10280 = vpop.f32.mrf.mxu0
        %10281 = vdwg.mxu0
        %10282 = vmatprep.subr.bf16.mxu0 %v8200
        %10283 = vmatpush1.bf16.msra.mxu0 %v8199
        %10284 = vmatprep.subr.bf16.mxu0 %v8194
        %10285 = vmatpush1.bf16.msra.mxu0 %v8193
        %10286 = vmatprep.subr.bf16.mxu0 %v8188
        %10287 = vmatpush1.bf16.msra.mxu0 %v8187
        %10288 = vmatprep.subr.bf16.mxu0 %v8182
        %10289 = vmatpush1.bf16.msra.mxu0 %v8181
        %10290 = vmatprep.subr.bf16.mxu0 %v8176
        %10291 = vmatpush1.bf16.msra.mxu0 %v8175
        %10292 = vmatprep.subr.bf16.mxu0 %v8170
        %10293 = vmatpush1.bf16.msra.mxu0 %v8169
        %10294 = vmatprep.subr.bf16.mxu0 %v8164
        %10295 = vmatpush1.bf16.msra.mxu0 %v8163
        %10296 = vmatprep.subr.bf16.mxu0 %v8158
        %10297 = vmatpush1.bf16.msra.mxu0 %v8157
        %10298 = vmatprep.subr.bf16.mxu0 %v8248
        %10299 = vmatpush2.bf16.msra.mxu0 %v8247
        %10300 = vmatprep.subr.bf16.mxu0 %v8242
        %10301 = vmatpush2.bf16.msra.mxu0 %v8241
        %10302 = vmatprep.subr.bf16.mxu0 %v8236
        %10303 = vmatpush2.bf16.msra.mxu0 %v8235
        %10304 = vmatprep.subr.bf16.mxu0 %v8230
        %10305 = vmatpush2.bf16.msra.mxu0 %v8229
        %10306 = vmatprep.subr.bf16.mxu0 %v8224
        %10307 = vmatpush2.bf16.msra.mxu0 %v8223
        %10308 = vmatprep.subr.bf16.mxu0 %v8218
        %10309 = vmatpush2.bf16.msra.mxu0 %v8217
        %10310 = vmatprep.subr.bf16.mxu0 %v8212
        %10311 = vmatpush2.bf16.msra.mxu0 %v8211
        %10312 = vmatprep.subr.bf16.mxu0 %v8206
        %10313 = vmatpush2.bf16.msra.mxu0 %v8205
        %10314 = vmatprep.mubr.bf16.mxu0 %v2863
        %10315 = vmatmul.mubr.bf16.gmra.mxu0 %v2862
        %v10316 = vpop.f32.mrf.mxu0
        %v10317 = vadd.f32 %v10276, %v10316
        %v10318 = vpop.f32.mrf.mxu0
        %v10319 = vadd.f32 %v10278, %v10318
        %v10320 = vpop.f32.mrf.mxu0
        %v10321 = vpop.f32.mrf.mxu0
        %10322 = vdwg.mxu0
        %10323 = vmatprep.subr.bf16.mxu0 %v8296
        %10324 = vmatpush1.bf16.msra.mxu0 %v8295
        %10325 = vmatprep.subr.bf16.mxu0 %v8290
        %10326 = vmatpush1.bf16.msra.mxu0 %v8289
        %10327 = vmatprep.subr.bf16.mxu0 %v8284
        %10328 = vmatpush1.bf16.msra.mxu0 %v8283
        %10329 = vmatprep.subr.bf16.mxu0 %v8278
        %10330 = vmatpush1.bf16.msra.mxu0 %v8277
        %10331 = vmatprep.subr.bf16.mxu0 %v8272
        %10332 = vmatpush1.bf16.msra.mxu0 %v8271
        %10333 = vmatprep.subr.bf16.mxu0 %v8266
        %10334 = vmatpush1.bf16.msra.mxu0 %v8265
        %10335 = vmatprep.subr.bf16.mxu0 %v8260
        %10336 = vmatpush1.bf16.msra.mxu0 %v8259
        %10337 = vmatprep.subr.bf16.mxu0 %v8254
        %10338 = vmatpush1.bf16.msra.mxu0 %v8253
        %10339 = vmatprep.subr.bf16.mxu0 %v8344
        %10340 = vmatpush2.bf16.msra.mxu0 %v8343
        %10341 = vmatprep.subr.bf16.mxu0 %v8338
        %10342 = vmatpush2.bf16.msra.mxu0 %v8337
        %10343 = vmatprep.subr.bf16.mxu0 %v8332
        %10344 = vmatpush2.bf16.msra.mxu0 %v8331
        %10345 = vmatprep.subr.bf16.mxu0 %v8326
        %10346 = vmatpush2.bf16.msra.mxu0 %v8325
        %10347 = vmatprep.subr.bf16.mxu0 %v8320
        %10348 = vmatpush2.bf16.msra.mxu0 %v8319
        %10349 = vmatprep.subr.bf16.mxu0 %v8314
        %10350 = vmatpush2.bf16.msra.mxu0 %v8313
        %10351 = vmatprep.subr.bf16.mxu0 %v8308
        %10352 = vmatpush2.bf16.msra.mxu0 %v8307
        %10353 = vmatprep.subr.bf16.mxu0 %v8302
        %10354 = vmatpush2.bf16.msra.mxu0 %v8301
        %10355 = vmatprep.mubr.bf16.mxu0 %v2865
        %10356 = vmatmul.mubr.bf16.gmra.mxu0 %v2864
        %v10357 = vpop.f32.mrf.mxu0
        %v10358 = vadd.f32 %v10317, %v10357
        %v10359 = vpop.f32.mrf.mxu0
        %v10360 = vadd.f32 %v10319, %v10359
        %v10361 = vpop.f32.mrf.mxu0
        %v10362 = vpop.f32.mrf.mxu0
        %10363 = vdwg.mxu0
        %10364 = vmatprep.subr.bf16.mxu0 %v8392
        %10365 = vmatpush1.bf16.msra.mxu0 %v8391
        %10366 = vmatprep.subr.bf16.mxu0 %v8386
        %10367 = vmatpush1.bf16.msra.mxu0 %v8385
        %10368 = vmatprep.subr.bf16.mxu0 %v8380
        %10369 = vmatpush1.bf16.msra.mxu0 %v8379
        %10370 = vmatprep.subr.bf16.mxu0 %v8374
        %10371 = vmatpush1.bf16.msra.mxu0 %v8373
        %10372 = vmatprep.subr.bf16.mxu0 %v8368
        %10373 = vmatpush1.bf16.msra.mxu0 %v8367
        %10374 = vmatprep.subr.bf16.mxu0 %v8362
        %10375 = vmatpush1.bf16.msra.mxu0 %v8361
        %10376 = vmatprep.subr.bf16.mxu0 %v8356
        %10377 = vmatpush1.bf16.msra.mxu0 %v8355
        %10378 = vmatprep.subr.bf16.mxu0 %v8350
        %10379 = vmatpush1.bf16.msra.mxu0 %v8349
        %10380 = vmatprep.subr.bf16.mxu0 %v8440
        %10381 = vmatpush2.bf16.msra.mxu0 %v8439
        %10382 = vmatprep.subr.bf16.mxu0 %v8434
        %10383 = vmatpush2.bf16.msra.mxu0 %v8433
        %10384 = vmatprep.subr.bf16.mxu0 %v8428
        %10385 = vmatpush2.bf16.msra.mxu0 %v8427
        %10386 = vmatprep.subr.bf16.mxu0 %v8422
        %10387 = vmatpush2.bf16.msra.mxu0 %v8421
        %10388 = vmatprep.subr.bf16.mxu0 %v8416
        %10389 = vmatpush2.bf16.msra.mxu0 %v8415
        %10390 = vmatprep.subr.bf16.mxu0 %v8410
        %10391 = vmatpush2.bf16.msra.mxu0 %v8409
        %10392 = vmatprep.subr.bf16.mxu0 %v8404
        %10393 = vmatpush2.bf16.msra.mxu0 %v8403
        %10394 = vmatprep.subr.bf16.mxu0 %v8398
        %10395 = vmatpush2.bf16.msra.mxu0 %v8397
        %10396 = vmatprep.mubr.bf16.mxu0 %v2867
        %10397 = vmatmul.mubr.bf16.gmra.mxu0 %v2866
        %v10398 = vpop.f32.mrf.mxu0
        %v10399 = vadd.f32 %v10358, %v10398
        %v10400 = vpop.f32.mrf.mxu0
        %v10401 = vadd.f32 %v10360, %v10400
        %v10402 = vpop.f32.mrf.mxu0
        %v10403 = vpop.f32.mrf.mxu0
        %10404 = vdwg.mxu0
        %10405 = vmatprep.subr.bf16.mxu0 %v8488
        %10406 = vmatpush1.bf16.msra.mxu0 %v8487
        %10407 = vmatprep.subr.bf16.mxu0 %v8482
        %10408 = vmatpush1.bf16.msra.mxu0 %v8481
        %10409 = vmatprep.subr.bf16.mxu0 %v8476
        %10410 = vmatpush1.bf16.msra.mxu0 %v8475
        %10411 = vmatprep.subr.bf16.mxu0 %v8470
        %10412 = vmatpush1.bf16.msra.mxu0 %v8469
        %10413 = vmatprep.subr.bf16.mxu0 %v8464
        %10414 = vmatpush1.bf16.msra.mxu0 %v8463
        %10415 = vmatprep.subr.bf16.mxu0 %v8458
        %10416 = vmatpush1.bf16.msra.mxu0 %v8457
        %10417 = vmatprep.subr.bf16.mxu0 %v8452
        %10418 = vmatpush1.bf16.msra.mxu0 %v8451
        %10419 = vmatprep.subr.bf16.mxu0 %v8446
        %10420 = vmatpush1.bf16.msra.mxu0 %v8445
        %10421 = vmatprep.subr.bf16.mxu0 %v8536
        %10422 = vmatpush2.bf16.msra.mxu0 %v8535
        %10423 = vmatprep.subr.bf16.mxu0 %v8530
        %10424 = vmatpush2.bf16.msra.mxu0 %v8529
        %10425 = vmatprep.subr.bf16.mxu0 %v8524
        %10426 = vmatpush2.bf16.msra.mxu0 %v8523
        %10427 = vmatprep.subr.bf16.mxu0 %v8518
        %10428 = vmatpush2.bf16.msra.mxu0 %v8517
        %10429 = vmatprep.subr.bf16.mxu0 %v8512
        %10430 = vmatpush2.bf16.msra.mxu0 %v8511
        %10431 = vmatprep.subr.bf16.mxu0 %v8506
        %10432 = vmatpush2.bf16.msra.mxu0 %v8505
        %10433 = vmatprep.subr.bf16.mxu0 %v8500
        %10434 = vmatpush2.bf16.msra.mxu0 %v8499
        %10435 = vmatprep.subr.bf16.mxu0 %v8494
        %10436 = vmatpush2.bf16.msra.mxu0 %v8493
        %10437 = vmatprep.mubr.bf16.mxu0 %v2869
        %10438 = vmatmul.mubr.bf16.gmra.mxu0 %v2868
        %v10439 = vpop.f32.mrf.mxu0
        %v10440 = vadd.f32 %v10399, %v10439
        %v10441 = vpop.f32.mrf.mxu0
        %v10442 = vadd.f32 %v10401, %v10441
        %v10443 = vpop.f32.mrf.mxu0
        %v10444 = vpop.f32.mrf.mxu0
        %10445 = vdwg.mxu0
        %10446 = vmatprep.subr.bf16.mxu0 %v8584
        %10447 = vmatpush1.bf16.msra.mxu0 %v8583
        %10448 = vmatprep.subr.bf16.mxu0 %v8578
        %10449 = vmatpush1.bf16.msra.mxu0 %v8577
        %10450 = vmatprep.subr.bf16.mxu0 %v8572
        %10451 = vmatpush1.bf16.msra.mxu0 %v8571
        %10452 = vmatprep.subr.bf16.mxu0 %v8566
        %10453 = vmatpush1.bf16.msra.mxu0 %v8565
        %10454 = vmatprep.subr.bf16.mxu0 %v8560
        %10455 = vmatpush1.bf16.msra.mxu0 %v8559
        %10456 = vmatprep.subr.bf16.mxu0 %v8554
        %10457 = vmatpush1.bf16.msra.mxu0 %v8553
        %10458 = vmatprep.subr.bf16.mxu0 %v8548
        %10459 = vmatpush1.bf16.msra.mxu0 %v8547
        %10460 = vmatprep.subr.bf16.mxu0 %v8542
        %10461 = vmatpush1.bf16.msra.mxu0 %v8541
        %10462 = vmatprep.subr.bf16.mxu0 %v8632
        %10463 = vmatpush2.bf16.msra.mxu0 %v8631
        %10464 = vmatprep.subr.bf16.mxu0 %v8626
        %10465 = vmatpush2.bf16.msra.mxu0 %v8625
        %10466 = vmatprep.subr.bf16.mxu0 %v8620
        %10467 = vmatpush2.bf16.msra.mxu0 %v8619
        %10468 = vmatprep.subr.bf16.mxu0 %v8614
        %10469 = vmatpush2.bf16.msra.mxu0 %v8613
        %10470 = vmatprep.subr.bf16.mxu0 %v8608
        %10471 = vmatpush2.bf16.msra.mxu0 %v8607
        %10472 = vmatprep.subr.bf16.mxu0 %v8602
        %10473 = vmatpush2.bf16.msra.mxu0 %v8601
        %10474 = vmatprep.subr.bf16.mxu0 %v8596
        %10475 = vmatpush2.bf16.msra.mxu0 %v8595
        %10476 = vmatprep.subr.bf16.mxu0 %v8590
        %10477 = vmatpush2.bf16.msra.mxu0 %v8589
        %10478 = vmatprep.mubr.bf16.mxu0 %v2871
        %10479 = vmatmul.mubr.bf16.gmra.mxu0 %v2870
        %v10480 = vpop.f32.mrf.mxu0
        %v10481 = vadd.f32 %v10440, %v10480
        %v10482 = vpop.f32.mrf.mxu0
        %v10483 = vadd.f32 %v10442, %v10482
        %v10484 = vpop.f32.mrf.mxu0
        %v10485 = vpop.f32.mrf.mxu0
        %10486 = vdwg.mxu0
        %10487 = vmatprep.subr.bf16.mxu0 %v8680
        %10488 = vmatpush1.bf16.msra.mxu0 %v8679
        %10489 = vmatprep.subr.bf16.mxu0 %v8674
        %10490 = vmatpush1.bf16.msra.mxu0 %v8673
        %10491 = vmatprep.subr.bf16.mxu0 %v8668
        %10492 = vmatpush1.bf16.msra.mxu0 %v8667
        %10493 = vmatprep.subr.bf16.mxu0 %v8662
        %10494 = vmatpush1.bf16.msra.mxu0 %v8661
        %10495 = vmatprep.subr.bf16.mxu0 %v8656
        %10496 = vmatpush1.bf16.msra.mxu0 %v8655
        %10497 = vmatprep.subr.bf16.mxu0 %v8650
        %10498 = vmatpush1.bf16.msra.mxu0 %v8649
        %10499 = vmatprep.subr.bf16.mxu0 %v8644
        %10500 = vmatpush1.bf16.msra.mxu0 %v8643
        %10501 = vmatprep.subr.bf16.mxu0 %v8638
        %10502 = vmatpush1.bf16.msra.mxu0 %v8637
        %10503 = vmatprep.subr.bf16.mxu0 %v8728
        %10504 = vmatpush2.bf16.msra.mxu0 %v8727
        %10505 = vmatprep.subr.bf16.mxu0 %v8722
        %10506 = vmatpush2.bf16.msra.mxu0 %v8721
        %10507 = vmatprep.subr.bf16.mxu0 %v8716
        %10508 = vmatpush2.bf16.msra.mxu0 %v8715
        %10509 = vmatprep.subr.bf16.mxu0 %v8710
        %10510 = vmatpush2.bf16.msra.mxu0 %v8709
        %10511 = vmatprep.subr.bf16.mxu0 %v8704
        %10512 = vmatpush2.bf16.msra.mxu0 %v8703
        %10513 = vmatprep.subr.bf16.mxu0 %v8698
        %10514 = vmatpush2.bf16.msra.mxu0 %v8697
        %10515 = vmatprep.subr.bf16.mxu0 %v8692
        %10516 = vmatpush2.bf16.msra.mxu0 %v8691
        %10517 = vmatprep.subr.bf16.mxu0 %v8686
        %10518 = vmatpush2.bf16.msra.mxu0 %v8685
        %10519 = vmatprep.mubr.bf16.mxu0 %v2873
        %10520 = vmatmul.mubr.bf16.gmra.mxu0 %v2872
        %v10521 = vpop.f32.mrf.mxu0
        %v10522 = vadd.f32 %v10481, %v10521
        %v10523 = vpop.f32.mrf.mxu0
        %v10524 = vadd.f32 %v10483, %v10523
        %v10525 = vpop.f32.mrf.mxu0
        %v10526 = vpop.f32.mrf.mxu0
        %10527 = vdwg.mxu0
        %10528 = vmatprep.subr.bf16.mxu0 %v8776
        %10529 = vmatpush1.bf16.msra.mxu0 %v8775
        %10530 = vmatprep.subr.bf16.mxu0 %v8770
        %10531 = vmatpush1.bf16.msra.mxu0 %v8769
        %10532 = vmatprep.subr.bf16.mxu0 %v8764
        %10533 = vmatpush1.bf16.msra.mxu0 %v8763
        %10534 = vmatprep.subr.bf16.mxu0 %v8758
        %10535 = vmatpush1.bf16.msra.mxu0 %v8757
        %10536 = vmatprep.subr.bf16.mxu0 %v8752
        %10537 = vmatpush1.bf16.msra.mxu0 %v8751
        %10538 = vmatprep.subr.bf16.mxu0 %v8746
        %10539 = vmatpush1.bf16.msra.mxu0 %v8745
        %10540 = vmatprep.subr.bf16.mxu0 %v8740
        %10541 = vmatpush1.bf16.msra.mxu0 %v8739
        %10542 = vmatprep.subr.bf16.mxu0 %v8734
        %10543 = vmatpush1.bf16.msra.mxu0 %v8733
        %10544 = vmatprep.subr.bf16.mxu0 %v8824
        %10545 = vmatpush2.bf16.msra.mxu0 %v8823
        %10546 = vmatprep.subr.bf16.mxu0 %v8818
        %10547 = vmatpush2.bf16.msra.mxu0 %v8817
        %10548 = vmatprep.subr.bf16.mxu0 %v8812
        %10549 = vmatpush2.bf16.msra.mxu0 %v8811
        %10550 = vmatprep.subr.bf16.mxu0 %v8806
        %10551 = vmatpush2.bf16.msra.mxu0 %v8805
        %10552 = vmatprep.subr.bf16.mxu0 %v8800
        %10553 = vmatpush2.bf16.msra.mxu0 %v8799
        %10554 = vmatprep.subr.bf16.mxu0 %v8794
        %10555 = vmatpush2.bf16.msra.mxu0 %v8793
        %10556 = vmatprep.subr.bf16.mxu0 %v8788
        %10557 = vmatpush2.bf16.msra.mxu0 %v8787
        %10558 = vmatprep.subr.bf16.mxu0 %v8782
        %10559 = vmatpush2.bf16.msra.mxu0 %v8781
        %10560 = vmatprep.mubr.bf16.mxu0 %v2875
        %10561 = vmatmul.mubr.bf16.gmra.mxu0 %v2874
        %v10562 = vpop.f32.mrf.mxu0
        %v10563 = vadd.f32 %v10522, %v10562
        %v10564 = vpop.f32.mrf.mxu0
        %v10565 = vadd.f32 %v10524, %v10564
        %v10566 = vpop.f32.mrf.mxu0
        %v10567 = vpop.f32.mrf.mxu0
        %10568 = vdwg.mxu0
        %10569 = vmatprep.subr.bf16.mxu0 %v8872
        %10570 = vmatpush1.bf16.msra.mxu0 %v8871
        %10571 = vmatprep.subr.bf16.mxu0 %v8866
        %10572 = vmatpush1.bf16.msra.mxu0 %v8865
        %10573 = vmatprep.subr.bf16.mxu0 %v8860
        %10574 = vmatpush1.bf16.msra.mxu0 %v8859
        %10575 = vmatprep.subr.bf16.mxu0 %v8854
        %10576 = vmatpush1.bf16.msra.mxu0 %v8853
        %10577 = vmatprep.subr.bf16.mxu0 %v8848
        %10578 = vmatpush1.bf16.msra.mxu0 %v8847
        %10579 = vmatprep.subr.bf16.mxu0 %v8842
        %10580 = vmatpush1.bf16.msra.mxu0 %v8841
        %10581 = vmatprep.subr.bf16.mxu0 %v8836
        %10582 = vmatpush1.bf16.msra.mxu0 %v8835
        %10583 = vmatprep.subr.bf16.mxu0 %v8830
        %10584 = vmatpush1.bf16.msra.mxu0 %v8829
        %10585 = vmatprep.subr.bf16.mxu0 0
        %10586 = vmatpush2.bf16.msra.mxu0 0
        %10587 = vmatprep.subr.bf16.mxu0 0
        %10588 = vmatpush2.bf16.msra.mxu0 0
        %10589 = vmatprep.subr.bf16.mxu0 0
        %10590 = vmatpush2.bf16.msra.mxu0 0
        %10591 = vmatprep.subr.bf16.mxu0 0
        %10592 = vmatpush2.bf16.msra.mxu0 0
        %10593 = vmatprep.subr.bf16.mxu0 0
        %10594 = vmatpush2.bf16.msra.mxu0 0
        %10595 = vmatprep.subr.bf16.mxu0 0
        %10596 = vmatpush2.bf16.msra.mxu0 0
        %10597 = vmatprep.subr.bf16.mxu0 0
        %10598 = vmatpush2.bf16.msra.mxu0 0
        %10599 = vmatprep.subr.bf16.mxu0 0
        %10600 = vmatpush2.bf16.msra.mxu0 0
        %10601 = vmatprep.mubr.bf16.mxu0 0
        %10602 = vmatmul.mubr.bf16.gmra.mxu0 %v2876
        %v10603 = vpop.f32.mrf.mxu0
        %v10604 = vadd.f32 %v10563, %v10603
        %v10605 = vpop.f32.mrf.mxu0
        %v10606 = vadd.f32 %v10565, %v10605
        %v10607 = vpop.f32.mrf.mxu0
        %v10608 = vpop.f32.mrf.mxu0
        %10609 = vdwg.mxu0
        %10610 = vmatprep.subr.bf16.mxu0 %v7722
        %10611 = vmatpush1.bf16.msra.mxu0 %v7721
        %10612 = vmatprep.subr.bf16.mxu0 %v7716
        %10613 = vmatpush1.bf16.msra.mxu0 %v7715
        %10614 = vmatprep.subr.bf16.mxu0 %v7710
        %10615 = vmatpush1.bf16.msra.mxu0 %v7709
        %10616 = vmatprep.subr.bf16.mxu0 %v7704
        %10617 = vmatpush1.bf16.msra.mxu0 %v7703
        %10618 = vmatprep.subr.bf16.mxu0 %v7698
        %10619 = vmatpush1.bf16.msra.mxu0 %v7697
        %10620 = vmatprep.subr.bf16.mxu0 %v7692
        %10621 = vmatpush1.bf16.msra.mxu0 %v7691
        %10622 = vmatprep.subr.bf16.mxu0 %v7686
        %10623 = vmatpush1.bf16.msra.mxu0 %v7685
        %10624 = vmatprep.subr.bf16.mxu0 %v7680
        %10625 = vmatpush1.bf16.msra.mxu0 %v7679
        %10626 = vmatprep.subr.bf16.mxu0 %v7770
        %10627 = vmatpush2.bf16.msra.mxu0 %v7769
        %10628 = vmatprep.subr.bf16.mxu0 %v7764
        %10629 = vmatpush2.bf16.msra.mxu0 %v7763
        %10630 = vmatprep.subr.bf16.mxu0 %v7758
        %10631 = vmatpush2.bf16.msra.mxu0 %v7757
        %10632 = vmatprep.subr.bf16.mxu0 %v7752
        %10633 = vmatpush2.bf16.msra.mxu0 %v7751
        %10634 = vmatprep.subr.bf16.mxu0 %v7746
        %10635 = vmatpush2.bf16.msra.mxu0 %v7745
        %10636 = vmatprep.subr.bf16.mxu0 %v7740
        %10637 = vmatpush2.bf16.msra.mxu0 %v7739
        %10638 = vmatprep.subr.bf16.mxu0 %v7734
        %10639 = vmatpush2.bf16.msra.mxu0 %v7733
        %10640 = vmatprep.subr.bf16.mxu0 %v7728
        %10641 = vmatpush2.bf16.msra.mxu0 %v7727
        %10642 = vmatprep.mubr.bf16.mxu0 %v2853
        %10643 = vmatmul.mubr.bf16.gmra.mxu0 %v2852
        %v10644 = vpop.f32.mrf.mxu0
        %v10645 = vadd.f32 0.0, %v10644
        %v10646 = vpop.f32.mrf.mxu0
        %v10647 = vadd.f32 0.0, %v10646
        %v10648 = vpop.f32.mrf.mxu0
        %v10649 = vpop.f32.mrf.mxu0
        %10650 = vdwg.mxu0
        %10651 = vmatprep.subr.bf16.mxu0 %v7818
        %10652 = vmatpush1.bf16.msra.mxu0 %v7817
        %10653 = vmatprep.subr.bf16.mxu0 %v7812
        %10654 = vmatpush1.bf16.msra.mxu0 %v7811
        %10655 = vmatprep.subr.bf16.mxu0 %v7806
        %10656 = vmatpush1.bf16.msra.mxu0 %v7805
        %10657 = vmatprep.subr.bf16.mxu0 %v7800
        %10658 = vmatpush1.bf16.msra.mxu0 %v7799
        %10659 = vmatprep.subr.bf16.mxu0 %v7794
        %10660 = vmatpush1.bf16.msra.mxu0 %v7793
        %10661 = vmatprep.subr.bf16.mxu0 %v7788
        %10662 = vmatpush1.bf16.msra.mxu0 %v7787
        %10663 = vmatprep.subr.bf16.mxu0 %v7782
        %10664 = vmatpush1.bf16.msra.mxu0 %v7781
        %10665 = vmatprep.subr.bf16.mxu0 %v7776
        %10666 = vmatpush1.bf16.msra.mxu0 %v7775
        %10667 = vmatprep.subr.bf16.mxu0 %v7866
        %10668 = vmatpush2.bf16.msra.mxu0 %v7865
        %10669 = vmatprep.subr.bf16.mxu0 %v7860
        %10670 = vmatpush2.bf16.msra.mxu0 %v7859
        %10671 = vmatprep.subr.bf16.mxu0 %v7854
        %10672 = vmatpush2.bf16.msra.mxu0 %v7853
        %10673 = vmatprep.subr.bf16.mxu0 %v7848
        %10674 = vmatpush2.bf16.msra.mxu0 %v7847
        %10675 = vmatprep.subr.bf16.mxu0 %v7842
        %10676 = vmatpush2.bf16.msra.mxu0 %v7841
        %10677 = vmatprep.subr.bf16.mxu0 %v7836
        %10678 = vmatpush2.bf16.msra.mxu0 %v7835
        %10679 = vmatprep.subr.bf16.mxu0 %v7830
        %10680 = vmatpush2.bf16.msra.mxu0 %v7829
        %10681 = vmatprep.subr.bf16.mxu0 %v7824
        %10682 = vmatpush2.bf16.msra.mxu0 %v7823
        %10683 = vmatprep.mubr.bf16.mxu0 %v2855
        %10684 = vmatmul.mubr.bf16.gmra.mxu0 %v2854
        %v10685 = vpop.f32.mrf.mxu0
        %v10686 = vadd.f32 %v10645, %v10685
        %v10687 = vpop.f32.mrf.mxu0
        %v10688 = vadd.f32 %v10647, %v10687
        %v10689 = vpop.f32.mrf.mxu0
        %v10690 = vpop.f32.mrf.mxu0
        %10691 = vdwg.mxu0
        %10692 = vmatprep.subr.bf16.mxu0 %v7914
        %10693 = vmatpush1.bf16.msra.mxu0 %v7913
        %10694 = vmatprep.subr.bf16.mxu0 %v7908
        %10695 = vmatpush1.bf16.msra.mxu0 %v7907
        %10696 = vmatprep.subr.bf16.mxu0 %v7902
        %10697 = vmatpush1.bf16.msra.mxu0 %v7901
        %10698 = vmatprep.subr.bf16.mxu0 %v7896
        %10699 = vmatpush1.bf16.msra.mxu0 %v7895
        %10700 = vmatprep.subr.bf16.mxu0 %v7890
        %10701 = vmatpush1.bf16.msra.mxu0 %v7889
        %10702 = vmatprep.subr.bf16.mxu0 %v7884
        %10703 = vmatpush1.bf16.msra.mxu0 %v7883
        %10704 = vmatprep.subr.bf16.mxu0 %v7878
        %10705 = vmatpush1.bf16.msra.mxu0 %v7877
        %10706 = vmatprep.subr.bf16.mxu0 %v7872
        %10707 = vmatpush1.bf16.msra.mxu0 %v7871
        %10708 = vmatprep.subr.bf16.mxu0 %v7962
        %10709 = vmatpush2.bf16.msra.mxu0 %v7961
        %10710 = vmatprep.subr.bf16.mxu0 %v7956
        %10711 = vmatpush2.bf16.msra.mxu0 %v7955
        %10712 = vmatprep.subr.bf16.mxu0 %v7950
        %10713 = vmatpush2.bf16.msra.mxu0 %v7949
        %10714 = vmatprep.subr.bf16.mxu0 %v7944
        %10715 = vmatpush2.bf16.msra.mxu0 %v7943
        %10716 = vmatprep.subr.bf16.mxu0 %v7938
        %10717 = vmatpush2.bf16.msra.mxu0 %v7937
        %10718 = vmatprep.subr.bf16.mxu0 %v7932
        %10719 = vmatpush2.bf16.msra.mxu0 %v7931
        %10720 = vmatprep.subr.bf16.mxu0 %v7926
        %10721 = vmatpush2.bf16.msra.mxu0 %v7925
        %10722 = vmatprep.subr.bf16.mxu0 %v7920
        %10723 = vmatpush2.bf16.msra.mxu0 %v7919
        %10724 = vmatprep.mubr.bf16.mxu0 %v2857
        %10725 = vmatmul.mubr.bf16.gmra.mxu0 %v2856
        %v10726 = vpop.f32.mrf.mxu0
        %v10727 = vadd.f32 %v10686, %v10726
        %v10728 = vpop.f32.mrf.mxu0
        %v10729 = vadd.f32 %v10688, %v10728
        %v10730 = vpop.f32.mrf.mxu0
        %v10731 = vpop.f32.mrf.mxu0
        %10732 = vdwg.mxu0
        %10733 = vmatprep.subr.bf16.mxu0 %v8010
        %10734 = vmatpush1.bf16.msra.mxu0 %v8009
        %10735 = vmatprep.subr.bf16.mxu0 %v8004
        %10736 = vmatpush1.bf16.msra.mxu0 %v8003
        %10737 = vmatprep.subr.bf16.mxu0 %v7998
        %10738 = vmatpush1.bf16.msra.mxu0 %v7997
        %10739 = vmatprep.subr.bf16.mxu0 %v7992
        %10740 = vmatpush1.bf16.msra.mxu0 %v7991
        %10741 = vmatprep.subr.bf16.mxu0 %v7986
        %10742 = vmatpush1.bf16.msra.mxu0 %v7985
        %10743 = vmatprep.subr.bf16.mxu0 %v7980
        %10744 = vmatpush1.bf16.msra.mxu0 %v7979
        %10745 = vmatprep.subr.bf16.mxu0 %v7974
        %10746 = vmatpush1.bf16.msra.mxu0 %v7973
        %10747 = vmatprep.subr.bf16.mxu0 %v7968
        %10748 = vmatpush1.bf16.msra.mxu0 %v7967
        %10749 = vmatprep.subr.bf16.mxu0 %v8058
        %10750 = vmatpush2.bf16.msra.mxu0 %v8057
        %10751 = vmatprep.subr.bf16.mxu0 %v8052
        %10752 = vmatpush2.bf16.msra.mxu0 %v8051
        %10753 = vmatprep.subr.bf16.mxu0 %v8046
        %10754 = vmatpush2.bf16.msra.mxu0 %v8045
        %10755 = vmatprep.subr.bf16.mxu0 %v8040
        %10756 = vmatpush2.bf16.msra.mxu0 %v8039
        %10757 = vmatprep.subr.bf16.mxu0 %v8034
        %10758 = vmatpush2.bf16.msra.mxu0 %v8033
        %10759 = vmatprep.subr.bf16.mxu0 %v8028
        %10760 = vmatpush2.bf16.msra.mxu0 %v8027
        %10761 = vmatprep.subr.bf16.mxu0 %v8022
        %10762 = vmatpush2.bf16.msra.mxu0 %v8021
        %10763 = vmatprep.subr.bf16.mxu0 %v8016
        %10764 = vmatpush2.bf16.msra.mxu0 %v8015
        %10765 = vmatprep.mubr.bf16.mxu0 %v2859
        %10766 = vmatmul.mubr.bf16.gmra.mxu0 %v2858
        %v10767 = vpop.f32.mrf.mxu0
        %v10768 = vadd.f32 %v10727, %v10767
        %v10769 = vpop.f32.mrf.mxu0
        %v10770 = vadd.f32 %v10729, %v10769
        %v10771 = vpop.f32.mrf.mxu0
        %v10772 = vpop.f32.mrf.mxu0
        %10773 = vdwg.mxu0
        %10774 = vmatprep.subr.bf16.mxu0 %v8106
        %10775 = vmatpush1.bf16.msra.mxu0 %v8105
        %10776 = vmatprep.subr.bf16.mxu0 %v8100
        %10777 = vmatpush1.bf16.msra.mxu0 %v8099
        %10778 = vmatprep.subr.bf16.mxu0 %v8094
        %10779 = vmatpush1.bf16.msra.mxu0 %v8093
        %10780 = vmatprep.subr.bf16.mxu0 %v8088
        %10781 = vmatpush1.bf16.msra.mxu0 %v8087
        %10782 = vmatprep.subr.bf16.mxu0 %v8082
        %10783 = vmatpush1.bf16.msra.mxu0 %v8081
        %10784 = vmatprep.subr.bf16.mxu0 %v8076
        %10785 = vmatpush1.bf16.msra.mxu0 %v8075
        %10786 = vmatprep.subr.bf16.mxu0 %v8070
        %10787 = vmatpush1.bf16.msra.mxu0 %v8069
        %10788 = vmatprep.subr.bf16.mxu0 %v8064
        %10789 = vmatpush1.bf16.msra.mxu0 %v8063
        %10790 = vmatprep.subr.bf16.mxu0 %v8154
        %10791 = vmatpush2.bf16.msra.mxu0 %v8153
        %10792 = vmatprep.subr.bf16.mxu0 %v8148
        %10793 = vmatpush2.bf16.msra.mxu0 %v8147
        %10794 = vmatprep.subr.bf16.mxu0 %v8142
        %10795 = vmatpush2.bf16.msra.mxu0 %v8141
        %10796 = vmatprep.subr.bf16.mxu0 %v8136
        %10797 = vmatpush2.bf16.msra.mxu0 %v8135
        %10798 = vmatprep.subr.bf16.mxu0 %v8130
        %10799 = vmatpush2.bf16.msra.mxu0 %v8129
        %10800 = vmatprep.subr.bf16.mxu0 %v8124
        %10801 = vmatpush2.bf16.msra.mxu0 %v8123
        %10802 = vmatprep.subr.bf16.mxu0 %v8118
        %10803 = vmatpush2.bf16.msra.mxu0 %v8117
        %10804 = vmatprep.subr.bf16.mxu0 %v8112
        %10805 = vmatpush2.bf16.msra.mxu0 %v8111
        %10806 = vmatprep.mubr.bf16.mxu0 %v2861
        %10807 = vmatmul.mubr.bf16.gmra.mxu0 %v2860
        %v10808 = vpop.f32.mrf.mxu0
        %v10809 = vadd.f32 %v10768, %v10808
        %v10810 = vpop.f32.mrf.mxu0
        %v10811 = vadd.f32 %v10770, %v10810
        %v10812 = vpop.f32.mrf.mxu0
        %v10813 = vpop.f32.mrf.mxu0
        %10814 = vdwg.mxu0
        %10815 = vmatprep.subr.bf16.mxu0 %v8202
        %10816 = vmatpush1.bf16.msra.mxu0 %v8201
        %10817 = vmatprep.subr.bf16.mxu0 %v8196
        %10818 = vmatpush1.bf16.msra.mxu0 %v8195
        %10819 = vmatprep.subr.bf16.mxu0 %v8190
        %10820 = vmatpush1.bf16.msra.mxu0 %v8189
        %10821 = vmatprep.subr.bf16.mxu0 %v8184
        %10822 = vmatpush1.bf16.msra.mxu0 %v8183
        %10823 = vmatprep.subr.bf16.mxu0 %v8178
        %10824 = vmatpush1.bf16.msra.mxu0 %v8177
        %10825 = vmatprep.subr.bf16.mxu0 %v8172
        %10826 = vmatpush1.bf16.msra.mxu0 %v8171
        %10827 = vmatprep.subr.bf16.mxu0 %v8166
        %10828 = vmatpush1.bf16.msra.mxu0 %v8165
        %10829 = vmatprep.subr.bf16.mxu0 %v8160
        %10830 = vmatpush1.bf16.msra.mxu0 %v8159
        %10831 = vmatprep.subr.bf16.mxu0 %v8250
        %10832 = vmatpush2.bf16.msra.mxu0 %v8249
        %10833 = vmatprep.subr.bf16.mxu0 %v8244
        %10834 = vmatpush2.bf16.msra.mxu0 %v8243
        %10835 = vmatprep.subr.bf16.mxu0 %v8238
        %10836 = vmatpush2.bf16.msra.mxu0 %v8237
        %10837 = vmatprep.subr.bf16.mxu0 %v8232
        %10838 = vmatpush2.bf16.msra.mxu0 %v8231
        %10839 = vmatprep.subr.bf16.mxu0 %v8226
        %10840 = vmatpush2.bf16.msra.mxu0 %v8225
        %10841 = vmatprep.subr.bf16.mxu0 %v8220
        %10842 = vmatpush2.bf16.msra.mxu0 %v8219
        %10843 = vmatprep.subr.bf16.mxu0 %v8214
        %10844 = vmatpush2.bf16.msra.mxu0 %v8213
        %10845 = vmatprep.subr.bf16.mxu0 %v8208
        %10846 = vmatpush2.bf16.msra.mxu0 %v8207
        %10847 = vmatprep.mubr.bf16.mxu0 %v2863
        %10848 = vmatmul.mubr.bf16.gmra.mxu0 %v2862
        %v10849 = vpop.f32.mrf.mxu0
        %v10850 = vadd.f32 %v10809, %v10849
        %v10851 = vpop.f32.mrf.mxu0
        %v10852 = vadd.f32 %v10811, %v10851
        %v10853 = vpop.f32.mrf.mxu0
        %v10854 = vpop.f32.mrf.mxu0
        %10855 = vdwg.mxu0
        %10856 = vmatprep.subr.bf16.mxu0 %v8298
        %10857 = vmatpush1.bf16.msra.mxu0 %v8297
        %10858 = vmatprep.subr.bf16.mxu0 %v8292
        %10859 = vmatpush1.bf16.msra.mxu0 %v8291
        %10860 = vmatprep.subr.bf16.mxu0 %v8286
        %10861 = vmatpush1.bf16.msra.mxu0 %v8285
        %10862 = vmatprep.subr.bf16.mxu0 %v8280
        %10863 = vmatpush1.bf16.msra.mxu0 %v8279
        %10864 = vmatprep.subr.bf16.mxu0 %v8274
        %10865 = vmatpush1.bf16.msra.mxu0 %v8273
        %10866 = vmatprep.subr.bf16.mxu0 %v8268
        %10867 = vmatpush1.bf16.msra.mxu0 %v8267
        %10868 = vmatprep.subr.bf16.mxu0 %v8262
        %10869 = vmatpush1.bf16.msra.mxu0 %v8261
        %10870 = vmatprep.subr.bf16.mxu0 %v8256
        %10871 = vmatpush1.bf16.msra.mxu0 %v8255
        %10872 = vmatprep.subr.bf16.mxu0 %v8346
        %10873 = vmatpush2.bf16.msra.mxu0 %v8345
        %10874 = vmatprep.subr.bf16.mxu0 %v8340
        %10875 = vmatpush2.bf16.msra.mxu0 %v8339
        %10876 = vmatprep.subr.bf16.mxu0 %v8334
        %10877 = vmatpush2.bf16.msra.mxu0 %v8333
        %10878 = vmatprep.subr.bf16.mxu0 %v8328
        %10879 = vmatpush2.bf16.msra.mxu0 %v8327
        %10880 = vmatprep.subr.bf16.mxu0 %v8322
        %10881 = vmatpush2.bf16.msra.mxu0 %v8321
        %10882 = vmatprep.subr.bf16.mxu0 %v8316
        %10883 = vmatpush2.bf16.msra.mxu0 %v8315
        %10884 = vmatprep.subr.bf16.mxu0 %v8310
        %10885 = vmatpush2.bf16.msra.mxu0 %v8309
        %10886 = vmatprep.subr.bf16.mxu0 %v8304
        %10887 = vmatpush2.bf16.msra.mxu0 %v8303
        %10888 = vmatprep.mubr.bf16.mxu0 %v2865
        %10889 = vmatmul.mubr.bf16.gmra.mxu0 %v2864
        %v10890 = vpop.f32.mrf.mxu0
        %v10891 = vadd.f32 %v10850, %v10890
        %v10892 = vpop.f32.mrf.mxu0
        %v10893 = vadd.f32 %v10852, %v10892
        %v10894 = vpop.f32.mrf.mxu0
        %v10895 = vpop.f32.mrf.mxu0
        %10896 = vdwg.mxu0
        %10897 = vmatprep.subr.bf16.mxu0 %v8394
        %10898 = vmatpush1.bf16.msra.mxu0 %v8393
        %10899 = vmatprep.subr.bf16.mxu0 %v8388
        %10900 = vmatpush1.bf16.msra.mxu0 %v8387
        %10901 = vmatprep.subr.bf16.mxu0 %v8382
        %10902 = vmatpush1.bf16.msra.mxu0 %v8381
        %10903 = vmatprep.subr.bf16.mxu0 %v8376
        %10904 = vmatpush1.bf16.msra.mxu0 %v8375
        %10905 = vmatprep.subr.bf16.mxu0 %v8370
        %10906 = vmatpush1.bf16.msra.mxu0 %v8369
        %10907 = vmatprep.subr.bf16.mxu0 %v8364
        %10908 = vmatpush1.bf16.msra.mxu0 %v8363
        %10909 = vmatprep.subr.bf16.mxu0 %v8358
        %10910 = vmatpush1.bf16.msra.mxu0 %v8357
        %10911 = vmatprep.subr.bf16.mxu0 %v8352
        %10912 = vmatpush1.bf16.msra.mxu0 %v8351
        %10913 = vmatprep.subr.bf16.mxu0 %v8442
        %10914 = vmatpush2.bf16.msra.mxu0 %v8441
        %10915 = vmatprep.subr.bf16.mxu0 %v8436
        %10916 = vmatpush2.bf16.msra.mxu0 %v8435
        %10917 = vmatprep.subr.bf16.mxu0 %v8430
        %10918 = vmatpush2.bf16.msra.mxu0 %v8429
        %10919 = vmatprep.subr.bf16.mxu0 %v8424
        %10920 = vmatpush2.bf16.msra.mxu0 %v8423
        %10921 = vmatprep.subr.bf16.mxu0 %v8418
        %10922 = vmatpush2.bf16.msra.mxu0 %v8417
        %10923 = vmatprep.subr.bf16.mxu0 %v8412
        %10924 = vmatpush2.bf16.msra.mxu0 %v8411
        %10925 = vmatprep.subr.bf16.mxu0 %v8406
        %10926 = vmatpush2.bf16.msra.mxu0 %v8405
        %10927 = vmatprep.subr.bf16.mxu0 %v8400
        %10928 = vmatpush2.bf16.msra.mxu0 %v8399
        %10929 = vmatprep.mubr.bf16.mxu0 %v2867
        %10930 = vmatmul.mubr.bf16.gmra.mxu0 %v2866
        %v10931 = vpop.f32.mrf.mxu0
        %v10932 = vadd.f32 %v10891, %v10931
        %v10933 = vpop.f32.mrf.mxu0
        %v10934 = vadd.f32 %v10893, %v10933
        %v10935 = vpop.f32.mrf.mxu0
        %v10936 = vpop.f32.mrf.mxu0
        %10937 = vdwg.mxu0
        %10938 = vmatprep.subr.bf16.mxu0 %v8490
        %10939 = vmatpush1.bf16.msra.mxu0 %v8489
        %10940 = vmatprep.subr.bf16.mxu0 %v8484
        %10941 = vmatpush1.bf16.msra.mxu0 %v8483
        %10942 = vmatprep.subr.bf16.mxu0 %v8478
        %10943 = vmatpush1.bf16.msra.mxu0 %v8477
        %10944 = vmatprep.subr.bf16.mxu0 %v8472
        %10945 = vmatpush1.bf16.msra.mxu0 %v8471
        %10946 = vmatprep.subr.bf16.mxu0 %v8466
        %10947 = vmatpush1.bf16.msra.mxu0 %v8465
        %10948 = vmatprep.subr.bf16.mxu0 %v8460
        %10949 = vmatpush1.bf16.msra.mxu0 %v8459
        %10950 = vmatprep.subr.bf16.mxu0 %v8454
        %10951 = vmatpush1.bf16.msra.mxu0 %v8453
        %10952 = vmatprep.subr.bf16.mxu0 %v8448
        %10953 = vmatpush1.bf16.msra.mxu0 %v8447
        %10954 = vmatprep.subr.bf16.mxu0 %v8538
        %10955 = vmatpush2.bf16.msra.mxu0 %v8537
        %10956 = vmatprep.subr.bf16.mxu0 %v8532
        %10957 = vmatpush2.bf16.msra.mxu0 %v8531
        %10958 = vmatprep.subr.bf16.mxu0 %v8526
        %10959 = vmatpush2.bf16.msra.mxu0 %v8525
        %10960 = vmatprep.subr.bf16.mxu0 %v8520
        %10961 = vmatpush2.bf16.msra.mxu0 %v8519
        %10962 = vmatprep.subr.bf16.mxu0 %v8514
        %10963 = vmatpush2.bf16.msra.mxu0 %v8513
        %10964 = vmatprep.subr.bf16.mxu0 %v8508
        %10965 = vmatpush2.bf16.msra.mxu0 %v8507
        %10966 = vmatprep.subr.bf16.mxu0 %v8502
        %10967 = vmatpush2.bf16.msra.mxu0 %v8501
        %10968 = vmatprep.subr.bf16.mxu0 %v8496
        %10969 = vmatpush2.bf16.msra.mxu0 %v8495
        %10970 = vmatprep.mubr.bf16.mxu0 %v2869
        %10971 = vmatmul.mubr.bf16.gmra.mxu0 %v2868
        %v10972 = vpop.f32.mrf.mxu0
        %v10973 = vadd.f32 %v10932, %v10972
        %v10974 = vpop.f32.mrf.mxu0
        %v10975 = vadd.f32 %v10934, %v10974
        %v10976 = vpop.f32.mrf.mxu0
        %v10977 = vpop.f32.mrf.mxu0
        %10978 = vdwg.mxu0
        %10979 = vmatprep.subr.bf16.mxu0 %v8586
        %10980 = vmatpush1.bf16.msra.mxu0 %v8585
        %10981 = vmatprep.subr.bf16.mxu0 %v8580
        %10982 = vmatpush1.bf16.msra.mxu0 %v8579
        %10983 = vmatprep.subr.bf16.mxu0 %v8574
        %10984 = vmatpush1.bf16.msra.mxu0 %v8573
        %10985 = vmatprep.subr.bf16.mxu0 %v8568
        %10986 = vmatpush1.bf16.msra.mxu0 %v8567
        %10987 = vmatprep.subr.bf16.mxu0 %v8562
        %10988 = vmatpush1.bf16.msra.mxu0 %v8561
        %10989 = vmatprep.subr.bf16.mxu0 %v8556
        %10990 = vmatpush1.bf16.msra.mxu0 %v8555
        %10991 = vmatprep.subr.bf16.mxu0 %v8550
        %10992 = vmatpush1.bf16.msra.mxu0 %v8549
        %10993 = vmatprep.subr.bf16.mxu0 %v8544
        %10994 = vmatpush1.bf16.msra.mxu0 %v8543
        %10995 = vmatprep.subr.bf16.mxu0 %v8634
        %10996 = vmatpush2.bf16.msra.mxu0 %v8633
        %10997 = vmatprep.subr.bf16.mxu0 %v8628
        %10998 = vmatpush2.bf16.msra.mxu0 %v8627
        %10999 = vmatprep.subr.bf16.mxu0 %v8622
        %11000 = vmatpush2.bf16.msra.mxu0 %v8621
        %11001 = vmatprep.subr.bf16.mxu0 %v8616
        %11002 = vmatpush2.bf16.msra.mxu0 %v8615
        %11003 = vmatprep.subr.bf16.mxu0 %v8610
        %11004 = vmatpush2.bf16.msra.mxu0 %v8609
        %11005 = vmatprep.subr.bf16.mxu0 %v8604
        %11006 = vmatpush2.bf16.msra.mxu0 %v8603
        %11007 = vmatprep.subr.bf16.mxu0 %v8598
        %11008 = vmatpush2.bf16.msra.mxu0 %v8597
        %11009 = vmatprep.subr.bf16.mxu0 %v8592
        %11010 = vmatpush2.bf16.msra.mxu0 %v8591
        %11011 = vmatprep.mubr.bf16.mxu0 %v2871
        %11012 = vmatmul.mubr.bf16.gmra.mxu0 %v2870
        %v11013 = vpop.f32.mrf.mxu0
        %v11014 = vadd.f32 %v10973, %v11013
        %v11015 = vpop.f32.mrf.mxu0
        %v11016 = vadd.f32 %v10975, %v11015
        %v11017 = vpop.f32.mrf.mxu0
        %v11018 = vpop.f32.mrf.mxu0
        %11019 = vdwg.mxu0
        %11020 = vmatprep.subr.bf16.mxu0 %v8682
        %11021 = vmatpush1.bf16.msra.mxu0 %v8681
        %11022 = vmatprep.subr.bf16.mxu0 %v8676
        %11023 = vmatpush1.bf16.msra.mxu0 %v8675
        %11024 = vmatprep.subr.bf16.mxu0 %v8670
        %11025 = vmatpush1.bf16.msra.mxu0 %v8669
        %11026 = vmatprep.subr.bf16.mxu0 %v8664
        %11027 = vmatpush1.bf16.msra.mxu0 %v8663
        %11028 = vmatprep.subr.bf16.mxu0 %v8658
        %11029 = vmatpush1.bf16.msra.mxu0 %v8657
        %11030 = vmatprep.subr.bf16.mxu0 %v8652
        %11031 = vmatpush1.bf16.msra.mxu0 %v8651
        %11032 = vmatprep.subr.bf16.mxu0 %v8646
        %11033 = vmatpush1.bf16.msra.mxu0 %v8645
        %11034 = vmatprep.subr.bf16.mxu0 %v8640
        %11035 = vmatpush1.bf16.msra.mxu0 %v8639
        %11036 = vmatprep.subr.bf16.mxu0 %v8730
        %11037 = vmatpush2.bf16.msra.mxu0 %v8729
        %11038 = vmatprep.subr.bf16.mxu0 %v8724
        %11039 = vmatpush2.bf16.msra.mxu0 %v8723
        %11040 = vmatprep.subr.bf16.mxu0 %v8718
        %11041 = vmatpush2.bf16.msra.mxu0 %v8717
        %11042 = vmatprep.subr.bf16.mxu0 %v8712
        %11043 = vmatpush2.bf16.msra.mxu0 %v8711
        %11044 = vmatprep.subr.bf16.mxu0 %v8706
        %11045 = vmatpush2.bf16.msra.mxu0 %v8705
        %11046 = vmatprep.subr.bf16.mxu0 %v8700
        %11047 = vmatpush2.bf16.msra.mxu0 %v8699
        %11048 = vmatprep.subr.bf16.mxu0 %v8694
        %11049 = vmatpush2.bf16.msra.mxu0 %v8693
        %11050 = vmatprep.subr.bf16.mxu0 %v8688
        %11051 = vmatpush2.bf16.msra.mxu0 %v8687
        %11052 = vmatprep.mubr.bf16.mxu0 %v2873
        %11053 = vmatmul.mubr.bf16.gmra.mxu0 %v2872
        %v11054 = vpop.f32.mrf.mxu0
        %v11055 = vadd.f32 %v11014, %v11054
        %v11056 = vpop.f32.mrf.mxu0
        %v11057 = vadd.f32 %v11016, %v11056
        %v11058 = vpop.f32.mrf.mxu0
        %v11059 = vpop.f32.mrf.mxu0
        %11060 = vdwg.mxu0
        %11061 = vmatprep.subr.bf16.mxu0 %v8778
        %11062 = vmatpush1.bf16.msra.mxu0 %v8777
        %11063 = vmatprep.subr.bf16.mxu0 %v8772
        %11064 = vmatpush1.bf16.msra.mxu0 %v8771
        %11065 = vmatprep.subr.bf16.mxu0 %v8766
        %11066 = vmatpush1.bf16.msra.mxu0 %v8765
        %11067 = vmatprep.subr.bf16.mxu0 %v8760
        %11068 = vmatpush1.bf16.msra.mxu0 %v8759
        %11069 = vmatprep.subr.bf16.mxu0 %v8754
        %11070 = vmatpush1.bf16.msra.mxu0 %v8753
        %11071 = vmatprep.subr.bf16.mxu0 %v8748
        %11072 = vmatpush1.bf16.msra.mxu0 %v8747
        %11073 = vmatprep.subr.bf16.mxu0 %v8742
        %11074 = vmatpush1.bf16.msra.mxu0 %v8741
        %11075 = vmatprep.subr.bf16.mxu0 %v8736
        %11076 = vmatpush1.bf16.msra.mxu0 %v8735
        %11077 = vmatprep.subr.bf16.mxu0 %v8826
        %11078 = vmatpush2.bf16.msra.mxu0 %v8825
        %11079 = vmatprep.subr.bf16.mxu0 %v8820
        %11080 = vmatpush2.bf16.msra.mxu0 %v8819
        %11081 = vmatprep.subr.bf16.mxu0 %v8814
        %11082 = vmatpush2.bf16.msra.mxu0 %v8813
        %11083 = vmatprep.subr.bf16.mxu0 %v8808
        %11084 = vmatpush2.bf16.msra.mxu0 %v8807
        %11085 = vmatprep.subr.bf16.mxu0 %v8802
        %11086 = vmatpush2.bf16.msra.mxu0 %v8801
        %11087 = vmatprep.subr.bf16.mxu0 %v8796
        %11088 = vmatpush2.bf16.msra.mxu0 %v8795
        %11089 = vmatprep.subr.bf16.mxu0 %v8790
        %11090 = vmatpush2.bf16.msra.mxu0 %v8789
        %11091 = vmatprep.subr.bf16.mxu0 %v8784
        %11092 = vmatpush2.bf16.msra.mxu0 %v8783
        %11093 = vmatprep.mubr.bf16.mxu0 %v2875
        %11094 = vmatmul.mubr.bf16.gmra.mxu0 %v2874
        %v11095 = vpop.f32.mrf.mxu0
        %v11096 = vadd.f32 %v11055, %v11095
        %v11097 = vpop.f32.mrf.mxu0
        %v11098 = vadd.f32 %v11057, %v11097
        %v11099 = vpop.f32.mrf.mxu0
        %v11100 = vpop.f32.mrf.mxu0
        %11101 = vdwg.mxu0
        %11102 = vmatprep.subr.bf16.mxu0 %v8874
        %11103 = vmatpush1.bf16.msra.mxu0 %v8873
        %11104 = vmatprep.subr.bf16.mxu0 %v8868
        %11105 = vmatpush1.bf16.msra.mxu0 %v8867
        %11106 = vmatprep.subr.bf16.mxu0 %v8862
        %11107 = vmatpush1.bf16.msra.mxu0 %v8861
        %11108 = vmatprep.subr.bf16.mxu0 %v8856
        %11109 = vmatpush1.bf16.msra.mxu0 %v8855
        %11110 = vmatprep.subr.bf16.mxu0 %v8850
        %11111 = vmatpush1.bf16.msra.mxu0 %v8849
        %11112 = vmatprep.subr.bf16.mxu0 %v8844
        %11113 = vmatpush1.bf16.msra.mxu0 %v8843
        %11114 = vmatprep.subr.bf16.mxu0 %v8838
        %11115 = vmatpush1.bf16.msra.mxu0 %v8837
        %11116 = vmatprep.subr.bf16.mxu0 %v8832
        %11117 = vmatpush1.bf16.msra.mxu0 %v8831
        %11118 = vmatprep.subr.bf16.mxu0 0
        %11119 = vmatpush2.bf16.msra.mxu0 0
        %11120 = vmatprep.subr.bf16.mxu0 0
        %11121 = vmatpush2.bf16.msra.mxu0 0
        %11122 = vmatprep.subr.bf16.mxu0 0
        %11123 = vmatpush2.bf16.msra.mxu0 0
        %11124 = vmatprep.subr.bf16.mxu0 0
        %11125 = vmatpush2.bf16.msra.mxu0 0
        %11126 = vmatprep.subr.bf16.mxu0 0
        %11127 = vmatpush2.bf16.msra.mxu0 0
        %11128 = vmatprep.subr.bf16.mxu0 0
        %11129 = vmatpush2.bf16.msra.mxu0 0
        %11130 = vmatprep.subr.bf16.mxu0 0
        %11131 = vmatpush2.bf16.msra.mxu0 0
        %11132 = vmatprep.subr.bf16.mxu0 0
        %11133 = vmatpush2.bf16.msra.mxu0 0
        %11134 = vmatprep.mubr.bf16.mxu0 0
        %11135 = vmatmul.mubr.bf16.gmra.mxu0 %v2876
        %v11136 = vpop.f32.mrf.mxu0
        %v11137 = vadd.f32 %v11096, %v11136
        %v11138 = vpop.f32.mrf.mxu0
        %v11139 = vadd.f32 %v11098, %v11138
        %v11140 = vpop.f32.mrf.mxu0
        %v11141 = vpop.f32.mrf.mxu0
        %11142 = vdwg.mxu0
        %11143 = vmatprep.subr.bf16.mxu0 %v7724
        %11144 = vmatpush1.bf16.msra.mxu0 %v7723
        %11145 = vmatprep.subr.bf16.mxu0 %v7718
        %11146 = vmatpush1.bf16.msra.mxu0 %v7717
        %11147 = vmatprep.subr.bf16.mxu0 %v7712
        %11148 = vmatpush1.bf16.msra.mxu0 %v7711
        %11149 = vmatprep.subr.bf16.mxu0 %v7706
        %11150 = vmatpush1.bf16.msra.mxu0 %v7705
        %11151 = vmatprep.subr.bf16.mxu0 %v7700
        %11152 = vmatpush1.bf16.msra.mxu0 %v7699
        %11153 = vmatprep.subr.bf16.mxu0 %v7694
        %11154 = vmatpush1.bf16.msra.mxu0 %v7693
        %11155 = vmatprep.subr.bf16.mxu0 %v7688
        %11156 = vmatpush1.bf16.msra.mxu0 %v7687
        %11157 = vmatprep.subr.bf16.mxu0 %v7682
        %11158 = vmatpush1.bf16.msra.mxu0 %v7681
        %11159 = vmatprep.subr.bf16.mxu0 %v7772
        %11160 = vmatpush2.bf16.msra.mxu0 %v7771
        %11161 = vmatprep.subr.bf16.mxu0 %v7766
        %11162 = vmatpush2.bf16.msra.mxu0 %v7765
        %11163 = vmatprep.subr.bf16.mxu0 %v7760
        %11164 = vmatpush2.bf16.msra.mxu0 %v7759
        %11165 = vmatprep.subr.bf16.mxu0 %v7754
        %11166 = vmatpush2.bf16.msra.mxu0 %v7753
        %11167 = vmatprep.subr.bf16.mxu0 %v7748
        %11168 = vmatpush2.bf16.msra.mxu0 %v7747
        %11169 = vmatprep.subr.bf16.mxu0 %v7742
        %11170 = vmatpush2.bf16.msra.mxu0 %v7741
        %11171 = vmatprep.subr.bf16.mxu0 %v7736
        %11172 = vmatpush2.bf16.msra.mxu0 %v7735
        %11173 = vmatprep.subr.bf16.mxu0 %v7730
        %11174 = vmatpush2.bf16.msra.mxu0 %v7729
        %11175 = vmatprep.mubr.bf16.mxu0 %v2853
        %11176 = vmatmul.mubr.bf16.gmra.mxu0 %v2852
        %v11177 = vpop.f32.mrf.mxu0
        %v11178 = vadd.f32 0.0, %v11177
        %v11179 = vpop.f32.mrf.mxu0
        %v11180 = vadd.f32 0.0, %v11179
        %v11181 = vpop.f32.mrf.mxu0
        %v11182 = vpop.f32.mrf.mxu0
        %11183 = vdwg.mxu0
        %11184 = vmatprep.subr.bf16.mxu0 %v7820
        %11185 = vmatpush1.bf16.msra.mxu0 %v7819
        %11186 = vmatprep.subr.bf16.mxu0 %v7814
        %11187 = vmatpush1.bf16.msra.mxu0 %v7813
        %11188 = vmatprep.subr.bf16.mxu0 %v7808
        %11189 = vmatpush1.bf16.msra.mxu0 %v7807
        %11190 = vmatprep.subr.bf16.mxu0 %v7802
        %11191 = vmatpush1.bf16.msra.mxu0 %v7801
        %11192 = vmatprep.subr.bf16.mxu0 %v7796
        %11193 = vmatpush1.bf16.msra.mxu0 %v7795
        %11194 = vmatprep.subr.bf16.mxu0 %v7790
        %11195 = vmatpush1.bf16.msra.mxu0 %v7789
        %11196 = vmatprep.subr.bf16.mxu0 %v7784
        %11197 = vmatpush1.bf16.msra.mxu0 %v7783
        %11198 = vmatprep.subr.bf16.mxu0 %v7778
        %11199 = vmatpush1.bf16.msra.mxu0 %v7777
        %11200 = vmatprep.subr.bf16.mxu0 %v7868
        %11201 = vmatpush2.bf16.msra.mxu0 %v7867
        %11202 = vmatprep.subr.bf16.mxu0 %v7862
        %11203 = vmatpush2.bf16.msra.mxu0 %v7861
        %11204 = vmatprep.subr.bf16.mxu0 %v7856
        %11205 = vmatpush2.bf16.msra.mxu0 %v7855
        %11206 = vmatprep.subr.bf16.mxu0 %v7850
        %11207 = vmatpush2.bf16.msra.mxu0 %v7849
        %11208 = vmatprep.subr.bf16.mxu0 %v7844
        %11209 = vmatpush2.bf16.msra.mxu0 %v7843
        %11210 = vmatprep.subr.bf16.mxu0 %v7838
        %11211 = vmatpush2.bf16.msra.mxu0 %v7837
        %11212 = vmatprep.subr.bf16.mxu0 %v7832
        %11213 = vmatpush2.bf16.msra.mxu0 %v7831
        %11214 = vmatprep.subr.bf16.mxu0 %v7826
        %11215 = vmatpush2.bf16.msra.mxu0 %v7825
        %11216 = vmatprep.mubr.bf16.mxu0 %v2855
        %11217 = vmatmul.mubr.bf16.gmra.mxu0 %v2854
        %v11218 = vpop.f32.mrf.mxu0
        %v11219 = vadd.f32 %v11178, %v11218
        %v11220 = vpop.f32.mrf.mxu0
        %v11221 = vadd.f32 %v11180, %v11220
        %v11222 = vpop.f32.mrf.mxu0
        %v11223 = vpop.f32.mrf.mxu0
        %11224 = vdwg.mxu0
        %11225 = vmatprep.subr.bf16.mxu0 %v7916
        %11226 = vmatpush1.bf16.msra.mxu0 %v7915
        %11227 = vmatprep.subr.bf16.mxu0 %v7910
        %11228 = vmatpush1.bf16.msra.mxu0 %v7909
        %11229 = vmatprep.subr.bf16.mxu0 %v7904
        %11230 = vmatpush1.bf16.msra.mxu0 %v7903
        %11231 = vmatprep.subr.bf16.mxu0 %v7898
        %11232 = vmatpush1.bf16.msra.mxu0 %v7897
        %11233 = vmatprep.subr.bf16.mxu0 %v7892
        %11234 = vmatpush1.bf16.msra.mxu0 %v7891
        %11235 = vmatprep.subr.bf16.mxu0 %v7886
        %11236 = vmatpush1.bf16.msra.mxu0 %v7885
        %11237 = vmatprep.subr.bf16.mxu0 %v7880
        %11238 = vmatpush1.bf16.msra.mxu0 %v7879
        %11239 = vmatprep.subr.bf16.mxu0 %v7874
        %11240 = vmatpush1.bf16.msra.mxu0 %v7873
        %11241 = vmatprep.subr.bf16.mxu0 %v7964
        %11242 = vmatpush2.bf16.msra.mxu0 %v7963
        %11243 = vmatprep.subr.bf16.mxu0 %v7958
        %11244 = vmatpush2.bf16.msra.mxu0 %v7957
        %11245 = vmatprep.subr.bf16.mxu0 %v7952
        %11246 = vmatpush2.bf16.msra.mxu0 %v7951
        %11247 = vmatprep.subr.bf16.mxu0 %v7946
        %11248 = vmatpush2.bf16.msra.mxu0 %v7945
        %11249 = vmatprep.subr.bf16.mxu0 %v7940
        %11250 = vmatpush2.bf16.msra.mxu0 %v7939
        %11251 = vmatprep.subr.bf16.mxu0 %v7934
        %11252 = vmatpush2.bf16.msra.mxu0 %v7933
        %11253 = vmatprep.subr.bf16.mxu0 %v7928
        %11254 = vmatpush2.bf16.msra.mxu0 %v7927
        %11255 = vmatprep.subr.bf16.mxu0 %v7922
        %11256 = vmatpush2.bf16.msra.mxu0 %v7921
        %11257 = vmatprep.mubr.bf16.mxu0 %v2857
        %11258 = vmatmul.mubr.bf16.gmra.mxu0 %v2856
        %v11259 = vpop.f32.mrf.mxu0
        %v11260 = vadd.f32 %v11219, %v11259
        %v11261 = vpop.f32.mrf.mxu0
        %v11262 = vadd.f32 %v11221, %v11261
        %v11263 = vpop.f32.mrf.mxu0
        %v11264 = vpop.f32.mrf.mxu0
        %11265 = vdwg.mxu0
        %11266 = vmatprep.subr.bf16.mxu0 %v8012
        %11267 = vmatpush1.bf16.msra.mxu0 %v8011
        %11268 = vmatprep.subr.bf16.mxu0 %v8006
        %11269 = vmatpush1.bf16.msra.mxu0 %v8005
        %11270 = vmatprep.subr.bf16.mxu0 %v8000
        %11271 = vmatpush1.bf16.msra.mxu0 %v7999
        %11272 = vmatprep.subr.bf16.mxu0 %v7994
        %11273 = vmatpush1.bf16.msra.mxu0 %v7993
        %11274 = vmatprep.subr.bf16.mxu0 %v7988
        %11275 = vmatpush1.bf16.msra.mxu0 %v7987
        %11276 = vmatprep.subr.bf16.mxu0 %v7982
        %11277 = vmatpush1.bf16.msra.mxu0 %v7981
        %11278 = vmatprep.subr.bf16.mxu0 %v7976
        %11279 = vmatpush1.bf16.msra.mxu0 %v7975
        %11280 = vmatprep.subr.bf16.mxu0 %v7970
        %11281 = vmatpush1.bf16.msra.mxu0 %v7969
        %11282 = vmatprep.subr.bf16.mxu0 %v8060
        %11283 = vmatpush2.bf16.msra.mxu0 %v8059
        %11284 = vmatprep.subr.bf16.mxu0 %v8054
        %11285 = vmatpush2.bf16.msra.mxu0 %v8053
        %11286 = vmatprep.subr.bf16.mxu0 %v8048
        %11287 = vmatpush2.bf16.msra.mxu0 %v8047
        %11288 = vmatprep.subr.bf16.mxu0 %v8042
        %11289 = vmatpush2.bf16.msra.mxu0 %v8041
        %11290 = vmatprep.subr.bf16.mxu0 %v8036
        %11291 = vmatpush2.bf16.msra.mxu0 %v8035
        %11292 = vmatprep.subr.bf16.mxu0 %v8030
        %11293 = vmatpush2.bf16.msra.mxu0 %v8029
        %11294 = vmatprep.subr.bf16.mxu0 %v8024
        %11295 = vmatpush2.bf16.msra.mxu0 %v8023
        %11296 = vmatprep.subr.bf16.mxu0 %v8018
        %11297 = vmatpush2.bf16.msra.mxu0 %v8017
        %11298 = vmatprep.mubr.bf16.mxu0 %v2859
        %11299 = vmatmul.mubr.bf16.gmra.mxu0 %v2858
        %v11300 = vpop.f32.mrf.mxu0
        %v11301 = vadd.f32 %v11260, %v11300
        %v11302 = vpop.f32.mrf.mxu0
        %v11303 = vadd.f32 %v11262, %v11302
        %v11304 = vpop.f32.mrf.mxu0
        %v11305 = vpop.f32.mrf.mxu0
        %11306 = vdwg.mxu0
        %11307 = vmatprep.subr.bf16.mxu0 %v8108
        %11308 = vmatpush1.bf16.msra.mxu0 %v8107
        %11309 = vmatprep.subr.bf16.mxu0 %v8102
        %11310 = vmatpush1.bf16.msra.mxu0 %v8101
        %11311 = vmatprep.subr.bf16.mxu0 %v8096
        %11312 = vmatpush1.bf16.msra.mxu0 %v8095
        %11313 = vmatprep.subr.bf16.mxu0 %v8090
        %11314 = vmatpush1.bf16.msra.mxu0 %v8089
        %11315 = vmatprep.subr.bf16.mxu0 %v8084
        %11316 = vmatpush1.bf16.msra.mxu0 %v8083
        %11317 = vmatprep.subr.bf16.mxu0 %v8078
        %11318 = vmatpush1.bf16.msra.mxu0 %v8077
        %11319 = vmatprep.subr.bf16.mxu0 %v8072
        %11320 = vmatpush1.bf16.msra.mxu0 %v8071
        %11321 = vmatprep.subr.bf16.mxu0 %v8066
        %11322 = vmatpush1.bf16.msra.mxu0 %v8065
        %11323 = vmatprep.subr.bf16.mxu0 %v8156
        %11324 = vmatpush2.bf16.msra.mxu0 %v8155
        %11325 = vmatprep.subr.bf16.mxu0 %v8150
        %11326 = vmatpush2.bf16.msra.mxu0 %v8149
        %11327 = vmatprep.subr.bf16.mxu0 %v8144
        %11328 = vmatpush2.bf16.msra.mxu0 %v8143
        %11329 = vmatprep.subr.bf16.mxu0 %v8138
        %11330 = vmatpush2.bf16.msra.mxu0 %v8137
        %11331 = vmatprep.subr.bf16.mxu0 %v8132
        %11332 = vmatpush2.bf16.msra.mxu0 %v8131
        %11333 = vmatprep.subr.bf16.mxu0 %v8126
        %11334 = vmatpush2.bf16.msra.mxu0 %v8125
        %11335 = vmatprep.subr.bf16.mxu0 %v8120
        %11336 = vmatpush2.bf16.msra.mxu0 %v8119
        %11337 = vmatprep.subr.bf16.mxu0 %v8114
        %11338 = vmatpush2.bf16.msra.mxu0 %v8113
        %11339 = vmatprep.mubr.bf16.mxu0 %v2861
        %11340 = vmatmul.mubr.bf16.gmra.mxu0 %v2860
        %v11341 = vpop.f32.mrf.mxu0
        %v11342 = vadd.f32 %v11301, %v11341
        %v11343 = vpop.f32.mrf.mxu0
        %v11344 = vadd.f32 %v11303, %v11343
        %v11345 = vpop.f32.mrf.mxu0
        %v11346 = vpop.f32.mrf.mxu0
        %11347 = vdwg.mxu0
        %11348 = vmatprep.subr.bf16.mxu0 %v8204
        %11349 = vmatpush1.bf16.msra.mxu0 %v8203
        %11350 = vmatprep.subr.bf16.mxu0 %v8198
        %11351 = vmatpush1.bf16.msra.mxu0 %v8197
        %11352 = vmatprep.subr.bf16.mxu0 %v8192
        %11353 = vmatpush1.bf16.msra.mxu0 %v8191
        %11354 = vmatprep.subr.bf16.mxu0 %v8186
        %11355 = vmatpush1.bf16.msra.mxu0 %v8185
        %11356 = vmatprep.subr.bf16.mxu0 %v8180
        %11357 = vmatpush1.bf16.msra.mxu0 %v8179
        %11358 = vmatprep.subr.bf16.mxu0 %v8174
        %11359 = vmatpush1.bf16.msra.mxu0 %v8173
        %11360 = vmatprep.subr.bf16.mxu0 %v8168
        %11361 = vmatpush1.bf16.msra.mxu0 %v8167
        %11362 = vmatprep.subr.bf16.mxu0 %v8162
        %11363 = vmatpush1.bf16.msra.mxu0 %v8161
        %11364 = vmatprep.subr.bf16.mxu0 %v8252
        %11365 = vmatpush2.bf16.msra.mxu0 %v8251
        %11366 = vmatprep.subr.bf16.mxu0 %v8246
        %11367 = vmatpush2.bf16.msra.mxu0 %v8245
        %11368 = vmatprep.subr.bf16.mxu0 %v8240
        %11369 = vmatpush2.bf16.msra.mxu0 %v8239
        %11370 = vmatprep.subr.bf16.mxu0 %v8234
        %11371 = vmatpush2.bf16.msra.mxu0 %v8233
        %11372 = vmatprep.subr.bf16.mxu0 %v8228
        %11373 = vmatpush2.bf16.msra.mxu0 %v8227
        %11374 = vmatprep.subr.bf16.mxu0 %v8222
        %11375 = vmatpush2.bf16.msra.mxu0 %v8221
        %11376 = vmatprep.subr.bf16.mxu0 %v8216
        %11377 = vmatpush2.bf16.msra.mxu0 %v8215
        %11378 = vmatprep.subr.bf16.mxu0 %v8210
        %11379 = vmatpush2.bf16.msra.mxu0 %v8209
        %11380 = vmatprep.mubr.bf16.mxu0 %v2863
        %11381 = vmatmul.mubr.bf16.gmra.mxu0 %v2862
        %v11382 = vpop.f32.mrf.mxu0
        %v11383 = vadd.f32 %v11342, %v11382
        %v11384 = vpop.f32.mrf.mxu0
        %v11385 = vadd.f32 %v11344, %v11384
        %v11386 = vpop.f32.mrf.mxu0
        %v11387 = vpop.f32.mrf.mxu0
        %11388 = vdwg.mxu0
        %11389 = vmatprep.subr.bf16.mxu0 %v8300
        %11390 = vmatpush1.bf16.msra.mxu0 %v8299
        %11391 = vmatprep.subr.bf16.mxu0 %v8294
        %11392 = vmatpush1.bf16.msra.mxu0 %v8293
        %11393 = vmatprep.subr.bf16.mxu0 %v8288
        %11394 = vmatpush1.bf16.msra.mxu0 %v8287
        %11395 = vmatprep.subr.bf16.mxu0 %v8282
        %11396 = vmatpush1.bf16.msra.mxu0 %v8281
        %11397 = vmatprep.subr.bf16.mxu0 %v8276
        %11398 = vmatpush1.bf16.msra.mxu0 %v8275
        %11399 = vmatprep.subr.bf16.mxu0 %v8270
        %11400 = vmatpush1.bf16.msra.mxu0 %v8269
        %11401 = vmatprep.subr.bf16.mxu0 %v8264
        %11402 = vmatpush1.bf16.msra.mxu0 %v8263
        %11403 = vmatprep.subr.bf16.mxu0 %v8258
        %11404 = vmatpush1.bf16.msra.mxu0 %v8257
        %11405 = vmatprep.subr.bf16.mxu0 %v8348
        %11406 = vmatpush2.bf16.msra.mxu0 %v8347
        %11407 = vmatprep.subr.bf16.mxu0 %v8342
        %11408 = vmatpush2.bf16.msra.mxu0 %v8341
        %11409 = vmatprep.subr.bf16.mxu0 %v8336
        %11410 = vmatpush2.bf16.msra.mxu0 %v8335
        %11411 = vmatprep.subr.bf16.mxu0 %v8330
        %11412 = vmatpush2.bf16.msra.mxu0 %v8329
        %11413 = vmatprep.subr.bf16.mxu0 %v8324
        %11414 = vmatpush2.bf16.msra.mxu0 %v8323
        %11415 = vmatprep.subr.bf16.mxu0 %v8318
        %11416 = vmatpush2.bf16.msra.mxu0 %v8317
        %11417 = vmatprep.subr.bf16.mxu0 %v8312
        %11418 = vmatpush2.bf16.msra.mxu0 %v8311
        %11419 = vmatprep.subr.bf16.mxu0 %v8306
        %11420 = vmatpush2.bf16.msra.mxu0 %v8305
        %11421 = vmatprep.mubr.bf16.mxu0 %v2865
        %11422 = vmatmul.mubr.bf16.gmra.mxu0 %v2864
        %v11423 = vpop.f32.mrf.mxu0
        %v11424 = vadd.f32 %v11383, %v11423
        %v11425 = vpop.f32.mrf.mxu0
        %v11426 = vadd.f32 %v11385, %v11425
        %v11427 = vpop.f32.mrf.mxu0
        %v11428 = vpop.f32.mrf.mxu0
        %11429 = vdwg.mxu0
        %11430 = vmatprep.subr.bf16.mxu0 %v8396
        %11431 = vmatpush1.bf16.msra.mxu0 %v8395
        %11432 = vmatprep.subr.bf16.mxu0 %v8390
        %11433 = vmatpush1.bf16.msra.mxu0 %v8389
        %11434 = vmatprep.subr.bf16.mxu0 %v8384
        %11435 = vmatpush1.bf16.msra.mxu0 %v8383
        %11436 = vmatprep.subr.bf16.mxu0 %v8378
        %11437 = vmatpush1.bf16.msra.mxu0 %v8377
        %11438 = vmatprep.subr.bf16.mxu0 %v8372
        %11439 = vmatpush1.bf16.msra.mxu0 %v8371
        %11440 = vmatprep.subr.bf16.mxu0 %v8366
        %11441 = vmatpush1.bf16.msra.mxu0 %v8365
        %11442 = vmatprep.subr.bf16.mxu0 %v8360
        %11443 = vmatpush1.bf16.msra.mxu0 %v8359
        %11444 = vmatprep.subr.bf16.mxu0 %v8354
        %11445 = vmatpush1.bf16.msra.mxu0 %v8353
        %11446 = vmatprep.subr.bf16.mxu0 %v8444
        %11447 = vmatpush2.bf16.msra.mxu0 %v8443
        %11448 = vmatprep.subr.bf16.mxu0 %v8438
        %11449 = vmatpush2.bf16.msra.mxu0 %v8437
        %11450 = vmatprep.subr.bf16.mxu0 %v8432
        %11451 = vmatpush2.bf16.msra.mxu0 %v8431
        %11452 = vmatprep.subr.bf16.mxu0 %v8426
        %11453 = vmatpush2.bf16.msra.mxu0 %v8425
        %11454 = vmatprep.subr.bf16.mxu0 %v8420
        %11455 = vmatpush2.bf16.msra.mxu0 %v8419
        %11456 = vmatprep.subr.bf16.mxu0 %v8414
        %11457 = vmatpush2.bf16.msra.mxu0 %v8413
        %11458 = vmatprep.subr.bf16.mxu0 %v8408
        %11459 = vmatpush2.bf16.msra.mxu0 %v8407
        %11460 = vmatprep.subr.bf16.mxu0 %v8402
        %11461 = vmatpush2.bf16.msra.mxu0 %v8401
        %11462 = vmatprep.mubr.bf16.mxu0 %v2867
        %11463 = vmatmul.mubr.bf16.gmra.mxu0 %v2866
        %v11464 = vpop.f32.mrf.mxu0
        %v11465 = vadd.f32 %v11424, %v11464
        %v11466 = vpop.f32.mrf.mxu0
        %v11467 = vadd.f32 %v11426, %v11466
        %v11468 = vpop.f32.mrf.mxu0
        %v11469 = vpop.f32.mrf.mxu0
        %11470 = vdwg.mxu0
        %11471 = vmatprep.subr.bf16.mxu0 %v8492
        %11472 = vmatpush1.bf16.msra.mxu0 %v8491
        %11473 = vmatprep.subr.bf16.mxu0 %v8486
        %11474 = vmatpush1.bf16.msra.mxu0 %v8485
        %11475 = vmatprep.subr.bf16.mxu0 %v8480
        %11476 = vmatpush1.bf16.msra.mxu0 %v8479
        %11477 = vmatprep.subr.bf16.mxu0 %v8474
        %11478 = vmatpush1.bf16.msra.mxu0 %v8473
        %11479 = vmatprep.subr.bf16.mxu0 %v8468
        %11480 = vmatpush1.bf16.msra.mxu0 %v8467
        %11481 = vmatprep.subr.bf16.mxu0 %v8462
        %11482 = vmatpush1.bf16.msra.mxu0 %v8461
        %11483 = vmatprep.subr.bf16.mxu0 %v8456
        %11484 = vmatpush1.bf16.msra.mxu0 %v8455
        %11485 = vmatprep.subr.bf16.mxu0 %v8450
        %11486 = vmatpush1.bf16.msra.mxu0 %v8449
        %11487 = vmatprep.subr.bf16.mxu0 %v8540
        %11488 = vmatpush2.bf16.msra.mxu0 %v8539
        %11489 = vmatprep.subr.bf16.mxu0 %v8534
        %11490 = vmatpush2.bf16.msra.mxu0 %v8533
        %11491 = vmatprep.subr.bf16.mxu0 %v8528
        %11492 = vmatpush2.bf16.msra.mxu0 %v8527
        %11493 = vmatprep.subr.bf16.mxu0 %v8522
        %11494 = vmatpush2.bf16.msra.mxu0 %v8521
        %11495 = vmatprep.subr.bf16.mxu0 %v8516
        %11496 = vmatpush2.bf16.msra.mxu0 %v8515
        %11497 = vmatprep.subr.bf16.mxu0 %v8510
        %11498 = vmatpush2.bf16.msra.mxu0 %v8509
        %11499 = vmatprep.subr.bf16.mxu0 %v8504
        %11500 = vmatpush2.bf16.msra.mxu0 %v8503
        %11501 = vmatprep.subr.bf16.mxu0 %v8498
        %11502 = vmatpush2.bf16.msra.mxu0 %v8497
        %11503 = vmatprep.mubr.bf16.mxu0 %v2869
        %11504 = vmatmul.mubr.bf16.gmra.mxu0 %v2868
        %v11505 = vpop.f32.mrf.mxu0
        %v11506 = vadd.f32 %v11465, %v11505
        %v11507 = vpop.f32.mrf.mxu0
        %v11508 = vadd.f32 %v11467, %v11507
        %v11509 = vpop.f32.mrf.mxu0
        %v11510 = vpop.f32.mrf.mxu0
        %11511 = vdwg.mxu0
        %11512 = vmatprep.subr.bf16.mxu0 %v8588
        %11513 = vmatpush1.bf16.msra.mxu0 %v8587
        %11514 = vmatprep.subr.bf16.mxu0 %v8582
        %11515 = vmatpush1.bf16.msra.mxu0 %v8581
        %11516 = vmatprep.subr.bf16.mxu0 %v8576
        %11517 = vmatpush1.bf16.msra.mxu0 %v8575
        %11518 = vmatprep.subr.bf16.mxu0 %v8570
        %11519 = vmatpush1.bf16.msra.mxu0 %v8569
        %11520 = vmatprep.subr.bf16.mxu0 %v8564
        %11521 = vmatpush1.bf16.msra.mxu0 %v8563
        %11522 = vmatprep.subr.bf16.mxu0 %v8558
        %11523 = vmatpush1.bf16.msra.mxu0 %v8557
        %11524 = vmatprep.subr.bf16.mxu0 %v8552
        %11525 = vmatpush1.bf16.msra.mxu0 %v8551
        %11526 = vmatprep.subr.bf16.mxu0 %v8546
        %11527 = vmatpush1.bf16.msra.mxu0 %v8545
        %11528 = vmatprep.subr.bf16.mxu0 %v8636
        %11529 = vmatpush2.bf16.msra.mxu0 %v8635
        %11530 = vmatprep.subr.bf16.mxu0 %v8630
        %11531 = vmatpush2.bf16.msra.mxu0 %v8629
        %11532 = vmatprep.subr.bf16.mxu0 %v8624
        %11533 = vmatpush2.bf16.msra.mxu0 %v8623
        %11534 = vmatprep.subr.bf16.mxu0 %v8618
        %11535 = vmatpush2.bf16.msra.mxu0 %v8617
        %11536 = vmatprep.subr.bf16.mxu0 %v8612
        %11537 = vmatpush2.bf16.msra.mxu0 %v8611
        %11538 = vmatprep.subr.bf16.mxu0 %v8606
        %11539 = vmatpush2.bf16.msra.mxu0 %v8605
        %11540 = vmatprep.subr.bf16.mxu0 %v8600
        %11541 = vmatpush2.bf16.msra.mxu0 %v8599
        %11542 = vmatprep.subr.bf16.mxu0 %v8594
        %11543 = vmatpush2.bf16.msra.mxu0 %v8593
        %11544 = vmatprep.mubr.bf16.mxu0 %v2871
        %11545 = vmatmul.mubr.bf16.gmra.mxu0 %v2870
        %v11546 = vpop.f32.mrf.mxu0
        %v11547 = vadd.f32 %v11506, %v11546
        %v11548 = vpop.f32.mrf.mxu0
        %v11549 = vadd.f32 %v11508, %v11548
        %v11550 = vpop.f32.mrf.mxu0
        %v11551 = vpop.f32.mrf.mxu0
        %11552 = vdwg.mxu0
        %11553 = vmatprep.subr.bf16.mxu0 %v8684
        %11554 = vmatpush1.bf16.msra.mxu0 %v8683
        %11555 = vmatprep.subr.bf16.mxu0 %v8678
        %11556 = vmatpush1.bf16.msra.mxu0 %v8677
        %11557 = vmatprep.subr.bf16.mxu0 %v8672
        %11558 = vmatpush1.bf16.msra.mxu0 %v8671
        %11559 = vmatprep.subr.bf16.mxu0 %v8666
        %11560 = vmatpush1.bf16.msra.mxu0 %v8665
        %11561 = vmatprep.subr.bf16.mxu0 %v8660
        %11562 = vmatpush1.bf16.msra.mxu0 %v8659
        %11563 = vmatprep.subr.bf16.mxu0 %v8654
        %11564 = vmatpush1.bf16.msra.mxu0 %v8653
        %11565 = vmatprep.subr.bf16.mxu0 %v8648
        %11566 = vmatpush1.bf16.msra.mxu0 %v8647
        %11567 = vmatprep.subr.bf16.mxu0 %v8642
        %11568 = vmatpush1.bf16.msra.mxu0 %v8641
        %11569 = vmatprep.subr.bf16.mxu0 %v8732
        %11570 = vmatpush2.bf16.msra.mxu0 %v8731
        %11571 = vmatprep.subr.bf16.mxu0 %v8726
        %11572 = vmatpush2.bf16.msra.mxu0 %v8725
        %11573 = vmatprep.subr.bf16.mxu0 %v8720
        %11574 = vmatpush2.bf16.msra.mxu0 %v8719
        %11575 = vmatprep.subr.bf16.mxu0 %v8714
        %11576 = vmatpush2.bf16.msra.mxu0 %v8713
        %11577 = vmatprep.subr.bf16.mxu0 %v8708
        %11578 = vmatpush2.bf16.msra.mxu0 %v8707
        %11579 = vmatprep.subr.bf16.mxu0 %v8702
        %11580 = vmatpush2.bf16.msra.mxu0 %v8701
        %11581 = vmatprep.subr.bf16.mxu0 %v8696
        %11582 = vmatpush2.bf16.msra.mxu0 %v8695
        %11583 = vmatprep.subr.bf16.mxu0 %v8690
        %11584 = vmatpush2.bf16.msra.mxu0 %v8689
        %11585 = vmatprep.mubr.bf16.mxu0 %v2873
        %11586 = vmatmul.mubr.bf16.gmra.mxu0 %v2872
        %v11587 = vpop.f32.mrf.mxu0
        %v11588 = vadd.f32 %v11547, %v11587
        %v11589 = vpop.f32.mrf.mxu0
        %v11590 = vadd.f32 %v11549, %v11589
        %v11591 = vpop.f32.mrf.mxu0
        %v11592 = vpop.f32.mrf.mxu0
        %11593 = vdwg.mxu0
        %11594 = vmatprep.subr.bf16.mxu0 %v8780
        %11595 = vmatpush1.bf16.msra.mxu0 %v8779
        %11596 = vmatprep.subr.bf16.mxu0 %v8774
        %11597 = vmatpush1.bf16.msra.mxu0 %v8773
        %11598 = vmatprep.subr.bf16.mxu0 %v8768
        %11599 = vmatpush1.bf16.msra.mxu0 %v8767
        %11600 = vmatprep.subr.bf16.mxu0 %v8762
        %11601 = vmatpush1.bf16.msra.mxu0 %v8761
        %11602 = vmatprep.subr.bf16.mxu0 %v8756
        %11603 = vmatpush1.bf16.msra.mxu0 %v8755
        %11604 = vmatprep.subr.bf16.mxu0 %v8750
        %11605 = vmatpush1.bf16.msra.mxu0 %v8749
        %11606 = vmatprep.subr.bf16.mxu0 %v8744
        %11607 = vmatpush1.bf16.msra.mxu0 %v8743
        %11608 = vmatprep.subr.bf16.mxu0 %v8738
        %11609 = vmatpush1.bf16.msra.mxu0 %v8737
        %11610 = vmatprep.subr.bf16.mxu0 %v8828
        %11611 = vmatpush2.bf16.msra.mxu0 %v8827
        %11612 = vmatprep.subr.bf16.mxu0 %v8822
        %11613 = vmatpush2.bf16.msra.mxu0 %v8821
        %11614 = vmatprep.subr.bf16.mxu0 %v8816
        %11615 = vmatpush2.bf16.msra.mxu0 %v8815
        %11616 = vmatprep.subr.bf16.mxu0 %v8810
        %11617 = vmatpush2.bf16.msra.mxu0 %v8809
        %11618 = vmatprep.subr.bf16.mxu0 %v8804
        %11619 = vmatpush2.bf16.msra.mxu0 %v8803
        %11620 = vmatprep.subr.bf16.mxu0 %v8798
        %11621 = vmatpush2.bf16.msra.mxu0 %v8797
        %11622 = vmatprep.subr.bf16.mxu0 %v8792
        %11623 = vmatpush2.bf16.msra.mxu0 %v8791
        %11624 = vmatprep.subr.bf16.mxu0 %v8786
        %11625 = vmatpush2.bf16.msra.mxu0 %v8785
        %11626 = vmatprep.mubr.bf16.mxu0 %v2875
        %11627 = vmatmul.mubr.bf16.gmra.mxu0 %v2874
        %v11628 = vpop.f32.mrf.mxu0
        %v11629 = vadd.f32 %v11588, %v11628
        %v11630 = vpop.f32.mrf.mxu0
        %v11631 = vadd.f32 %v11590, %v11630
        %v11632 = vpop.f32.mrf.mxu0
        %v11633 = vpop.f32.mrf.mxu0
        %11634 = vdwg.mxu0
        %11635 = vmatprep.subr.bf16.mxu0 %v8876
        %11636 = vmatpush1.bf16.msra.mxu0 %v8875
        %11637 = vmatprep.subr.bf16.mxu0 %v8870
        %11638 = vmatpush1.bf16.msra.mxu0 %v8869
        %11639 = vmatprep.subr.bf16.mxu0 %v8864
        %11640 = vmatpush1.bf16.msra.mxu0 %v8863
        %11641 = vmatprep.subr.bf16.mxu0 %v8858
        %11642 = vmatpush1.bf16.msra.mxu0 %v8857
        %11643 = vmatprep.subr.bf16.mxu0 %v8852
        %11644 = vmatpush1.bf16.msra.mxu0 %v8851
        %11645 = vmatprep.subr.bf16.mxu0 %v8846
        %11646 = vmatpush1.bf16.msra.mxu0 %v8845
        %11647 = vmatprep.subr.bf16.mxu0 %v8840
        %11648 = vmatpush1.bf16.msra.mxu0 %v8839
        %11649 = vmatprep.subr.bf16.mxu0 %v8834
        %11650 = vmatpush1.bf16.msra.mxu0 %v8833
        %11651 = vmatprep.subr.bf16.mxu0 0
        %11652 = vmatpush2.bf16.msra.mxu0 0
        %11653 = vmatprep.subr.bf16.mxu0 0
        %11654 = vmatpush2.bf16.msra.mxu0 0
        %11655 = vmatprep.subr.bf16.mxu0 0
        %11656 = vmatpush2.bf16.msra.mxu0 0
        %11657 = vmatprep.subr.bf16.mxu0 0
        %11658 = vmatpush2.bf16.msra.mxu0 0
        %11659 = vmatprep.subr.bf16.mxu0 0
        %11660 = vmatpush2.bf16.msra.mxu0 0
        %11661 = vmatprep.subr.bf16.mxu0 0
        %11662 = vmatpush2.bf16.msra.mxu0 0
        %11663 = vmatprep.subr.bf16.mxu0 0
        %11664 = vmatpush2.bf16.msra.mxu0 0
        %11665 = vmatprep.subr.bf16.mxu0 0
        %11666 = vmatpush2.bf16.msra.mxu0 0
        %11667 = vmatprep.mubr.bf16.mxu0 0
        %11668 = vmatmul.mubr.bf16.gmra.mxu0 %v2876
        %v11669 = vpop.f32.mrf.mxu0
        %v11670 = vadd.f32 %v11629, %v11669
        %v11671 = vpop.f32.mrf.mxu0
        %v11672 = vadd.f32 %v11631, %v11671
        %v11673 = vpop.f32.mrf.mxu0
        %v11674 = vpop.f32.mrf.mxu0
        %11675 = vdwg.mxu0
        %v11676 = vld [vmem:[%s6] sm:$0x3f]
        %v11678 = vlaneseq
        %v11679 = vshrl.u32 %v11678, 7
        %v11680 = vsub.s32 0, %v11679
        %v11681 = vrot.slane %v11676, %v11680
        %v11682 = vlaneseq
        %v11683 = vshrl.u32 %v11682, 7
        %v11684 = vsub.s32 1, %v11683
        %v11685 = vrot.slane %v11676, %v11684
        %v11686 = vlaneseq
        %v11687 = vshrl.u32 %v11686, 7
        %v11688 = vsub.s32 2, %v11687
        %v11689 = vrot.slane %v11676, %v11688
        %v11690 = vlaneseq
        %v11691 = vshrl.u32 %v11690, 7
        %v11692 = vsub.s32 3, %v11691
        %v11693 = vrot.slane %v11676, %v11692
        %v11694 = vlaneseq
        %v11695 = vshrl.u32 %v11694, 7
        %v11696 = vsub.s32 4, %v11695
        %v11697 = vrot.slane %v11676, %v11696
        %v11698 = vlaneseq
        %v11699 = vshrl.u32 %v11698, 7
        %v11700 = vsub.s32 5, %v11699
        %v11701 = vrot.slane %v11676, %v11700
        %v11708 = vmul.f32 %v10604, %v11681
        %v11709 = vmul.f32 %v10606, %v11685
        %v11710 = vmul.f32 %v11137, %v11689
        %v11711 = vmul.f32 %v11139, %v11693
        %v11712 = vmul.f32 %v11670, %v11697
        %v11713 = vmul.f32 %v11672, %v11701
        %v11714 = vld [vmem:[%s7] sm:$0x3f]
        %v11716 = vlaneseq
        %v11717 = vshrl.u32 %v11716, 7
        %v11718 = vsub.s32 0, %v11717
        %v11719 = vrot.slane %v11714, %v11718
        %v11720 = vlaneseq
        %v11721 = vshrl.u32 %v11720, 7
        %v11722 = vsub.s32 1, %v11721
        %v11723 = vrot.slane %v11714, %v11722
        %v11724 = vlaneseq
        %v11725 = vshrl.u32 %v11724, 7
        %v11726 = vsub.s32 2, %v11725
        %v11727 = vrot.slane %v11714, %v11726
        %v11728 = vlaneseq
        %v11729 = vshrl.u32 %v11728, 7
        %v11730 = vsub.s32 3, %v11729
        %v11731 = vrot.slane %v11714, %v11730
        %v11732 = vlaneseq
        %v11733 = vshrl.u32 %v11732, 7
        %v11734 = vsub.s32 4, %v11733
        %v11735 = vrot.slane %v11714, %v11734
        %v11736 = vlaneseq
        %v11737 = vshrl.u32 %v11736, 7
        %v11738 = vsub.s32 5, %v11737
        %v11739 = vrot.slane %v11714, %v11738
        %v11746 = vadd.f32 %v11708, %v11719
        %v11747 = vadd.f32 %v11709, %v11723
        %v11748 = vadd.f32 %v11710, %v11727
        %v11749 = vadd.f32 %v11711, %v11731
        %v11750 = vadd.f32 %v11712, %v11735
        %v11751 = vadd.f32 %v11713, %v11739
        %v11752 = vmax.f32 %v11746, 0.0
        %v11753 = vmax.f32 %v11747, 0.0
        %v11754 = vmax.f32 %v11748, 0.0
        %v11755 = vmax.f32 %v11749, 0.0
        %v11756 = vmax.f32 %v11750, 0.0
        %v11757 = vmax.f32 %v11751, 0.0
        %v11758 = vpack.c.bf16 %v11752, %v11752
        %v11759 = vpack.c.bf16 %v11753, %v11753
        %v11760 = vpack.c.bf16 %v11754, %v11754
        %v11761 = vpack.c.bf16 %v11755, %v11755
        %v11762 = vpack.c.bf16 %v11756, %v11756
        %v11763 = vpack.c.bf16 %v11757, %v11757
        %v11764 = vld [vmem:[%s8] sm:$0xf]
        %v11765 = vld [vmem:[%s8 + $0x4] sm:$0xf]
        %v11766 = vld [vmem:[%s8 + $0x8] sm:$0xf]
        %v11767 = vld [vmem:[%s8 + $0xc] sm:$0xf]
        %v11768 = vld [vmem:[%s8 + $0x10] sm:$0xf]
        %v11769 = vld [vmem:[%s8 + $0x14] sm:$0xf]
        %v11770 = vld [vmem:[%s8 + $0x18] sm:$0xf]
        %v11771 = vld [vmem:[%s8 + $0x1c] sm:$0xf]
        %v11772 = vld [vmem:[%s8 + $0x20] sm:$0xf]
        %v11773 = vld [vmem:[%s8 + $0x24] sm:$0xf]
        %v11774 = vld [vmem:[%s8 + $0x28] sm:$0xf]
        %v11775 = vld [vmem:[%s8 + $0x2c] sm:$0xf]
        %v11776 = vld [vmem:[%s8 + $0x30] sm:$0xf]
        %v11777 = vld [vmem:[%s8 + $0x34] sm:$0xf]
        %v11778 = vld [vmem:[%s8 + $0x38] sm:$0xf]
        %v11779 = vld [vmem:[%s8 + $0x3c] sm:$0xf]
        %v11780 = vld [vmem:[%s8 + $0x40] sm:$0xf]
        %v11781 = vld [vmem:[%s8 + $0x44] sm:$0xf]
        %v11782 = vld [vmem:[%s8 + $0x48] sm:$0xf]
        %v11783 = vld [vmem:[%s8 + $0x4c] sm:$0xf]
        %v11784 = vld [vmem:[%s8 + $0x50] sm:$0xf]
        %v11785 = vld [vmem:[%s8 + $0x54] sm:$0xf]
        %v11786 = vld [vmem:[%s8 + $0x58] sm:$0xf]
        %v11787 = vld [vmem:[%s8 + $0x5c] sm:$0xf]
        %v11788 = vld [vmem:[%s8 + $0x60] sm:$0xf]
        %v11789 = vld [vmem:[%s8 + $0x64] sm:$0xf]
        %v11790 = vld [vmem:[%s8 + $0x68] sm:$0xf]
        %v11791 = vld [vmem:[%s8 + $0x6c] sm:$0xf]
        %v11792 = vld [vmem:[%s8 + $0x70] sm:$0xf]
        %v11793 = vld [vmem:[%s8 + $0x74] sm:$0xf]
        %v11794 = vld [vmem:[%s8 + $0x78] sm:$0xf]
        %v11795 = vld [vmem:[%s8 + $0x7c] sm:$0xf]
        %v11796 = vld [vmem:[%s8 + $0x80] sm:$0xf]
        %v11797 = vld [vmem:[%s8 + $0x84] sm:$0xf]
        %v11798 = vld [vmem:[%s8 + $0x88] sm:$0xf]
        %v11799 = vld [vmem:[%s8 + $0x8c] sm:$0xf]
        %v11800 = vld [vmem:[%s8 + $0x90] sm:$0xf]
        %v11801 = vld [vmem:[%s8 + $0x94] sm:$0xf]
        %v11802 = vld [vmem:[%s8 + $0x98] sm:$0xf]
        %v11803 = vld [vmem:[%s8 + $0x9c] sm:$0xf]
        %v11804 = vld [vmem:[%s8 + $0xa0] sm:$0xf]
        %v11805 = vld [vmem:[%s8 + $0xa4] sm:$0xf]
        %v11806 = vld [vmem:[%s8 + $0xa8] sm:$0xf]
        %v11807 = vld [vmem:[%s8 + $0xac] sm:$0xf]
        %v11808 = vld [vmem:[%s8 + $0xb0] sm:$0xf]
        %v11809 = vld [vmem:[%s8 + $0xb4] sm:$0xf]
        %v11810 = vld [vmem:[%s8 + $0xb8] sm:$0xf]
        %v11811 = vld [vmem:[%s8 + $0xbc] sm:$0xf]
        %v11812 = vld [vmem:[%s8 + $0xc0] sm:$0xf]
        %v11813 = vld [vmem:[%s8 + $0xc4] sm:$0xf]
        %v11814 = vld [vmem:[%s8 + $0xc8] sm:$0xf]
        %v11815 = vld [vmem:[%s8 + $0xcc] sm:$0xf]
        %v11816 = vld [vmem:[%s8 + $0xd0] sm:$0xf]
        %v11817 = vld [vmem:[%s8 + $0xd4] sm:$0xf]
        %v11818 = vld [vmem:[%s8 + $0xd8] sm:$0xf]
        %v11819 = vld [vmem:[%s8 + $0xdc] sm:$0xf]
        %v11820 = vld [vmem:[%s8 + $0xe0] sm:$0xf]
        %v11821 = vld [vmem:[%s8 + $0xe4] sm:$0xf]
        %v11822 = vld [vmem:[%s8 + $0xe8] sm:$0xf]
        %v11823 = vld [vmem:[%s8 + $0xec] sm:$0xf]
        %v11824 = vld [vmem:[%s8 + $0xf0] sm:$0xf]
        %v11825 = vld [vmem:[%s8 + $0xf4] sm:$0xf]
        %v11826 = vld [vmem:[%s8 + $0xf8] sm:$0xf]
        %v11827 = vld [vmem:[%s8 + $0xfc] sm:$0xf]
        %v11828 = vld [vmem:[%s8 + $0x100] sm:$0xf]
        %v11829 = vld [vmem:[%s8 + $0x104] sm:$0xf]
        %v11830 = vld [vmem:[%s8 + $0x108] sm:$0xf]
        %v11831 = vld [vmem:[%s8 + $0x10c] sm:$0xf]
        %v11832 = vld [vmem:[%s8 + $0x110] sm:$0xf]
        %v11833 = vld [vmem:[%s8 + $0x114] sm:$0xf]
        %v11834 = vld [vmem:[%s8 + $0x118] sm:$0xf]
        %v11835 = vld [vmem:[%s8 + $0x11c] sm:$0xf]
        %v11836 = vld [vmem:[%s8 + $0x120] sm:$0xf]
        %v11837 = vld [vmem:[%s8 + $0x124] sm:$0xf]
        %v11838 = vld [vmem:[%s8 + $0x128] sm:$0xf]
        %v11839 = vld [vmem:[%s8 + $0x12c] sm:$0xf]
        %v11840 = vld [vmem:[%s8 + $0x130] sm:$0xf]
        %v11841 = vld [vmem:[%s8 + $0x134] sm:$0xf]
        %v11842 = vld [vmem:[%s8 + $0x138] sm:$0xf]
        %v11843 = vld [vmem:[%s8 + $0x13c] sm:$0xf]
        %v11844 = vld [vmem:[%s8 + $0x140] sm:$0xf]
        %v11845 = vld [vmem:[%s8 + $0x144] sm:$0xf]
        %v11846 = vld [vmem:[%s8 + $0x148] sm:$0xf]
        %v11847 = vld [vmem:[%s8 + $0x14c] sm:$0xf]
        %v11848 = vld [vmem:[%s8 + $0x150] sm:$0xf]
        %v11849 = vld [vmem:[%s8 + $0x154] sm:$0xf]
        %v11850 = vld [vmem:[%s8 + $0x158] sm:$0xf]
        %v11851 = vld [vmem:[%s8 + $0x15c] sm:$0xf]
        %v11852 = vld [vmem:[%s8 + $0x160] sm:$0xf]
        %v11853 = vld [vmem:[%s8 + $0x164] sm:$0xf]
        %v11854 = vld [vmem:[%s8 + $0x168] sm:$0xf]
        %v11855 = vld [vmem:[%s8 + $0x16c] sm:$0xf]
        %v11856 = vld [vmem:[%s8 + $0x170] sm:$0xf]
        %v11857 = vld [vmem:[%s8 + $0x174] sm:$0xf]
        %v11858 = vld [vmem:[%s8 + $0x178] sm:$0xf]
        %v11859 = vld [vmem:[%s8 + $0x17c] sm:$0xf]
        %v11860 = vld [vmem:[%s9] sm:$0x1]
        %v11957 = vunpack.c.l.b16 %v11764
        %v11958 = vunpack.c.l.b16 %v11765
        %v11959 = vunpack.c.l.b16 %v11766
        %v11960 = vunpack.c.l.b16 %v11767
        %v11961 = vunpack.c.l.b16 %v11768
        %v11962 = vunpack.c.l.b16 %v11769
        %v11963 = vunpack.c.l.b16 %v11770
        %v11964 = vunpack.c.l.b16 %v11771
        %v11965 = vunpack.c.l.b16 %v11772
        %v11966 = vunpack.c.l.b16 %v11773
        %v11967 = vunpack.c.l.b16 %v11774
        %v11968 = vunpack.c.l.b16 %v11775
        %v11969 = vunpack.c.l.b16 %v11776
        %v11970 = vunpack.c.l.b16 %v11777
        %v11971 = vunpack.c.l.b16 %v11778
        %v11972 = vunpack.c.l.b16 %v11779
        %v11973 = vunpack.c.l.b16 %v11780
        %v11974 = vunpack.c.l.b16 %v11781
        %v11975 = vunpack.c.l.b16 %v11782
        %v11976 = vunpack.c.l.b16 %v11783
        %v11977 = vunpack.c.l.b16 %v11784
        %v11978 = vunpack.c.l.b16 %v11785
        %v11979 = vunpack.c.l.b16 %v11786
        %v11980 = vunpack.c.l.b16 %v11787
        %v11981 = vunpack.c.l.b16 %v11788
        %v11982 = vunpack.c.l.b16 %v11789
        %v11983 = vunpack.c.l.b16 %v11790
        %v11984 = vunpack.c.l.b16 %v11791
        %v11985 = vunpack.c.l.b16 %v11792
        %v11986 = vunpack.c.l.b16 %v11793
        %v11987 = vunpack.c.l.b16 %v11794
        %v11988 = vunpack.c.l.b16 %v11795
        %v11989 = vunpack.c.l.b16 %v11796
        %v11990 = vunpack.c.l.b16 %v11797
        %v11991 = vunpack.c.l.b16 %v11798
        %v11992 = vunpack.c.l.b16 %v11799
        %v11993 = vunpack.c.l.b16 %v11800
        %v11994 = vunpack.c.l.b16 %v11801
        %v11995 = vunpack.c.l.b16 %v11802
        %v11996 = vunpack.c.l.b16 %v11803
        %v11997 = vunpack.c.l.b16 %v11804
        %v11998 = vunpack.c.l.b16 %v11805
        %v11999 = vunpack.c.l.b16 %v11806
        %v12000 = vunpack.c.l.b16 %v11807
        %v12001 = vunpack.c.l.b16 %v11808
        %v12002 = vunpack.c.l.b16 %v11809
        %v12003 = vunpack.c.l.b16 %v11810
        %v12004 = vunpack.c.l.b16 %v11811
        %v12005 = vunpack.c.l.b16 %v11812
        %v12006 = vunpack.c.l.b16 %v11813
        %v12007 = vunpack.c.l.b16 %v11814
        %v12008 = vunpack.c.l.b16 %v11815
        %v12009 = vunpack.c.l.b16 %v11816
        %v12010 = vunpack.c.l.b16 %v11817
        %v12011 = vunpack.c.l.b16 %v11818
        %v12012 = vunpack.c.l.b16 %v11819
        %v12013 = vunpack.c.l.b16 %v11820
        %v12014 = vunpack.c.l.b16 %v11821
        %v12015 = vunpack.c.l.b16 %v11822
        %v12016 = vunpack.c.l.b16 %v11823
        %v12017 = vunpack.c.l.b16 %v11824
        %v12018 = vunpack.c.l.b16 %v11825
        %v12019 = vunpack.c.l.b16 %v11826
        %v12020 = vunpack.c.l.b16 %v11827
        %v12021 = vunpack.c.l.b16 %v11828
        %v12022 = vunpack.c.l.b16 %v11829
        %v12023 = vunpack.c.l.b16 %v11830
        %v12024 = vunpack.c.l.b16 %v11831
        %v12025 = vunpack.c.l.b16 %v11832
        %v12026 = vunpack.c.l.b16 %v11833
        %v12027 = vunpack.c.l.b16 %v11834
        %v12028 = vunpack.c.l.b16 %v11835
        %v12029 = vunpack.c.l.b16 %v11836
        %v12030 = vunpack.c.l.b16 %v11837
        %v12031 = vunpack.c.l.b16 %v11838
        %v12032 = vunpack.c.l.b16 %v11839
        %v12033 = vunpack.c.l.b16 %v11840
        %v12034 = vunpack.c.l.b16 %v11841
        %v12035 = vunpack.c.l.b16 %v11842
        %v12036 = vunpack.c.l.b16 %v11843
        %v12037 = vunpack.c.l.b16 %v11844
        %v12038 = vunpack.c.l.b16 %v11845
        %v12039 = vunpack.c.l.b16 %v11846
        %v12040 = vunpack.c.l.b16 %v11847
        %v12041 = vunpack.c.l.b16 %v11848
        %v12042 = vunpack.c.l.b16 %v11849
        %v12043 = vunpack.c.l.b16 %v11850
        %v12044 = vunpack.c.l.b16 %v11851
        %v12045 = vunpack.c.l.b16 %v11852
        %v12046 = vunpack.c.l.b16 %v11853
        %v12047 = vunpack.c.l.b16 %v11854
        %v12048 = vunpack.c.l.b16 %v11855
        %v12049 = vunpack.c.l.b16 %v11856
        %v12050 = vunpack.c.l.b16 %v11857
        %v12051 = vunpack.c.l.b16 %v11858
        %v12052 = vunpack.c.l.b16 %v11859
        %v12053 = vpack.c.b16 %v11958, %v11957
        %v12054 = vpack.c.b16 %v11960, %v11959
        %v12055 = vpack.c.b16 %v11962, %v11961
        %v12056 = vpack.c.b16 %v11964, %v11963
        %v12057 = vpack.c.b16 %v11966, %v11965
        %v12058 = vpack.c.b16 %v11968, %v11967
        %v12059 = vpack.c.b16 %v11970, %v11969
        %v12060 = vpack.c.b16 %v11972, %v11971
        %v12061 = vpack.c.b16 %v11974, %v11973
        %v12062 = vpack.c.b16 %v11976, %v11975
        %v12063 = vpack.c.b16 %v11978, %v11977
        %v12064 = vpack.c.b16 %v11980, %v11979
        %v12065 = vpack.c.b16 %v11982, %v11981
        %v12066 = vpack.c.b16 %v11984, %v11983
        %v12067 = vpack.c.b16 %v11986, %v11985
        %v12068 = vpack.c.b16 %v11988, %v11987
        %v12069 = vpack.c.b16 %v11990, %v11989
        %v12070 = vpack.c.b16 %v11992, %v11991
        %v12071 = vpack.c.b16 %v11994, %v11993
        %v12072 = vpack.c.b16 %v11996, %v11995
        %v12073 = vpack.c.b16 %v11998, %v11997
        %v12074 = vpack.c.b16 %v12000, %v11999
        %v12075 = vpack.c.b16 %v12002, %v12001
        %v12076 = vpack.c.b16 %v12004, %v12003
        %v12077 = vpack.c.b16 %v12006, %v12005
        %v12078 = vpack.c.b16 %v12008, %v12007
        %v12079 = vpack.c.b16 %v12010, %v12009
        %v12080 = vpack.c.b16 %v12012, %v12011
        %v12081 = vpack.c.b16 %v12014, %v12013
        %v12082 = vpack.c.b16 %v12016, %v12015
        %v12083 = vpack.c.b16 %v12018, %v12017
        %v12084 = vpack.c.b16 %v12020, %v12019
        %v12085 = vpack.c.b16 %v12022, %v12021
        %v12086 = vpack.c.b16 %v12024, %v12023
        %v12087 = vpack.c.b16 %v12026, %v12025
        %v12088 = vpack.c.b16 %v12028, %v12027
        %v12089 = vpack.c.b16 %v12030, %v12029
        %v12090 = vpack.c.b16 %v12032, %v12031
        %v12091 = vpack.c.b16 %v12034, %v12033
        %v12092 = vpack.c.b16 %v12036, %v12035
        %v12093 = vpack.c.b16 %v12038, %v12037
        %v12094 = vpack.c.b16 %v12040, %v12039
        %v12095 = vpack.c.b16 %v12042, %v12041
        %v12096 = vpack.c.b16 %v12044, %v12043
        %v12097 = vpack.c.b16 %v12046, %v12045
        %v12098 = vpack.c.b16 %v12048, %v12047
        %v12099 = vpack.c.b16 %v12050, %v12049
        %v12100 = vpack.c.b16 %v12052, %v12051
        %12149 = vmatprep.subr.bf16.mxu0 0
        %12150 = vmatpush1.bf16.msra.mxu0 %v12060
        %12151 = vmatprep.subr.bf16.mxu0 0
        %12152 = vmatpush1.bf16.msra.mxu0 %v12059
        %12153 = vmatprep.subr.bf16.mxu0 0
        %12154 = vmatpush1.bf16.msra.mxu0 %v12058
        %12155 = vmatprep.subr.bf16.mxu0 0
        %12156 = vmatpush1.bf16.msra.mxu0 %v12057
        %12157 = vmatprep.subr.bf16.mxu0 0
        %12158 = vmatpush1.bf16.msra.mxu0 %v12056
        %12159 = vmatprep.subr.bf16.mxu0 0
        %12160 = vmatpush1.bf16.msra.mxu0 %v12055
        %12161 = vmatprep.subr.bf16.mxu0 0
        %12162 = vmatpush1.bf16.msra.mxu0 %v12054
        %12163 = vmatprep.subr.bf16.mxu0 0
        %12164 = vmatpush1.bf16.msra.mxu0 %v12053
        %12165 = vmatprep.subr.bf16.mxu0 0
        %12166 = vmatpush2.bf16.msra.mxu0 %v12068
        %12167 = vmatprep.subr.bf16.mxu0 0
        %12168 = vmatpush2.bf16.msra.mxu0 %v12067
        %12169 = vmatprep.subr.bf16.mxu0 0
        %12170 = vmatpush2.bf16.msra.mxu0 %v12066
        %12171 = vmatprep.subr.bf16.mxu0 0
        %12172 = vmatpush2.bf16.msra.mxu0 %v12065
        %12173 = vmatprep.subr.bf16.mxu0 0
        %12174 = vmatpush2.bf16.msra.mxu0 %v12064
        %12175 = vmatprep.subr.bf16.mxu0 0
        %12176 = vmatpush2.bf16.msra.mxu0 %v12063
        %12177 = vmatprep.subr.bf16.mxu0 0
        %12178 = vmatpush2.bf16.msra.mxu0 %v12062
        %12179 = vmatprep.subr.bf16.mxu0 0
        %12180 = vmatpush2.bf16.msra.mxu0 %v12061
        %12181 = vmatprep.mubr.bf16.mxu0 %v11759
        %12182 = vmatmul.mubr.bf16.gmra.mxu0 %v11758
        %v12183 = vpop.f32.mrf.mxu0
        %v12184 = vadd.f32 %v11860, %v12183
        %v12185 = vpop.f32.mrf.mxu0
        %v12186 = vpop.f32.mrf.mxu0
        %v12187 = vpop.f32.mrf.mxu0
        %12188 = vdwg.mxu0
        %12189 = vmatprep.subr.bf16.mxu0 0
        %12190 = vmatpush1.bf16.msra.mxu0 %v12076
        %12191 = vmatprep.subr.bf16.mxu0 0
        %12192 = vmatpush1.bf16.msra.mxu0 %v12075
        %12193 = vmatprep.subr.bf16.mxu0 0
        %12194 = vmatpush1.bf16.msra.mxu0 %v12074
        %12195 = vmatprep.subr.bf16.mxu0 0
        %12196 = vmatpush1.bf16.msra.mxu0 %v12073
        %12197 = vmatprep.subr.bf16.mxu0 0
        %12198 = vmatpush1.bf16.msra.mxu0 %v12072
        %12199 = vmatprep.subr.bf16.mxu0 0
        %12200 = vmatpush1.bf16.msra.mxu0 %v12071
        %12201 = vmatprep.subr.bf16.mxu0 0
        %12202 = vmatpush1.bf16.msra.mxu0 %v12070
        %12203 = vmatprep.subr.bf16.mxu0 0
        %12204 = vmatpush1.bf16.msra.mxu0 %v12069
        %12205 = vmatprep.subr.bf16.mxu0 0
        %12206 = vmatpush2.bf16.msra.mxu0 %v12084
        %12207 = vmatprep.subr.bf16.mxu0 0
        %12208 = vmatpush2.bf16.msra.mxu0 %v12083
        %12209 = vmatprep.subr.bf16.mxu0 0
        %12210 = vmatpush2.bf16.msra.mxu0 %v12082
        %12211 = vmatprep.subr.bf16.mxu0 0
        %12212 = vmatpush2.bf16.msra.mxu0 %v12081
        %12213 = vmatprep.subr.bf16.mxu0 0
        %12214 = vmatpush2.bf16.msra.mxu0 %v12080
        %12215 = vmatprep.subr.bf16.mxu0 0
        %12216 = vmatpush2.bf16.msra.mxu0 %v12079
        %12217 = vmatprep.subr.bf16.mxu0 0
        %12218 = vmatpush2.bf16.msra.mxu0 %v12078
        %12219 = vmatprep.subr.bf16.mxu0 0
        %12220 = vmatpush2.bf16.msra.mxu0 %v12077
        %12221 = vmatprep.mubr.bf16.mxu0 %v11761
        %12222 = vmatmul.mubr.bf16.gmra.mxu0 %v11760
        %v12223 = vpop.f32.mrf.mxu0
        %v12224 = vadd.f32 %v12184, %v12223
        %v12225 = vpop.f32.mrf.mxu0
        %v12226 = vpop.f32.mrf.mxu0
        %v12227 = vpop.f32.mrf.mxu0
        %12228 = vdwg.mxu0
        %12229 = vmatprep.subr.bf16.mxu0 0
        %12230 = vmatpush1.bf16.msra.mxu0 %v12092
        %12231 = vmatprep.subr.bf16.mxu0 0
        %12232 = vmatpush1.bf16.msra.mxu0 %v12091
        %12233 = vmatprep.subr.bf16.mxu0 0
        %12234 = vmatpush1.bf16.msra.mxu0 %v12090
        %12235 = vmatprep.subr.bf16.mxu0 0
        %12236 = vmatpush1.bf16.msra.mxu0 %v12089
        %12237 = vmatprep.subr.bf16.mxu0 0
        %12238 = vmatpush1.bf16.msra.mxu0 %v12088
        %12239 = vmatprep.subr.bf16.mxu0 0
        %12240 = vmatpush1.bf16.msra.mxu0 %v12087
        %12241 = vmatprep.subr.bf16.mxu0 0
        %12242 = vmatpush1.bf16.msra.mxu0 %v12086
        %12243 = vmatprep.subr.bf16.mxu0 0
        %12244 = vmatpush1.bf16.msra.mxu0 %v12085
        %12245 = vmatprep.subr.bf16.mxu0 0
        %12246 = vmatpush2.bf16.msra.mxu0 %v12100
        %12247 = vmatprep.subr.bf16.mxu0 0
        %12248 = vmatpush2.bf16.msra.mxu0 %v12099
        %12249 = vmatprep.subr.bf16.mxu0 0
        %12250 = vmatpush2.bf16.msra.mxu0 %v12098
        %12251 = vmatprep.subr.bf16.mxu0 0
        %12252 = vmatpush2.bf16.msra.mxu0 %v12097
        %12253 = vmatprep.subr.bf16.mxu0 0
        %12254 = vmatpush2.bf16.msra.mxu0 %v12096
        %12255 = vmatprep.subr.bf16.mxu0 0
        %12256 = vmatpush2.bf16.msra.mxu0 %v12095
        %12257 = vmatprep.subr.bf16.mxu0 0
        %12258 = vmatpush2.bf16.msra.mxu0 %v12094
        %12259 = vmatprep.subr.bf16.mxu0 0
        %12260 = vmatpush2.bf16.msra.mxu0 %v12093
        %12261 = vmatprep.mubr.bf16.mxu0 %v11763
        %12262 = vmatmul.mubr.bf16.gmra.mxu0 %v11762
        %v12263 = vpop.f32.mrf.mxu0
        %v12264 = vadd.f32 %v12224, %v12263
        %v12265 = vpop.f32.mrf.mxu0
        %v12266 = vpop.f32.mrf.mxu0
        %v12267 = vpop.f32.mrf.mxu0
        %12268 = vdwg.mxu0
        %12269 = vst [vmem:[%s349] sm:$0x1] %v12264
        %s12270 = sand.u32 %s247, 1
        %s12271 = scalar_lea.sflag [#allocation3], %s12270
        %s12272 = sand.u32 %s247, 1
        %s12273 = scalar_lea.vmem [#allocation2], %s12272
        // Predicated region
        $region61: #{inception_aux_forward.1} parent=59 // pred_check
          %p12274 = pneg %p257
        $region62: #{inception_aux_forward.1} parent=59 // pred_check_branch
          %12276 = sbr.rel (%p12274) target = $region64
        $region63: #{inception_aux_forward.1} parent=59 // pred_region
          %s12278 = ssub.s32 16, 16
          %12279 = vsyncadd %s12271, %s12278
          %s12280 = smul.addr %s24, 16
          %s12281 = scalar_lea.hbm %s10, %s12280
          %s12283 = sshll.u32 %s12273, 4
          %s12284 = int_to_ptr.vmem [resolvable:$true] %s12283
          %12286 = dma.vmem_to_hbm [thread:$0]  %s12284, 16, %s12281, %s12271
        $region64: #{inception_aux_forward.1} parent=59 // pred_fallthru
          _
      $region60: #{inception_aux_forward.1} parent=5 // pred_fallthru
        _
      %p12287 = scmp.le.s32.totalorder 2, %s19
      // Predicated region
      $region65: #{inception_aux_forward.1} parent=5 // pred_check
        %p12288 = pneg %p12287
      $region66: #{inception_aux_forward.1} parent=5 // pred_check_branch
        %12290 = sbr.rel (%p12288) target = $region68
      $region67: #{inception_aux_forward.1} parent=5 // pred_region
        %s12291 = ssub.s32 %s19, 2
        // Predicated region
        $region69: #{inception_aux_forward.1} parent=67 // pred_check
          %p12292 = pneg %p263
        $region70: #{inception_aux_forward.1} parent=67 // pred_check_branch
          %12294 = sbr.rel (%p12292) target = $region72
        $region71: #{inception_aux_forward.1} parent=67 // pred_region
          %s12295 = sand.u32 %s248, 1
          %s12296 = scalar_lea.sflag [#allocation3], %s12295
          %s12297 = sand.u32 %s248, 1
          %s12298 = scalar_lea.vmem [#allocation2], %s12297
          %12299 = dma.done %s12296, 16
        $region72: #{inception_aux_forward.1} parent=67 // pred_fallthru
          _
      $region68: #{inception_aux_forward.1} parent=5 // pred_fallthru
        _
    $region6: #{inception_aux_forward.1} parent=1 // loop_footer
      %s23 = sadd.s32 1, %s19
    $region7: #{inception_aux_forward.1} parent=1 // loop_footer_branch
      %18 = sbr.rel target = $region3
    $region8: #{inception_aux_forward.1} parent=1 // loop_exit
      _
    %12300 = vsyncpa [#allocation3], 1
    %s12301 = scalar_lea.sflag [#allocation3], 1
    %12302 = vsyncpa %s12301, 1

</llo_original>
